<compile_context>
chip_gen: v6e
topology: v6e:2x2x1
jax: 0.10.0
libtpu: 0.0.40
codegen_flags: <defaults>
</compile_context>

<pallas_src>
import functools

import numpy as np
import jax
import jax.numpy as jnp
from jax.experimental import pallas as pl
from jax.experimental.pallas import tpu as pltpu


_VMEM_SPEC = pl.BlockSpec(memory_space=pltpu.MemorySpace.VMEM)
_F32 = jnp.float32


# ------------------------------ LSTM pieces --------------------------------

def _gate_update(s, c_prev, H):
    """One LSTM gate update from pre-activation s (B, 4H).

    Gate order (i, f, g, o) as in torch.  sigmoid/tanh are applied to the full
    (B, 4H) vreg once, gates are then sliced (2 EUP pushes per step)."""
    sg = jax.nn.sigmoid(s)
    th = jnp.tanh(s)
    ig = sg[:, 0:H] * th[:, 2 * H:3 * H]                  # i * g
    c = ig if c_prev is None else sg[:, H:2 * H] * c_prev + ig
    h = sg[:, 3 * H:4 * H] * jnp.tanh(c)
    return h, c


def _scan_dir(gx, w_h, B, H, T, reverse=False, out_ref=None, col0=0):
    """Run one LSTM direction over precomputed gate inputs.

    gx: (T*B, 4H) = x @ Wi + b (input projection hoisted out of the loop).
    Stores h_t into out_ref[t*B:(t+1)*B, col0:col0+H] (VMEM) if given.
    Returns the hidden state of the last processed step."""
    order = range(T - 1, -1, -1) if reverse else range(T)
    h = None
    c = None
    for t in order:                                       # static, unrolled (T small)
        s = gx[t * B:(t + 1) * B, :]
        if h is not None:
            s = s + jnp.dot(h, w_h, preferred_element_type=_F32)
        h, c = _gate_update(s, c, H)
        if out_ref is not None:
            out_ref[t * B:(t + 1) * B, col0:col0 + H] = h
    return h


def _bidir_layer(x, wi_f, wh_f, b_f, wi_b, wh_b, b_b, out_ref, B, T):
    """Fused bidirectional LSTM layer, output written to VMEM out_ref (T*B, 2H)."""
    H = wh_f.shape[0]
    gx_f = jnp.dot(x, wi_f, preferred_element_type=_F32) + b_f
    gx_b = jnp.dot(x, wi_b, preferred_element_type=_F32) + b_b
    _scan_dir(gx_f, wh_f, B, H, T, reverse=False, out_ref=out_ref, col0=0)
    _scan_dir(gx_b, wh_b, B, H, T, reverse=True, out_ref=out_ref, col0=H)


def _uni_layer(x, wi, wh, b, out_ref, B, T):
    """Unidirectional LSTM layer, output written to VMEM out_ref (T*B, H)."""
    H = wh.shape[0]
    gx = jnp.dot(x, wi, preferred_element_type=_F32) + b
    _scan_dir(gx, wh, B, H, T, reverse=False, out_ref=out_ref, col0=0)


# ------------------------------ fused kernel -------------------------------

def _model_kernel(x_ref, cal_ref,
                  e1f_wi, e1f_wh, e1f_b, e1b_wi, e1b_wh, e1b_b,
                  e2_wi, e2_wh, e2_b,
                  mw1, mb1, mw2, mb2,
                  d1f_wi, d1f_wh, d1f_b, d1b_wi, d1b_wh, d1b_b,
                  d2_wi, d2_wh, d2_b,
                  o1f_wi, o1f_wh, o1f_b, o1b_wi, o1b_wh, o1b_b,
                  o2f_wi, o2f_wh, o2f_b, o2b_wi, o2b_wh, o2b_b,
                  fw1, fb1, fw2, fb2, fw3, fb3,
                  xhat_ref, xrec_ref,
                  s_enc1, s_enc2, s_dec1, s_out1,
                  *, B, T):
    x = x_ref[...]                                         # (T*B, F_in) time-major rows
    cal = cal_ref[...]                                     # (T*B, 8)  = [month | day]

    # ---------------- AutoEncoder: encoder ----------------
    # (model-level BN and encoder BN already folded into e1*_wi / e1*_b)
    _bidir_layer(x, e1f_wi[...], e1f_wh[...], e1f_b[...],
                 e1b_wi[...], e1b_wh[...], e1b_b[...], s_enc1, B, T)
    _uni_layer(s_enc1[...], e2_wi[...], e2_wh[...], e2_b[...], s_enc2, B, T)

    # ---------------- mapping MLP (Linear-ReLU-Linear-ReLU) ----------------
    enc_h = s_enc2[...]                                    # (T*B, H)
    z = jax.nn.relu(jnp.dot(enc_h, mw1[...], preferred_element_type=_F32) + mb1[...])
    x_map = jax.nn.relu(jnp.dot(z, mw2[...], preferred_element_type=_F32) + mb2[...])

    # ---------------- AutoEncoder: decoder (x_rec) ----------------
    _bidir_layer(x_map, d1f_wi[...], d1f_wh[...], d1f_b[...],
                 d1b_wi[...], d1b_wh[...], d1b_b[...], s_dec1, B, T)
    _uni_layer(s_dec1[...], d2_wi[...], d2_wh[...], d2_b[...], xrec_ref, B, T)

    # ---------------- prediction branch ----------------
    # torch.cat([x_map, month, day], dim=2) @ Wi  ==  x_map @ Wi[:E] + cal @ Wi[E:]
    E = x_map.shape[1]
    H = o1f_wh.shape[0]
    wi_f = o1f_wi[...]
    wi_b = o1b_wi[...]
    gx_f = (jnp.dot(x_map, wi_f[0:E], preferred_element_type=_F32)
            + jnp.dot(cal, wi_f[E:], preferred_element_type=_F32) + o1f_b[...])
    gx_b = (jnp.dot(x_map, wi_b[0:E], preferred_element_type=_F32)
            + jnp.dot(cal, wi_b[E:], preferred_element_type=_F32) + o1b_b[...])
    _scan_dir(gx_f, o1f_wh[...], B, H, T, reverse=False, out_ref=s_out1, col0=0)
    _scan_dir(gx_b, o1b_wh[...], B, H, T, reverse=True, out_ref=s_out1, col0=H)

    # Outer LSTM2: only out[:, -1, :] is consumed by the FC head.
    g = s_out1[...]                                        # (T*B, 2H)
    gx2f = jnp.dot(g, o2f_wi[...], preferred_element_type=_F32) + o2f_b[...]
    h_last_f = _scan_dir(gx2f, o2f_wh[...], B, H, T, reverse=False)
    # Backward direction at output index T-1 == single zero-state cell on g[T-1].
    g_last = g[(T - 1) * B:T * B, :]
    gx2b_last = jnp.dot(g_last, o2b_wi[...], preferred_element_type=_F32) + o2b_b[...]
    h_last_b, _ = _gate_update(gx2b_last, None, H)

    # ---------------- FC head (split first weight instead of concat) --------
    w1 = fw1[...]
    z1 = jax.nn.relu(jnp.dot(h_last_f, w1[0:H], preferred_element_type=_F32)
                     + jnp.dot(h_last_b, w1[H:], preferred_element_type=_F32)
                     + fb1[...])
    z2 = jax.nn.relu(jnp.dot(z1, fw2[...], preferred_element_type=_F32) + fb2[...])
    xhat_ref[...] = jnp.dot(z2, fw3[...], preferred_element_type=_F32) + fb3[...]


# --------------------------- BatchNorm folding -----------------------------

def fold_affine_into_lstm(scale, shift, lstm_params):
    """Fold per-channel affine y = x*scale + shift (eval-mode BN) into the
    LSTM's input transform: y @ Wi + b == x @ (scale^T * Wi) + (shift @ Wi + b)."""
    w_i, w_h, b = lstm_params
    w_i2 = scale.reshape(-1, 1) * w_i
    b2 = b + jnp.dot(shift.reshape(1, -1), w_i)
    return (w_i2, w_h, b2)


# ----------------------------- parameter init ------------------------------

def _uniform(key, shape, scale):
    return jax.random.uniform(key, shape, _F32, -scale, scale)


def init_lstm(key, in_size, hidden):
    """Fused-gate layout (In,4H),(H,4H),(1,4H); gate order (i,f,g,o); b = b_ih+b_hh."""
    k1, k2, k3 = jax.random.split(key, 3)
    s = 1.0 / np.sqrt(hidden)
    return (_uniform(k1, (in_size, 4 * hidden), s),
            _uniform(k2, (hidden, 4 * hidden), s),
            _uniform(k3, (1, 4 * hidden), s))


def init_linear(key, in_size, out_size):
    k1, k2 = jax.random.split(key)
    s = 1.0 / np.sqrt(in_size)
    return _uniform(k1, (in_size, out_size), s), _uniform(k2, (1, out_size), s)


def init_bn(c, eps=1e-5):
    # Eval-mode per-channel affine (PyTorch defaults: gamma=1, beta=0, mean=0, var=1).
    # TODO(synk): training-mode batch statistics / running-stat updates not implemented.
    scale = jnp.full((1, c), 1.0 / np.sqrt(1.0 + eps), _F32)
    shift = jnp.zeros((1, c), _F32)
    return {'scale': scale, 'shift': shift}


def init_encoder(key, in_size, hidden):
    k1, k2, k3 = jax.random.split(key, 3)
    return {
        'bn': init_bn(in_size),
        'lstm1_f': init_lstm(k1, in_size, hidden),
        'lstm1_b': init_lstm(k2, in_size, hidden),
        'lstm2': init_lstm(k3, 2 * hidden, hidden),
    }


def init_autoencoder(key, in_size, hidden, emb):
    k1, k2, k3, k4 = jax.random.split(key, 4)
    w1, b1 = init_linear(k2, hidden, hidden // 2)
    w2, b2 = init_linear(k3, hidden // 2, emb)
    return {
        'encoder': init_encoder(k1, in_size, hidden),
        'map': {'w1': w1, 'b1': b1, 'w2': w2, 'b2': b2},
        'decoder': init_encoder(k4, emb, in_size),
    }


def init_model(key, input_size, hidden, emb):
    ks = jax.random.split(key, 10)
    fc_w1, fc_b1 = init_linear(ks[5], 2 * hidden, 64)
    fc_w2, fc_b2 = init_linear(ks[6], 64, 32)
    fc_w3, fc_b3 = init_linear(ks[7], 32, 1)
    return {
        'day_emb': jax.random.normal(ks[0], (7, 4), _F32),
        'month_emb': jax.random.normal(ks[1], (13, 4), _F32),
        'bn': init_bn(input_size),
        'ae': init_autoencoder(ks[2], input_size, hidden, emb),
        'lstm1_f': init_lstm(ks[3], emb + 8, hidden),
        'lstm1_b': init_lstm(ks[8], emb + 8, hidden),
        'lstm2_f': init_lstm(ks[4], 2 * hidden, hidden),
        'lstm2_b': init_lstm(ks[9], 2 * hidden, hidden),
        'fc': {'w1': fc_w1, 'b1': fc_b1, 'w2': fc_w2, 'b2': fc_b2,
               'w3': fc_w3, 'b3': fc_b3},
    }


# ------------------------------- forward pass -------------------------------

def lstm_autoencoder_forward(params, enc, day, month):
    B, T, F_in = enc.shape

    # Batch-first -> time-major flat rows once at the boundary (row = t*B + b).
    x_flat = jnp.transpose(enc, (1, 0, 2)).reshape(T * B, F_in)
    day_e = jnp.take(params['day_emb'], jnp.transpose(day), axis=0)        # (T, B, 4)
    month_e = jnp.take(params['month_emb'], jnp.transpose(month), axis=0)  # (T, B, 4)
    cal_flat = jnp.concatenate([month_e, day_e], axis=2).reshape(T * B, 8)

    ae = params['ae']
    enc_p, dec_p = ae['encoder'], ae['decoder']

    # Compose model-level BN with the AE-encoder BN, fold into encoder lstm1.
    s1, t1 = params['bn']['scale'], params['bn']['shift']
    s2, t2 = enc_p['bn']['scale'], enc_p['bn']['shift']
    scale, shift = s1 * s2, t1 * s2 + t2
    e1f = fold_affine_into_lstm(scale, shift, enc_p['lstm1_f'])
    e1b = fold_affine_into_lstm(scale, shift, enc_p['lstm1_b'])
    # Decoder BN folds into decoder lstm1.
    d1f = fold_affine_into_lstm(dec_p['bn']['scale'], dec_p['bn']['shift'], dec_p['lstm1_f'])
    d1b = fold_affine_into_lstm(dec_p['bn']['scale'], dec_p['bn']['shift'], dec_p['lstm1_b'])

    m, fc = ae['map'], params['fc']
    args = (
        x_flat, cal_flat,
        *e1f, *e1b, *enc_p['lstm2'],
        m['w1'], m['b1'], m['w2'], m['b2'],
        *d1f, *d1b, *dec_p['lstm2'],
        *params['lstm1_f'], *params['lstm1_b'],
        *params['lstm2_f'], *params['lstm2_b'],
        fc['w1'], fc['b1'], fc['w2'], fc['b2'], fc['w3'], fc['b3'],
    )

    enc_h = enc_p['lstm2'][1].shape[0]       # AE hidden (32)
    dec_h = dec_p['lstm2'][1].shape[0]       # decoder hidden == input_size (4)
    out_h = params['lstm2_f'][1].shape[0]    # outer hidden (32)

    kernel = functools.partial(_model_kernel, B=B, T=T)
    x_hat, x_rec_flat = pl.pallas_call(
        kernel,
        out_shape=(jax.ShapeDtypeStruct((B, 1), _F32),
                   jax.ShapeDtypeStruct((T * B, dec_h), _F32)),
        in_specs=[_VMEM_SPEC] * len(args),
        out_specs=(_VMEM_SPEC, _VMEM_SPEC),
        scratch_shapes=[
            pltpu.VMEM((T * B, 2 * enc_h), _F32),   # AE encoder lstm1 output
            pltpu.VMEM((T * B, enc_h), _F32),       # AE encoder lstm2 output
            pltpu.VMEM((T * B, 2 * dec_h), _F32),   # AE decoder lstm1 output
            pltpu.VMEM((T * B, 2 * out_h), _F32),   # outer lstm1 output
        ],
    )(*args)

    x_rec = x_rec_flat.reshape(T, B, dec_h).transpose(1, 0, 2)   # (B, T, input_size)
    return x_hat, x_rec


# ---------------------------------- main ------------------------------------

if __name__ == "__main__":
    B, T = 2, 8
    input_size, hidden_size, emb_size = 4, 32, 8

    key = jax.random.PRNGKey(0)
    kp, kx, kd, km = jax.random.split(key, 4)
    params = init_model(kp, input_size, hidden_size, emb_size)

    enc = jax.random.normal(kx, (B, T, input_size), _F32)
    day = jax.random.randint(kd, (B, T), 0, 7)
    month = jax.random.randint(km, (B, T), 0, 13)

    fwd = jax.jit(lstm_autoencoder_forward)
    x_hat, x_rec = fwd(params, enc, day, month)
    jax.block_until_ready((x_hat, x_rec))

    assert x_hat.shape == (B, 1), x_hat.shape
    assert x_rec.shape == (B, T, input_size), x_rec.shape
    assert bool(jnp.all(jnp.isfinite(x_hat))) and bool(jnp.all(jnp.isfinite(x_rec)))
    print("KERNEL_OK")
</pallas_src>

<mosaic_0001>
module attributes {stable_mosaic.version = 11 : i64} {
  func.func @_model_kernel(%arg0: memref<16x4xf32, #tpu.memory_space<vmem>>, %arg1: memref<16x8xf32, #tpu.memory_space<vmem>>, %arg2: memref<4x128xf32, #tpu.memory_space<vmem>>, %arg3: memref<32x128xf32, #tpu.memory_space<vmem>>, %arg4: memref<1x128xf32, #tpu.memory_space<vmem>>, %arg5: memref<4x128xf32, #tpu.memory_space<vmem>>, %arg6: memref<32x128xf32, #tpu.memory_space<vmem>>, %arg7: memref<1x128xf32, #tpu.memory_space<vmem>>, %arg8: memref<64x128xf32, #tpu.memory_space<vmem>>, %arg9: memref<32x128xf32, #tpu.memory_space<vmem>>, %arg10: memref<1x128xf32, #tpu.memory_space<vmem>>, %arg11: memref<32x16xf32, #tpu.memory_space<vmem>>, %arg12: memref<1x16xf32, #tpu.memory_space<vmem>>, %arg13: memref<16x8xf32, #tpu.memory_space<vmem>>, %arg14: memref<1x8xf32, #tpu.memory_space<vmem>>, %arg15: memref<8x16xf32, #tpu.memory_space<vmem>>, %arg16: memref<4x16xf32, #tpu.memory_space<vmem>>, %arg17: memref<1x16xf32, #tpu.memory_space<vmem>>, %arg18: memref<8x16xf32, #tpu.memory_space<vmem>>, %arg19: memref<4x16xf32, #tpu.memory_space<vmem>>, %arg20: memref<1x16xf32, #tpu.memory_space<vmem>>, %arg21: memref<8x16xf32, #tpu.memory_space<vmem>>, %arg22: memref<4x16xf32, #tpu.memory_space<vmem>>, %arg23: memref<1x16xf32, #tpu.memory_space<vmem>>, %arg24: memref<16x128xf32, #tpu.memory_space<vmem>>, %arg25: memref<32x128xf32, #tpu.memory_space<vmem>>, %arg26: memref<1x128xf32, #tpu.memory_space<vmem>>, %arg27: memref<16x128xf32, #tpu.memory_space<vmem>>, %arg28: memref<32x128xf32, #tpu.memory_space<vmem>>, %arg29: memref<1x128xf32, #tpu.memory_space<vmem>>, %arg30: memref<64x128xf32, #tpu.memory_space<vmem>>, %arg31: memref<32x128xf32, #tpu.memory_space<vmem>>, %arg32: memref<1x128xf32, #tpu.memory_space<vmem>>, %arg33: memref<64x128xf32, #tpu.memory_space<vmem>>, %arg34: memref<32x128xf32, #tpu.memory_space<vmem>>, %arg35: memref<1x128xf32, #tpu.memory_space<vmem>>, %arg36: memref<64x64xf32, #tpu.memory_space<vmem>>, %arg37: memref<1x64xf32, #tpu.memory_space<vmem>>, %arg38: memref<64x32xf32, #tpu.memory_space<vmem>>, %arg39: memref<1x32xf32, #tpu.memory_space<vmem>>, %arg40: memref<32x1xf32, #tpu.memory_space<vmem>>, %arg41: memref<1x1xf32, #tpu.memory_space<vmem>>, %arg42: memref<2x1xf32, #tpu.memory_space<vmem>>, %arg43: memref<16x4xf32, #tpu.memory_space<vmem>>, %arg44: memref<16x64xf32, #tpu.memory_space<vmem>>, %arg45: memref<16x32xf32, #tpu.memory_space<vmem>>, %arg46: memref<16x8xf32, #tpu.memory_space<vmem>>, %arg47: memref<16x64xf32, #tpu.memory_space<vmem>>) attributes {dimension_semantics = [], scalar_prefetch = 0 : i64, scratch_operands = 4 : i64, tpu.core_type = #tpu.core_type<tc>} {
    %c0 = arith.constant 0 : index
    %c0_0 = arith.constant 0 : index
    %0 = vector.load %arg0[%c0, %c0_0] : memref<16x4xf32, #tpu.memory_space<vmem>>, vector<16x4xf32>
    %c0_1 = arith.constant 0 : index
    %c0_2 = arith.constant 0 : index
    %1 = vector.load %arg1[%c0_1, %c0_2] : memref<16x8xf32, #tpu.memory_space<vmem>>, vector<16x8xf32>
    %c0_3 = arith.constant 0 : index
    %c0_4 = arith.constant 0 : index
    %2 = vector.load %arg2[%c0_3, %c0_4] : memref<4x128xf32, #tpu.memory_space<vmem>>, vector<4x128xf32>
    %c0_5 = arith.constant 0 : index
    %c0_6 = arith.constant 0 : index
    %3 = vector.load %arg3[%c0_5, %c0_6] : memref<32x128xf32, #tpu.memory_space<vmem>>, vector<32x128xf32>
    %c0_7 = arith.constant 0 : index
    %c0_8 = arith.constant 0 : index
    %4 = vector.load %arg4[%c0_7, %c0_8] : memref<1x128xf32, #tpu.memory_space<vmem>>, vector<1x128xf32>
    %c0_9 = arith.constant 0 : index
    %c0_10 = arith.constant 0 : index
    %5 = vector.load %arg5[%c0_9, %c0_10] : memref<4x128xf32, #tpu.memory_space<vmem>>, vector<4x128xf32>
    %c0_11 = arith.constant 0 : index
    %c0_12 = arith.constant 0 : index
    %6 = vector.load %arg6[%c0_11, %c0_12] : memref<32x128xf32, #tpu.memory_space<vmem>>, vector<32x128xf32>
    %c0_13 = arith.constant 0 : index
    %c0_14 = arith.constant 0 : index
    %7 = vector.load %arg7[%c0_13, %c0_14] : memref<1x128xf32, #tpu.memory_space<vmem>>, vector<1x128xf32>
    %cst = arith.constant dense<0.000000e+00> : vector<16x128xf32>
    %8 = tpu.matmul %0, %2, %cst {dimension_numbers = #tpu.dot_dimension_numbers<[1], [0], [0], [1], [0, 0, 1, 1], [], []>} : vector<16x4xf32>, vector<4x128xf32>, vector<16x128xf32> -> vector<16x128xf32>
    %9 = vector.broadcast %4 : vector<1x128xf32> to vector<16x128xf32>
    %10 = arith.addf %8, %9 : vector<16x128xf32>
    %cst_15 = arith.constant dense<0.000000e+00> : vector<16x128xf32>
    %11 = tpu.matmul %0, %5, %cst_15 {dimension_numbers = #tpu.dot_dimension_numbers<[1], [0], [0], [1], [0, 0, 1, 1], [], []>} : vector<16x4xf32>, vector<4x128xf32>, vector<16x128xf32> -> vector<16x128xf32>
    %12 = vector.broadcast %7 : vector<1x128xf32> to vector<16x128xf32>
    %13 = arith.addf %11, %12 : vector<16x128xf32>
    %14 = vector.extract_strided_slice %10 {offsets = [0, 0], sizes = [2, 128], strides = [1, 1]} : vector<16x128xf32> to vector<2x128xf32>
    %15 = arith.negf %14 : vector<2x128xf32>
    %16 = math.exp %15 : vector<2x128xf32>
    %cst_16 = arith.constant 1.000000e+00 : f32
    %17 = vector.broadcast %cst_16 : f32 to vector<2x128xf32>
    %18 = arith.addf %17, %16 : vector<2x128xf32>
    %19 = arith.divf %17, %18 : vector<2x128xf32>
    %20 = math.tanh %14 : vector<2x128xf32>
    %21 = vector.extract_strided_slice %19 {offsets = [0, 0], sizes = [2, 32], strides = [1, 1]} : vector<2x128xf32> to vector<2x32xf32>
    %22 = vector.extract_strided_slice %20 {offsets = [0, 64], sizes = [2, 32], strides = [1, 1]} : vector<2x128xf32> to vector<2x32xf32>
    %23 = arith.mulf %21, %22 : vector<2x32xf32>
    %24 = vector.extract_strided_slice %19 {offsets = [0, 96], sizes = [2, 32], strides = [1, 1]} : vector<2x128xf32> to vector<2x32xf32>
    %25 = math.tanh %23 : vector<2x32xf32>
    %26 = arith.mulf %24, %25 : vector<2x32xf32>
    %c0_17 = arith.constant 0 : index
    %c0_18 = arith.constant 0 : index
    %27 = vector.load %arg44[%c0_17, %c0_18] : memref<16x64xf32, #tpu.memory_space<vmem>>, vector<2x32xf32>
    tpu.vector_store %arg44[%c0_17, %c0_18], %26 {strides = array<i32>} : memref<16x64xf32, #tpu.memory_space<vmem>>, vector<2x32xf32>,
    %28 = vector.extract_strided_slice %10 {offsets = [2, 0], sizes = [2, 128], strides = [1, 1]} : vector<16x128xf32> to vector<2x128xf32>
    %cst_19 = arith.constant dense<0.000000e+00> : vector<2x128xf32>
    %29 = tpu.matmul %26, %3, %cst_19 {dimension_numbers = #tpu.dot_dimension_numbers<[1], [0], [0], [1], [0, 0, 1, 1], [], []>} : vector<2x32xf32>, vector<32x128xf32>, vector<2x128xf32> -> vector<2x128xf32>
    %30 = arith.addf %28, %29 : vector<2x128xf32>
    %31 = arith.negf %30 : vector<2x128xf32>
    %32 = math.exp %31 : vector<2x128xf32>
    %cst_20 = arith.constant 1.000000e+00 : f32
    %33 = vector.broadcast %cst_20 : f32 to vector<2x128xf32>
    %34 = arith.addf %33, %32 : vector<2x128xf32>
    %35 = arith.divf %33, %34 : vector<2x128xf32>
    %36 = math.tanh %30 : vector<2x128xf32>
    %37 = vector.extract_strided_slice %35 {offsets = [0, 0], sizes = [2, 32], strides = [1, 1]} : vector<2x128xf32> to vector<2x32xf32>
    %38 = vector.extract_strided_slice %36 {offsets = [0, 64], sizes = [2, 32], strides = [1, 1]} : vector<2x128xf32> to vector<2x32xf32>
    %39 = arith.mulf %37, %38 : vector<2x32xf32>
    %40 = vector.extract_strided_slice %35 {offsets = [0, 32], sizes = [2, 32], strides = [1, 1]} : vector<2x128xf32> to vector<2x32xf32>
    %41 = arith.mulf %40, %23 : vector<2x32xf32>
    %42 = arith.addf %41, %39 : vector<2x32xf32>
    %43 = vector.extract_strided_slice %35 {offsets = [0, 96], sizes = [2, 32], strides = [1, 1]} : vector<2x128xf32> to vector<2x32xf32>
    %44 = math.tanh %42 : vector<2x32xf32>
    %45 = arith.mulf %43, %44 : vector<2x32xf32>
    %c2 = arith.constant 2 : index
    %c0_21 = arith.constant 0 : index
    %46 = vector.load %arg44[%c2, %c0_21] : memref<16x64xf32, #tpu.memory_space<vmem>>, vector<2x32xf32>
    tpu.vector_store %arg44[%c2, %c0_21], %45 {strides = array<i32>} : memref<16x64xf32, #tpu.memory_space<vmem>>, vector<2x32xf32>,
    %47 = vector.extract_strided_slice %10 {offsets = [4, 0], sizes = [2, 128], strides = [1, 1]} : vector<16x128xf32> to vector<2x128xf32>
    %cst_22 = arith.constant dense<0.000000e+00> : vector<2x128xf32>
    %48 = tpu.matmul %45, %3, %cst_22 {dimension_numbers = #tpu.dot_dimension_numbers<[1], [0], [0], [1], [0, 0, 1, 1], [], []>} : vector<2x32xf32>, vector<32x128xf32>, vector<2x128xf32> -> vector<2x128xf32>
    %49 = arith.addf %47, %48 : vector<2x128xf32>
    %50 = arith.negf %49 : vector<2x128xf32>
    %51 = math.exp %50 : vector<2x128xf32>
    %cst_23 = arith.constant 1.000000e+00 : f32
    %52 = vector.broadcast %cst_23 : f32 to vector<2x128xf32>
    %53 = arith.addf %52, %51 : vector<2x128xf32>
    %54 = arith.divf %52, %53 : vector<2x128xf32>
    %55 = math.tanh %49 : vector<2x128xf32>
    %56 = vector.extract_strided_slice %54 {offsets = [0, 0], sizes = [2, 32], strides = [1, 1]} : vector<2x128xf32> to vector<2x32xf32>
    %57 = vector.extract_strided_slice %55 {offsets = [0, 64], sizes = [2, 32], strides = [1, 1]} : vector<2x128xf32> to vector<2x32xf32>
    %58 = arith.mulf %56, %57 : vector<2x32xf32>
    %59 = vector.extract_strided_slice %54 {offsets = [0, 32], sizes = [2, 32], strides = [1, 1]} : vector<2x128xf32> to vector<2x32xf32>
    %60 = arith.mulf %59, %42 : vector<2x32xf32>
    %61 = arith.addf %60, %58 : vector<2x32xf32>
    %62 = vector.extract_strided_slice %54 {offsets = [0, 96], sizes = [2, 32], strides = [1, 1]} : vector<2x128xf32> to vector<2x32xf32>
    %63 = math.tanh %61 : vector<2x32xf32>
    %64 = arith.mulf %62, %63 : vector<2x32xf32>
    %c4 = arith.constant 4 : index
    %c0_24 = arith.constant 0 : index
    %65 = vector.load %arg44[%c4, %c0_24] : memref<16x64xf32, #tpu.memory_space<vmem>>, vector<2x32xf32>
    tpu.vector_store %arg44[%c4, %c0_24], %64 {strides = array<i32>} : memref<16x64xf32, #tpu.memory_space<vmem>>, vector<2x32xf32>,
    %66 = vector.extract_strided_slice %10 {offsets = [6, 0], sizes = [2, 128], strides = [1, 1]} : vector<16x128xf32> to vector<2x128xf32>
    %cst_25 = arith.constant dense<0.000000e+00> : vector<2x128xf32>
    %67 = tpu.matmul %64, %3, %cst_25 {dimension_numbers = #tpu.dot_dimension_numbers<[1], [0], [0], [1], [0, 0, 1, 1], [], []>} : vector<2x32xf32>, vector<32x128xf32>, vector<2x128xf32> -> vector<2x128xf32>
    %68 = arith.addf %66, %67 : vector<2x128xf32>
    %69 = arith.negf %68 : vector<2x128xf32>
    %70 = math.exp %69 : vector<2x128xf32>
    %cst_26 = arith.constant 1.000000e+00 : f32
    %71 = vector.broadcast %cst_26 : f32 to vector<2x128xf32>
    %72 = arith.addf %71, %70 : vector<2x128xf32>
    %73 = arith.divf %71, %72 : vector<2x128xf32>
    %74 = math.tanh %68 : vector<2x128xf32>
    %75 = vector.extract_strided_slice %73 {offsets = [0, 0], sizes = [2, 32], strides = [1, 1]} : vector<2x128xf32> to vector<2x32xf32>
    %76 = vector.extract_strided_slice %74 {offsets = [0, 64], sizes = [2, 32], strides = [1, 1]} : vector<2x128xf32> to vector<2x32xf32>
    %77 = arith.mulf %75, %76 : vector<2x32xf32>
    %78 = vector.extract_strided_slice %73 {offsets = [0, 32], sizes = [2, 32], strides = [1, 1]} : vector<2x128xf32> to vector<2x32xf32>
    %79 = arith.mulf %78, %61 : vector<2x32xf32>
    %80 = arith.addf %79, %77 : vector<2x32xf32>
    %81 = vector.extract_strided_slice %73 {offsets = [0, 96], sizes = [2, 32], strides = [1, 1]} : vector<2x128xf32> to vector<2x32xf32>
    %82 = math.tanh %80 : vector<2x32xf32>
    %83 = arith.mulf %81, %82 : vector<2x32xf32>
    %c6 = arith.constant 6 : index
    %c0_27 = arith.constant 0 : index
    %84 = vector.load %arg44[%c6, %c0_27] : memref<16x64xf32, #tpu.memory_space<vmem>>, vector<2x32xf32>
    tpu.vector_store %arg44[%c6, %c0_27], %83 {strides = array<i32>} : memref<16x64xf32, #tpu.memory_space<vmem>>, vector<2x32xf32>,
    %85 = vector.extract_strided_slice %10 {offsets = [8, 0], sizes = [2, 128], strides = [1, 1]} : vector<16x128xf32> to vector<2x128xf32>
    %cst_28 = arith.constant dense<0.000000e+00> : vector<2x128xf32>
    %86 = tpu.matmul %83, %3, %cst_28 {dimension_numbers = #tpu.dot_dimension_numbers<[1], [0], [0], [1], [0, 0, 1, 1], [], []>} : vector<2x32xf32>, vector<32x128xf32>, vector<2x128xf32> -> vector<2x128xf32>
    %87 = arith.addf %85, %86 : vector<2x128xf32>
    %88 = arith.negf %87 : vector<2x128xf32>
    %89 = math.exp %88 : vector<2x128xf32>
    %cst_29 = arith.constant 1.000000e+00 : f32
    %90 = vector.broadcast %cst_29 : f32 to vector<2x128xf32>
    %91 = arith.addf %90, %89 : vector<2x128xf32>
    %92 = arith.divf %90, %91 : vector<2x128xf32>
    %93 = math.tanh %87 : vector<2x128xf32>
    %94 = vector.extract_strided_slice %92 {offsets = [0, 0], sizes = [2, 32], strides = [1, 1]} : vector<2x128xf32> to vector<2x32xf32>
    %95 = vector.extract_strided_slice %93 {offsets = [0, 64], sizes = [2, 32], strides = [1, 1]} : vector<2x128xf32> to vector<2x32xf32>
    %96 = arith.mulf %94, %95 : vector<2x32xf32>
    %97 = vector.extract_strided_slice %92 {offsets = [0, 32], sizes = [2, 32], strides = [1, 1]} : vector<2x128xf32> to vector<2x32xf32>
    %98 = arith.mulf %97, %80 : vector<2x32xf32>
    %99 = arith.addf %98, %96 : vector<2x32xf32>
    %100 = vector.extract_strided_slice %92 {offsets = [0, 96], sizes = [2, 32], strides = [1, 1]} : vector<2x128xf32> to vector<2x32xf32>
    %101 = math.tanh %99 : vector<2x32xf32>
    %102 = arith.mulf %100, %101 : vector<2x32xf32>
    %c8 = arith.constant 8 : index
    %c0_30 = arith.constant 0 : index
    %103 = vector.load %arg44[%c8, %c0_30] : memref<16x64xf32, #tpu.memory_space<vmem>>, vector<2x32xf32>
    tpu.vector_store %arg44[%c8, %c0_30], %102 {strides = array<i32>} : memref<16x64xf32, #tpu.memory_space<vmem>>, vector<2x32xf32>,
    %104 = vector.extract_strided_slice %10 {offsets = [10, 0], sizes = [2, 128], strides = [1, 1]} : vector<16x128xf32> to vector<2x128xf32>
    %cst_31 = arith.constant dense<0.000000e+00> : vector<2x128xf32>
    %105 = tpu.matmul %102, %3, %cst_31 {dimension_numbers = #tpu.dot_dimension_numbers<[1], [0], [0], [1], [0, 0, 1, 1], [], []>} : vector<2x32xf32>, vector<32x128xf32>, vector<2x128xf32> -> vector<2x128xf32>
    %106 = arith.addf %104, %105 : vector<2x128xf32>
    %107 = arith.negf %106 : vector<2x128xf32>
    %108 = math.exp %107 : vector<2x128xf32>
    %cst_32 = arith.constant 1.000000e+00 : f32
    %109 = vector.broadcast %cst_32 : f32 to vector<2x128xf32>
    %110 = arith.addf %109, %108 : vector<2x128xf32>
    %111 = arith.divf %109, %110 : vector<2x128xf32>
    %112 = math.tanh %106 : vector<2x128xf32>
    %113 = vector.extract_strided_slice %111 {offsets = [0, 0], sizes = [2, 32], strides = [1, 1]} : vector<2x128xf32> to vector<2x32xf32>
    %114 = vector.extract_strided_slice %112 {offsets = [0, 64], sizes = [2, 32], strides = [1, 1]} : vector<2x128xf32> to vector<2x32xf32>
    %115 = arith.mulf %113, %114 : vector<2x32xf32>
    %116 = vector.extract_strided_slice %111 {offsets = [0, 32], sizes = [2, 32], strides = [1, 1]} : vector<2x128xf32> to vector<2x32xf32>
    %117 = arith.mulf %116, %99 : vector<2x32xf32>
    %118 = arith.addf %117, %115 : vector<2x32xf32>
    %119 = vector.extract_strided_slice %111 {offsets = [0, 96], sizes = [2, 32], strides = [1, 1]} : vector<2x128xf32> to vector<2x32xf32>
    %120 = math.tanh %118 : vector<2x32xf32>
    %121 = arith.mulf %119, %120 : vector<2x32xf32>
    %c10 = arith.constant 10 : index
    %c0_33 = arith.constant 0 : index
    %122 = vector.load %arg44[%c10, %c0_33] : memref<16x64xf32, #tpu.memory_space<vmem>>, vector<2x32xf32>
    tpu.vector_store %arg44[%c10, %c0_33], %121 {strides = array<i32>} : memref<16x64xf32, #tpu.memory_space<vmem>>, vector<2x32xf32>,
    %123 = vector.extract_strided_slice %10 {offsets = [12, 0], sizes = [2, 128], strides = [1, 1]} : vector<16x128xf32> to vector<2x128xf32>
    %cst_34 = arith.constant dense<0.000000e+00> : vector<2x128xf32>
    %124 = tpu.matmul %121, %3, %cst_34 {dimension_numbers = #tpu.dot_dimension_numbers<[1], [0], [0], [1], [0, 0, 1, 1], [], []>} : vector<2x32xf32>, vector<32x128xf32>, vector<2x128xf32> -> vector<2x128xf32>
    %125 = arith.addf %123, %124 : vector<2x128xf32>
    %126 = arith.negf %125 : vector<2x128xf32>
    %127 = math.exp %126 : vector<2x128xf32>
    %cst_35 = arith.constant 1.000000e+00 : f32
    %128 = vector.broadcast %cst_35 : f32 to vector<2x128xf32>
    %129 = arith.addf %128, %127 : vector<2x128xf32>
    %130 = arith.divf %128, %129 : vector<2x128xf32>
    %131 = math.tanh %125 : vector<2x128xf32>
    %132 = vector.extract_strided_slice %130 {offsets = [0, 0], sizes = [2, 32], strides = [1, 1]} : vector<2x128xf32> to vector<2x32xf32>
    %133 = vector.extract_strided_slice %131 {offsets = [0, 64], sizes = [2, 32], strides = [1, 1]} : vector<2x128xf32> to vector<2x32xf32>
    %134 = arith.mulf %132, %133 : vector<2x32xf32>
    %135 = vector.extract_strided_slice %130 {offsets = [0, 32], sizes = [2, 32], strides = [1, 1]} : vector<2x128xf32> to vector<2x32xf32>
    %136 = arith.mulf %135, %118 : vector<2x32xf32>
    %137 = arith.addf %136, %134 : vector<2x32xf32>
    %138 = vector.extract_strided_slice %130 {offsets = [0, 96], sizes = [2, 32], strides = [1, 1]} : vector<2x128xf32> to vector<2x32xf32>
    %139 = math.tanh %137 : vector<2x32xf32>
    %140 = arith.mulf %138, %139 : vector<2x32xf32>
    %c12 = arith.constant 12 : index
    %c0_36 = arith.constant 0 : index
    %141 = vector.load %arg44[%c12, %c0_36] : memref<16x64xf32, #tpu.memory_space<vmem>>, vector<2x32xf32>
    tpu.vector_store %arg44[%c12, %c0_36], %140 {strides = array<i32>} : memref<16x64xf32, #tpu.memory_space<vmem>>, vector<2x32xf32>,
    %142 = vector.extract_strided_slice %10 {offsets = [14, 0], sizes = [2, 128], strides = [1, 1]} : vector<16x128xf32> to vector<2x128xf32>
    %cst_37 = arith.constant dense<0.000000e+00> : vector<2x128xf32>
    %143 = tpu.matmul %140, %3, %cst_37 {dimension_numbers = #tpu.dot_dimension_numbers<[1], [0], [0], [1], [0, 0, 1, 1], [], []>} : vector<2x32xf32>, vector<32x128xf32>, vector<2x128xf32> -> vector<2x128xf32>
    %144 = arith.addf %142, %143 : vector<2x128xf32>
    %145 = arith.negf %144 : vector<2x128xf32>
    %146 = math.exp %145 : vector<2x128xf32>
    %cst_38 = arith.constant 1.000000e+00 : f32
    %147 = vector.broadcast %cst_38 : f32 to vector<2x128xf32>
    %148 = arith.addf %147, %146 : vector<2x128xf32>
    %149 = arith.divf %147, %148 : vector<2x128xf32>
    %150 = math.tanh %144 : vector<2x128xf32>
    %151 = vector.extract_strided_slice %149 {offsets = [0, 0], sizes = [2, 32], strides = [1, 1]} : vector<2x128xf32> to vector<2x32xf32>
    %152 = vector.extract_strided_slice %150 {offsets = [0, 64], sizes = [2, 32], strides = [1, 1]} : vector<2x128xf32> to vector<2x32xf32>
    %153 = arith.mulf %151, %152 : vector<2x32xf32>
    %154 = vector.extract_strided_slice %149 {offsets = [0, 32], sizes = [2, 32], strides = [1, 1]} : vector<2x128xf32> to vector<2x32xf32>
    %155 = arith.mulf %154, %137 : vector<2x32xf32>
    %156 = arith.addf %155, %153 : vector<2x32xf32>
    %157 = vector.extract_strided_slice %149 {offsets = [0, 96], sizes = [2, 32], strides = [1, 1]} : vector<2x128xf32> to vector<2x32xf32>
    %158 = math.tanh %156 : vector<2x32xf32>
    %159 = arith.mulf %157, %158 : vector<2x32xf32>
    %c14 = arith.constant 14 : index
    %c0_39 = arith.constant 0 : index
    %160 = vector.load %arg44[%c14, %c0_39] : memref<16x64xf32, #tpu.memory_space<vmem>>, vector<2x32xf32>
    tpu.vector_store %arg44[%c14, %c0_39], %159 {strides = array<i32>} : memref<16x64xf32, #tpu.memory_space<vmem>>, vector<2x32xf32>,
    %161 = vector.extract_strided_slice %13 {offsets = [14, 0], sizes = [2, 128], strides = [1, 1]} : vector<16x128xf32> to vector<2x128xf32>
    %162 = arith.negf %161 : vector<2x128xf32>
    %163 = math.exp %162 : vector<2x128xf32>
    %cst_40 = arith.constant 1.000000e+00 : f32
    %164 = vector.broadcast %cst_40 : f32 to vector<2x128xf32>
    %165 = arith.addf %164, %163 : vector<2x128xf32>
    %166 = arith.divf %164, %165 : vector<2x128xf32>
    %167 = math.tanh %161 : vector<2x128xf32>
    %168 = vector.extract_strided_slice %166 {offsets = [0, 0], sizes = [2, 32], strides = [1, 1]} : vector<2x128xf32> to vector<2x32xf32>
    %169 = vector.extract_strided_slice %167 {offsets = [0, 64], sizes = [2, 32], strides = [1, 1]} : vector<2x128xf32> to vector<2x32xf32>
    %170 = arith.mulf %168, %169 : vector<2x32xf32>
    %171 = vector.extract_strided_slice %166 {offsets = [0, 96], sizes = [2, 32], strides = [1, 1]} : vector<2x128xf32> to vector<2x32xf32>
    %172 = math.tanh %170 : vector<2x32xf32>
    %173 = arith.mulf %171, %172 : vector<2x32xf32>
    %c14_41 = arith.constant 14 : index
    %c32 = arith.constant 32 : index
    %174 = vector.load %arg44[%c14_41, %c32] : memref<16x64xf32, #tpu.memory_space<vmem>>, vector<2x32xf32>
    tpu.vector_store %arg44[%c14_41, %c32], %173 {strides = array<i32>} : memref<16x64xf32, #tpu.memory_space<vmem>>, vector<2x32xf32>,
    %175 = vector.extract_strided_slice %13 {offsets = [12, 0], sizes = [2, 128], strides = [1, 1]} : vector<16x128xf32> to vector<2x128xf32>
    %cst_42 = arith.constant dense<0.000000e+00> : vector<2x128xf32>
    %176 = tpu.matmul %173, %6, %cst_42 {dimension_numbers = #tpu.dot_dimension_numbers<[1], [0], [0], [1], [0, 0, 1, 1], [], []>} : vector<2x32xf32>, vector<32x128xf32>, vector<2x128xf32> -> vector<2x128xf32>
    %177 = arith.addf %175, %176 : vector<2x128xf32>
    %178 = arith.negf %177 : vector<2x128xf32>
    %179 = math.exp %178 : vector<2x128xf32>
    %cst_43 = arith.constant 1.000000e+00 : f32
    %180 = vector.broadcast %cst_43 : f32 to vector<2x128xf32>
    %181 = arith.addf %180, %179 : vector<2x128xf32>
    %182 = arith.divf %180, %181 : vector<2x128xf32>
    %183 = math.tanh %177 : vector<2x128xf32>
    %184 = vector.extract_strided_slice %182 {offsets = [0, 0], sizes = [2, 32], strides = [1, 1]} : vector<2x128xf32> to vector<2x32xf32>
    %185 = vector.extract_strided_slice %183 {offsets = [0, 64], sizes = [2, 32], strides = [1, 1]} : vector<2x128xf32> to vector<2x32xf32>
    %186 = arith.mulf %184, %185 : vector<2x32xf32>
    %187 = vector.extract_strided_slice %182 {offsets = [0, 32], sizes = [2, 32], strides = [1, 1]} : vector<2x128xf32> to vector<2x32xf32>
    %188 = arith.mulf %187, %170 : vector<2x32xf32>
    %189 = arith.addf %188, %186 : vector<2x32xf32>
    %190 = vector.extract_strided_slice %182 {offsets = [0, 96], sizes = [2, 32], strides = [1, 1]} : vector<2x128xf32> to vector<2x32xf32>
    %191 = math.tanh %189 : vector<2x32xf32>
    %192 = arith.mulf %190, %191 : vector<2x32xf32>
    %c12_44 = arith.constant 12 : index
    %c32_45 = arith.constant 32 : index
    %193 = vector.load %arg44[%c12_44, %c32_45] : memref<16x64xf32, #tpu.memory_space<vmem>>, vector<2x32xf32>
    tpu.vector_store %arg44[%c12_44, %c32_45], %192 {strides = array<i32>} : memref<16x64xf32, #tpu.memory_space<vmem>>, vector<2x32xf32>,
    %194 = vector.extract_strided_slice %13 {offsets = [10, 0], sizes = [2, 128], strides = [1, 1]} : vector<16x128xf32> to vector<2x128xf32>
    %cst_46 = arith.constant dense<0.000000e+00> : vector<2x128xf32>
    %195 = tpu.matmul %192, %6, %cst_46 {dimension_numbers = #tpu.dot_dimension_numbers<[1], [0], [0], [1], [0, 0, 1, 1], [], []>} : vector<2x32xf32>, vector<32x128xf32>, vector<2x128xf32> -> vector<2x128xf32>
    %196 = arith.addf %194, %195 : vector<2x128xf32>
    %197 = arith.negf %196 : vector<2x128xf32>
    %198 = math.exp %197 : vector<2x128xf32>
    %cst_47 = arith.constant 1.000000e+00 : f32
    %199 = vector.broadcast %cst_47 : f32 to vector<2x128xf32>
    %200 = arith.addf %199, %198 : vector<2x128xf32>
    %201 = arith.divf %199, %200 : vector<2x128xf32>
    %202 = math.tanh %196 : vector<2x128xf32>
    %203 = vector.extract_strided_slice %201 {offsets = [0, 0], sizes = [2, 32], strides = [1, 1]} : vector<2x128xf32> to vector<2x32xf32>
    %204 = vector.extract_strided_slice %202 {offsets = [0, 64], sizes = [2, 32], strides = [1, 1]} : vector<2x128xf32> to vector<2x32xf32>
    %205 = arith.mulf %203, %204 : vector<2x32xf32>
    %206 = vector.extract_strided_slice %201 {offsets = [0, 32], sizes = [2, 32], strides = [1, 1]} : vector<2x128xf32> to vector<2x32xf32>
    %207 = arith.mulf %206, %189 : vector<2x32xf32>
    %208 = arith.addf %207, %205 : vector<2x32xf32>
    %209 = vector.extract_strided_slice %201 {offsets = [0, 96], sizes = [2, 32], strides = [1, 1]} : vector<2x128xf32> to vector<2x32xf32>
    %210 = math.tanh %208 : vector<2x32xf32>
    %211 = arith.mulf %209, %210 : vector<2x32xf32>
    %c10_48 = arith.constant 10 : index
    %c32_49 = arith.constant 32 : index
    %212 = vector.load %arg44[%c10_48, %c32_49] : memref<16x64xf32, #tpu.memory_space<vmem>>, vector<2x32xf32>
    tpu.vector_store %arg44[%c10_48, %c32_49], %211 {strides = array<i32>} : memref<16x64xf32, #tpu.memory_space<vmem>>, vector<2x32xf32>,
    %213 = vector.extract_strided_slice %13 {offsets = [8, 0], sizes = [2, 128], strides = [1, 1]} : vector<16x128xf32> to vector<2x128xf32>
    %cst_50 = arith.constant dense<0.000000e+00> : vector<2x128xf32>
    %214 = tpu.matmul %211, %6, %cst_50 {dimension_numbers = #tpu.dot_dimension_numbers<[1], [0], [0], [1], [0, 0, 1, 1], [], []>} : vector<2x32xf32>, vector<32x128xf32>, vector<2x128xf32> -> vector<2x128xf32>
    %215 = arith.addf %213, %214 : vector<2x128xf32>
    %216 = arith.negf %215 : vector<2x128xf32>
    %217 = math.exp %216 : vector<2x128xf32>
    %cst_51 = arith.constant 1.000000e+00 : f32
    %218 = vector.broadcast %cst_51 : f32 to vector<2x128xf32>
    %219 = arith.addf %218, %217 : vector<2x128xf32>
    %220 = arith.divf %218, %219 : vector<2x128xf32>
    %221 = math.tanh %215 : vector<2x128xf32>
    %222 = vector.extract_strided_slice %220 {offsets = [0, 0], sizes = [2, 32], strides = [1, 1]} : vector<2x128xf32> to vector<2x32xf32>
    %223 = vector.extract_strided_slice %221 {offsets = [0, 64], sizes = [2, 32], strides = [1, 1]} : vector<2x128xf32> to vector<2x32xf32>
    %224 = arith.mulf %222, %223 : vector<2x32xf32>
    %225 = vector.extract_strided_slice %220 {offsets = [0, 32], sizes = [2, 32], strides = [1, 1]} : vector<2x128xf32> to vector<2x32xf32>
    %226 = arith.mulf %225, %208 : vector<2x32xf32>
    %227 = arith.addf %226, %224 : vector<2x32xf32>
    %228 = vector.extract_strided_slice %220 {offsets = [0, 96], sizes = [2, 32], strides = [1, 1]} : vector<2x128xf32> to vector<2x32xf32>
    %229 = math.tanh %227 : vector<2x32xf32>
    %230 = arith.mulf %228, %229 : vector<2x32xf32>
    %c8_52 = arith.constant 8 : index
    %c32_53 = arith.constant 32 : index
    %231 = vector.load %arg44[%c8_52, %c32_53] : memref<16x64xf32, #tpu.memory_space<vmem>>, vector<2x32xf32>
    tpu.vector_store %arg44[%c8_52, %c32_53], %230 {strides = array<i32>} : memref<16x64xf32, #tpu.memory_space<vmem>>, vector<2x32xf32>,
    %232 = vector.extract_strided_slice %13 {offsets = [6, 0], sizes = [2, 128], strides = [1, 1]} : vector<16x128xf32> to vector<2x128xf32>
    %cst_54 = arith.constant dense<0.000000e+00> : vector<2x128xf32>
    %233 = tpu.matmul %230, %6, %cst_54 {dimension_numbers = #tpu.dot_dimension_numbers<[1], [0], [0], [1], [0, 0, 1, 1], [], []>} : vector<2x32xf32>, vector<32x128xf32>, vector<2x128xf32> -> vector<2x128xf32>
    %234 = arith.addf %232, %233 : vector<2x128xf32>
    %235 = arith.negf %234 : vector<2x128xf32>
    %236 = math.exp %235 : vector<2x128xf32>
    %cst_55 = arith.constant 1.000000e+00 : f32
    %237 = vector.broadcast %cst_55 : f32 to vector<2x128xf32>
    %238 = arith.addf %237, %236 : vector<2x128xf32>
    %239 = arith.divf %237, %238 : vector<2x128xf32>
    %240 = math.tanh %234 : vector<2x128xf32>
    %241 = vector.extract_strided_slice %239 {offsets = [0, 0], sizes = [2, 32], strides = [1, 1]} : vector<2x128xf32> to vector<2x32xf32>
    %242 = vector.extract_strided_slice %240 {offsets = [0, 64], sizes = [2, 32], strides = [1, 1]} : vector<2x128xf32> to vector<2x32xf32>
    %243 = arith.mulf %241, %242 : vector<2x32xf32>
    %244 = vector.extract_strided_slice %239 {offsets = [0, 32], sizes = [2, 32], strides = [1, 1]} : vector<2x128xf32> to vector<2x32xf32>
    %245 = arith.mulf %244, %227 : vector<2x32xf32>
    %246 = arith.addf %245, %243 : vector<2x32xf32>
    %247 = vector.extract_strided_slice %239 {offsets = [0, 96], sizes = [2, 32], strides = [1, 1]} : vector<2x128xf32> to vector<2x32xf32>
    %248 = math.tanh %246 : vector<2x32xf32>
    %249 = arith.mulf %247, %248 : vector<2x32xf32>
    %c6_56 = arith.constant 6 : index
    %c32_57 = arith.constant 32 : index
    %250 = vector.load %arg44[%c6_56, %c32_57] : memref<16x64xf32, #tpu.memory_space<vmem>>, vector<2x32xf32>
    tpu.vector_store %arg44[%c6_56, %c32_57], %249 {strides = array<i32>} : memref<16x64xf32, #tpu.memory_space<vmem>>, vector<2x32xf32>,
    %251 = vector.extract_strided_slice %13 {offsets = [4, 0], sizes = [2, 128], strides = [1, 1]} : vector<16x128xf32> to vector<2x128xf32>
    %cst_58 = arith.constant dense<0.000000e+00> : vector<2x128xf32>
    %252 = tpu.matmul %249, %6, %cst_58 {dimension_numbers = #tpu.dot_dimension_numbers<[1], [0], [0], [1], [0, 0, 1, 1], [], []>} : vector<2x32xf32>, vector<32x128xf32>, vector<2x128xf32> -> vector<2x128xf32>
    %253 = arith.addf %251, %252 : vector<2x128xf32>
    %254 = arith.negf %253 : vector<2x128xf32>
    %255 = math.exp %254 : vector<2x128xf32>
    %cst_59 = arith.constant 1.000000e+00 : f32
    %256 = vector.broadcast %cst_59 : f32 to vector<2x128xf32>
    %257 = arith.addf %256, %255 : vector<2x128xf32>
    %258 = arith.divf %256, %257 : vector<2x128xf32>
    %259 = math.tanh %253 : vector<2x128xf32>
    %260 = vector.extract_strided_slice %258 {offsets = [0, 0], sizes = [2, 32], strides = [1, 1]} : vector<2x128xf32> to vector<2x32xf32>
    %261 = vector.extract_strided_slice %259 {offsets = [0, 64], sizes = [2, 32], strides = [1, 1]} : vector<2x128xf32> to vector<2x32xf32>
    %262 = arith.mulf %260, %261 : vector<2x32xf32>
    %263 = vector.extract_strided_slice %258 {offsets = [0, 32], sizes = [2, 32], strides = [1, 1]} : vector<2x128xf32> to vector<2x32xf32>
    %264 = arith.mulf %263, %246 : vector<2x32xf32>
    %265 = arith.addf %264, %262 : vector<2x32xf32>
    %266 = vector.extract_strided_slice %258 {offsets = [0, 96], sizes = [2, 32], strides = [1, 1]} : vector<2x128xf32> to vector<2x32xf32>
    %267 = math.tanh %265 : vector<2x32xf32>
    %268 = arith.mulf %266, %267 : vector<2x32xf32>
    %c4_60 = arith.constant 4 : index
    %c32_61 = arith.constant 32 : index
    %269 = vector.load %arg44[%c4_60, %c32_61] : memref<16x64xf32, #tpu.memory_space<vmem>>, vector<2x32xf32>
    tpu.vector_store %arg44[%c4_60, %c32_61], %268 {strides = array<i32>} : memref<16x64xf32, #tpu.memory_space<vmem>>, vector<2x32xf32>,
    %270 = vector.extract_strided_slice %13 {offsets = [2, 0], sizes = [2, 128], strides = [1, 1]} : vector<16x128xf32> to vector<2x128xf32>
    %cst_62 = arith.constant dense<0.000000e+00> : vector<2x128xf32>
    %271 = tpu.matmul %268, %6, %cst_62 {dimension_numbers = #tpu.dot_dimension_numbers<[1], [0], [0], [1], [0, 0, 1, 1], [], []>} : vector<2x32xf32>, vector<32x128xf32>, vector<2x128xf32> -> vector<2x128xf32>
    %272 = arith.addf %270, %271 : vector<2x128xf32>
    %273 = arith.negf %272 : vector<2x128xf32>
    %274 = math.exp %273 : vector<2x128xf32>
    %cst_63 = arith.constant 1.000000e+00 : f32
    %275 = vector.broadcast %cst_63 : f32 to vector<2x128xf32>
    %276 = arith.addf %275, %274 : vector<2x128xf32>
    %277 = arith.divf %275, %276 : vector<2x128xf32>
    %278 = math.tanh %272 : vector<2x128xf32>
    %279 = vector.extract_strided_slice %277 {offsets = [0, 0], sizes = [2, 32], strides = [1, 1]} : vector<2x128xf32> to vector<2x32xf32>
    %280 = vector.extract_strided_slice %278 {offsets = [0, 64], sizes = [2, 32], strides = [1, 1]} : vector<2x128xf32> to vector<2x32xf32>
    %281 = arith.mulf %279, %280 : vector<2x32xf32>
    %282 = vector.extract_strided_slice %277 {offsets = [0, 32], sizes = [2, 32], strides = [1, 1]} : vector<2x128xf32> to vector<2x32xf32>
    %283 = arith.mulf %282, %265 : vector<2x32xf32>
    %284 = arith.addf %283, %281 : vector<2x32xf32>
    %285 = vector.extract_strided_slice %277 {offsets = [0, 96], sizes = [2, 32], strides = [1, 1]} : vector<2x128xf32> to vector<2x32xf32>
    %286 = math.tanh %284 : vector<2x32xf32>
    %287 = arith.mulf %285, %286 : vector<2x32xf32>
    %c2_64 = arith.constant 2 : index
    %c32_65 = arith.constant 32 : index
    %288 = vector.load %arg44[%c2_64, %c32_65] : memref<16x64xf32, #tpu.memory_space<vmem>>, vector<2x32xf32>
    tpu.vector_store %arg44[%c2_64, %c32_65], %287 {strides = array<i32>} : memref<16x64xf32, #tpu.memory_space<vmem>>, vector<2x32xf32>,
    %289 = vector.extract_strided_slice %13 {offsets = [0, 0], sizes = [2, 128], strides = [1, 1]} : vector<16x128xf32> to vector<2x128xf32>
    %cst_66 = arith.constant dense<0.000000e+00> : vector<2x128xf32>
    %290 = tpu.matmul %287, %6, %cst_66 {dimension_numbers = #tpu.dot_dimension_numbers<[1], [0], [0], [1], [0, 0, 1, 1], [], []>} : vector<2x32xf32>, vector<32x128xf32>, vector<2x128xf32> -> vector<2x128xf32>
    %291 = arith.addf %289, %290 : vector<2x128xf32>
    %292 = arith.negf %291 : vector<2x128xf32>
    %293 = math.exp %292 : vector<2x128xf32>
    %cst_67 = arith.constant 1.000000e+00 : f32
    %294 = vector.broadcast %cst_67 : f32 to vector<2x128xf32>
    %295 = arith.addf %294, %293 : vector<2x128xf32>
    %296 = arith.divf %294, %295 : vector<2x128xf32>
    %297 = math.tanh %291 : vector<2x128xf32>
    %298 = vector.extract_strided_slice %296 {offsets = [0, 0], sizes = [2, 32], strides = [1, 1]} : vector<2x128xf32> to vector<2x32xf32>
    %299 = vector.extract_strided_slice %297 {offsets = [0, 64], sizes = [2, 32], strides = [1, 1]} : vector<2x128xf32> to vector<2x32xf32>
    %300 = arith.mulf %298, %299 : vector<2x32xf32>
    %301 = vector.extract_strided_slice %296 {offsets = [0, 32], sizes = [2, 32], strides = [1, 1]} : vector<2x128xf32> to vector<2x32xf32>
    %302 = arith.mulf %301, %284 : vector<2x32xf32>
    %303 = arith.addf %302, %300 : vector<2x32xf32>
    %304 = vector.extract_strided_slice %296 {offsets = [0, 96], sizes = [2, 32], strides = [1, 1]} : vector<2x128xf32> to vector<2x32xf32>
    %305 = math.tanh %303 : vector<2x32xf32>
    %306 = arith.mulf %304, %305 : vector<2x32xf32>
    %c0_68 = arith.constant 0 : index
    %c32_69 = arith.constant 32 : index
    %307 = vector.load %arg44[%c0_68, %c32_69] : memref<16x64xf32, #tpu.memory_space<vmem>>, vector<2x32xf32>
    tpu.vector_store %arg44[%c0_68, %c32_69], %306 {strides = array<i32>} : memref<16x64xf32, #tpu.memory_space<vmem>>, vector<2x32xf32>,
    %c0_70 = arith.constant 0 : index
    %c0_71 = arith.constant 0 : index
    %308 = vector.load %arg44[%c0_70, %c0_71] : memref<16x64xf32, #tpu.memory_space<vmem>>, vector<16x64xf32>
    %c0_72 = arith.constant 0 : index
    %c0_73 = arith.constant 0 : index
    %309 = vector.load %arg8[%c0_72, %c0_73] : memref<64x128xf32, #tpu.memory_space<vmem>>, vector<64x128xf32>
    %c0_74 = arith.constant 0 : index
    %c0_75 = arith.constant 0 : index
    %310 = vector.load %arg9[%c0_74, %c0_75] : memref<32x128xf32, #tpu.memory_space<vmem>>, vector<32x128xf32>
    %c0_76 = arith.constant 0 : index
    %c0_77 = arith.constant 0 : index
    %311 = vector.load %arg10[%c0_76, %c0_77] : memref<1x128xf32, #tpu.memory_space<vmem>>, vector<1x128xf32>
    %cst_78 = arith.constant dense<0.000000e+00> : vector<16x128xf32>
    %312 = tpu.matmul %308, %309, %cst_78 {dimension_numbers = #tpu.dot_dimension_numbers<[1], [0], [0], [1], [0, 0, 1, 1], [], []>} : vector<16x64xf32>, vector<64x128xf32>, vector<16x128xf32> -> vector<16x128xf32>
    %313 = vector.broadcast %311 : vector<1x128xf32> to vector<16x128xf32>
    %314 = arith.addf %312, %313 : vector<16x128xf32>
    %315 = vector.extract_strided_slice %314 {offsets = [0, 0], sizes = [2, 128], strides = [1, 1]} : vector<16x128xf32> to vector<2x128xf32>
    %316 = arith.negf %315 : vector<2x128xf32>
    %317 = math.exp %316 : vector<2x128xf32>
    %cst_79 = arith.constant 1.000000e+00 : f32
    %318 = vector.broadcast %cst_79 : f32 to vector<2x128xf32>
    %319 = arith.addf %318, %317 : vector<2x128xf32>
    %320 = arith.divf %318, %319 : vector<2x128xf32>
    %321 = math.tanh %315 : vector<2x128xf32>
    %322 = vector.extract_strided_slice %320 {offsets = [0, 0], sizes = [2, 32], strides = [1, 1]} : vector<2x128xf32> to vector<2x32xf32>
    %323 = vector.extract_strided_slice %321 {offsets = [0, 64], sizes = [2, 32], strides = [1, 1]} : vector<2x128xf32> to vector<2x32xf32>
    %324 = arith.mulf %322, %323 : vector<2x32xf32>
    %325 = vector.extract_strided_slice %320 {offsets = [0, 96], sizes = [2, 32], strides = [1, 1]} : vector<2x128xf32> to vector<2x32xf32>
    %326 = math.tanh %324 : vector<2x32xf32>
    %327 = arith.mulf %325, %326 : vector<2x32xf32>
    %c0_80 = arith.constant 0 : index
    %c0_81 = arith.constant 0 : index
    %328 = vector.load %arg45[%c0_80, %c0_81] : memref<16x32xf32, #tpu.memory_space<vmem>>, vector<2x32xf32>
    tpu.vector_store %arg45[%c0_80, %c0_81], %327 {strides = array<i32>} : memref<16x32xf32, #tpu.memory_space<vmem>>, vector<2x32xf32>,
    %329 = vector.extract_strided_slice %314 {offsets = [2, 0], sizes = [2, 128], strides = [1, 1]} : vector<16x128xf32> to vector<2x128xf32>
    %cst_82 = arith.constant dense<0.000000e+00> : vector<2x128xf32>
    %330 = tpu.matmul %327, %310, %cst_82 {dimension_numbers = #tpu.dot_dimension_numbers<[1], [0], [0], [1], [0, 0, 1, 1], [], []>} : vector<2x32xf32>, vector<32x128xf32>, vector<2x128xf32> -> vector<2x128xf32>
    %331 = arith.addf %329, %330 : vector<2x128xf32>
    %332 = arith.negf %331 : vector<2x128xf32>
    %333 = math.exp %332 : vector<2x128xf32>
    %cst_83 = arith.constant 1.000000e+00 : f32
    %334 = vector.broadcast %cst_83 : f32 to vector<2x128xf32>
    %335 = arith.addf %334, %333 : vector<2x128xf32>
    %336 = arith.divf %334, %335 : vector<2x128xf32>
    %337 = math.tanh %331 : vector<2x128xf32>
    %338 = vector.extract_strided_slice %336 {offsets = [0, 0], sizes = [2, 32], strides = [1, 1]} : vector<2x128xf32> to vector<2x32xf32>
    %339 = vector.extract_strided_slice %337 {offsets = [0, 64], sizes = [2, 32], strides = [1, 1]} : vector<2x128xf32> to vector<2x32xf32>
    %340 = arith.mulf %338, %339 : vector<2x32xf32>
    %341 = vector.extract_strided_slice %336 {offsets = [0, 32], sizes = [2, 32], strides = [1, 1]} : vector<2x128xf32> to vector<2x32xf32>
    %342 = arith.mulf %341, %324 : vector<2x32xf32>
    %343 = arith.addf %342, %340 : vector<2x32xf32>
    %344 = vector.extract_strided_slice %336 {offsets = [0, 96], sizes = [2, 32], strides = [1, 1]} : vector<2x128xf32> to vector<2x32xf32>
    %345 = math.tanh %343 : vector<2x32xf32>
    %346 = arith.mulf %344, %345 : vector<2x32xf32>
    %c2_84 = arith.constant 2 : index
    %c0_85 = arith.constant 0 : index
    %347 = vector.load %arg45[%c2_84, %c0_85] : memref<16x32xf32, #tpu.memory_space<vmem>>, vector<2x32xf32>
    tpu.vector_store %arg45[%c2_84, %c0_85], %346 {strides = array<i32>} : memref<16x32xf32, #tpu.memory_space<vmem>>, vector<2x32xf32>,
    %348 = vector.extract_strided_slice %314 {offsets = [4, 0], sizes = [2, 128], strides = [1, 1]} : vector<16x128xf32> to vector<2x128xf32>
    %cst_86 = arith.constant dense<0.000000e+00> : vector<2x128xf32>
    %349 = tpu.matmul %346, %310, %cst_86 {dimension_numbers = #tpu.dot_dimension_numbers<[1], [0], [0], [1], [0, 0, 1, 1], [], []>} : vector<2x32xf32>, vector<32x128xf32>, vector<2x128xf32> -> vector<2x128xf32>
    %350 = arith.addf %348, %349 : vector<2x128xf32>
    %351 = arith.negf %350 : vector<2x128xf32>
    %352 = math.exp %351 : vector<2x128xf32>
    %cst_87 = arith.constant 1.000000e+00 : f32
    %353 = vector.broadcast %cst_87 : f32 to vector<2x128xf32>
    %354 = arith.addf %353, %352 : vector<2x128xf32>
    %355 = arith.divf %353, %354 : vector<2x128xf32>
    %356 = math.tanh %350 : vector<2x128xf32>
    %357 = vector.extract_strided_slice %355 {offsets = [0, 0], sizes = [2, 32], strides = [1, 1]} : vector<2x128xf32> to vector<2x32xf32>
    %358 = vector.extract_strided_slice %356 {offsets = [0, 64], sizes = [2, 32], strides = [1, 1]} : vector<2x128xf32> to vector<2x32xf32>
    %359 = arith.mulf %357, %358 : vector<2x32xf32>
    %360 = vector.extract_strided_slice %355 {offsets = [0, 32], sizes = [2, 32], strides = [1, 1]} : vector<2x128xf32> to vector<2x32xf32>
    %361 = arith.mulf %360, %343 : vector<2x32xf32>
    %362 = arith.addf %361, %359 : vector<2x32xf32>
    %363 = vector.extract_strided_slice %355 {offsets = [0, 96], sizes = [2, 32], strides = [1, 1]} : vector<2x128xf32> to vector<2x32xf32>
    %364 = math.tanh %362 : vector<2x32xf32>
    %365 = arith.mulf %363, %364 : vector<2x32xf32>
    %c4_88 = arith.constant 4 : index
    %c0_89 = arith.constant 0 : index
    %366 = vector.load %arg45[%c4_88, %c0_89] : memref<16x32xf32, #tpu.memory_space<vmem>>, vector<2x32xf32>
    tpu.vector_store %arg45[%c4_88, %c0_89], %365 {strides = array<i32>} : memref<16x32xf32, #tpu.memory_space<vmem>>, vector<2x32xf32>,
    %367 = vector.extract_strided_slice %314 {offsets = [6, 0], sizes = [2, 128], strides = [1, 1]} : vector<16x128xf32> to vector<2x128xf32>
    %cst_90 = arith.constant dense<0.000000e+00> : vector<2x128xf32>
    %368 = tpu.matmul %365, %310, %cst_90 {dimension_numbers = #tpu.dot_dimension_numbers<[1], [0], [0], [1], [0, 0, 1, 1], [], []>} : vector<2x32xf32>, vector<32x128xf32>, vector<2x128xf32> -> vector<2x128xf32>
    %369 = arith.addf %367, %368 : vector<2x128xf32>
    %370 = arith.negf %369 : vector<2x128xf32>
    %371 = math.exp %370 : vector<2x128xf32>
    %cst_91 = arith.constant 1.000000e+00 : f32
    %372 = vector.broadcast %cst_91 : f32 to vector<2x128xf32>
    %373 = arith.addf %372, %371 : vector<2x128xf32>
    %374 = arith.divf %372, %373 : vector<2x128xf32>
    %375 = math.tanh %369 : vector<2x128xf32>
    %376 = vector.extract_strided_slice %374 {offsets = [0, 0], sizes = [2, 32], strides = [1, 1]} : vector<2x128xf32> to vector<2x32xf32>
    %377 = vector.extract_strided_slice %375 {offsets = [0, 64], sizes = [2, 32], strides = [1, 1]} : vector<2x128xf32> to vector<2x32xf32>
    %378 = arith.mulf %376, %377 : vector<2x32xf32>
    %379 = vector.extract_strided_slice %374 {offsets = [0, 32], sizes = [2, 32], strides = [1, 1]} : vector<2x128xf32> to vector<2x32xf32>
    %380 = arith.mulf %379, %362 : vector<2x32xf32>
    %381 = arith.addf %380, %378 : vector<2x32xf32>
    %382 = vector.extract_strided_slice %374 {offsets = [0, 96], sizes = [2, 32], strides = [1, 1]} : vector<2x128xf32> to vector<2x32xf32>
    %383 = math.tanh %381 : vector<2x32xf32>
    %384 = arith.mulf %382, %383 : vector<2x32xf32>
    %c6_92 = arith.constant 6 : index
    %c0_93 = arith.constant 0 : index
    %385 = vector.load %arg45[%c6_92, %c0_93] : memref<16x32xf32, #tpu.memory_space<vmem>>, vector<2x32xf32>
    tpu.vector_store %arg45[%c6_92, %c0_93], %384 {strides = array<i32>} : memref<16x32xf32, #tpu.memory_space<vmem>>, vector<2x32xf32>,
    %386 = vector.extract_strided_slice %314 {offsets = [8, 0], sizes = [2, 128], strides = [1, 1]} : vector<16x128xf32> to vector<2x128xf32>
    %cst_94 = arith.constant dense<0.000000e+00> : vector<2x128xf32>
    %387 = tpu.matmul %384, %310, %cst_94 {dimension_numbers = #tpu.dot_dimension_numbers<[1], [0], [0], [1], [0, 0, 1, 1], [], []>} : vector<2x32xf32>, vector<32x128xf32>, vector<2x128xf32> -> vector<2x128xf32>
    %388 = arith.addf %386, %387 : vector<2x128xf32>
    %389 = arith.negf %388 : vector<2x128xf32>
    %390 = math.exp %389 : vector<2x128xf32>
    %cst_95 = arith.constant 1.000000e+00 : f32
    %391 = vector.broadcast %cst_95 : f32 to vector<2x128xf32>
    %392 = arith.addf %391, %390 : vector<2x128xf32>
    %393 = arith.divf %391, %392 : vector<2x128xf32>
    %394 = math.tanh %388 : vector<2x128xf32>
    %395 = vector.extract_strided_slice %393 {offsets = [0, 0], sizes = [2, 32], strides = [1, 1]} : vector<2x128xf32> to vector<2x32xf32>
    %396 = vector.extract_strided_slice %394 {offsets = [0, 64], sizes = [2, 32], strides = [1, 1]} : vector<2x128xf32> to vector<2x32xf32>
    %397 = arith.mulf %395, %396 : vector<2x32xf32>
    %398 = vector.extract_strided_slice %393 {offsets = [0, 32], sizes = [2, 32], strides = [1, 1]} : vector<2x128xf32> to vector<2x32xf32>
    %399 = arith.mulf %398, %381 : vector<2x32xf32>
    %400 = arith.addf %399, %397 : vector<2x32xf32>
    %401 = vector.extract_strided_slice %393 {offsets = [0, 96], sizes = [2, 32], strides = [1, 1]} : vector<2x128xf32> to vector<2x32xf32>
    %402 = math.tanh %400 : vector<2x32xf32>
    %403 = arith.mulf %401, %402 : vector<2x32xf32>
    %c8_96 = arith.constant 8 : index
    %c0_97 = arith.constant 0 : index
    %404 = vector.load %arg45[%c8_96, %c0_97] : memref<16x32xf32, #tpu.memory_space<vmem>>, vector<2x32xf32>
    tpu.vector_store %arg45[%c8_96, %c0_97], %403 {strides = array<i32>} : memref<16x32xf32, #tpu.memory_space<vmem>>, vector<2x32xf32>,
    %405 = vector.extract_strided_slice %314 {offsets = [10, 0], sizes = [2, 128], strides = [1, 1]} : vector<16x128xf32> to vector<2x128xf32>
    %cst_98 = arith.constant dense<0.000000e+00> : vector<2x128xf32>
    %406 = tpu.matmul %403, %310, %cst_98 {dimension_numbers = #tpu.dot_dimension_numbers<[1], [0], [0], [1], [0, 0, 1, 1], [], []>} : vector<2x32xf32>, vector<32x128xf32>, vector<2x128xf32> -> vector<2x128xf32>
    %407 = arith.addf %405, %406 : vector<2x128xf32>
    %408 = arith.negf %407 : vector<2x128xf32>
    %409 = math.exp %408 : vector<2x128xf32>
    %cst_99 = arith.constant 1.000000e+00 : f32
    %410 = vector.broadcast %cst_99 : f32 to vector<2x128xf32>
    %411 = arith.addf %410, %409 : vector<2x128xf32>
    %412 = arith.divf %410, %411 : vector<2x128xf32>
    %413 = math.tanh %407 : vector<2x128xf32>
    %414 = vector.extract_strided_slice %412 {offsets = [0, 0], sizes = [2, 32], strides = [1, 1]} : vector<2x128xf32> to vector<2x32xf32>
    %415 = vector.extract_strided_slice %413 {offsets = [0, 64], sizes = [2, 32], strides = [1, 1]} : vector<2x128xf32> to vector<2x32xf32>
    %416 = arith.mulf %414, %415 : vector<2x32xf32>
    %417 = vector.extract_strided_slice %412 {offsets = [0, 32], sizes = [2, 32], strides = [1, 1]} : vector<2x128xf32> to vector<2x32xf32>
    %418 = arith.mulf %417, %400 : vector<2x32xf32>
    %419 = arith.addf %418, %416 : vector<2x32xf32>
    %420 = vector.extract_strided_slice %412 {offsets = [0, 96], sizes = [2, 32], strides = [1, 1]} : vector<2x128xf32> to vector<2x32xf32>
    %421 = math.tanh %419 : vector<2x32xf32>
    %422 = arith.mulf %420, %421 : vector<2x32xf32>
    %c10_100 = arith.constant 10 : index
    %c0_101 = arith.constant 0 : index
    %423 = vector.load %arg45[%c10_100, %c0_101] : memref<16x32xf32, #tpu.memory_space<vmem>>, vector<2x32xf32>
    tpu.vector_store %arg45[%c10_100, %c0_101], %422 {strides = array<i32>} : memref<16x32xf32, #tpu.memory_space<vmem>>, vector<2x32xf32>,
    %424 = vector.extract_strided_slice %314 {offsets = [12, 0], sizes = [2, 128], strides = [1, 1]} : vector<16x128xf32> to vector<2x128xf32>
    %cst_102 = arith.constant dense<0.000000e+00> : vector<2x128xf32>
    %425 = tpu.matmul %422, %310, %cst_102 {dimension_numbers = #tpu.dot_dimension_numbers<[1], [0], [0], [1], [0, 0, 1, 1], [], []>} : vector<2x32xf32>, vector<32x128xf32>, vector<2x128xf32> -> vector<2x128xf32>
    %426 = arith.addf %424, %425 : vector<2x128xf32>
    %427 = arith.negf %426 : vector<2x128xf32>
    %428 = math.exp %427 : vector<2x128xf32>
    %cst_103 = arith.constant 1.000000e+00 : f32
    %429 = vector.broadcast %cst_103 : f32 to vector<2x128xf32>
    %430 = arith.addf %429, %428 : vector<2x128xf32>
    %431 = arith.divf %429, %430 : vector<2x128xf32>
    %432 = math.tanh %426 : vector<2x128xf32>
    %433 = vector.extract_strided_slice %431 {offsets = [0, 0], sizes = [2, 32], strides = [1, 1]} : vector<2x128xf32> to vector<2x32xf32>
    %434 = vector.extract_strided_slice %432 {offsets = [0, 64], sizes = [2, 32], strides = [1, 1]} : vector<2x128xf32> to vector<2x32xf32>
    %435 = arith.mulf %433, %434 : vector<2x32xf32>
    %436 = vector.extract_strided_slice %431 {offsets = [0, 32], sizes = [2, 32], strides = [1, 1]} : vector<2x128xf32> to vector<2x32xf32>
    %437 = arith.mulf %436, %419 : vector<2x32xf32>
    %438 = arith.addf %437, %435 : vector<2x32xf32>
    %439 = vector.extract_strided_slice %431 {offsets = [0, 96], sizes = [2, 32], strides = [1, 1]} : vector<2x128xf32> to vector<2x32xf32>
    %440 = math.tanh %438 : vector<2x32xf32>
    %441 = arith.mulf %439, %440 : vector<2x32xf32>
    %c12_104 = arith.constant 12 : index
    %c0_105 = arith.constant 0 : index
    %442 = vector.load %arg45[%c12_104, %c0_105] : memref<16x32xf32, #tpu.memory_space<vmem>>, vector<2x32xf32>
    tpu.vector_store %arg45[%c12_104, %c0_105], %441 {strides = array<i32>} : memref<16x32xf32, #tpu.memory_space<vmem>>, vector<2x32xf32>,
    %443 = vector.extract_strided_slice %314 {offsets = [14, 0], sizes = [2, 128], strides = [1, 1]} : vector<16x128xf32> to vector<2x128xf32>
    %cst_106 = arith.constant dense<0.000000e+00> : vector<2x128xf32>
    %444 = tpu.matmul %441, %310, %cst_106 {dimension_numbers = #tpu.dot_dimension_numbers<[1], [0], [0], [1], [0, 0, 1, 1], [], []>} : vector<2x32xf32>, vector<32x128xf32>, vector<2x128xf32> -> vector<2x128xf32>
    %445 = arith.addf %443, %444 : vector<2x128xf32>
    %446 = arith.negf %445 : vector<2x128xf32>
    %447 = math.exp %446 : vector<2x128xf32>
    %cst_107 = arith.constant 1.000000e+00 : f32
    %448 = vector.broadcast %cst_107 : f32 to vector<2x128xf32>
    %449 = arith.addf %448, %447 : vector<2x128xf32>
    %450 = arith.divf %448, %449 : vector<2x128xf32>
    %451 = math.tanh %445 : vector<2x128xf32>
    %452 = vector.extract_strided_slice %450 {offsets = [0, 0], sizes = [2, 32], strides = [1, 1]} : vector<2x128xf32> to vector<2x32xf32>
    %453 = vector.extract_strided_slice %451 {offsets = [0, 64], sizes = [2, 32], strides = [1, 1]} : vector<2x128xf32> to vector<2x32xf32>
    %454 = arith.mulf %452, %453 : vector<2x32xf32>
    %455 = vector.extract_strided_slice %450 {offsets = [0, 32], sizes = [2, 32], strides = [1, 1]} : vector<2x128xf32> to vector<2x32xf32>
    %456 = arith.mulf %455, %438 : vector<2x32xf32>
    %457 = arith.addf %456, %454 : vector<2x32xf32>
    %458 = vector.extract_strided_slice %450 {offsets = [0, 96], sizes = [2, 32], strides = [1, 1]} : vector<2x128xf32> to vector<2x32xf32>
    %459 = math.tanh %457 : vector<2x32xf32>
    %460 = arith.mulf %458, %459 : vector<2x32xf32>
    %c14_108 = arith.constant 14 : index
    %c0_109 = arith.constant 0 : index
    %461 = vector.load %arg45[%c14_108, %c0_109] : memref<16x32xf32, #tpu.memory_space<vmem>>, vector<2x32xf32>
    tpu.vector_store %arg45[%c14_108, %c0_109], %460 {strides = array<i32>} : memref<16x32xf32, #tpu.memory_space<vmem>>, vector<2x32xf32>,
    %c0_110 = arith.constant 0 : index
    %c0_111 = arith.constant 0 : index
    %462 = vector.load %arg45[%c0_110, %c0_111] : memref<16x32xf32, #tpu.memory_space<vmem>>, vector<16x32xf32>
    %c0_112 = arith.constant 0 : index
    %c0_113 = arith.constant 0 : index
    %463 = vector.load %arg11[%c0_112, %c0_113] : memref<32x16xf32, #tpu.memory_space<vmem>>, vector<32x16xf32>
    %cst_114 = arith.constant dense<0.000000e+00> : vector<16x16xf32>
    %464 = tpu.matmul %462, %463, %cst_114 {dimension_numbers = #tpu.dot_dimension_numbers<[1], [0], [0], [1], [0, 0, 1, 1], [], []>} : vector<16x32xf32>, vector<32x16xf32>, vector<16x16xf32> -> vector<16x16xf32>
    %c0_115 = arith.constant 0 : index
    %c0_116 = arith.constant 0 : index
    %465 = vector.load %arg12[%c0_115, %c0_116] : memref<1x16xf32, #tpu.memory_space<vmem>>, vector<1x16xf32>
    %466 = vector.broadcast %465 : vector<1x16xf32> to vector<16x16xf32>
    %467 = arith.addf %464, %466 : vector<16x16xf32>
    %cst_117 = arith.constant 0.000000e+00 : f32
    %468 = vector.broadcast %cst_117 : f32 to vector<16x16xf32>
    %469 = arith.maximumf %467, %468 : vector<16x16xf32>
    %c0_118 = arith.constant 0 : index
    %c0_119 = arith.constant 0 : index
    %470 = vector.load %arg13[%c0_118, %c0_119] : memref<16x8xf32, #tpu.memory_space<vmem>>, vector<16x8xf32>
    %cst_120 = arith.constant dense<0.000000e+00> : vector<16x8xf32>
    %471 = tpu.matmul %469, %470, %cst_120 {dimension_numbers = #tpu.dot_dimension_numbers<[1], [0], [0], [1], [0, 0, 1, 1], [], []>} : vector<16x16xf32>, vector<16x8xf32>, vector<16x8xf32> -> vector<16x8xf32>
    %c0_121 = arith.constant 0 : index
    %c0_122 = arith.constant 0 : index
    %472 = vector.load %arg14[%c0_121, %c0_122] : memref<1x8xf32, #tpu.memory_space<vmem>>, vector<1x8xf32>
    %473 = vector.broadcast %472 : vector<1x8xf32> to vector<16x8xf32>
    %474 = arith.addf %471, %473 : vector<16x8xf32>
    %cst_123 = arith.constant 0.000000e+00 : f32
    %475 = vector.broadcast %cst_123 : f32 to vector<16x8xf32>
    %476 = arith.maximumf %474, %475 : vector<16x8xf32>
    %c0_124 = arith.constant 0 : index
    %c0_125 = arith.constant 0 : index
    %477 = vector.load %arg15[%c0_124, %c0_125] : memref<8x16xf32, #tpu.memory_space<vmem>>, vector<8x16xf32>
    %c0_126 = arith.constant 0 : index
    %c0_127 = arith.constant 0 : index
    %478 = vector.load %arg16[%c0_126, %c0_127] : memref<4x16xf32, #tpu.memory_space<vmem>>, vector<4x16xf32>
    %c0_128 = arith.constant 0 : index
    %c0_129 = arith.constant 0 : index
    %479 = vector.load %arg17[%c0_128, %c0_129] : memref<1x16xf32, #tpu.memory_space<vmem>>, vector<1x16xf32>
    %c0_130 = arith.constant 0 : index
    %c0_131 = arith.constant 0 : index
    %480 = vector.load %arg18[%c0_130, %c0_131] : memref<8x16xf32, #tpu.memory_space<vmem>>, vector<8x16xf32>
    %c0_132 = arith.constant 0 : index
    %c0_133 = arith.constant 0 : index
    %481 = vector.load %arg19[%c0_132, %c0_133] : memref<4x16xf32, #tpu.memory_space<vmem>>, vector<4x16xf32>
    %c0_134 = arith.constant 0 : index
    %c0_135 = arith.constant 0 : index
    %482 = vector.load %arg20[%c0_134, %c0_135] : memref<1x16xf32, #tpu.memory_space<vmem>>, vector<1x16xf32>
    %cst_136 = arith.constant dense<0.000000e+00> : vector<16x16xf32>
    %483 = tpu.matmul %476, %477, %cst_136 {dimension_numbers = #tpu.dot_dimension_numbers<[1], [0], [0], [1], [0, 0, 1, 1], [], []>} : vector<16x8xf32>, vector<8x16xf32>, vector<16x16xf32> -> vector<16x16xf32>
    %484 = vector.broadcast %479 : vector<1x16xf32> to vector<16x16xf32>
    %485 = arith.addf %483, %484 : vector<16x16xf32>
    %cst_137 = arith.constant dense<0.000000e+00> : vector<16x16xf32>
    %486 = tpu.matmul %476, %480, %cst_137 {dimension_numbers = #tpu.dot_dimension_numbers<[1], [0], [0], [1], [0, 0, 1, 1], [], []>} : vector<16x8xf32>, vector<8x16xf32>, vector<16x16xf32> -> vector<16x16xf32>
    %487 = vector.broadcast %482 : vector<1x16xf32> to vector<16x16xf32>
    %488 = arith.addf %486, %487 : vector<16x16xf32>
    %489 = vector.extract_strided_slice %485 {offsets = [0, 0], sizes = [2, 16], strides = [1, 1]} : vector<16x16xf32> to vector<2x16xf32>
    %490 = arith.negf %489 : vector<2x16xf32>
    %491 = math.exp %490 : vector<2x16xf32>
    %cst_138 = arith.constant 1.000000e+00 : f32
    %492 = vector.broadcast %cst_138 : f32 to vector<2x16xf32>
    %493 = arith.addf %492, %491 : vector<2x16xf32>
    %494 = arith.divf %492, %493 : vector<2x16xf32>
    %495 = math.tanh %489 : vector<2x16xf32>
    %496 = vector.extract_strided_slice %494 {offsets = [0, 0], sizes = [2, 4], strides = [1, 1]} : vector<2x16xf32> to vector<2x4xf32>
    %497 = vector.extract_strided_slice %495 {offsets = [0, 8], sizes = [2, 4], strides = [1, 1]} : vector<2x16xf32> to vector<2x4xf32>
    %498 = arith.mulf %496, %497 : vector<2x4xf32>
    %499 = vector.extract_strided_slice %494 {offsets = [0, 12], sizes = [2, 4], strides = [1, 1]} : vector<2x16xf32> to vector<2x4xf32>
    %500 = math.tanh %498 : vector<2x4xf32>
    %501 = arith.mulf %499, %500 : vector<2x4xf32>
    %c0_139 = arith.constant 0 : index
    %c0_140 = arith.constant 0 : index
    %502 = vector.load %arg46[%c0_139, %c0_140] : memref<16x8xf32, #tpu.memory_space<vmem>>, vector<2x4xf32>
    tpu.vector_store %arg46[%c0_139, %c0_140], %501 {strides = array<i32>} : memref<16x8xf32, #tpu.memory_space<vmem>>, vector<2x4xf32>,
    %503 = vector.extract_strided_slice %485 {offsets = [2, 0], sizes = [2, 16], strides = [1, 1]} : vector<16x16xf32> to vector<2x16xf32>
    %cst_141 = arith.constant dense<0.000000e+00> : vector<2x16xf32>
    %504 = tpu.matmul %501, %478, %cst_141 {dimension_numbers = #tpu.dot_dimension_numbers<[1], [0], [0], [1], [0, 0, 1, 1], [], []>} : vector<2x4xf32>, vector<4x16xf32>, vector<2x16xf32> -> vector<2x16xf32>
    %505 = arith.addf %503, %504 : vector<2x16xf32>
    %506 = arith.negf %505 : vector<2x16xf32>
    %507 = math.exp %506 : vector<2x16xf32>
    %cst_142 = arith.constant 1.000000e+00 : f32
    %508 = vector.broadcast %cst_142 : f32 to vector<2x16xf32>
    %509 = arith.addf %508, %507 : vector<2x16xf32>
    %510 = arith.divf %508, %509 : vector<2x16xf32>
    %511 = math.tanh %505 : vector<2x16xf32>
    %512 = vector.extract_strided_slice %510 {offsets = [0, 0], sizes = [2, 4], strides = [1, 1]} : vector<2x16xf32> to vector<2x4xf32>
    %513 = vector.extract_strided_slice %511 {offsets = [0, 8], sizes = [2, 4], strides = [1, 1]} : vector<2x16xf32> to vector<2x4xf32>
    %514 = arith.mulf %512, %513 : vector<2x4xf32>
    %515 = vector.extract_strided_slice %510 {offsets = [0, 4], sizes = [2, 4], strides = [1, 1]} : vector<2x16xf32> to vector<2x4xf32>
    %516 = arith.mulf %515, %498 : vector<2x4xf32>
    %517 = arith.addf %516, %514 : vector<2x4xf32>
    %518 = vector.extract_strided_slice %510 {offsets = [0, 12], sizes = [2, 4], strides = [1, 1]} : vector<2x16xf32> to vector<2x4xf32>
    %519 = math.tanh %517 : vector<2x4xf32>
    %520 = arith.mulf %518, %519 : vector<2x4xf32>
    %c2_143 = arith.constant 2 : index
    %c0_144 = arith.constant 0 : index
    %521 = vector.load %arg46[%c2_143, %c0_144] : memref<16x8xf32, #tpu.memory_space<vmem>>, vector<2x4xf32>
    tpu.vector_store %arg46[%c2_143, %c0_144], %520 {strides = array<i32>} : memref<16x8xf32, #tpu.memory_space<vmem>>, vector<2x4xf32>,
    %522 = vector.extract_strided_slice %485 {offsets = [4, 0], sizes = [2, 16], strides = [1, 1]} : vector<16x16xf32> to vector<2x16xf32>
    %cst_145 = arith.constant dense<0.000000e+00> : vector<2x16xf32>
    %523 = tpu.matmul %520, %478, %cst_145 {dimension_numbers = #tpu.dot_dimension_numbers<[1], [0], [0], [1], [0, 0, 1, 1], [], []>} : vector<2x4xf32>, vector<4x16xf32>, vector<2x16xf32> -> vector<2x16xf32>
    %524 = arith.addf %522, %523 : vector<2x16xf32>
    %525 = arith.negf %524 : vector<2x16xf32>
    %526 = math.exp %525 : vector<2x16xf32>
    %cst_146 = arith.constant 1.000000e+00 : f32
    %527 = vector.broadcast %cst_146 : f32 to vector<2x16xf32>
    %528 = arith.addf %527, %526 : vector<2x16xf32>
    %529 = arith.divf %527, %528 : vector<2x16xf32>
    %530 = math.tanh %524 : vector<2x16xf32>
    %531 = vector.extract_strided_slice %529 {offsets = [0, 0], sizes = [2, 4], strides = [1, 1]} : vector<2x16xf32> to vector<2x4xf32>
    %532 = vector.extract_strided_slice %530 {offsets = [0, 8], sizes = [2, 4], strides = [1, 1]} : vector<2x16xf32> to vector<2x4xf32>
    %533 = arith.mulf %531, %532 : vector<2x4xf32>
    %534 = vector.extract_strided_slice %529 {offsets = [0, 4], sizes = [2, 4], strides = [1, 1]} : vector<2x16xf32> to vector<2x4xf32>
    %535 = arith.mulf %534, %517 : vector<2x4xf32>
    %536 = arith.addf %535, %533 : vector<2x4xf32>
    %537 = vector.extract_strided_slice %529 {offsets = [0, 12], sizes = [2, 4], strides = [1, 1]} : vector<2x16xf32> to vector<2x4xf32>
    %538 = math.tanh %536 : vector<2x4xf32>
    %539 = arith.mulf %537, %538 : vector<2x4xf32>
    %c4_147 = arith.constant 4 : index
    %c0_148 = arith.constant 0 : index
    %540 = vector.load %arg46[%c4_147, %c0_148] : memref<16x8xf32, #tpu.memory_space<vmem>>, vector<2x4xf32>
    tpu.vector_store %arg46[%c4_147, %c0_148], %539 {strides = array<i32>} : memref<16x8xf32, #tpu.memory_space<vmem>>, vector<2x4xf32>,
    %541 = vector.extract_strided_slice %485 {offsets = [6, 0], sizes = [2, 16], strides = [1, 1]} : vector<16x16xf32> to vector<2x16xf32>
    %cst_149 = arith.constant dense<0.000000e+00> : vector<2x16xf32>
    %542 = tpu.matmul %539, %478, %cst_149 {dimension_numbers = #tpu.dot_dimension_numbers<[1], [0], [0], [1], [0, 0, 1, 1], [], []>} : vector<2x4xf32>, vector<4x16xf32>, vector<2x16xf32> -> vector<2x16xf32>
    %543 = arith.addf %541, %542 : vector<2x16xf32>
    %544 = arith.negf %543 : vector<2x16xf32>
    %545 = math.exp %544 : vector<2x16xf32>
    %cst_150 = arith.constant 1.000000e+00 : f32
    %546 = vector.broadcast %cst_150 : f32 to vector<2x16xf32>
    %547 = arith.addf %546, %545 : vector<2x16xf32>
    %548 = arith.divf %546, %547 : vector<2x16xf32>
    %549 = math.tanh %543 : vector<2x16xf32>
    %550 = vector.extract_strided_slice %548 {offsets = [0, 0], sizes = [2, 4], strides = [1, 1]} : vector<2x16xf32> to vector<2x4xf32>
    %551 = vector.extract_strided_slice %549 {offsets = [0, 8], sizes = [2, 4], strides = [1, 1]} : vector<2x16xf32> to vector<2x4xf32>
    %552 = arith.mulf %550, %551 : vector<2x4xf32>
    %553 = vector.extract_strided_slice %548 {offsets = [0, 4], sizes = [2, 4], strides = [1, 1]} : vector<2x16xf32> to vector<2x4xf32>
    %554 = arith.mulf %553, %536 : vector<2x4xf32>
    %555 = arith.addf %554, %552 : vector<2x4xf32>
    %556 = vector.extract_strided_slice %548 {offsets = [0, 12], sizes = [2, 4], strides = [1, 1]} : vector<2x16xf32> to vector<2x4xf32>
    %557 = math.tanh %555 : vector<2x4xf32>
    %558 = arith.mulf %556, %557 : vector<2x4xf32>
    %c6_151 = arith.constant 6 : index
    %c0_152 = arith.constant 0 : index
    %559 = vector.load %arg46[%c6_151, %c0_152] : memref<16x8xf32, #tpu.memory_space<vmem>>, vector<2x4xf32>
    tpu.vector_store %arg46[%c6_151, %c0_152], %558 {strides = array<i32>} : memref<16x8xf32, #tpu.memory_space<vmem>>, vector<2x4xf32>,
    %560 = vector.extract_strided_slice %485 {offsets = [8, 0], sizes = [2, 16], strides = [1, 1]} : vector<16x16xf32> to vector<2x16xf32>
    %cst_153 = arith.constant dense<0.000000e+00> : vector<2x16xf32>
    %561 = tpu.matmul %558, %478, %cst_153 {dimension_numbers = #tpu.dot_dimension_numbers<[1], [0], [0], [1], [0, 0, 1, 1], [], []>} : vector<2x4xf32>, vector<4x16xf32>, vector<2x16xf32> -> vector<2x16xf32>
    %562 = arith.addf %560, %561 : vector<2x16xf32>
    %563 = arith.negf %562 : vector<2x16xf32>
    %564 = math.exp %563 : vector<2x16xf32>
    %cst_154 = arith.constant 1.000000e+00 : f32
    %565 = vector.broadcast %cst_154 : f32 to vector<2x16xf32>
    %566 = arith.addf %565, %564 : vector<2x16xf32>
    %567 = arith.divf %565, %566 : vector<2x16xf32>
    %568 = math.tanh %562 : vector<2x16xf32>
    %569 = vector.extract_strided_slice %567 {offsets = [0, 0], sizes = [2, 4], strides = [1, 1]} : vector<2x16xf32> to vector<2x4xf32>
    %570 = vector.extract_strided_slice %568 {offsets = [0, 8], sizes = [2, 4], strides = [1, 1]} : vector<2x16xf32> to vector<2x4xf32>
    %571 = arith.mulf %569, %570 : vector<2x4xf32>
    %572 = vector.extract_strided_slice %567 {offsets = [0, 4], sizes = [2, 4], strides = [1, 1]} : vector<2x16xf32> to vector<2x4xf32>
    %573 = arith.mulf %572, %555 : vector<2x4xf32>
    %574 = arith.addf %573, %571 : vector<2x4xf32>
    %575 = vector.extract_strided_slice %567 {offsets = [0, 12], sizes = [2, 4], strides = [1, 1]} : vector<2x16xf32> to vector<2x4xf32>
    %576 = math.tanh %574 : vector<2x4xf32>
    %577 = arith.mulf %575, %576 : vector<2x4xf32>
    %c8_155 = arith.constant 8 : index
    %c0_156 = arith.constant 0 : index
    %578 = vector.load %arg46[%c8_155, %c0_156] : memref<16x8xf32, #tpu.memory_space<vmem>>, vector<2x4xf32>
    tpu.vector_store %arg46[%c8_155, %c0_156], %577 {strides = array<i32>} : memref<16x8xf32, #tpu.memory_space<vmem>>, vector<2x4xf32>,
    %579 = vector.extract_strided_slice %485 {offsets = [10, 0], sizes = [2, 16], strides = [1, 1]} : vector<16x16xf32> to vector<2x16xf32>
    %cst_157 = arith.constant dense<0.000000e+00> : vector<2x16xf32>
    %580 = tpu.matmul %577, %478, %cst_157 {dimension_numbers = #tpu.dot_dimension_numbers<[1], [0], [0], [1], [0, 0, 1, 1], [], []>} : vector<2x4xf32>, vector<4x16xf32>, vector<2x16xf32> -> vector<2x16xf32>
    %581 = arith.addf %579, %580 : vector<2x16xf32>
    %582 = arith.negf %581 : vector<2x16xf32>
    %583 = math.exp %582 : vector<2x16xf32>
    %cst_158 = arith.constant 1.000000e+00 : f32
    %584 = vector.broadcast %cst_158 : f32 to vector<2x16xf32>
    %585 = arith.addf %584, %583 : vector<2x16xf32>
    %586 = arith.divf %584, %585 : vector<2x16xf32>
    %587 = math.tanh %581 : vector<2x16xf32>
    %588 = vector.extract_strided_slice %586 {offsets = [0, 0], sizes = [2, 4], strides = [1, 1]} : vector<2x16xf32> to vector<2x4xf32>
    %589 = vector.extract_strided_slice %587 {offsets = [0, 8], sizes = [2, 4], strides = [1, 1]} : vector<2x16xf32> to vector<2x4xf32>
    %590 = arith.mulf %588, %589 : vector<2x4xf32>
    %591 = vector.extract_strided_slice %586 {offsets = [0, 4], sizes = [2, 4], strides = [1, 1]} : vector<2x16xf32> to vector<2x4xf32>
    %592 = arith.mulf %591, %574 : vector<2x4xf32>
    %593 = arith.addf %592, %590 : vector<2x4xf32>
    %594 = vector.extract_strided_slice %586 {offsets = [0, 12], sizes = [2, 4], strides = [1, 1]} : vector<2x16xf32> to vector<2x4xf32>
    %595 = math.tanh %593 : vector<2x4xf32>
    %596 = arith.mulf %594, %595 : vector<2x4xf32>
    %c10_159 = arith.constant 10 : index
    %c0_160 = arith.constant 0 : index
    %597 = vector.load %arg46[%c10_159, %c0_160] : memref<16x8xf32, #tpu.memory_space<vmem>>, vector<2x4xf32>
    tpu.vector_store %arg46[%c10_159, %c0_160], %596 {strides = array<i32>} : memref<16x8xf32, #tpu.memory_space<vmem>>, vector<2x4xf32>,
    %598 = vector.extract_strided_slice %485 {offsets = [12, 0], sizes = [2, 16], strides = [1, 1]} : vector<16x16xf32> to vector<2x16xf32>
    %cst_161 = arith.constant dense<0.000000e+00> : vector<2x16xf32>
    %599 = tpu.matmul %596, %478, %cst_161 {dimension_numbers = #tpu.dot_dimension_numbers<[1], [0], [0], [1], [0, 0, 1, 1], [], []>} : vector<2x4xf32>, vector<4x16xf32>, vector<2x16xf32> -> vector<2x16xf32>
    %600 = arith.addf %598, %599 : vector<2x16xf32>
    %601 = arith.negf %600 : vector<2x16xf32>
    %602 = math.exp %601 : vector<2x16xf32>
    %cst_162 = arith.constant 1.000000e+00 : f32
    %603 = vector.broadcast %cst_162 : f32 to vector<2x16xf32>
    %604 = arith.addf %603, %602 : vector<2x16xf32>
    %605 = arith.divf %603, %604 : vector<2x16xf32>
    %606 = math.tanh %600 : vector<2x16xf32>
    %607 = vector.extract_strided_slice %605 {offsets = [0, 0], sizes = [2, 4], strides = [1, 1]} : vector<2x16xf32> to vector<2x4xf32>
    %608 = vector.extract_strided_slice %606 {offsets = [0, 8], sizes = [2, 4], strides = [1, 1]} : vector<2x16xf32> to vector<2x4xf32>
    %609 = arith.mulf %607, %608 : vector<2x4xf32>
    %610 = vector.extract_strided_slice %605 {offsets = [0, 4], sizes = [2, 4], strides = [1, 1]} : vector<2x16xf32> to vector<2x4xf32>
    %611 = arith.mulf %610, %593 : vector<2x4xf32>
    %612 = arith.addf %611, %609 : vector<2x4xf32>
    %613 = vector.extract_strided_slice %605 {offsets = [0, 12], sizes = [2, 4], strides = [1, 1]} : vector<2x16xf32> to vector<2x4xf32>
    %614 = math.tanh %612 : vector<2x4xf32>
    %615 = arith.mulf %613, %614 : vector<2x4xf32>
    %c12_163 = arith.constant 12 : index
    %c0_164 = arith.constant 0 : index
    %616 = vector.load %arg46[%c12_163, %c0_164] : memref<16x8xf32, #tpu.memory_space<vmem>>, vector<2x4xf32>
    tpu.vector_store %arg46[%c12_163, %c0_164], %615 {strides = array<i32>} : memref<16x8xf32, #tpu.memory_space<vmem>>, vector<2x4xf32>,
    %617 = vector.extract_strided_slice %485 {offsets = [14, 0], sizes = [2, 16], strides = [1, 1]} : vector<16x16xf32> to vector<2x16xf32>
    %cst_165 = arith.constant dense<0.000000e+00> : vector<2x16xf32>
    %618 = tpu.matmul %615, %478, %cst_165 {dimension_numbers = #tpu.dot_dimension_numbers<[1], [0], [0], [1], [0, 0, 1, 1], [], []>} : vector<2x4xf32>, vector<4x16xf32>, vector<2x16xf32> -> vector<2x16xf32>
    %619 = arith.addf %617, %618 : vector<2x16xf32>
    %620 = arith.negf %619 : vector<2x16xf32>
    %621 = math.exp %620 : vector<2x16xf32>
    %cst_166 = arith.constant 1.000000e+00 : f32
    %622 = vector.broadcast %cst_166 : f32 to vector<2x16xf32>
    %623 = arith.addf %622, %621 : vector<2x16xf32>
    %624 = arith.divf %622, %623 : vector<2x16xf32>
    %625 = math.tanh %619 : vector<2x16xf32>
    %626 = vector.extract_strided_slice %624 {offsets = [0, 0], sizes = [2, 4], strides = [1, 1]} : vector<2x16xf32> to vector<2x4xf32>
    %627 = vector.extract_strided_slice %625 {offsets = [0, 8], sizes = [2, 4], strides = [1, 1]} : vector<2x16xf32> to vector<2x4xf32>
    %628 = arith.mulf %626, %627 : vector<2x4xf32>
    %629 = vector.extract_strided_slice %624 {offsets = [0, 4], sizes = [2, 4], strides = [1, 1]} : vector<2x16xf32> to vector<2x4xf32>
    %630 = arith.mulf %629, %612 : vector<2x4xf32>
    %631 = arith.addf %630, %628 : vector<2x4xf32>
    %632 = vector.extract_strided_slice %624 {offsets = [0, 12], sizes = [2, 4], strides = [1, 1]} : vector<2x16xf32> to vector<2x4xf32>
    %633 = math.tanh %631 : vector<2x4xf32>
    %634 = arith.mulf %632, %633 : vector<2x4xf32>
    %c14_167 = arith.constant 14 : index
    %c0_168 = arith.constant 0 : index
    %635 = vector.load %arg46[%c14_167, %c0_168] : memref<16x8xf32, #tpu.memory_space<vmem>>, vector<2x4xf32>
    tpu.vector_store %arg46[%c14_167, %c0_168], %634 {strides = array<i32>} : memref<16x8xf32, #tpu.memory_space<vmem>>, vector<2x4xf32>,
    %636 = vector.extract_strided_slice %488 {offsets = [14, 0], sizes = [2, 16], strides = [1, 1]} : vector<16x16xf32> to vector<2x16xf32>
    %637 = arith.negf %636 : vector<2x16xf32>
    %638 = math.exp %637 : vector<2x16xf32>
    %cst_169 = arith.constant 1.000000e+00 : f32
    %639 = vector.broadcast %cst_169 : f32 to vector<2x16xf32>
    %640 = arith.addf %639, %638 : vector<2x16xf32>
    %641 = arith.divf %639, %640 : vector<2x16xf32>
    %642 = math.tanh %636 : vector<2x16xf32>
    %643 = vector.extract_strided_slice %641 {offsets = [0, 0], sizes = [2, 4], strides = [1, 1]} : vector<2x16xf32> to vector<2x4xf32>
    %644 = vector.extract_strided_slice %642 {offsets = [0, 8], sizes = [2, 4], strides = [1, 1]} : vector<2x16xf32> to vector<2x4xf32>
    %645 = arith.mulf %643, %644 : vector<2x4xf32>
    %646 = vector.extract_strided_slice %641 {offsets = [0, 12], sizes = [2, 4], strides = [1, 1]} : vector<2x16xf32> to vector<2x4xf32>
    %647 = math.tanh %645 : vector<2x4xf32>
    %648 = arith.mulf %646, %647 : vector<2x4xf32>
    %c14_170 = arith.constant 14 : index
    %c4_171 = arith.constant 4 : index
    %649 = vector.load %arg46[%c14_170, %c4_171] : memref<16x8xf32, #tpu.memory_space<vmem>>, vector<2x4xf32>
    tpu.vector_store %arg46[%c14_170, %c4_171], %648 {strides = array<i32>} : memref<16x8xf32, #tpu.memory_space<vmem>>, vector<2x4xf32>,
    %650 = vector.extract_strided_slice %488 {offsets = [12, 0], sizes = [2, 16], strides = [1, 1]} : vector<16x16xf32> to vector<2x16xf32>
    %cst_172 = arith.constant dense<0.000000e+00> : vector<2x16xf32>
    %651 = tpu.matmul %648, %481, %cst_172 {dimension_numbers = #tpu.dot_dimension_numbers<[1], [0], [0], [1], [0, 0, 1, 1], [], []>} : vector<2x4xf32>, vector<4x16xf32>, vector<2x16xf32> -> vector<2x16xf32>
    %652 = arith.addf %650, %651 : vector<2x16xf32>
    %653 = arith.negf %652 : vector<2x16xf32>
    %654 = math.exp %653 : vector<2x16xf32>
    %cst_173 = arith.constant 1.000000e+00 : f32
    %655 = vector.broadcast %cst_173 : f32 to vector<2x16xf32>
    %656 = arith.addf %655, %654 : vector<2x16xf32>
    %657 = arith.divf %655, %656 : vector<2x16xf32>
    %658 = math.tanh %652 : vector<2x16xf32>
    %659 = vector.extract_strided_slice %657 {offsets = [0, 0], sizes = [2, 4], strides = [1, 1]} : vector<2x16xf32> to vector<2x4xf32>
    %660 = vector.extract_strided_slice %658 {offsets = [0, 8], sizes = [2, 4], strides = [1, 1]} : vector<2x16xf32> to vector<2x4xf32>
    %661 = arith.mulf %659, %660 : vector<2x4xf32>
    %662 = vector.extract_strided_slice %657 {offsets = [0, 4], sizes = [2, 4], strides = [1, 1]} : vector<2x16xf32> to vector<2x4xf32>
    %663 = arith.mulf %662, %645 : vector<2x4xf32>
    %664 = arith.addf %663, %661 : vector<2x4xf32>
    %665 = vector.extract_strided_slice %657 {offsets = [0, 12], sizes = [2, 4], strides = [1, 1]} : vector<2x16xf32> to vector<2x4xf32>
    %666 = math.tanh %664 : vector<2x4xf32>
    %667 = arith.mulf %665, %666 : vector<2x4xf32>
    %c12_174 = arith.constant 12 : index
    %c4_175 = arith.constant 4 : index
    %668 = vector.load %arg46[%c12_174, %c4_175] : memref<16x8xf32, #tpu.memory_space<vmem>>, vector<2x4xf32>
    tpu.vector_store %arg46[%c12_174, %c4_175], %667 {strides = array<i32>} : memref<16x8xf32, #tpu.memory_space<vmem>>, vector<2x4xf32>,
    %669 = vector.extract_strided_slice %488 {offsets = [10, 0], sizes = [2, 16], strides = [1, 1]} : vector<16x16xf32> to vector<2x16xf32>
    %cst_176 = arith.constant dense<0.000000e+00> : vector<2x16xf32>
    %670 = tpu.matmul %667, %481, %cst_176 {dimension_numbers = #tpu.dot_dimension_numbers<[1], [0], [0], [1], [0, 0, 1, 1], [], []>} : vector<2x4xf32>, vector<4x16xf32>, vector<2x16xf32> -> vector<2x16xf32>
    %671 = arith.addf %669, %670 : vector<2x16xf32>
    %672 = arith.negf %671 : vector<2x16xf32>
    %673 = math.exp %672 : vector<2x16xf32>
    %cst_177 = arith.constant 1.000000e+00 : f32
    %674 = vector.broadcast %cst_177 : f32 to vector<2x16xf32>
    %675 = arith.addf %674, %673 : vector<2x16xf32>
    %676 = arith.divf %674, %675 : vector<2x16xf32>
    %677 = math.tanh %671 : vector<2x16xf32>
    %678 = vector.extract_strided_slice %676 {offsets = [0, 0], sizes = [2, 4], strides = [1, 1]} : vector<2x16xf32> to vector<2x4xf32>
    %679 = vector.extract_strided_slice %677 {offsets = [0, 8], sizes = [2, 4], strides = [1, 1]} : vector<2x16xf32> to vector<2x4xf32>
    %680 = arith.mulf %678, %679 : vector<2x4xf32>
    %681 = vector.extract_strided_slice %676 {offsets = [0, 4], sizes = [2, 4], strides = [1, 1]} : vector<2x16xf32> to vector<2x4xf32>
    %682 = arith.mulf %681, %664 : vector<2x4xf32>
    %683 = arith.addf %682, %680 : vector<2x4xf32>
    %684 = vector.extract_strided_slice %676 {offsets = [0, 12], sizes = [2, 4], strides = [1, 1]} : vector<2x16xf32> to vector<2x4xf32>
    %685 = math.tanh %683 : vector<2x4xf32>
    %686 = arith.mulf %684, %685 : vector<2x4xf32>
    %c10_178 = arith.constant 10 : index
    %c4_179 = arith.constant 4 : index
    %687 = vector.load %arg46[%c10_178, %c4_179] : memref<16x8xf32, #tpu.memory_space<vmem>>, vector<2x4xf32>
    tpu.vector_store %arg46[%c10_178, %c4_179], %686 {strides = array<i32>} : memref<16x8xf32, #tpu.memory_space<vmem>>, vector<2x4xf32>,
    %688 = vector.extract_strided_slice %488 {offsets = [8, 0], sizes = [2, 16], strides = [1, 1]} : vector<16x16xf32> to vector<2x16xf32>
    %cst_180 = arith.constant dense<0.000000e+00> : vector<2x16xf32>
    %689 = tpu.matmul %686, %481, %cst_180 {dimension_numbers = #tpu.dot_dimension_numbers<[1], [0], [0], [1], [0, 0, 1, 1], [], []>} : vector<2x4xf32>, vector<4x16xf32>, vector<2x16xf32> -> vector<2x16xf32>
    %690 = arith.addf %688, %689 : vector<2x16xf32>
    %691 = arith.negf %690 : vector<2x16xf32>
    %692 = math.exp %691 : vector<2x16xf32>
    %cst_181 = arith.constant 1.000000e+00 : f32
    %693 = vector.broadcast %cst_181 : f32 to vector<2x16xf32>
    %694 = arith.addf %693, %692 : vector<2x16xf32>
    %695 = arith.divf %693, %694 : vector<2x16xf32>
    %696 = math.tanh %690 : vector<2x16xf32>
    %697 = vector.extract_strided_slice %695 {offsets = [0, 0], sizes = [2, 4], strides = [1, 1]} : vector<2x16xf32> to vector<2x4xf32>
    %698 = vector.extract_strided_slice %696 {offsets = [0, 8], sizes = [2, 4], strides = [1, 1]} : vector<2x16xf32> to vector<2x4xf32>
    %699 = arith.mulf %697, %698 : vector<2x4xf32>
    %700 = vector.extract_strided_slice %695 {offsets = [0, 4], sizes = [2, 4], strides = [1, 1]} : vector<2x16xf32> to vector<2x4xf32>
    %701 = arith.mulf %700, %683 : vector<2x4xf32>
    %702 = arith.addf %701, %699 : vector<2x4xf32>
    %703 = vector.extract_strided_slice %695 {offsets = [0, 12], sizes = [2, 4], strides = [1, 1]} : vector<2x16xf32> to vector<2x4xf32>
    %704 = math.tanh %702 : vector<2x4xf32>
    %705 = arith.mulf %703, %704 : vector<2x4xf32>
    %c8_182 = arith.constant 8 : index
    %c4_183 = arith.constant 4 : index
    %706 = vector.load %arg46[%c8_182, %c4_183] : memref<16x8xf32, #tpu.memory_space<vmem>>, vector<2x4xf32>
    tpu.vector_store %arg46[%c8_182, %c4_183], %705 {strides = array<i32>} : memref<16x8xf32, #tpu.memory_space<vmem>>, vector<2x4xf32>,
    %707 = vector.extract_strided_slice %488 {offsets = [6, 0], sizes = [2, 16], strides = [1, 1]} : vector<16x16xf32> to vector<2x16xf32>
    %cst_184 = arith.constant dense<0.000000e+00> : vector<2x16xf32>
    %708 = tpu.matmul %705, %481, %cst_184 {dimension_numbers = #tpu.dot_dimension_numbers<[1], [0], [0], [1], [0, 0, 1, 1], [], []>} : vector<2x4xf32>, vector<4x16xf32>, vector<2x16xf32> -> vector<2x16xf32>
    %709 = arith.addf %707, %708 : vector<2x16xf32>
    %710 = arith.negf %709 : vector<2x16xf32>
    %711 = math.exp %710 : vector<2x16xf32>
    %cst_185 = arith.constant 1.000000e+00 : f32
    %712 = vector.broadcast %cst_185 : f32 to vector<2x16xf32>
    %713 = arith.addf %712, %711 : vector<2x16xf32>
    %714 = arith.divf %712, %713 : vector<2x16xf32>
    %715 = math.tanh %709 : vector<2x16xf32>
    %716 = vector.extract_strided_slice %714 {offsets = [0, 0], sizes = [2, 4], strides = [1, 1]} : vector<2x16xf32> to vector<2x4xf32>
    %717 = vector.extract_strided_slice %715 {offsets = [0, 8], sizes = [2, 4], strides = [1, 1]} : vector<2x16xf32> to vector<2x4xf32>
    %718 = arith.mulf %716, %717 : vector<2x4xf32>
    %719 = vector.extract_strided_slice %714 {offsets = [0, 4], sizes = [2, 4], strides = [1, 1]} : vector<2x16xf32> to vector<2x4xf32>
    %720 = arith.mulf %719, %702 : vector<2x4xf32>
    %721 = arith.addf %720, %718 : vector<2x4xf32>
    %722 = vector.extract_strided_slice %714 {offsets = [0, 12], sizes = [2, 4], strides = [1, 1]} : vector<2x16xf32> to vector<2x4xf32>
    %723 = math.tanh %721 : vector<2x4xf32>
    %724 = arith.mulf %722, %723 : vector<2x4xf32>
    %c6_186 = arith.constant 6 : index
    %c4_187 = arith.constant 4 : index
    %725 = vector.load %arg46[%c6_186, %c4_187] : memref<16x8xf32, #tpu.memory_space<vmem>>, vector<2x4xf32>
    tpu.vector_store %arg46[%c6_186, %c4_187], %724 {strides = array<i32>} : memref<16x8xf32, #tpu.memory_space<vmem>>, vector<2x4xf32>,
    %726 = vector.extract_strided_slice %488 {offsets = [4, 0], sizes = [2, 16], strides = [1, 1]} : vector<16x16xf32> to vector<2x16xf32>
    %cst_188 = arith.constant dense<0.000000e+00> : vector<2x16xf32>
    %727 = tpu.matmul %724, %481, %cst_188 {dimension_numbers = #tpu.dot_dimension_numbers<[1], [0], [0], [1], [0, 0, 1, 1], [], []>} : vector<2x4xf32>, vector<4x16xf32>, vector<2x16xf32> -> vector<2x16xf32>
    %728 = arith.addf %726, %727 : vector<2x16xf32>
    %729 = arith.negf %728 : vector<2x16xf32>
    %730 = math.exp %729 : vector<2x16xf32>
    %cst_189 = arith.constant 1.000000e+00 : f32
    %731 = vector.broadcast %cst_189 : f32 to vector<2x16xf32>
    %732 = arith.addf %731, %730 : vector<2x16xf32>
    %733 = arith.divf %731, %732 : vector<2x16xf32>
    %734 = math.tanh %728 : vector<2x16xf32>
    %735 = vector.extract_strided_slice %733 {offsets = [0, 0], sizes = [2, 4], strides = [1, 1]} : vector<2x16xf32> to vector<2x4xf32>
    %736 = vector.extract_strided_slice %734 {offsets = [0, 8], sizes = [2, 4], strides = [1, 1]} : vector<2x16xf32> to vector<2x4xf32>
    %737 = arith.mulf %735, %736 : vector<2x4xf32>
    %738 = vector.extract_strided_slice %733 {offsets = [0, 4], sizes = [2, 4], strides = [1, 1]} : vector<2x16xf32> to vector<2x4xf32>
    %739 = arith.mulf %738, %721 : vector<2x4xf32>
    %740 = arith.addf %739, %737 : vector<2x4xf32>
    %741 = vector.extract_strided_slice %733 {offsets = [0, 12], sizes = [2, 4], strides = [1, 1]} : vector<2x16xf32> to vector<2x4xf32>
    %742 = math.tanh %740 : vector<2x4xf32>
    %743 = arith.mulf %741, %742 : vector<2x4xf32>
    %c4_190 = arith.constant 4 : index
    %c4_191 = arith.constant 4 : index
    %744 = vector.load %arg46[%c4_190, %c4_191] : memref<16x8xf32, #tpu.memory_space<vmem>>, vector<2x4xf32>
    tpu.vector_store %arg46[%c4_190, %c4_191], %743 {strides = array<i32>} : memref<16x8xf32, #tpu.memory_space<vmem>>, vector<2x4xf32>,
    %745 = vector.extract_strided_slice %488 {offsets = [2, 0], sizes = [2, 16], strides = [1, 1]} : vector<16x16xf32> to vector<2x16xf32>
    %cst_192 = arith.constant dense<0.000000e+00> : vector<2x16xf32>
    %746 = tpu.matmul %743, %481, %cst_192 {dimension_numbers = #tpu.dot_dimension_numbers<[1], [0], [0], [1], [0, 0, 1, 1], [], []>} : vector<2x4xf32>, vector<4x16xf32>, vector<2x16xf32> -> vector<2x16xf32>
    %747 = arith.addf %745, %746 : vector<2x16xf32>
    %748 = arith.negf %747 : vector<2x16xf32>
    %749 = math.exp %748 : vector<2x16xf32>
    %cst_193 = arith.constant 1.000000e+00 : f32
    %750 = vector.broadcast %cst_193 : f32 to vector<2x16xf32>
    %751 = arith.addf %750, %749 : vector<2x16xf32>
    %752 = arith.divf %750, %751 : vector<2x16xf32>
    %753 = math.tanh %747 : vector<2x16xf32>
    %754 = vector.extract_strided_slice %752 {offsets = [0, 0], sizes = [2, 4], strides = [1, 1]} : vector<2x16xf32> to vector<2x4xf32>
    %755 = vector.extract_strided_slice %753 {offsets = [0, 8], sizes = [2, 4], strides = [1, 1]} : vector<2x16xf32> to vector<2x4xf32>
    %756 = arith.mulf %754, %755 : vector<2x4xf32>
    %757 = vector.extract_strided_slice %752 {offsets = [0, 4], sizes = [2, 4], strides = [1, 1]} : vector<2x16xf32> to vector<2x4xf32>
    %758 = arith.mulf %757, %740 : vector<2x4xf32>
    %759 = arith.addf %758, %756 : vector<2x4xf32>
    %760 = vector.extract_strided_slice %752 {offsets = [0, 12], sizes = [2, 4], strides = [1, 1]} : vector<2x16xf32> to vector<2x4xf32>
    %761 = math.tanh %759 : vector<2x4xf32>
    %762 = arith.mulf %760, %761 : vector<2x4xf32>
    %c2_194 = arith.constant 2 : index
    %c4_195 = arith.constant 4 : index
    %763 = vector.load %arg46[%c2_194, %c4_195] : memref<16x8xf32, #tpu.memory_space<vmem>>, vector<2x4xf32>
    tpu.vector_store %arg46[%c2_194, %c4_195], %762 {strides = array<i32>} : memref<16x8xf32, #tpu.memory_space<vmem>>, vector<2x4xf32>,
    %764 = vector.extract_strided_slice %488 {offsets = [0, 0], sizes = [2, 16], strides = [1, 1]} : vector<16x16xf32> to vector<2x16xf32>
    %cst_196 = arith.constant dense<0.000000e+00> : vector<2x16xf32>
    %765 = tpu.matmul %762, %481, %cst_196 {dimension_numbers = #tpu.dot_dimension_numbers<[1], [0], [0], [1], [0, 0, 1, 1], [], []>} : vector<2x4xf32>, vector<4x16xf32>, vector<2x16xf32> -> vector<2x16xf32>
    %766 = arith.addf %764, %765 : vector<2x16xf32>
    %767 = arith.negf %766 : vector<2x16xf32>
    %768 = math.exp %767 : vector<2x16xf32>
    %cst_197 = arith.constant 1.000000e+00 : f32
    %769 = vector.broadcast %cst_197 : f32 to vector<2x16xf32>
    %770 = arith.addf %769, %768 : vector<2x16xf32>
    %771 = arith.divf %769, %770 : vector<2x16xf32>
    %772 = math.tanh %766 : vector<2x16xf32>
    %773 = vector.extract_strided_slice %771 {offsets = [0, 0], sizes = [2, 4], strides = [1, 1]} : vector<2x16xf32> to vector<2x4xf32>
    %774 = vector.extract_strided_slice %772 {offsets = [0, 8], sizes = [2, 4], strides = [1, 1]} : vector<2x16xf32> to vector<2x4xf32>
    %775 = arith.mulf %773, %774 : vector<2x4xf32>
    %776 = vector.extract_strided_slice %771 {offsets = [0, 4], sizes = [2, 4], strides = [1, 1]} : vector<2x16xf32> to vector<2x4xf32>
    %777 = arith.mulf %776, %759 : vector<2x4xf32>
    %778 = arith.addf %777, %775 : vector<2x4xf32>
    %779 = vector.extract_strided_slice %771 {offsets = [0, 12], sizes = [2, 4], strides = [1, 1]} : vector<2x16xf32> to vector<2x4xf32>
    %780 = math.tanh %778 : vector<2x4xf32>
    %781 = arith.mulf %779, %780 : vector<2x4xf32>
    %c0_198 = arith.constant 0 : index
    %c4_199 = arith.constant 4 : index
    %782 = vector.load %arg46[%c0_198, %c4_199] : memref<16x8xf32, #tpu.memory_space<vmem>>, vector<2x4xf32>
    tpu.vector_store %arg46[%c0_198, %c4_199], %781 {strides = array<i32>} : memref<16x8xf32, #tpu.memory_space<vmem>>, vector<2x4xf32>,
    %c0_200 = arith.constant 0 : index
    %c0_201 = arith.constant 0 : index
    %783 = vector.load %arg46[%c0_200, %c0_201] : memref<16x8xf32, #tpu.memory_space<vmem>>, vector<16x8xf32>
    %c0_202 = arith.constant 0 : index
    %c0_203 = arith.constant 0 : index
    %784 = vector.load %arg21[%c0_202, %c0_203] : memref<8x16xf32, #tpu.memory_space<vmem>>, vector<8x16xf32>
    %c0_204 = arith.constant 0 : index
    %c0_205 = arith.constant 0 : index
    %785 = vector.load %arg22[%c0_204, %c0_205] : memref<4x16xf32, #tpu.memory_space<vmem>>, vector<4x16xf32>
    %c0_206 = arith.constant 0 : index
    %c0_207 = arith.constant 0 : index
    %786 = vector.load %arg23[%c0_206, %c0_207] : memref<1x16xf32, #tpu.memory_space<vmem>>, vector<1x16xf32>
    %cst_208 = arith.constant dense<0.000000e+00> : vector<16x16xf32>
    %787 = tpu.matmul %783, %784, %cst_208 {dimension_numbers = #tpu.dot_dimension_numbers<[1], [0], [0], [1], [0, 0, 1, 1], [], []>} : vector<16x8xf32>, vector<8x16xf32>, vector<16x16xf32> -> vector<16x16xf32>
    %788 = vector.broadcast %786 : vector<1x16xf32> to vector<16x16xf32>
    %789 = arith.addf %787, %788 : vector<16x16xf32>
    %790 = vector.extract_strided_slice %789 {offsets = [0, 0], sizes = [2, 16], strides = [1, 1]} : vector<16x16xf32> to vector<2x16xf32>
    %791 = arith.negf %790 : vector<2x16xf32>
    %792 = math.exp %791 : vector<2x16xf32>
    %cst_209 = arith.constant 1.000000e+00 : f32
    %793 = vector.broadcast %cst_209 : f32 to vector<2x16xf32>
    %794 = arith.addf %793, %792 : vector<2x16xf32>
    %795 = arith.divf %793, %794 : vector<2x16xf32>
    %796 = math.tanh %790 : vector<2x16xf32>
    %797 = vector.extract_strided_slice %795 {offsets = [0, 0], sizes = [2, 4], strides = [1, 1]} : vector<2x16xf32> to vector<2x4xf32>
    %798 = vector.extract_strided_slice %796 {offsets = [0, 8], sizes = [2, 4], strides = [1, 1]} : vector<2x16xf32> to vector<2x4xf32>
    %799 = arith.mulf %797, %798 : vector<2x4xf32>
    %800 = vector.extract_strided_slice %795 {offsets = [0, 12], sizes = [2, 4], strides = [1, 1]} : vector<2x16xf32> to vector<2x4xf32>
    %801 = math.tanh %799 : vector<2x4xf32>
    %802 = arith.mulf %800, %801 : vector<2x4xf32>
    %c0_210 = arith.constant 0 : index
    %c0_211 = arith.constant 0 : index
    %803 = vector.load %arg43[%c0_210, %c0_211] : memref<16x4xf32, #tpu.memory_space<vmem>>, vector<2x4xf32>
    tpu.vector_store %arg43[%c0_210, %c0_211], %802 {strides = array<i32>} : memref<16x4xf32, #tpu.memory_space<vmem>>, vector<2x4xf32>,
    %804 = vector.extract_strided_slice %789 {offsets = [2, 0], sizes = [2, 16], strides = [1, 1]} : vector<16x16xf32> to vector<2x16xf32>
    %cst_212 = arith.constant dense<0.000000e+00> : vector<2x16xf32>
    %805 = tpu.matmul %802, %785, %cst_212 {dimension_numbers = #tpu.dot_dimension_numbers<[1], [0], [0], [1], [0, 0, 1, 1], [], []>} : vector<2x4xf32>, vector<4x16xf32>, vector<2x16xf32> -> vector<2x16xf32>
    %806 = arith.addf %804, %805 : vector<2x16xf32>
    %807 = arith.negf %806 : vector<2x16xf32>
    %808 = math.exp %807 : vector<2x16xf32>
    %cst_213 = arith.constant 1.000000e+00 : f32
    %809 = vector.broadcast %cst_213 : f32 to vector<2x16xf32>
    %810 = arith.addf %809, %808 : vector<2x16xf32>
    %811 = arith.divf %809, %810 : vector<2x16xf32>
    %812 = math.tanh %806 : vector<2x16xf32>
    %813 = vector.extract_strided_slice %811 {offsets = [0, 0], sizes = [2, 4], strides = [1, 1]} : vector<2x16xf32> to vector<2x4xf32>
    %814 = vector.extract_strided_slice %812 {offsets = [0, 8], sizes = [2, 4], strides = [1, 1]} : vector<2x16xf32> to vector<2x4xf32>
    %815 = arith.mulf %813, %814 : vector<2x4xf32>
    %816 = vector.extract_strided_slice %811 {offsets = [0, 4], sizes = [2, 4], strides = [1, 1]} : vector<2x16xf32> to vector<2x4xf32>
    %817 = arith.mulf %816, %799 : vector<2x4xf32>
    %818 = arith.addf %817, %815 : vector<2x4xf32>
    %819 = vector.extract_strided_slice %811 {offsets = [0, 12], sizes = [2, 4], strides = [1, 1]} : vector<2x16xf32> to vector<2x4xf32>
    %820 = math.tanh %818 : vector<2x4xf32>
    %821 = arith.mulf %819, %820 : vector<2x4xf32>
    %c2_214 = arith.constant 2 : index
    %c0_215 = arith.constant 0 : index
    %822 = vector.load %arg43[%c2_214, %c0_215] : memref<16x4xf32, #tpu.memory_space<vmem>>, vector<2x4xf32>
    tpu.vector_store %arg43[%c2_214, %c0_215], %821 {strides = array<i32>} : memref<16x4xf32, #tpu.memory_space<vmem>>, vector<2x4xf32>,
    %823 = vector.extract_strided_slice %789 {offsets = [4, 0], sizes = [2, 16], strides = [1, 1]} : vector<16x16xf32> to vector<2x16xf32>
    %cst_216 = arith.constant dense<0.000000e+00> : vector<2x16xf32>
    %824 = tpu.matmul %821, %785, %cst_216 {dimension_numbers = #tpu.dot_dimension_numbers<[1], [0], [0], [1], [0, 0, 1, 1], [], []>} : vector<2x4xf32>, vector<4x16xf32>, vector<2x16xf32> -> vector<2x16xf32>
    %825 = arith.addf %823, %824 : vector<2x16xf32>
    %826 = arith.negf %825 : vector<2x16xf32>
    %827 = math.exp %826 : vector<2x16xf32>
    %cst_217 = arith.constant 1.000000e+00 : f32
    %828 = vector.broadcast %cst_217 : f32 to vector<2x16xf32>
    %829 = arith.addf %828, %827 : vector<2x16xf32>
    %830 = arith.divf %828, %829 : vector<2x16xf32>
    %831 = math.tanh %825 : vector<2x16xf32>
    %832 = vector.extract_strided_slice %830 {offsets = [0, 0], sizes = [2, 4], strides = [1, 1]} : vector<2x16xf32> to vector<2x4xf32>
    %833 = vector.extract_strided_slice %831 {offsets = [0, 8], sizes = [2, 4], strides = [1, 1]} : vector<2x16xf32> to vector<2x4xf32>
    %834 = arith.mulf %832, %833 : vector<2x4xf32>
    %835 = vector.extract_strided_slice %830 {offsets = [0, 4], sizes = [2, 4], strides = [1, 1]} : vector<2x16xf32> to vector<2x4xf32>
    %836 = arith.mulf %835, %818 : vector<2x4xf32>
    %837 = arith.addf %836, %834 : vector<2x4xf32>
    %838 = vector.extract_strided_slice %830 {offsets = [0, 12], sizes = [2, 4], strides = [1, 1]} : vector<2x16xf32> to vector<2x4xf32>
    %839 = math.tanh %837 : vector<2x4xf32>
    %840 = arith.mulf %838, %839 : vector<2x4xf32>
    %c4_218 = arith.constant 4 : index
    %c0_219 = arith.constant 0 : index
    %841 = vector.load %arg43[%c4_218, %c0_219] : memref<16x4xf32, #tpu.memory_space<vmem>>, vector<2x4xf32>
    tpu.vector_store %arg43[%c4_218, %c0_219], %840 {strides = array<i32>} : memref<16x4xf32, #tpu.memory_space<vmem>>, vector<2x4xf32>,
    %842 = vector.extract_strided_slice %789 {offsets = [6, 0], sizes = [2, 16], strides = [1, 1]} : vector<16x16xf32> to vector<2x16xf32>
    %cst_220 = arith.constant dense<0.000000e+00> : vector<2x16xf32>
    %843 = tpu.matmul %840, %785, %cst_220 {dimension_numbers = #tpu.dot_dimension_numbers<[1], [0], [0], [1], [0, 0, 1, 1], [], []>} : vector<2x4xf32>, vector<4x16xf32>, vector<2x16xf32> -> vector<2x16xf32>
    %844 = arith.addf %842, %843 : vector<2x16xf32>
    %845 = arith.negf %844 : vector<2x16xf32>
    %846 = math.exp %845 : vector<2x16xf32>
    %cst_221 = arith.constant 1.000000e+00 : f32
    %847 = vector.broadcast %cst_221 : f32 to vector<2x16xf32>
    %848 = arith.addf %847, %846 : vector<2x16xf32>
    %849 = arith.divf %847, %848 : vector<2x16xf32>
    %850 = math.tanh %844 : vector<2x16xf32>
    %851 = vector.extract_strided_slice %849 {offsets = [0, 0], sizes = [2, 4], strides = [1, 1]} : vector<2x16xf32> to vector<2x4xf32>
    %852 = vector.extract_strided_slice %850 {offsets = [0, 8], sizes = [2, 4], strides = [1, 1]} : vector<2x16xf32> to vector<2x4xf32>
    %853 = arith.mulf %851, %852 : vector<2x4xf32>
    %854 = vector.extract_strided_slice %849 {offsets = [0, 4], sizes = [2, 4], strides = [1, 1]} : vector<2x16xf32> to vector<2x4xf32>
    %855 = arith.mulf %854, %837 : vector<2x4xf32>
    %856 = arith.addf %855, %853 : vector<2x4xf32>
    %857 = vector.extract_strided_slice %849 {offsets = [0, 12], sizes = [2, 4], strides = [1, 1]} : vector<2x16xf32> to vector<2x4xf32>
    %858 = math.tanh %856 : vector<2x4xf32>
    %859 = arith.mulf %857, %858 : vector<2x4xf32>
    %c6_222 = arith.constant 6 : index
    %c0_223 = arith.constant 0 : index
    %860 = vector.load %arg43[%c6_222, %c0_223] : memref<16x4xf32, #tpu.memory_space<vmem>>, vector<2x4xf32>
    tpu.vector_store %arg43[%c6_222, %c0_223], %859 {strides = array<i32>} : memref<16x4xf32, #tpu.memory_space<vmem>>, vector<2x4xf32>,
    %861 = vector.extract_strided_slice %789 {offsets = [8, 0], sizes = [2, 16], strides = [1, 1]} : vector<16x16xf32> to vector<2x16xf32>
    %cst_224 = arith.constant dense<0.000000e+00> : vector<2x16xf32>
    %862 = tpu.matmul %859, %785, %cst_224 {dimension_numbers = #tpu.dot_dimension_numbers<[1], [0], [0], [1], [0, 0, 1, 1], [], []>} : vector<2x4xf32>, vector<4x16xf32>, vector<2x16xf32> -> vector<2x16xf32>
    %863 = arith.addf %861, %862 : vector<2x16xf32>
    %864 = arith.negf %863 : vector<2x16xf32>
    %865 = math.exp %864 : vector<2x16xf32>
    %cst_225 = arith.constant 1.000000e+00 : f32
    %866 = vector.broadcast %cst_225 : f32 to vector<2x16xf32>
    %867 = arith.addf %866, %865 : vector<2x16xf32>
    %868 = arith.divf %866, %867 : vector<2x16xf32>
    %869 = math.tanh %863 : vector<2x16xf32>
    %870 = vector.extract_strided_slice %868 {offsets = [0, 0], sizes = [2, 4], strides = [1, 1]} : vector<2x16xf32> to vector<2x4xf32>
    %871 = vector.extract_strided_slice %869 {offsets = [0, 8], sizes = [2, 4], strides = [1, 1]} : vector<2x16xf32> to vector<2x4xf32>
    %872 = arith.mulf %870, %871 : vector<2x4xf32>
    %873 = vector.extract_strided_slice %868 {offsets = [0, 4], sizes = [2, 4], strides = [1, 1]} : vector<2x16xf32> to vector<2x4xf32>
    %874 = arith.mulf %873, %856 : vector<2x4xf32>
    %875 = arith.addf %874, %872 : vector<2x4xf32>
    %876 = vector.extract_strided_slice %868 {offsets = [0, 12], sizes = [2, 4], strides = [1, 1]} : vector<2x16xf32> to vector<2x4xf32>
    %877 = math.tanh %875 : vector<2x4xf32>
    %878 = arith.mulf %876, %877 : vector<2x4xf32>
    %c8_226 = arith.constant 8 : index
    %c0_227 = arith.constant 0 : index
    %879 = vector.load %arg43[%c8_226, %c0_227] : memref<16x4xf32, #tpu.memory_space<vmem>>, vector<2x4xf32>
    tpu.vector_store %arg43[%c8_226, %c0_227], %878 {strides = array<i32>} : memref<16x4xf32, #tpu.memory_space<vmem>>, vector<2x4xf32>,
    %880 = vector.extract_strided_slice %789 {offsets = [10, 0], sizes = [2, 16], strides = [1, 1]} : vector<16x16xf32> to vector<2x16xf32>
    %cst_228 = arith.constant dense<0.000000e+00> : vector<2x16xf32>
    %881 = tpu.matmul %878, %785, %cst_228 {dimension_numbers = #tpu.dot_dimension_numbers<[1], [0], [0], [1], [0, 0, 1, 1], [], []>} : vector<2x4xf32>, vector<4x16xf32>, vector<2x16xf32> -> vector<2x16xf32>
    %882 = arith.addf %880, %881 : vector<2x16xf32>
    %883 = arith.negf %882 : vector<2x16xf32>
    %884 = math.exp %883 : vector<2x16xf32>
    %cst_229 = arith.constant 1.000000e+00 : f32
    %885 = vector.broadcast %cst_229 : f32 to vector<2x16xf32>
    %886 = arith.addf %885, %884 : vector<2x16xf32>
    %887 = arith.divf %885, %886 : vector<2x16xf32>
    %888 = math.tanh %882 : vector<2x16xf32>
    %889 = vector.extract_strided_slice %887 {offsets = [0, 0], sizes = [2, 4], strides = [1, 1]} : vector<2x16xf32> to vector<2x4xf32>
    %890 = vector.extract_strided_slice %888 {offsets = [0, 8], sizes = [2, 4], strides = [1, 1]} : vector<2x16xf32> to vector<2x4xf32>
    %891 = arith.mulf %889, %890 : vector<2x4xf32>
    %892 = vector.extract_strided_slice %887 {offsets = [0, 4], sizes = [2, 4], strides = [1, 1]} : vector<2x16xf32> to vector<2x4xf32>
    %893 = arith.mulf %892, %875 : vector<2x4xf32>
    %894 = arith.addf %893, %891 : vector<2x4xf32>
    %895 = vector.extract_strided_slice %887 {offsets = [0, 12], sizes = [2, 4], strides = [1, 1]} : vector<2x16xf32> to vector<2x4xf32>
    %896 = math.tanh %894 : vector<2x4xf32>
    %897 = arith.mulf %895, %896 : vector<2x4xf32>
    %c10_230 = arith.constant 10 : index
    %c0_231 = arith.constant 0 : index
    %898 = vector.load %arg43[%c10_230, %c0_231] : memref<16x4xf32, #tpu.memory_space<vmem>>, vector<2x4xf32>
    tpu.vector_store %arg43[%c10_230, %c0_231], %897 {strides = array<i32>} : memref<16x4xf32, #tpu.memory_space<vmem>>, vector<2x4xf32>,
    %899 = vector.extract_strided_slice %789 {offsets = [12, 0], sizes = [2, 16], strides = [1, 1]} : vector<16x16xf32> to vector<2x16xf32>
    %cst_232 = arith.constant dense<0.000000e+00> : vector<2x16xf32>
    %900 = tpu.matmul %897, %785, %cst_232 {dimension_numbers = #tpu.dot_dimension_numbers<[1], [0], [0], [1], [0, 0, 1, 1], [], []>} : vector<2x4xf32>, vector<4x16xf32>, vector<2x16xf32> -> vector<2x16xf32>
    %901 = arith.addf %899, %900 : vector<2x16xf32>
    %902 = arith.negf %901 : vector<2x16xf32>
    %903 = math.exp %902 : vector<2x16xf32>
    %cst_233 = arith.constant 1.000000e+00 : f32
    %904 = vector.broadcast %cst_233 : f32 to vector<2x16xf32>
    %905 = arith.addf %904, %903 : vector<2x16xf32>
    %906 = arith.divf %904, %905 : vector<2x16xf32>
    %907 = math.tanh %901 : vector<2x16xf32>
    %908 = vector.extract_strided_slice %906 {offsets = [0, 0], sizes = [2, 4], strides = [1, 1]} : vector<2x16xf32> to vector<2x4xf32>
    %909 = vector.extract_strided_slice %907 {offsets = [0, 8], sizes = [2, 4], strides = [1, 1]} : vector<2x16xf32> to vector<2x4xf32>
    %910 = arith.mulf %908, %909 : vector<2x4xf32>
    %911 = vector.extract_strided_slice %906 {offsets = [0, 4], sizes = [2, 4], strides = [1, 1]} : vector<2x16xf32> to vector<2x4xf32>
    %912 = arith.mulf %911, %894 : vector<2x4xf32>
    %913 = arith.addf %912, %910 : vector<2x4xf32>
    %914 = vector.extract_strided_slice %906 {offsets = [0, 12], sizes = [2, 4], strides = [1, 1]} : vector<2x16xf32> to vector<2x4xf32>
    %915 = math.tanh %913 : vector<2x4xf32>
    %916 = arith.mulf %914, %915 : vector<2x4xf32>
    %c12_234 = arith.constant 12 : index
    %c0_235 = arith.constant 0 : index
    %917 = vector.load %arg43[%c12_234, %c0_235] : memref<16x4xf32, #tpu.memory_space<vmem>>, vector<2x4xf32>
    tpu.vector_store %arg43[%c12_234, %c0_235], %916 {strides = array<i32>} : memref<16x4xf32, #tpu.memory_space<vmem>>, vector<2x4xf32>,
    %918 = vector.extract_strided_slice %789 {offsets = [14, 0], sizes = [2, 16], strides = [1, 1]} : vector<16x16xf32> to vector<2x16xf32>
    %cst_236 = arith.constant dense<0.000000e+00> : vector<2x16xf32>
    %919 = tpu.matmul %916, %785, %cst_236 {dimension_numbers = #tpu.dot_dimension_numbers<[1], [0], [0], [1], [0, 0, 1, 1], [], []>} : vector<2x4xf32>, vector<4x16xf32>, vector<2x16xf32> -> vector<2x16xf32>
    %920 = arith.addf %918, %919 : vector<2x16xf32>
    %921 = arith.negf %920 : vector<2x16xf32>
    %922 = math.exp %921 : vector<2x16xf32>
    %cst_237 = arith.constant 1.000000e+00 : f32
    %923 = vector.broadcast %cst_237 : f32 to vector<2x16xf32>
    %924 = arith.addf %923, %922 : vector<2x16xf32>
    %925 = arith.divf %923, %924 : vector<2x16xf32>
    %926 = math.tanh %920 : vector<2x16xf32>
    %927 = vector.extract_strided_slice %925 {offsets = [0, 0], sizes = [2, 4], strides = [1, 1]} : vector<2x16xf32> to vector<2x4xf32>
    %928 = vector.extract_strided_slice %926 {offsets = [0, 8], sizes = [2, 4], strides = [1, 1]} : vector<2x16xf32> to vector<2x4xf32>
    %929 = arith.mulf %927, %928 : vector<2x4xf32>
    %930 = vector.extract_strided_slice %925 {offsets = [0, 4], sizes = [2, 4], strides = [1, 1]} : vector<2x16xf32> to vector<2x4xf32>
    %931 = arith.mulf %930, %913 : vector<2x4xf32>
    %932 = arith.addf %931, %929 : vector<2x4xf32>
    %933 = vector.extract_strided_slice %925 {offsets = [0, 12], sizes = [2, 4], strides = [1, 1]} : vector<2x16xf32> to vector<2x4xf32>
    %934 = math.tanh %932 : vector<2x4xf32>
    %935 = arith.mulf %933, %934 : vector<2x4xf32>
    %c14_238 = arith.constant 14 : index
    %c0_239 = arith.constant 0 : index
    %936 = vector.load %arg43[%c14_238, %c0_239] : memref<16x4xf32, #tpu.memory_space<vmem>>, vector<2x4xf32>
    tpu.vector_store %arg43[%c14_238, %c0_239], %935 {strides = array<i32>} : memref<16x4xf32, #tpu.memory_space<vmem>>, vector<2x4xf32>,
    %c0_240 = arith.constant 0 : index
    %c0_241 = arith.constant 0 : index
    %937 = vector.load %arg24[%c0_240, %c0_241] : memref<16x128xf32, #tpu.memory_space<vmem>>, vector<16x128xf32>
    %c0_242 = arith.constant 0 : index
    %c0_243 = arith.constant 0 : index
    %938 = vector.load %arg27[%c0_242, %c0_243] : memref<16x128xf32, #tpu.memory_space<vmem>>, vector<16x128xf32>
    %939 = vector.extract_strided_slice %937 {offsets = [0, 0], sizes = [8, 128], strides = [1, 1]} : vector<16x128xf32> to vector<8x128xf32>
    %cst_244 = arith.constant dense<0.000000e+00> : vector<16x128xf32>
    %940 = tpu.matmul %476, %939, %cst_244 {dimension_numbers = #tpu.dot_dimension_numbers<[1], [0], [0], [1], [0, 0, 1, 1], [], []>} : vector<16x8xf32>, vector<8x128xf32>, vector<16x128xf32> -> vector<16x128xf32>
    %941 = vector.extract_strided_slice %937 {offsets = [8, 0], sizes = [8, 128], strides = [1, 1]} : vector<16x128xf32> to vector<8x128xf32>
    %cst_245 = arith.constant dense<0.000000e+00> : vector<16x128xf32>
    %942 = tpu.matmul %1, %941, %cst_245 {dimension_numbers = #tpu.dot_dimension_numbers<[1], [0], [0], [1], [0, 0, 1, 1], [], []>} : vector<16x8xf32>, vector<8x128xf32>, vector<16x128xf32> -> vector<16x128xf32>
    %943 = arith.addf %940, %942 : vector<16x128xf32>
    %c0_246 = arith.constant 0 : index
    %c0_247 = arith.constant 0 : index
    %944 = vector.load %arg26[%c0_246, %c0_247] : memref<1x128xf32, #tpu.memory_space<vmem>>, vector<1x128xf32>
    %945 = vector.broadcast %944 : vector<1x128xf32> to vector<16x128xf32>
    %946 = arith.addf %943, %945 : vector<16x128xf32>
    %947 = vector.extract_strided_slice %938 {offsets = [0, 0], sizes = [8, 128], strides = [1, 1]} : vector<16x128xf32> to vector<8x128xf32>
    %cst_248 = arith.constant dense<0.000000e+00> : vector<16x128xf32>
    %948 = tpu.matmul %476, %947, %cst_248 {dimension_numbers = #tpu.dot_dimension_numbers<[1], [0], [0], [1], [0, 0, 1, 1], [], []>} : vector<16x8xf32>, vector<8x128xf32>, vector<16x128xf32> -> vector<16x128xf32>
    %949 = vector.extract_strided_slice %938 {offsets = [8, 0], sizes = [8, 128], strides = [1, 1]} : vector<16x128xf32> to vector<8x128xf32>
    %cst_249 = arith.constant dense<0.000000e+00> : vector<16x128xf32>
    %950 = tpu.matmul %1, %949, %cst_249 {dimension_numbers = #tpu.dot_dimension_numbers<[1], [0], [0], [1], [0, 0, 1, 1], [], []>} : vector<16x8xf32>, vector<8x128xf32>, vector<16x128xf32> -> vector<16x128xf32>
    %951 = arith.addf %948, %950 : vector<16x128xf32>
    %c0_250 = arith.constant 0 : index
    %c0_251 = arith.constant 0 : index
    %952 = vector.load %arg29[%c0_250, %c0_251] : memref<1x128xf32, #tpu.memory_space<vmem>>, vector<1x128xf32>
    %953 = vector.broadcast %952 : vector<1x128xf32> to vector<16x128xf32>
    %954 = arith.addf %951, %953 : vector<16x128xf32>
    %c0_252 = arith.constant 0 : index
    %c0_253 = arith.constant 0 : index
    %955 = vector.load %arg25[%c0_252, %c0_253] : memref<32x128xf32, #tpu.memory_space<vmem>>, vector<32x128xf32>
    %956 = vector.extract_strided_slice %946 {offsets = [0, 0], sizes = [2, 128], strides = [1, 1]} : vector<16x128xf32> to vector<2x128xf32>
    %957 = arith.negf %956 : vector<2x128xf32>
    %958 = math.exp %957 : vector<2x128xf32>
    %cst_254 = arith.constant 1.000000e+00 : f32
    %959 = vector.broadcast %cst_254 : f32 to vector<2x128xf32>
    %960 = arith.addf %959, %958 : vector<2x128xf32>
    %961 = arith.divf %959, %960 : vector<2x128xf32>
    %962 = math.tanh %956 : vector<2x128xf32>
    %963 = vector.extract_strided_slice %961 {offsets = [0, 0], sizes = [2, 32], strides = [1, 1]} : vector<2x128xf32> to vector<2x32xf32>
    %964 = vector.extract_strided_slice %962 {offsets = [0, 64], sizes = [2, 32], strides = [1, 1]} : vector<2x128xf32> to vector<2x32xf32>
    %965 = arith.mulf %963, %964 : vector<2x32xf32>
    %966 = vector.extract_strided_slice %961 {offsets = [0, 96], sizes = [2, 32], strides = [1, 1]} : vector<2x128xf32> to vector<2x32xf32>
    %967 = math.tanh %965 : vector<2x32xf32>
    %968 = arith.mulf %966, %967 : vector<2x32xf32>
    %c0_255 = arith.constant 0 : index
    %c0_256 = arith.constant 0 : index
    %969 = vector.load %arg47[%c0_255, %c0_256] : memref<16x64xf32, #tpu.memory_space<vmem>>, vector<2x32xf32>
    tpu.vector_store %arg47[%c0_255, %c0_256], %968 {strides = array<i32>} : memref<16x64xf32, #tpu.memory_space<vmem>>, vector<2x32xf32>,
    %970 = vector.extract_strided_slice %946 {offsets = [2, 0], sizes = [2, 128], strides = [1, 1]} : vector<16x128xf32> to vector<2x128xf32>
    %cst_257 = arith.constant dense<0.000000e+00> : vector<2x128xf32>
    %971 = tpu.matmul %968, %955, %cst_257 {dimension_numbers = #tpu.dot_dimension_numbers<[1], [0], [0], [1], [0, 0, 1, 1], [], []>} : vector<2x32xf32>, vector<32x128xf32>, vector<2x128xf32> -> vector<2x128xf32>
    %972 = arith.addf %970, %971 : vector<2x128xf32>
    %973 = arith.negf %972 : vector<2x128xf32>
    %974 = math.exp %973 : vector<2x128xf32>
    %cst_258 = arith.constant 1.000000e+00 : f32
    %975 = vector.broadcast %cst_258 : f32 to vector<2x128xf32>
    %976 = arith.addf %975, %974 : vector<2x128xf32>
    %977 = arith.divf %975, %976 : vector<2x128xf32>
    %978 = math.tanh %972 : vector<2x128xf32>
    %979 = vector.extract_strided_slice %977 {offsets = [0, 0], sizes = [2, 32], strides = [1, 1]} : vector<2x128xf32> to vector<2x32xf32>
    %980 = vector.extract_strided_slice %978 {offsets = [0, 64], sizes = [2, 32], strides = [1, 1]} : vector<2x128xf32> to vector<2x32xf32>
    %981 = arith.mulf %979, %980 : vector<2x32xf32>
    %982 = vector.extract_strided_slice %977 {offsets = [0, 32], sizes = [2, 32], strides = [1, 1]} : vector<2x128xf32> to vector<2x32xf32>
    %983 = arith.mulf %982, %965 : vector<2x32xf32>
    %984 = arith.addf %983, %981 : vector<2x32xf32>
    %985 = vector.extract_strided_slice %977 {offsets = [0, 96], sizes = [2, 32], strides = [1, 1]} : vector<2x128xf32> to vector<2x32xf32>
    %986 = math.tanh %984 : vector<2x32xf32>
    %987 = arith.mulf %985, %986 : vector<2x32xf32>
    %c2_259 = arith.constant 2 : index
    %c0_260 = arith.constant 0 : index
    %988 = vector.load %arg47[%c2_259, %c0_260] : memref<16x64xf32, #tpu.memory_space<vmem>>, vector<2x32xf32>
    tpu.vector_store %arg47[%c2_259, %c0_260], %987 {strides = array<i32>} : memref<16x64xf32, #tpu.memory_space<vmem>>, vector<2x32xf32>,
    %989 = vector.extract_strided_slice %946 {offsets = [4, 0], sizes = [2, 128], strides = [1, 1]} : vector<16x128xf32> to vector<2x128xf32>
    %cst_261 = arith.constant dense<0.000000e+00> : vector<2x128xf32>
    %990 = tpu.matmul %987, %955, %cst_261 {dimension_numbers = #tpu.dot_dimension_numbers<[1], [0], [0], [1], [0, 0, 1, 1], [], []>} : vector<2x32xf32>, vector<32x128xf32>, vector<2x128xf32> -> vector<2x128xf32>
    %991 = arith.addf %989, %990 : vector<2x128xf32>
    %992 = arith.negf %991 : vector<2x128xf32>
    %993 = math.exp %992 : vector<2x128xf32>
    %cst_262 = arith.constant 1.000000e+00 : f32
    %994 = vector.broadcast %cst_262 : f32 to vector<2x128xf32>
    %995 = arith.addf %994, %993 : vector<2x128xf32>
    %996 = arith.divf %994, %995 : vector<2x128xf32>
    %997 = math.tanh %991 : vector<2x128xf32>
    %998 = vector.extract_strided_slice %996 {offsets = [0, 0], sizes = [2, 32], strides = [1, 1]} : vector<2x128xf32> to vector<2x32xf32>
    %999 = vector.extract_strided_slice %997 {offsets = [0, 64], sizes = [2, 32], strides = [1, 1]} : vector<2x128xf32> to vector<2x32xf32>
    %1000 = arith.mulf %998, %999 : vector<2x32xf32>
    %1001 = vector.extract_strided_slice %996 {offsets = [0, 32], sizes = [2, 32], strides = [1, 1]} : vector<2x128xf32> to vector<2x32xf32>
    %1002 = arith.mulf %1001, %984 : vector<2x32xf32>
    %1003 = arith.addf %1002, %1000 : vector<2x32xf32>
    %1004 = vector.extract_strided_slice %996 {offsets = [0, 96], sizes = [2, 32], strides = [1, 1]} : vector<2x128xf32> to vector<2x32xf32>
    %1005 = math.tanh %1003 : vector<2x32xf32>
    %1006 = arith.mulf %1004, %1005 : vector<2x32xf32>
    %c4_263 = arith.constant 4 : index
    %c0_264 = arith.constant 0 : index
    %1007 = vector.load %arg47[%c4_263, %c0_264] : memref<16x64xf32, #tpu.memory_space<vmem>>, vector<2x32xf32>
    tpu.vector_store %arg47[%c4_263, %c0_264], %1006 {strides = array<i32>} : memref<16x64xf32, #tpu.memory_space<vmem>>, vector<2x32xf32>,
    %1008 = vector.extract_strided_slice %946 {offsets = [6, 0], sizes = [2, 128], strides = [1, 1]} : vector<16x128xf32> to vector<2x128xf32>
    %cst_265 = arith.constant dense<0.000000e+00> : vector<2x128xf32>
    %1009 = tpu.matmul %1006, %955, %cst_265 {dimension_numbers = #tpu.dot_dimension_numbers<[1], [0], [0], [1], [0, 0, 1, 1], [], []>} : vector<2x32xf32>, vector<32x128xf32>, vector<2x128xf32> -> vector<2x128xf32>
    %1010 = arith.addf %1008, %1009 : vector<2x128xf32>
    %1011 = arith.negf %1010 : vector<2x128xf32>
    %1012 = math.exp %1011 : vector<2x128xf32>
    %cst_266 = arith.constant 1.000000e+00 : f32
    %1013 = vector.broadcast %cst_266 : f32 to vector<2x128xf32>
    %1014 = arith.addf %1013, %1012 : vector<2x128xf32>
    %1015 = arith.divf %1013, %1014 : vector<2x128xf32>
    %1016 = math.tanh %1010 : vector<2x128xf32>
    %1017 = vector.extract_strided_slice %1015 {offsets = [0, 0], sizes = [2, 32], strides = [1, 1]} : vector<2x128xf32> to vector<2x32xf32>
    %1018 = vector.extract_strided_slice %1016 {offsets = [0, 64], sizes = [2, 32], strides = [1, 1]} : vector<2x128xf32> to vector<2x32xf32>
    %1019 = arith.mulf %1017, %1018 : vector<2x32xf32>
    %1020 = vector.extract_strided_slice %1015 {offsets = [0, 32], sizes = [2, 32], strides = [1, 1]} : vector<2x128xf32> to vector<2x32xf32>
    %1021 = arith.mulf %1020, %1003 : vector<2x32xf32>
    %1022 = arith.addf %1021, %1019 : vector<2x32xf32>
    %1023 = vector.extract_strided_slice %1015 {offsets = [0, 96], sizes = [2, 32], strides = [1, 1]} : vector<2x128xf32> to vector<2x32xf32>
    %1024 = math.tanh %1022 : vector<2x32xf32>
    %1025 = arith.mulf %1023, %1024 : vector<2x32xf32>
    %c6_267 = arith.constant 6 : index
    %c0_268 = arith.constant 0 : index
    %1026 = vector.load %arg47[%c6_267, %c0_268] : memref<16x64xf32, #tpu.memory_space<vmem>>, vector<2x32xf32>
    tpu.vector_store %arg47[%c6_267, %c0_268], %1025 {strides = array<i32>} : memref<16x64xf32, #tpu.memory_space<vmem>>, vector<2x32xf32>,
    %1027 = vector.extract_strided_slice %946 {offsets = [8, 0], sizes = [2, 128], strides = [1, 1]} : vector<16x128xf32> to vector<2x128xf32>
    %cst_269 = arith.constant dense<0.000000e+00> : vector<2x128xf32>
    %1028 = tpu.matmul %1025, %955, %cst_269 {dimension_numbers = #tpu.dot_dimension_numbers<[1], [0], [0], [1], [0, 0, 1, 1], [], []>} : vector<2x32xf32>, vector<32x128xf32>, vector<2x128xf32> -> vector<2x128xf32>
    %1029 = arith.addf %1027, %1028 : vector<2x128xf32>
    %1030 = arith.negf %1029 : vector<2x128xf32>
    %1031 = math.exp %1030 : vector<2x128xf32>
    %cst_270 = arith.constant 1.000000e+00 : f32
    %1032 = vector.broadcast %cst_270 : f32 to vector<2x128xf32>
    %1033 = arith.addf %1032, %1031 : vector<2x128xf32>
    %1034 = arith.divf %1032, %1033 : vector<2x128xf32>
    %1035 = math.tanh %1029 : vector<2x128xf32>
    %1036 = vector.extract_strided_slice %1034 {offsets = [0, 0], sizes = [2, 32], strides = [1, 1]} : vector<2x128xf32> to vector<2x32xf32>
    %1037 = vector.extract_strided_slice %1035 {offsets = [0, 64], sizes = [2, 32], strides = [1, 1]} : vector<2x128xf32> to vector<2x32xf32>
    %1038 = arith.mulf %1036, %1037 : vector<2x32xf32>
    %1039 = vector.extract_strided_slice %1034 {offsets = [0, 32], sizes = [2, 32], strides = [1, 1]} : vector<2x128xf32> to vector<2x32xf32>
    %1040 = arith.mulf %1039, %1022 : vector<2x32xf32>
    %1041 = arith.addf %1040, %1038 : vector<2x32xf32>
    %1042 = vector.extract_strided_slice %1034 {offsets = [0, 96], sizes = [2, 32], strides = [1, 1]} : vector<2x128xf32> to vector<2x32xf32>
    %1043 = math.tanh %1041 : vector<2x32xf32>
    %1044 = arith.mulf %1042, %1043 : vector<2x32xf32>
    %c8_271 = arith.constant 8 : index
    %c0_272 = arith.constant 0 : index
    %1045 = vector.load %arg47[%c8_271, %c0_272] : memref<16x64xf32, #tpu.memory_space<vmem>>, vector<2x32xf32>
    tpu.vector_store %arg47[%c8_271, %c0_272], %1044 {strides = array<i32>} : memref<16x64xf32, #tpu.memory_space<vmem>>, vector<2x32xf32>,
    %1046 = vector.extract_strided_slice %946 {offsets = [10, 0], sizes = [2, 128], strides = [1, 1]} : vector<16x128xf32> to vector<2x128xf32>
    %cst_273 = arith.constant dense<0.000000e+00> : vector<2x128xf32>
    %1047 = tpu.matmul %1044, %955, %cst_273 {dimension_numbers = #tpu.dot_dimension_numbers<[1], [0], [0], [1], [0, 0, 1, 1], [], []>} : vector<2x32xf32>, vector<32x128xf32>, vector<2x128xf32> -> vector<2x128xf32>
    %1048 = arith.addf %1046, %1047 : vector<2x128xf32>
    %1049 = arith.negf %1048 : vector<2x128xf32>
    %1050 = math.exp %1049 : vector<2x128xf32>
    %cst_274 = arith.constant 1.000000e+00 : f32
    %1051 = vector.broadcast %cst_274 : f32 to vector<2x128xf32>
    %1052 = arith.addf %1051, %1050 : vector<2x128xf32>
    %1053 = arith.divf %1051, %1052 : vector<2x128xf32>
    %1054 = math.tanh %1048 : vector<2x128xf32>
    %1055 = vector.extract_strided_slice %1053 {offsets = [0, 0], sizes = [2, 32], strides = [1, 1]} : vector<2x128xf32> to vector<2x32xf32>
    %1056 = vector.extract_strided_slice %1054 {offsets = [0, 64], sizes = [2, 32], strides = [1, 1]} : vector<2x128xf32> to vector<2x32xf32>
    %1057 = arith.mulf %1055, %1056 : vector<2x32xf32>
    %1058 = vector.extract_strided_slice %1053 {offsets = [0, 32], sizes = [2, 32], strides = [1, 1]} : vector<2x128xf32> to vector<2x32xf32>
    %1059 = arith.mulf %1058, %1041 : vector<2x32xf32>
    %1060 = arith.addf %1059, %1057 : vector<2x32xf32>
    %1061 = vector.extract_strided_slice %1053 {offsets = [0, 96], sizes = [2, 32], strides = [1, 1]} : vector<2x128xf32> to vector<2x32xf32>
    %1062 = math.tanh %1060 : vector<2x32xf32>
    %1063 = arith.mulf %1061, %1062 : vector<2x32xf32>
    %c10_275 = arith.constant 10 : index
    %c0_276 = arith.constant 0 : index
    %1064 = vector.load %arg47[%c10_275, %c0_276] : memref<16x64xf32, #tpu.memory_space<vmem>>, vector<2x32xf32>
    tpu.vector_store %arg47[%c10_275, %c0_276], %1063 {strides = array<i32>} : memref<16x64xf32, #tpu.memory_space<vmem>>, vector<2x32xf32>,
    %1065 = vector.extract_strided_slice %946 {offsets = [12, 0], sizes = [2, 128], strides = [1, 1]} : vector<16x128xf32> to vector<2x128xf32>
    %cst_277 = arith.constant dense<0.000000e+00> : vector<2x128xf32>
    %1066 = tpu.matmul %1063, %955, %cst_277 {dimension_numbers = #tpu.dot_dimension_numbers<[1], [0], [0], [1], [0, 0, 1, 1], [], []>} : vector<2x32xf32>, vector<32x128xf32>, vector<2x128xf32> -> vector<2x128xf32>
    %1067 = arith.addf %1065, %1066 : vector<2x128xf32>
    %1068 = arith.negf %1067 : vector<2x128xf32>
    %1069 = math.exp %1068 : vector<2x128xf32>
    %cst_278 = arith.constant 1.000000e+00 : f32
    %1070 = vector.broadcast %cst_278 : f32 to vector<2x128xf32>
    %1071 = arith.addf %1070, %1069 : vector<2x128xf32>
    %1072 = arith.divf %1070, %1071 : vector<2x128xf32>
    %1073 = math.tanh %1067 : vector<2x128xf32>
    %1074 = vector.extract_strided_slice %1072 {offsets = [0, 0], sizes = [2, 32], strides = [1, 1]} : vector<2x128xf32> to vector<2x32xf32>
    %1075 = vector.extract_strided_slice %1073 {offsets = [0, 64], sizes = [2, 32], strides = [1, 1]} : vector<2x128xf32> to vector<2x32xf32>
    %1076 = arith.mulf %1074, %1075 : vector<2x32xf32>
    %1077 = vector.extract_strided_slice %1072 {offsets = [0, 32], sizes = [2, 32], strides = [1, 1]} : vector<2x128xf32> to vector<2x32xf32>
    %1078 = arith.mulf %1077, %1060 : vector<2x32xf32>
    %1079 = arith.addf %1078, %1076 : vector<2x32xf32>
    %1080 = vector.extract_strided_slice %1072 {offsets = [0, 96], sizes = [2, 32], strides = [1, 1]} : vector<2x128xf32> to vector<2x32xf32>
    %1081 = math.tanh %1079 : vector<2x32xf32>
    %1082 = arith.mulf %1080, %1081 : vector<2x32xf32>
    %c12_279 = arith.constant 12 : index
    %c0_280 = arith.constant 0 : index
    %1083 = vector.load %arg47[%c12_279, %c0_280] : memref<16x64xf32, #tpu.memory_space<vmem>>, vector<2x32xf32>
    tpu.vector_store %arg47[%c12_279, %c0_280], %1082 {strides = array<i32>} : memref<16x64xf32, #tpu.memory_space<vmem>>, vector<2x32xf32>,
    %1084 = vector.extract_strided_slice %946 {offsets = [14, 0], sizes = [2, 128], strides = [1, 1]} : vector<16x128xf32> to vector<2x128xf32>
    %cst_281 = arith.constant dense<0.000000e+00> : vector<2x128xf32>
    %1085 = tpu.matmul %1082, %955, %cst_281 {dimension_numbers = #tpu.dot_dimension_numbers<[1], [0], [0], [1], [0, 0, 1, 1], [], []>} : vector<2x32xf32>, vector<32x128xf32>, vector<2x128xf32> -> vector<2x128xf32>
    %1086 = arith.addf %1084, %1085 : vector<2x128xf32>
    %1087 = arith.negf %1086 : vector<2x128xf32>
    %1088 = math.exp %1087 : vector<2x128xf32>
    %cst_282 = arith.constant 1.000000e+00 : f32
    %1089 = vector.broadcast %cst_282 : f32 to vector<2x128xf32>
    %1090 = arith.addf %1089, %1088 : vector<2x128xf32>
    %1091 = arith.divf %1089, %1090 : vector<2x128xf32>
    %1092 = math.tanh %1086 : vector<2x128xf32>
    %1093 = vector.extract_strided_slice %1091 {offsets = [0, 0], sizes = [2, 32], strides = [1, 1]} : vector<2x128xf32> to vector<2x32xf32>
    %1094 = vector.extract_strided_slice %1092 {offsets = [0, 64], sizes = [2, 32], strides = [1, 1]} : vector<2x128xf32> to vector<2x32xf32>
    %1095 = arith.mulf %1093, %1094 : vector<2x32xf32>
    %1096 = vector.extract_strided_slice %1091 {offsets = [0, 32], sizes = [2, 32], strides = [1, 1]} : vector<2x128xf32> to vector<2x32xf32>
    %1097 = arith.mulf %1096, %1079 : vector<2x32xf32>
    %1098 = arith.addf %1097, %1095 : vector<2x32xf32>
    %1099 = vector.extract_strided_slice %1091 {offsets = [0, 96], sizes = [2, 32], strides = [1, 1]} : vector<2x128xf32> to vector<2x32xf32>
    %1100 = math.tanh %1098 : vector<2x32xf32>
    %1101 = arith.mulf %1099, %1100 : vector<2x32xf32>
    %c14_283 = arith.constant 14 : index
    %c0_284 = arith.constant 0 : index
    %1102 = vector.load %arg47[%c14_283, %c0_284] : memref<16x64xf32, #tpu.memory_space<vmem>>, vector<2x32xf32>
    tpu.vector_store %arg47[%c14_283, %c0_284], %1101 {strides = array<i32>} : memref<16x64xf32, #tpu.memory_space<vmem>>, vector<2x32xf32>,
    %c0_285 = arith.constant 0 : index
    %c0_286 = arith.constant 0 : index
    %1103 = vector.load %arg28[%c0_285, %c0_286] : memref<32x128xf32, #tpu.memory_space<vmem>>, vector<32x128xf32>
    %1104 = vector.extract_strided_slice %954 {offsets = [14, 0], sizes = [2, 128], strides = [1, 1]} : vector<16x128xf32> to vector<2x128xf32>
    %1105 = arith.negf %1104 : vector<2x128xf32>
    %1106 = math.exp %1105 : vector<2x128xf32>
    %cst_287 = arith.constant 1.000000e+00 : f32
    %1107 = vector.broadcast %cst_287 : f32 to vector<2x128xf32>
    %1108 = arith.addf %1107, %1106 : vector<2x128xf32>
    %1109 = arith.divf %1107, %1108 : vector<2x128xf32>
    %1110 = math.tanh %1104 : vector<2x128xf32>
    %1111 = vector.extract_strided_slice %1109 {offsets = [0, 0], sizes = [2, 32], strides = [1, 1]} : vector<2x128xf32> to vector<2x32xf32>
    %1112 = vector.extract_strided_slice %1110 {offsets = [0, 64], sizes = [2, 32], strides = [1, 1]} : vector<2x128xf32> to vector<2x32xf32>
    %1113 = arith.mulf %1111, %1112 : vector<2x32xf32>
    %1114 = vector.extract_strided_slice %1109 {offsets = [0, 96], sizes = [2, 32], strides = [1, 1]} : vector<2x128xf32> to vector<2x32xf32>
    %1115 = math.tanh %1113 : vector<2x32xf32>
    %1116 = arith.mulf %1114, %1115 : vector<2x32xf32>
    %c14_288 = arith.constant 14 : index
    %c32_289 = arith.constant 32 : index
    %1117 = vector.load %arg47[%c14_288, %c32_289] : memref<16x64xf32, #tpu.memory_space<vmem>>, vector<2x32xf32>
    tpu.vector_store %arg47[%c14_288, %c32_289], %1116 {strides = array<i32>} : memref<16x64xf32, #tpu.memory_space<vmem>>, vector<2x32xf32>,
    %1118 = vector.extract_strided_slice %954 {offsets = [12, 0], sizes = [2, 128], strides = [1, 1]} : vector<16x128xf32> to vector<2x128xf32>
    %cst_290 = arith.constant dense<0.000000e+00> : vector<2x128xf32>
    %1119 = tpu.matmul %1116, %1103, %cst_290 {dimension_numbers = #tpu.dot_dimension_numbers<[1], [0], [0], [1], [0, 0, 1, 1], [], []>} : vector<2x32xf32>, vector<32x128xf32>, vector<2x128xf32> -> vector<2x128xf32>
    %1120 = arith.addf %1118, %1119 : vector<2x128xf32>
    %1121 = arith.negf %1120 : vector<2x128xf32>
    %1122 = math.exp %1121 : vector<2x128xf32>
    %cst_291 = arith.constant 1.000000e+00 : f32
    %1123 = vector.broadcast %cst_291 : f32 to vector<2x128xf32>
    %1124 = arith.addf %1123, %1122 : vector<2x128xf32>
    %1125 = arith.divf %1123, %1124 : vector<2x128xf32>
    %1126 = math.tanh %1120 : vector<2x128xf32>
    %1127 = vector.extract_strided_slice %1125 {offsets = [0, 0], sizes = [2, 32], strides = [1, 1]} : vector<2x128xf32> to vector<2x32xf32>
    %1128 = vector.extract_strided_slice %1126 {offsets = [0, 64], sizes = [2, 32], strides = [1, 1]} : vector<2x128xf32> to vector<2x32xf32>
    %1129 = arith.mulf %1127, %1128 : vector<2x32xf32>
    %1130 = vector.extract_strided_slice %1125 {offsets = [0, 32], sizes = [2, 32], strides = [1, 1]} : vector<2x128xf32> to vector<2x32xf32>
    %1131 = arith.mulf %1130, %1113 : vector<2x32xf32>
    %1132 = arith.addf %1131, %1129 : vector<2x32xf32>
    %1133 = vector.extract_strided_slice %1125 {offsets = [0, 96], sizes = [2, 32], strides = [1, 1]} : vector<2x128xf32> to vector<2x32xf32>
    %1134 = math.tanh %1132 : vector<2x32xf32>
    %1135 = arith.mulf %1133, %1134 : vector<2x32xf32>
    %c12_292 = arith.constant 12 : index
    %c32_293 = arith.constant 32 : index
    %1136 = vector.load %arg47[%c12_292, %c32_293] : memref<16x64xf32, #tpu.memory_space<vmem>>, vector<2x32xf32>
    tpu.vector_store %arg47[%c12_292, %c32_293], %1135 {strides = array<i32>} : memref<16x64xf32, #tpu.memory_space<vmem>>, vector<2x32xf32>,
    %1137 = vector.extract_strided_slice %954 {offsets = [10, 0], sizes = [2, 128], strides = [1, 1]} : vector<16x128xf32> to vector<2x128xf32>
    %cst_294 = arith.constant dense<0.000000e+00> : vector<2x128xf32>
    %1138 = tpu.matmul %1135, %1103, %cst_294 {dimension_numbers = #tpu.dot_dimension_numbers<[1], [0], [0], [1], [0, 0, 1, 1], [], []>} : vector<2x32xf32>, vector<32x128xf32>, vector<2x128xf32> -> vector<2x128xf32>
    %1139 = arith.addf %1137, %1138 : vector<2x128xf32>
    %1140 = arith.negf %1139 : vector<2x128xf32>
    %1141 = math.exp %1140 : vector<2x128xf32>
    %cst_295 = arith.constant 1.000000e+00 : f32
    %1142 = vector.broadcast %cst_295 : f32 to vector<2x128xf32>
    %1143 = arith.addf %1142, %1141 : vector<2x128xf32>
    %1144 = arith.divf %1142, %1143 : vector<2x128xf32>
    %1145 = math.tanh %1139 : vector<2x128xf32>
    %1146 = vector.extract_strided_slice %1144 {offsets = [0, 0], sizes = [2, 32], strides = [1, 1]} : vector<2x128xf32> to vector<2x32xf32>
    %1147 = vector.extract_strided_slice %1145 {offsets = [0, 64], sizes = [2, 32], strides = [1, 1]} : vector<2x128xf32> to vector<2x32xf32>
    %1148 = arith.mulf %1146, %1147 : vector<2x32xf32>
    %1149 = vector.extract_strided_slice %1144 {offsets = [0, 32], sizes = [2, 32], strides = [1, 1]} : vector<2x128xf32> to vector<2x32xf32>
    %1150 = arith.mulf %1149, %1132 : vector<2x32xf32>
    %1151 = arith.addf %1150, %1148 : vector<2x32xf32>
    %1152 = vector.extract_strided_slice %1144 {offsets = [0, 96], sizes = [2, 32], strides = [1, 1]} : vector<2x128xf32> to vector<2x32xf32>
    %1153 = math.tanh %1151 : vector<2x32xf32>
    %1154 = arith.mulf %1152, %1153 : vector<2x32xf32>
    %c10_296 = arith.constant 10 : index
    %c32_297 = arith.constant 32 : index
    %1155 = vector.load %arg47[%c10_296, %c32_297] : memref<16x64xf32, #tpu.memory_space<vmem>>, vector<2x32xf32>
    tpu.vector_store %arg47[%c10_296, %c32_297], %1154 {strides = array<i32>} : memref<16x64xf32, #tpu.memory_space<vmem>>, vector<2x32xf32>,
    %1156 = vector.extract_strided_slice %954 {offsets = [8, 0], sizes = [2, 128], strides = [1, 1]} : vector<16x128xf32> to vector<2x128xf32>
    %cst_298 = arith.constant dense<0.000000e+00> : vector<2x128xf32>
    %1157 = tpu.matmul %1154, %1103, %cst_298 {dimension_numbers = #tpu.dot_dimension_numbers<[1], [0], [0], [1], [0, 0, 1, 1], [], []>} : vector<2x32xf32>, vector<32x128xf32>, vector<2x128xf32> -> vector<2x128xf32>
    %1158 = arith.addf %1156, %1157 : vector<2x128xf32>
    %1159 = arith.negf %1158 : vector<2x128xf32>
    %1160 = math.exp %1159 : vector<2x128xf32>
    %cst_299 = arith.constant 1.000000e+00 : f32
    %1161 = vector.broadcast %cst_299 : f32 to vector<2x128xf32>
    %1162 = arith.addf %1161, %1160 : vector<2x128xf32>
    %1163 = arith.divf %1161, %1162 : vector<2x128xf32>
    %1164 = math.tanh %1158 : vector<2x128xf32>
    %1165 = vector.extract_strided_slice %1163 {offsets = [0, 0], sizes = [2, 32], strides = [1, 1]} : vector<2x128xf32> to vector<2x32xf32>
    %1166 = vector.extract_strided_slice %1164 {offsets = [0, 64], sizes = [2, 32], strides = [1, 1]} : vector<2x128xf32> to vector<2x32xf32>
    %1167 = arith.mulf %1165, %1166 : vector<2x32xf32>
    %1168 = vector.extract_strided_slice %1163 {offsets = [0, 32], sizes = [2, 32], strides = [1, 1]} : vector<2x128xf32> to vector<2x32xf32>
    %1169 = arith.mulf %1168, %1151 : vector<2x32xf32>
    %1170 = arith.addf %1169, %1167 : vector<2x32xf32>
    %1171 = vector.extract_strided_slice %1163 {offsets = [0, 96], sizes = [2, 32], strides = [1, 1]} : vector<2x128xf32> to vector<2x32xf32>
    %1172 = math.tanh %1170 : vector<2x32xf32>
    %1173 = arith.mulf %1171, %1172 : vector<2x32xf32>
    %c8_300 = arith.constant 8 : index
    %c32_301 = arith.constant 32 : index
    %1174 = vector.load %arg47[%c8_300, %c32_301] : memref<16x64xf32, #tpu.memory_space<vmem>>, vector<2x32xf32>
    tpu.vector_store %arg47[%c8_300, %c32_301], %1173 {strides = array<i32>} : memref<16x64xf32, #tpu.memory_space<vmem>>, vector<2x32xf32>,
    %1175 = vector.extract_strided_slice %954 {offsets = [6, 0], sizes = [2, 128], strides = [1, 1]} : vector<16x128xf32> to vector<2x128xf32>
    %cst_302 = arith.constant dense<0.000000e+00> : vector<2x128xf32>
    %1176 = tpu.matmul %1173, %1103, %cst_302 {dimension_numbers = #tpu.dot_dimension_numbers<[1], [0], [0], [1], [0, 0, 1, 1], [], []>} : vector<2x32xf32>, vector<32x128xf32>, vector<2x128xf32> -> vector<2x128xf32>
    %1177 = arith.addf %1175, %1176 : vector<2x128xf32>
    %1178 = arith.negf %1177 : vector<2x128xf32>
    %1179 = math.exp %1178 : vector<2x128xf32>
    %cst_303 = arith.constant 1.000000e+00 : f32
    %1180 = vector.broadcast %cst_303 : f32 to vector<2x128xf32>
    %1181 = arith.addf %1180, %1179 : vector<2x128xf32>
    %1182 = arith.divf %1180, %1181 : vector<2x128xf32>
    %1183 = math.tanh %1177 : vector<2x128xf32>
    %1184 = vector.extract_strided_slice %1182 {offsets = [0, 0], sizes = [2, 32], strides = [1, 1]} : vector<2x128xf32> to vector<2x32xf32>
    %1185 = vector.extract_strided_slice %1183 {offsets = [0, 64], sizes = [2, 32], strides = [1, 1]} : vector<2x128xf32> to vector<2x32xf32>
    %1186 = arith.mulf %1184, %1185 : vector<2x32xf32>
    %1187 = vector.extract_strided_slice %1182 {offsets = [0, 32], sizes = [2, 32], strides = [1, 1]} : vector<2x128xf32> to vector<2x32xf32>
    %1188 = arith.mulf %1187, %1170 : vector<2x32xf32>
    %1189 = arith.addf %1188, %1186 : vector<2x32xf32>
    %1190 = vector.extract_strided_slice %1182 {offsets = [0, 96], sizes = [2, 32], strides = [1, 1]} : vector<2x128xf32> to vector<2x32xf32>
    %1191 = math.tanh %1189 : vector<2x32xf32>
    %1192 = arith.mulf %1190, %1191 : vector<2x32xf32>
    %c6_304 = arith.constant 6 : index
    %c32_305 = arith.constant 32 : index
    %1193 = vector.load %arg47[%c6_304, %c32_305] : memref<16x64xf32, #tpu.memory_space<vmem>>, vector<2x32xf32>
    tpu.vector_store %arg47[%c6_304, %c32_305], %1192 {strides = array<i32>} : memref<16x64xf32, #tpu.memory_space<vmem>>, vector<2x32xf32>,
    %1194 = vector.extract_strided_slice %954 {offsets = [4, 0], sizes = [2, 128], strides = [1, 1]} : vector<16x128xf32> to vector<2x128xf32>
    %cst_306 = arith.constant dense<0.000000e+00> : vector<2x128xf32>
    %1195 = tpu.matmul %1192, %1103, %cst_306 {dimension_numbers = #tpu.dot_dimension_numbers<[1], [0], [0], [1], [0, 0, 1, 1], [], []>} : vector<2x32xf32>, vector<32x128xf32>, vector<2x128xf32> -> vector<2x128xf32>
    %1196 = arith.addf %1194, %1195 : vector<2x128xf32>
    %1197 = arith.negf %1196 : vector<2x128xf32>
    %1198 = math.exp %1197 : vector<2x128xf32>
    %cst_307 = arith.constant 1.000000e+00 : f32
    %1199 = vector.broadcast %cst_307 : f32 to vector<2x128xf32>
    %1200 = arith.addf %1199, %1198 : vector<2x128xf32>
    %1201 = arith.divf %1199, %1200 : vector<2x128xf32>
    %1202 = math.tanh %1196 : vector<2x128xf32>
    %1203 = vector.extract_strided_slice %1201 {offsets = [0, 0], sizes = [2, 32], strides = [1, 1]} : vector<2x128xf32> to vector<2x32xf32>
    %1204 = vector.extract_strided_slice %1202 {offsets = [0, 64], sizes = [2, 32], strides = [1, 1]} : vector<2x128xf32> to vector<2x32xf32>
    %1205 = arith.mulf %1203, %1204 : vector<2x32xf32>
    %1206 = vector.extract_strided_slice %1201 {offsets = [0, 32], sizes = [2, 32], strides = [1, 1]} : vector<2x128xf32> to vector<2x32xf32>
    %1207 = arith.mulf %1206, %1189 : vector<2x32xf32>
    %1208 = arith.addf %1207, %1205 : vector<2x32xf32>
    %1209 = vector.extract_strided_slice %1201 {offsets = [0, 96], sizes = [2, 32], strides = [1, 1]} : vector<2x128xf32> to vector<2x32xf32>
    %1210 = math.tanh %1208 : vector<2x32xf32>
    %1211 = arith.mulf %1209, %1210 : vector<2x32xf32>
    %c4_308 = arith.constant 4 : index
    %c32_309 = arith.constant 32 : index
    %1212 = vector.load %arg47[%c4_308, %c32_309] : memref<16x64xf32, #tpu.memory_space<vmem>>, vector<2x32xf32>
    tpu.vector_store %arg47[%c4_308, %c32_309], %1211 {strides = array<i32>} : memref<16x64xf32, #tpu.memory_space<vmem>>, vector<2x32xf32>,
    %1213 = vector.extract_strided_slice %954 {offsets = [2, 0], sizes = [2, 128], strides = [1, 1]} : vector<16x128xf32> to vector<2x128xf32>
    %cst_310 = arith.constant dense<0.000000e+00> : vector<2x128xf32>
    %1214 = tpu.matmul %1211, %1103, %cst_310 {dimension_numbers = #tpu.dot_dimension_numbers<[1], [0], [0], [1], [0, 0, 1, 1], [], []>} : vector<2x32xf32>, vector<32x128xf32>, vector<2x128xf32> -> vector<2x128xf32>
    %1215 = arith.addf %1213, %1214 : vector<2x128xf32>
    %1216 = arith.negf %1215 : vector<2x128xf32>
    %1217 = math.exp %1216 : vector<2x128xf32>
    %cst_311 = arith.constant 1.000000e+00 : f32
    %1218 = vector.broadcast %cst_311 : f32 to vector<2x128xf32>
    %1219 = arith.addf %1218, %1217 : vector<2x128xf32>
    %1220 = arith.divf %1218, %1219 : vector<2x128xf32>
    %1221 = math.tanh %1215 : vector<2x128xf32>
    %1222 = vector.extract_strided_slice %1220 {offsets = [0, 0], sizes = [2, 32], strides = [1, 1]} : vector<2x128xf32> to vector<2x32xf32>
    %1223 = vector.extract_strided_slice %1221 {offsets = [0, 64], sizes = [2, 32], strides = [1, 1]} : vector<2x128xf32> to vector<2x32xf32>
    %1224 = arith.mulf %1222, %1223 : vector<2x32xf32>
    %1225 = vector.extract_strided_slice %1220 {offsets = [0, 32], sizes = [2, 32], strides = [1, 1]} : vector<2x128xf32> to vector<2x32xf32>
    %1226 = arith.mulf %1225, %1208 : vector<2x32xf32>
    %1227 = arith.addf %1226, %1224 : vector<2x32xf32>
    %1228 = vector.extract_strided_slice %1220 {offsets = [0, 96], sizes = [2, 32], strides = [1, 1]} : vector<2x128xf32> to vector<2x32xf32>
    %1229 = math.tanh %1227 : vector<2x32xf32>
    %1230 = arith.mulf %1228, %1229 : vector<2x32xf32>
    %c2_312 = arith.constant 2 : index
    %c32_313 = arith.constant 32 : index
    %1231 = vector.load %arg47[%c2_312, %c32_313] : memref<16x64xf32, #tpu.memory_space<vmem>>, vector<2x32xf32>
    tpu.vector_store %arg47[%c2_312, %c32_313], %1230 {strides = array<i32>} : memref<16x64xf32, #tpu.memory_space<vmem>>, vector<2x32xf32>,
    %1232 = vector.extract_strided_slice %954 {offsets = [0, 0], sizes = [2, 128], strides = [1, 1]} : vector<16x128xf32> to vector<2x128xf32>
    %cst_314 = arith.constant dense<0.000000e+00> : vector<2x128xf32>
    %1233 = tpu.matmul %1230, %1103, %cst_314 {dimension_numbers = #tpu.dot_dimension_numbers<[1], [0], [0], [1], [0, 0, 1, 1], [], []>} : vector<2x32xf32>, vector<32x128xf32>, vector<2x128xf32> -> vector<2x128xf32>
    %1234 = arith.addf %1232, %1233 : vector<2x128xf32>
    %1235 = arith.negf %1234 : vector<2x128xf32>
    %1236 = math.exp %1235 : vector<2x128xf32>
    %cst_315 = arith.constant 1.000000e+00 : f32
    %1237 = vector.broadcast %cst_315 : f32 to vector<2x128xf32>
    %1238 = arith.addf %1237, %1236 : vector<2x128xf32>
    %1239 = arith.divf %1237, %1238 : vector<2x128xf32>
    %1240 = math.tanh %1234 : vector<2x128xf32>
    %1241 = vector.extract_strided_slice %1239 {offsets = [0, 0], sizes = [2, 32], strides = [1, 1]} : vector<2x128xf32> to vector<2x32xf32>
    %1242 = vector.extract_strided_slice %1240 {offsets = [0, 64], sizes = [2, 32], strides = [1, 1]} : vector<2x128xf32> to vector<2x32xf32>
    %1243 = arith.mulf %1241, %1242 : vector<2x32xf32>
    %1244 = vector.extract_strided_slice %1239 {offsets = [0, 32], sizes = [2, 32], strides = [1, 1]} : vector<2x128xf32> to vector<2x32xf32>
    %1245 = arith.mulf %1244, %1227 : vector<2x32xf32>
    %1246 = arith.addf %1245, %1243 : vector<2x32xf32>
    %1247 = vector.extract_strided_slice %1239 {offsets = [0, 96], sizes = [2, 32], strides = [1, 1]} : vector<2x128xf32> to vector<2x32xf32>
    %1248 = math.tanh %1246 : vector<2x32xf32>
    %1249 = arith.mulf %1247, %1248 : vector<2x32xf32>
    %c0_316 = arith.constant 0 : index
    %c32_317 = arith.constant 32 : index
    %1250 = vector.load %arg47[%c0_316, %c32_317] : memref<16x64xf32, #tpu.memory_space<vmem>>, vector<2x32xf32>
    tpu.vector_store %arg47[%c0_316, %c32_317], %1249 {strides = array<i32>} : memref<16x64xf32, #tpu.memory_space<vmem>>, vector<2x32xf32>,
    %c0_318 = arith.constant 0 : index
    %c0_319 = arith.constant 0 : index
    %1251 = vector.load %arg47[%c0_318, %c0_319] : memref<16x64xf32, #tpu.memory_space<vmem>>, vector<16x64xf32>
    %c0_320 = arith.constant 0 : index
    %c0_321 = arith.constant 0 : index
    %1252 = vector.load %arg30[%c0_320, %c0_321] : memref<64x128xf32, #tpu.memory_space<vmem>>, vector<64x128xf32>
    %cst_322 = arith.constant dense<0.000000e+00> : vector<16x128xf32>
    %1253 = tpu.matmul %1251, %1252, %cst_322 {dimension_numbers = #tpu.dot_dimension_numbers<[1], [0], [0], [1], [0, 0, 1, 1], [], []>} : vector<16x64xf32>, vector<64x128xf32>, vector<16x128xf32> -> vector<16x128xf32>
    %c0_323 = arith.constant 0 : index
    %c0_324 = arith.constant 0 : index
    %1254 = vector.load %arg32[%c0_323, %c0_324] : memref<1x128xf32, #tpu.memory_space<vmem>>, vector<1x128xf32>
    %1255 = vector.broadcast %1254 : vector<1x128xf32> to vector<16x128xf32>
    %1256 = arith.addf %1253, %1255 : vector<16x128xf32>
    %c0_325 = arith.constant 0 : index
    %c0_326 = arith.constant 0 : index
    %1257 = vector.load %arg31[%c0_325, %c0_326] : memref<32x128xf32, #tpu.memory_space<vmem>>, vector<32x128xf32>
    %1258 = vector.extract_strided_slice %1256 {offsets = [0, 0], sizes = [2, 128], strides = [1, 1]} : vector<16x128xf32> to vector<2x128xf32>
    %1259 = arith.negf %1258 : vector<2x128xf32>
    %1260 = math.exp %1259 : vector<2x128xf32>
    %cst_327 = arith.constant 1.000000e+00 : f32
    %1261 = vector.broadcast %cst_327 : f32 to vector<2x128xf32>
    %1262 = arith.addf %1261, %1260 : vector<2x128xf32>
    %1263 = arith.divf %1261, %1262 : vector<2x128xf32>
    %1264 = math.tanh %1258 : vector<2x128xf32>
    %1265 = vector.extract_strided_slice %1263 {offsets = [0, 0], sizes = [2, 32], strides = [1, 1]} : vector<2x128xf32> to vector<2x32xf32>
    %1266 = vector.extract_strided_slice %1264 {offsets = [0, 64], sizes = [2, 32], strides = [1, 1]} : vector<2x128xf32> to vector<2x32xf32>
    %1267 = arith.mulf %1265, %1266 : vector<2x32xf32>
    %1268 = vector.extract_strided_slice %1263 {offsets = [0, 96], sizes = [2, 32], strides = [1, 1]} : vector<2x128xf32> to vector<2x32xf32>
    %1269 = math.tanh %1267 : vector<2x32xf32>
    %1270 = arith.mulf %1268, %1269 : vector<2x32xf32>
    %1271 = vector.extract_strided_slice %1256 {offsets = [2, 0], sizes = [2, 128], strides = [1, 1]} : vector<16x128xf32> to vector<2x128xf32>
    %cst_328 = arith.constant dense<0.000000e+00> : vector<2x128xf32>
    %1272 = tpu.matmul %1270, %1257, %cst_328 {dimension_numbers = #tpu.dot_dimension_numbers<[1], [0], [0], [1], [0, 0, 1, 1], [], []>} : vector<2x32xf32>, vector<32x128xf32>, vector<2x128xf32> -> vector<2x128xf32>
    %1273 = arith.addf %1271, %1272 : vector<2x128xf32>
    %1274 = arith.negf %1273 : vector<2x128xf32>
    %1275 = math.exp %1274 : vector<2x128xf32>
    %cst_329 = arith.constant 1.000000e+00 : f32
    %1276 = vector.broadcast %cst_329 : f32 to vector<2x128xf32>
    %1277 = arith.addf %1276, %1275 : vector<2x128xf32>
    %1278 = arith.divf %1276, %1277 : vector<2x128xf32>
    %1279 = math.tanh %1273 : vector<2x128xf32>
    %1280 = vector.extract_strided_slice %1278 {offsets = [0, 0], sizes = [2, 32], strides = [1, 1]} : vector<2x128xf32> to vector<2x32xf32>
    %1281 = vector.extract_strided_slice %1279 {offsets = [0, 64], sizes = [2, 32], strides = [1, 1]} : vector<2x128xf32> to vector<2x32xf32>
    %1282 = arith.mulf %1280, %1281 : vector<2x32xf32>
    %1283 = vector.extract_strided_slice %1278 {offsets = [0, 32], sizes = [2, 32], strides = [1, 1]} : vector<2x128xf32> to vector<2x32xf32>
    %1284 = arith.mulf %1283, %1267 : vector<2x32xf32>
    %1285 = arith.addf %1284, %1282 : vector<2x32xf32>
    %1286 = vector.extract_strided_slice %1278 {offsets = [0, 96], sizes = [2, 32], strides = [1, 1]} : vector<2x128xf32> to vector<2x32xf32>
    %1287 = math.tanh %1285 : vector<2x32xf32>
    %1288 = arith.mulf %1286, %1287 : vector<2x32xf32>
    %1289 = vector.extract_strided_slice %1256 {offsets = [4, 0], sizes = [2, 128], strides = [1, 1]} : vector<16x128xf32> to vector<2x128xf32>
    %cst_330 = arith.constant dense<0.000000e+00> : vector<2x128xf32>
    %1290 = tpu.matmul %1288, %1257, %cst_330 {dimension_numbers = #tpu.dot_dimension_numbers<[1], [0], [0], [1], [0, 0, 1, 1], [], []>} : vector<2x32xf32>, vector<32x128xf32>, vector<2x128xf32> -> vector<2x128xf32>
    %1291 = arith.addf %1289, %1290 : vector<2x128xf32>
    %1292 = arith.negf %1291 : vector<2x128xf32>
    %1293 = math.exp %1292 : vector<2x128xf32>
    %cst_331 = arith.constant 1.000000e+00 : f32
    %1294 = vector.broadcast %cst_331 : f32 to vector<2x128xf32>
    %1295 = arith.addf %1294, %1293 : vector<2x128xf32>
    %1296 = arith.divf %1294, %1295 : vector<2x128xf32>
    %1297 = math.tanh %1291 : vector<2x128xf32>
    %1298 = vector.extract_strided_slice %1296 {offsets = [0, 0], sizes = [2, 32], strides = [1, 1]} : vector<2x128xf32> to vector<2x32xf32>
    %1299 = vector.extract_strided_slice %1297 {offsets = [0, 64], sizes = [2, 32], strides = [1, 1]} : vector<2x128xf32> to vector<2x32xf32>
    %1300 = arith.mulf %1298, %1299 : vector<2x32xf32>
    %1301 = vector.extract_strided_slice %1296 {offsets = [0, 32], sizes = [2, 32], strides = [1, 1]} : vector<2x128xf32> to vector<2x32xf32>
    %1302 = arith.mulf %1301, %1285 : vector<2x32xf32>
    %1303 = arith.addf %1302, %1300 : vector<2x32xf32>
    %1304 = vector.extract_strided_slice %1296 {offsets = [0, 96], sizes = [2, 32], strides = [1, 1]} : vector<2x128xf32> to vector<2x32xf32>
    %1305 = math.tanh %1303 : vector<2x32xf32>
    %1306 = arith.mulf %1304, %1305 : vector<2x32xf32>
    %1307 = vector.extract_strided_slice %1256 {offsets = [6, 0], sizes = [2, 128], strides = [1, 1]} : vector<16x128xf32> to vector<2x128xf32>
    %cst_332 = arith.constant dense<0.000000e+00> : vector<2x128xf32>
    %1308 = tpu.matmul %1306, %1257, %cst_332 {dimension_numbers = #tpu.dot_dimension_numbers<[1], [0], [0], [1], [0, 0, 1, 1], [], []>} : vector<2x32xf32>, vector<32x128xf32>, vector<2x128xf32> -> vector<2x128xf32>
    %1309 = arith.addf %1307, %1308 : vector<2x128xf32>
    %1310 = arith.negf %1309 : vector<2x128xf32>
    %1311 = math.exp %1310 : vector<2x128xf32>
    %cst_333 = arith.constant 1.000000e+00 : f32
    %1312 = vector.broadcast %cst_333 : f32 to vector<2x128xf32>
    %1313 = arith.addf %1312, %1311 : vector<2x128xf32>
    %1314 = arith.divf %1312, %1313 : vector<2x128xf32>
    %1315 = math.tanh %1309 : vector<2x128xf32>
    %1316 = vector.extract_strided_slice %1314 {offsets = [0, 0], sizes = [2, 32], strides = [1, 1]} : vector<2x128xf32> to vector<2x32xf32>
    %1317 = vector.extract_strided_slice %1315 {offsets = [0, 64], sizes = [2, 32], strides = [1, 1]} : vector<2x128xf32> to vector<2x32xf32>
    %1318 = arith.mulf %1316, %1317 : vector<2x32xf32>
    %1319 = vector.extract_strided_slice %1314 {offsets = [0, 32], sizes = [2, 32], strides = [1, 1]} : vector<2x128xf32> to vector<2x32xf32>
    %1320 = arith.mulf %1319, %1303 : vector<2x32xf32>
    %1321 = arith.addf %1320, %1318 : vector<2x32xf32>
    %1322 = vector.extract_strided_slice %1314 {offsets = [0, 96], sizes = [2, 32], strides = [1, 1]} : vector<2x128xf32> to vector<2x32xf32>
    %1323 = math.tanh %1321 : vector<2x32xf32>
    %1324 = arith.mulf %1322, %1323 : vector<2x32xf32>
    %1325 = vector.extract_strided_slice %1256 {offsets = [8, 0], sizes = [2, 128], strides = [1, 1]} : vector<16x128xf32> to vector<2x128xf32>
    %cst_334 = arith.constant dense<0.000000e+00> : vector<2x128xf32>
    %1326 = tpu.matmul %1324, %1257, %cst_334 {dimension_numbers = #tpu.dot_dimension_numbers<[1], [0], [0], [1], [0, 0, 1, 1], [], []>} : vector<2x32xf32>, vector<32x128xf32>, vector<2x128xf32> -> vector<2x128xf32>
    %1327 = arith.addf %1325, %1326 : vector<2x128xf32>
    %1328 = arith.negf %1327 : vector<2x128xf32>
    %1329 = math.exp %1328 : vector<2x128xf32>
    %cst_335 = arith.constant 1.000000e+00 : f32
    %1330 = vector.broadcast %cst_335 : f32 to vector<2x128xf32>
    %1331 = arith.addf %1330, %1329 : vector<2x128xf32>
    %1332 = arith.divf %1330, %1331 : vector<2x128xf32>
    %1333 = math.tanh %1327 : vector<2x128xf32>
    %1334 = vector.extract_strided_slice %1332 {offsets = [0, 0], sizes = [2, 32], strides = [1, 1]} : vector<2x128xf32> to vector<2x32xf32>
    %1335 = vector.extract_strided_slice %1333 {offsets = [0, 64], sizes = [2, 32], strides = [1, 1]} : vector<2x128xf32> to vector<2x32xf32>
    %1336 = arith.mulf %1334, %1335 : vector<2x32xf32>
    %1337 = vector.extract_strided_slice %1332 {offsets = [0, 32], sizes = [2, 32], strides = [1, 1]} : vector<2x128xf32> to vector<2x32xf32>
    %1338 = arith.mulf %1337, %1321 : vector<2x32xf32>
    %1339 = arith.addf %1338, %1336 : vector<2x32xf32>
    %1340 = vector.extract_strided_slice %1332 {offsets = [0, 96], sizes = [2, 32], strides = [1, 1]} : vector<2x128xf32> to vector<2x32xf32>
    %1341 = math.tanh %1339 : vector<2x32xf32>
    %1342 = arith.mulf %1340, %1341 : vector<2x32xf32>
    %1343 = vector.extract_strided_slice %1256 {offsets = [10, 0], sizes = [2, 128], strides = [1, 1]} : vector<16x128xf32> to vector<2x128xf32>
    %cst_336 = arith.constant dense<0.000000e+00> : vector<2x128xf32>
    %1344 = tpu.matmul %1342, %1257, %cst_336 {dimension_numbers = #tpu.dot_dimension_numbers<[1], [0], [0], [1], [0, 0, 1, 1], [], []>} : vector<2x32xf32>, vector<32x128xf32>, vector<2x128xf32> -> vector<2x128xf32>
    %1345 = arith.addf %1343, %1344 : vector<2x128xf32>
    %1346 = arith.negf %1345 : vector<2x128xf32>
    %1347 = math.exp %1346 : vector<2x128xf32>
    %cst_337 = arith.constant 1.000000e+00 : f32
    %1348 = vector.broadcast %cst_337 : f32 to vector<2x128xf32>
    %1349 = arith.addf %1348, %1347 : vector<2x128xf32>
    %1350 = arith.divf %1348, %1349 : vector<2x128xf32>
    %1351 = math.tanh %1345 : vector<2x128xf32>
    %1352 = vector.extract_strided_slice %1350 {offsets = [0, 0], sizes = [2, 32], strides = [1, 1]} : vector<2x128xf32> to vector<2x32xf32>
    %1353 = vector.extract_strided_slice %1351 {offsets = [0, 64], sizes = [2, 32], strides = [1, 1]} : vector<2x128xf32> to vector<2x32xf32>
    %1354 = arith.mulf %1352, %1353 : vector<2x32xf32>
    %1355 = vector.extract_strided_slice %1350 {offsets = [0, 32], sizes = [2, 32], strides = [1, 1]} : vector<2x128xf32> to vector<2x32xf32>
    %1356 = arith.mulf %1355, %1339 : vector<2x32xf32>
    %1357 = arith.addf %1356, %1354 : vector<2x32xf32>
    %1358 = vector.extract_strided_slice %1350 {offsets = [0, 96], sizes = [2, 32], strides = [1, 1]} : vector<2x128xf32> to vector<2x32xf32>
    %1359 = math.tanh %1357 : vector<2x32xf32>
    %1360 = arith.mulf %1358, %1359 : vector<2x32xf32>
    %1361 = vector.extract_strided_slice %1256 {offsets = [12, 0], sizes = [2, 128], strides = [1, 1]} : vector<16x128xf32> to vector<2x128xf32>
    %cst_338 = arith.constant dense<0.000000e+00> : vector<2x128xf32>
    %1362 = tpu.matmul %1360, %1257, %cst_338 {dimension_numbers = #tpu.dot_dimension_numbers<[1], [0], [0], [1], [0, 0, 1, 1], [], []>} : vector<2x32xf32>, vector<32x128xf32>, vector<2x128xf32> -> vector<2x128xf32>
    %1363 = arith.addf %1361, %1362 : vector<2x128xf32>
    %1364 = arith.negf %1363 : vector<2x128xf32>
    %1365 = math.exp %1364 : vector<2x128xf32>
    %cst_339 = arith.constant 1.000000e+00 : f32
    %1366 = vector.broadcast %cst_339 : f32 to vector<2x128xf32>
    %1367 = arith.addf %1366, %1365 : vector<2x128xf32>
    %1368 = arith.divf %1366, %1367 : vector<2x128xf32>
    %1369 = math.tanh %1363 : vector<2x128xf32>
    %1370 = vector.extract_strided_slice %1368 {offsets = [0, 0], sizes = [2, 32], strides = [1, 1]} : vector<2x128xf32> to vector<2x32xf32>
    %1371 = vector.extract_strided_slice %1369 {offsets = [0, 64], sizes = [2, 32], strides = [1, 1]} : vector<2x128xf32> to vector<2x32xf32>
    %1372 = arith.mulf %1370, %1371 : vector<2x32xf32>
    %1373 = vector.extract_strided_slice %1368 {offsets = [0, 32], sizes = [2, 32], strides = [1, 1]} : vector<2x128xf32> to vector<2x32xf32>
    %1374 = arith.mulf %1373, %1357 : vector<2x32xf32>
    %1375 = arith.addf %1374, %1372 : vector<2x32xf32>
    %1376 = vector.extract_strided_slice %1368 {offsets = [0, 96], sizes = [2, 32], strides = [1, 1]} : vector<2x128xf32> to vector<2x32xf32>
    %1377 = math.tanh %1375 : vector<2x32xf32>
    %1378 = arith.mulf %1376, %1377 : vector<2x32xf32>
    %1379 = vector.extract_strided_slice %1256 {offsets = [14, 0], sizes = [2, 128], strides = [1, 1]} : vector<16x128xf32> to vector<2x128xf32>
    %cst_340 = arith.constant dense<0.000000e+00> : vector<2x128xf32>
    %1380 = tpu.matmul %1378, %1257, %cst_340 {dimension_numbers = #tpu.dot_dimension_numbers<[1], [0], [0], [1], [0, 0, 1, 1], [], []>} : vector<2x32xf32>, vector<32x128xf32>, vector<2x128xf32> -> vector<2x128xf32>
    %1381 = arith.addf %1379, %1380 : vector<2x128xf32>
    %1382 = arith.negf %1381 : vector<2x128xf32>
    %1383 = math.exp %1382 : vector<2x128xf32>
    %cst_341 = arith.constant 1.000000e+00 : f32
    %1384 = vector.broadcast %cst_341 : f32 to vector<2x128xf32>
    %1385 = arith.addf %1384, %1383 : vector<2x128xf32>
    %1386 = arith.divf %1384, %1385 : vector<2x128xf32>
    %1387 = math.tanh %1381 : vector<2x128xf32>
    %1388 = vector.extract_strided_slice %1386 {offsets = [0, 0], sizes = [2, 32], strides = [1, 1]} : vector<2x128xf32> to vector<2x32xf32>
    %1389 = vector.extract_strided_slice %1387 {offsets = [0, 64], sizes = [2, 32], strides = [1, 1]} : vector<2x128xf32> to vector<2x32xf32>
    %1390 = arith.mulf %1388, %1389 : vector<2x32xf32>
    %1391 = vector.extract_strided_slice %1386 {offsets = [0, 32], sizes = [2, 32], strides = [1, 1]} : vector<2x128xf32> to vector<2x32xf32>
    %1392 = arith.mulf %1391, %1375 : vector<2x32xf32>
    %1393 = arith.addf %1392, %1390 : vector<2x32xf32>
    %1394 = vector.extract_strided_slice %1386 {offsets = [0, 96], sizes = [2, 32], strides = [1, 1]} : vector<2x128xf32> to vector<2x32xf32>
    %1395 = math.tanh %1393 : vector<2x32xf32>
    %1396 = arith.mulf %1394, %1395 : vector<2x32xf32>
    %1397 = vector.extract_strided_slice %1251 {offsets = [14, 0], sizes = [2, 64], strides = [1, 1]} : vector<16x64xf32> to vector<2x64xf32>
    %c0_342 = arith.constant 0 : index
    %c0_343 = arith.constant 0 : index
    %1398 = vector.load %arg33[%c0_342, %c0_343] : memref<64x128xf32, #tpu.memory_space<vmem>>, vector<64x128xf32>
    %cst_344 = arith.constant dense<0.000000e+00> : vector<2x128xf32>
    %1399 = tpu.matmul %1397, %1398, %cst_344 {dimension_numbers = #tpu.dot_dimension_numbers<[1], [0], [0], [1], [0, 0, 1, 1], [], []>} : vector<2x64xf32>, vector<64x128xf32>, vector<2x128xf32> -> vector<2x128xf32>
    %c0_345 = arith.constant 0 : index
    %c0_346 = arith.constant 0 : index
    %1400 = vector.load %arg35[%c0_345, %c0_346] : memref<1x128xf32, #tpu.memory_space<vmem>>, vector<1x128xf32>
    %1401 = vector.broadcast %1400 : vector<1x128xf32> to vector<2x128xf32>
    %1402 = arith.addf %1399, %1401 : vector<2x128xf32>
    %1403 = arith.negf %1402 : vector<2x128xf32>
    %1404 = math.exp %1403 : vector<2x128xf32>
    %cst_347 = arith.constant 1.000000e+00 : f32
    %1405 = vector.broadcast %cst_347 : f32 to vector<2x128xf32>
    %1406 = arith.addf %1405, %1404 : vector<2x128xf32>
    %1407 = arith.divf %1405, %1406 : vector<2x128xf32>
    %1408 = math.tanh %1402 : vector<2x128xf32>
    %1409 = vector.extract_strided_slice %1407 {offsets = [0, 0], sizes = [2, 32], strides = [1, 1]} : vector<2x128xf32> to vector<2x32xf32>
    %1410 = vector.extract_strided_slice %1408 {offsets = [0, 64], sizes = [2, 32], strides = [1, 1]} : vector<2x128xf32> to vector<2x32xf32>
    %1411 = arith.mulf %1409, %1410 : vector<2x32xf32>
    %1412 = vector.extract_strided_slice %1407 {offsets = [0, 96], sizes = [2, 32], strides = [1, 1]} : vector<2x128xf32> to vector<2x32xf32>
    %1413 = math.tanh %1411 : vector<2x32xf32>
    %1414 = arith.mulf %1412, %1413 : vector<2x32xf32>
    %c0_348 = arith.constant 0 : index
    %c0_349 = arith.constant 0 : index
    %1415 = vector.load %arg36[%c0_348, %c0_349] : memref<64x64xf32, #tpu.memory_space<vmem>>, vector<64x64xf32>
    %1416 = vector.extract_strided_slice %1415 {offsets = [0, 0], sizes = [32, 64], strides = [1, 1]} : vector<64x64xf32> to vector<32x64xf32>
    %cst_350 = arith.constant dense<0.000000e+00> : vector<2x64xf32>
    %1417 = tpu.matmul %1396, %1416, %cst_350 {dimension_numbers = #tpu.dot_dimension_numbers<[1], [0], [0], [1], [0, 0, 1, 1], [], []>} : vector<2x32xf32>, vector<32x64xf32>, vector<2x64xf32> -> vector<2x64xf32>
    %1418 = vector.extract_strided_slice %1415 {offsets = [32, 0], sizes = [32, 64], strides = [1, 1]} : vector<64x64xf32> to vector<32x64xf32>
    %cst_351 = arith.constant dense<0.000000e+00> : vector<2x64xf32>
    %1419 = tpu.matmul %1414, %1418, %cst_351 {dimension_numbers = #tpu.dot_dimension_numbers<[1], [0], [0], [1], [0, 0, 1, 1], [], []>} : vector<2x32xf32>, vector<32x64xf32>, vector<2x64xf32> -> vector<2x64xf32>
    %1420 = arith.addf %1417, %1419 : vector<2x64xf32>
    %c0_352 = arith.constant 0 : index
    %c0_353 = arith.constant 0 : index
    %1421 = vector.load %arg37[%c0_352, %c0_353] : memref<1x64xf32, #tpu.memory_space<vmem>>, vector<1x64xf32>
    %1422 = vector.broadcast %1421 : vector<1x64xf32> to vector<2x64xf32>
    %1423 = arith.addf %1420, %1422 : vector<2x64xf32>
    %cst_354 = arith.constant 0.000000e+00 : f32
    %1424 = vector.broadcast %cst_354 : f32 to vector<2x64xf32>
    %1425 = arith.maximumf %1423, %1424 : vector<2x64xf32>
    %c0_355 = arith.constant 0 : index
    %c0_356 = arith.constant 0 : index
    %1426 = vector.load %arg38[%c0_355, %c0_356] : memref<64x32xf32, #tpu.memory_space<vmem>>, vector<64x32xf32>
    %cst_357 = arith.constant dense<0.000000e+00> : vector<2x32xf32>
    %1427 = tpu.matmul %1425, %1426, %cst_357 {dimension_numbers = #tpu.dot_dimension_numbers<[1], [0], [0], [1], [0, 0, 1, 1], [], []>} : vector<2x64xf32>, vector<64x32xf32>, vector<2x32xf32> -> vector<2x32xf32>
    %c0_358 = arith.constant 0 : index
    %c0_359 = arith.constant 0 : index
    %1428 = vector.load %arg39[%c0_358, %c0_359] : memref<1x32xf32, #tpu.memory_space<vmem>>, vector<1x32xf32>
    %1429 = vector.broadcast %1428 : vector<1x32xf32> to vector<2x32xf32>
    %1430 = arith.addf %1427, %1429 : vector<2x32xf32>
    %cst_360 = arith.constant 0.000000e+00 : f32
    %1431 = vector.broadcast %cst_360 : f32 to vector<2x32xf32>
    %1432 = arith.maximumf %1430, %1431 : vector<2x32xf32>
    %c0_361 = arith.constant 0 : index
    %c0_362 = arith.constant 0 : index
    %1433 = vector.load %arg40[%c0_361, %c0_362] : memref<32x1xf32, #tpu.memory_space<vmem>>, vector<32x1xf32>
    %cst_363 = arith.constant dense<0.000000e+00> : vector<2x1xf32>
    %1434 = tpu.matmul %1432, %1433, %cst_363 {dimension_numbers = #tpu.dot_dimension_numbers<[1], [0], [0], [1], [0, 0, 1, 1], [], []>} : vector<2x32xf32>, vector<32x1xf32>, vector<2x1xf32> -> vector<2x1xf32>
    %c0_364 = arith.constant 0 : index
    %c0_365 = arith.constant 0 : index
    %1435 = vector.load %arg41[%c0_364, %c0_365] : memref<1x1xf32, #tpu.memory_space<vmem>>, vector<1x1xf32>
    %1436 = vector.broadcast %1435 : vector<1x1xf32> to vector<2x1xf32>
    %1437 = arith.addf %1434, %1436 : vector<2x1xf32>
    %c0_366 = arith.constant 0 : index
    %c0_367 = arith.constant 0 : index
    %1438 = vector.load %arg42[%c0_366, %c0_367] : memref<2x1xf32, #tpu.memory_space<vmem>>, vector<2x1xf32>
    tpu.vector_store %arg42[%c0_366, %c0_367], %1437 {strides = array<i32>} : memref<2x1xf32, #tpu.memory_space<vmem>>, vector<2x1xf32>,
    return
  }
}

</mosaic_0001>

<llo_original>
// kernel: lstm_autoencoder_forward.1
$region0: #{lstm_autoencoder_forward.1}
  #allocation0 [shape = 'u32[]', space=smem, size = 0x4, offset = 0x4, fixed_abs, tag = 'smem constant byte address 0x4 - core index']
  #allocation1 [shape = 'u32[144,128]{1,0:T(1,128)}', space=vmem, size = 0x12000, scoped, tag = 'internal scratch']
  #allocation2 [shape = 'f32[16,64]{1,0:T(8,128)}', space=vmem, size = 0x2000, scoped, tag = 'scratch operand']
  #allocation3 [shape = 'f32[16,32]{1,0:T(8,128)}', space=vmem, size = 0x2000, scoped, tag = 'scratch operand']
  #allocation4 [shape = 'f32[16,8]{1,0:T(8,128)}', space=vmem, size = 0x2000, scoped, tag = 'scratch operand']
  #allocation5 [shape = 'f32[16,64]{1,0:T(8,128)}', space=vmem, size = 0x2000, scoped, tag = 'scratch operand']
  #allocation6 [shape = 'f32[1,1]{1,0:T(1,128)S(1)}', space=vmem, size = 0x200, scoped, tag = 'scoped memory for lstm_autoencoder_forward.1']
  %s0 = inlined_call_operand.smem [shape: u32[44], index: -1, kind: input, shape index: {}]
  %s1 = sld [smem:[%s0]]
  %s2 = scalar_lea.smem %s0, 1
  %s3 = sld [smem:[%s2]]
  %s4 = scalar_lea.smem %s0, 2
  %s5 = sld [smem:[%s4]]
  %s6 = scalar_lea.smem %s0, 3
  %s7 = sld [smem:[%s6]]
  %s8 = scalar_lea.smem %s0, 4
  %s9 = sld [smem:[%s8]]
  %s10 = scalar_lea.smem %s0, 5
  %s11 = sld [smem:[%s10]]
  %s12 = scalar_lea.smem %s0, 6
  %s13 = sld [smem:[%s12]]
  %s14 = scalar_lea.smem %s0, 7
  %s15 = sld [smem:[%s14]]
  %s16 = scalar_lea.smem %s0, 8
  %s17 = sld [smem:[%s16]]
  %s18 = scalar_lea.smem %s0, 9
  %s19 = sld [smem:[%s18]]
  %s20 = scalar_lea.smem %s0, 10
  %s21 = sld [smem:[%s20]]
  %s22 = scalar_lea.smem %s0, 11
  %s23 = sld [smem:[%s22]]
  %s24 = scalar_lea.smem %s0, 12
  %s25 = sld [smem:[%s24]]
  %s26 = scalar_lea.smem %s0, 13
  %s27 = sld [smem:[%s26]]
  %s28 = scalar_lea.smem %s0, 14
  %s29 = sld [smem:[%s28]]
  %s30 = scalar_lea.smem %s0, 15
  %s31 = sld [smem:[%s30]]
  %s32 = scalar_lea.smem %s0, 16
  %s33 = sld [smem:[%s32]]
  %s34 = scalar_lea.smem %s0, 17
  %s35 = sld [smem:[%s34]]
  %s36 = scalar_lea.smem %s0, 18
  %s37 = sld [smem:[%s36]]
  %s38 = scalar_lea.smem %s0, 19
  %s39 = sld [smem:[%s38]]
  %s40 = scalar_lea.smem %s0, 20
  %s41 = sld [smem:[%s40]]
  %s42 = scalar_lea.smem %s0, 21
  %s43 = sld [smem:[%s42]]
  %s44 = scalar_lea.smem %s0, 22
  %s45 = sld [smem:[%s44]]
  %s46 = scalar_lea.smem %s0, 23
  %s47 = sld [smem:[%s46]]
  %s48 = scalar_lea.smem %s0, 24
  %s49 = sld [smem:[%s48]]
  %s50 = scalar_lea.smem %s0, 25
  %s51 = sld [smem:[%s50]]
  %s52 = scalar_lea.smem %s0, 26
  %s53 = sld [smem:[%s52]]
  %s54 = scalar_lea.smem %s0, 27
  %s55 = sld [smem:[%s54]]
  %s56 = scalar_lea.smem %s0, 28
  %s57 = sld [smem:[%s56]]
  %s58 = scalar_lea.smem %s0, 29
  %s59 = sld [smem:[%s58]]
  %s60 = scalar_lea.smem %s0, 30
  %s61 = sld [smem:[%s60]]
  %s62 = scalar_lea.smem %s0, 31
  %s63 = sld [smem:[%s62]]
  %s64 = scalar_lea.smem %s0, 32
  %s65 = sld [smem:[%s64]]
  %s66 = scalar_lea.smem %s0, 33
  %s67 = sld [smem:[%s66]]
  %s68 = scalar_lea.smem %s0, 34
  %s69 = sld [smem:[%s68]]
  %s70 = scalar_lea.smem %s0, 35
  %s71 = sld [smem:[%s70]]
  %s72 = scalar_lea.smem %s0, 36
  %s73 = sld [smem:[%s72]]
  %s74 = scalar_lea.smem %s0, 37
  %s75 = sld [smem:[%s74]]
  %s76 = scalar_lea.smem %s0, 38
  %s77 = sld [smem:[%s76]]
  %s78 = scalar_lea.smem %s0, 39
  %s79 = sld [smem:[%s78]]
  %s80 = scalar_lea.smem %s0, 40
  %s81 = sld [smem:[%s80]]
  %s82 = scalar_lea.smem %s0, 41
  %s83 = sld [smem:[%s82]]
  %s84 = scalar_lea.smem %s0, 42
  %s85 = sld [smem:[%s84]]
  %s86 = scalar_lea.smem %s0, 43
  %s87 = sld [smem:[%s86]]
  %88 = xla_tuple %s85, %s87
  %s89 = sld [smem:[#allocation0]]
  $region202: #{lstm_autoencoder_forward.1} parent=0
    _
  %s91 = ssub.s32 1, %s89
  %s92 = scalar_select 0, %s91, %s89
  %v93 = vstv %s83
  %94 = vst [vmem:[#allocation6] sm:$0x1] %v93
  $region1: #{lstm_autoencoder_forward.1} parent=0
    #allocation7 [shape = 'u8[512]{0}', space=vmem, size = 0x400, scoped, tag = 'input window, operand 32, single buffered']
    #allocation8 [shape = 's32[1]{0}', space=sflag, size = 0x4, scoped, tag = 'scoped memory for lstm_autoencoder_forward.1']
    #allocation9 [shape = 'u8[512]{0}', space=vmem, size = 0x400, scoped, tag = 'input window, operand 35, single buffered']
    #allocation10 [shape = 's32[1]{0}', space=sflag, size = 0x4, scoped, tag = 'scoped memory for lstm_autoencoder_forward.1']
    #allocation11 [shape = 'u8[512]{0}', space=vmem, size = 0x400, scoped, tag = 'input window, operand 37, single buffered']
    #allocation12 [shape = 'u8[512]{0}', space=vmem, size = 0x400, scoped, tag = 'input window, operand 39, single buffered']
    #allocation13 [shape = 's32[1]{0}', space=sflag, size = 0x4, scoped, tag = 'scoped memory for lstm_autoencoder_forward.1']
    %95 = vsyncpa [#allocation8], 0
    %96 = vsyncpa [#allocation10], 0
    %97 = vsyncpa [#allocation13], 0
    // Predicated region
    $region2: #{lstm_autoencoder_forward.1} parent=1 // pred_check
      _
    $region3: #{lstm_autoencoder_forward.1} parent=1 // pred_check_branch
      %99 = sbr.rel (0) target = $region5
    $region4: #{lstm_autoencoder_forward.1} parent=1 // pred_region
      _
    $region5: #{lstm_autoencoder_forward.1} parent=1 // pred_fallthru
      _
    // Predicated region
    $region6: #{lstm_autoencoder_forward.1} parent=1 // pred_check
      _
    $region7: #{lstm_autoencoder_forward.1} parent=1 // pred_check_branch
      %101 = sbr.rel (0) target = $region9
    $region8: #{lstm_autoencoder_forward.1} parent=1 // pred_region
      _
    $region9: #{lstm_autoencoder_forward.1} parent=1 // pred_fallthru
      _
    // Predicated region
    $region10: #{lstm_autoencoder_forward.1} parent=1 // pred_check
      _
    $region11: #{lstm_autoencoder_forward.1} parent=1 // pred_check_branch
      %103 = sbr.rel (0) target = $region13
    $region12: #{lstm_autoencoder_forward.1} parent=1 // pred_region
      _
    $region13: #{lstm_autoencoder_forward.1} parent=1 // pred_fallthru
      _
    // Predicated region
    $region14: #{lstm_autoencoder_forward.1} parent=1 // pred_check
      _
    $region15: #{lstm_autoencoder_forward.1} parent=1 // pred_check_branch
      %105 = sbr.rel (0) target = $region17
    $region16: #{lstm_autoencoder_forward.1} parent=1 // pred_region
      _
    $region17: #{lstm_autoencoder_forward.1} parent=1 // pred_fallthru
      _
    // Predicated region
    $region18: #{lstm_autoencoder_forward.1} parent=1 // pred_check
      _
    $region19: #{lstm_autoencoder_forward.1} parent=1 // pred_check_branch
      %107 = sbr.rel (0) target = $region21
    $region20: #{lstm_autoencoder_forward.1} parent=1 // pred_region
      _
    $region21: #{lstm_autoencoder_forward.1} parent=1 // pred_fallthru
      _
    // Predicated region
    $region22: #{lstm_autoencoder_forward.1} parent=1 // pred_check
      _
    $region23: #{lstm_autoencoder_forward.1} parent=1 // pred_check_branch
      %109 = sbr.rel (0) target = $region25
    $region24: #{lstm_autoencoder_forward.1} parent=1 // pred_region
      _
    $region25: #{lstm_autoencoder_forward.1} parent=1 // pred_fallthru
      _
    // Predicated region
    $region26: #{lstm_autoencoder_forward.1} parent=1 // pred_check
      _
    $region27: #{lstm_autoencoder_forward.1} parent=1 // pred_check_branch
      %111 = sbr.rel (0) target = $region29
    $region28: #{lstm_autoencoder_forward.1} parent=1 // pred_region
      _
    $region29: #{lstm_autoencoder_forward.1} parent=1 // pred_fallthru
      _
    // Predicated region
    $region30: #{lstm_autoencoder_forward.1} parent=1 // pred_check
      _
    $region31: #{lstm_autoencoder_forward.1} parent=1 // pred_check_branch
      %113 = sbr.rel (0) target = $region33
    $region32: #{lstm_autoencoder_forward.1} parent=1 // pred_region
      _
    $region33: #{lstm_autoencoder_forward.1} parent=1 // pred_fallthru
      _
    // Predicated region
    $region34: #{lstm_autoencoder_forward.1} parent=1 // pred_check
      _
    $region35: #{lstm_autoencoder_forward.1} parent=1 // pred_check_branch
      %115 = sbr.rel (0) target = $region37
    $region36: #{lstm_autoencoder_forward.1} parent=1 // pred_region
      _
    $region37: #{lstm_autoencoder_forward.1} parent=1 // pred_fallthru
      _
    // Predicated region
    $region38: #{lstm_autoencoder_forward.1} parent=1 // pred_check
      _
    $region39: #{lstm_autoencoder_forward.1} parent=1 // pred_check_branch
      %117 = sbr.rel (0) target = $region41
    $region40: #{lstm_autoencoder_forward.1} parent=1 // pred_region
      _
    $region41: #{lstm_autoencoder_forward.1} parent=1 // pred_fallthru
      _
    // Predicated region
    $region42: #{lstm_autoencoder_forward.1} parent=1 // pred_check
      _
    $region43: #{lstm_autoencoder_forward.1} parent=1 // pred_check_branch
      %119 = sbr.rel (0) target = $region45
    $region44: #{lstm_autoencoder_forward.1} parent=1 // pred_region
      _
    $region45: #{lstm_autoencoder_forward.1} parent=1 // pred_fallthru
      _
    // Predicated region
    $region46: #{lstm_autoencoder_forward.1} parent=1 // pred_check
      _
    $region47: #{lstm_autoencoder_forward.1} parent=1 // pred_check_branch
      %121 = sbr.rel (0) target = $region49
    $region48: #{lstm_autoencoder_forward.1} parent=1 // pred_region
      _
    $region49: #{lstm_autoencoder_forward.1} parent=1 // pred_fallthru
      _
    // Predicated region
    $region50: #{lstm_autoencoder_forward.1} parent=1 // pred_check
      _
    $region51: #{lstm_autoencoder_forward.1} parent=1 // pred_check_branch
      %123 = sbr.rel (0) target = $region53
    $region52: #{lstm_autoencoder_forward.1} parent=1 // pred_region
      _
    $region53: #{lstm_autoencoder_forward.1} parent=1 // pred_fallthru
      _
    // Predicated region
    $region54: #{lstm_autoencoder_forward.1} parent=1 // pred_check
      _
    $region55: #{lstm_autoencoder_forward.1} parent=1 // pred_check_branch
      %125 = sbr.rel (0) target = $region57
    $region56: #{lstm_autoencoder_forward.1} parent=1 // pred_region
      _
    $region57: #{lstm_autoencoder_forward.1} parent=1 // pred_fallthru
      _
    // Predicated region
    $region58: #{lstm_autoencoder_forward.1} parent=1 // pred_check
      _
    $region59: #{lstm_autoencoder_forward.1} parent=1 // pred_check_branch
      %127 = sbr.rel (0) target = $region61
    $region60: #{lstm_autoencoder_forward.1} parent=1 // pred_region
      _
    $region61: #{lstm_autoencoder_forward.1} parent=1 // pred_fallthru
      _
    // Predicated region
    $region62: #{lstm_autoencoder_forward.1} parent=1 // pred_check
      _
    $region63: #{lstm_autoencoder_forward.1} parent=1 // pred_check_branch
      %129 = sbr.rel (0) target = $region65
    $region64: #{lstm_autoencoder_forward.1} parent=1 // pred_region
      _
    $region65: #{lstm_autoencoder_forward.1} parent=1 // pred_fallthru
      _
    // Predicated region
    $region66: #{lstm_autoencoder_forward.1} parent=1 // pred_check
      _
    $region67: #{lstm_autoencoder_forward.1} parent=1 // pred_check_branch
      %131 = sbr.rel (0) target = $region69
    $region68: #{lstm_autoencoder_forward.1} parent=1 // pred_region
      _
    $region69: #{lstm_autoencoder_forward.1} parent=1 // pred_fallthru
      _
    // Predicated region
    $region70: #{lstm_autoencoder_forward.1} parent=1 // pred_check
      _
    $region71: #{lstm_autoencoder_forward.1} parent=1 // pred_check_branch
      %133 = sbr.rel (0) target = $region73
    $region72: #{lstm_autoencoder_forward.1} parent=1 // pred_region
      _
    $region73: #{lstm_autoencoder_forward.1} parent=1 // pred_fallthru
      _
    // Predicated region
    $region74: #{lstm_autoencoder_forward.1} parent=1 // pred_check
      _
    $region75: #{lstm_autoencoder_forward.1} parent=1 // pred_check_branch
      %135 = sbr.rel (0) target = $region77
    $region76: #{lstm_autoencoder_forward.1} parent=1 // pred_region
      _
    $region77: #{lstm_autoencoder_forward.1} parent=1 // pred_fallthru
      _
    // Predicated region
    $region78: #{lstm_autoencoder_forward.1} parent=1 // pred_check
      _
    $region79: #{lstm_autoencoder_forward.1} parent=1 // pred_check_branch
      %137 = sbr.rel (0) target = $region81
    $region80: #{lstm_autoencoder_forward.1} parent=1 // pred_region
      _
    $region81: #{lstm_autoencoder_forward.1} parent=1 // pred_fallthru
      _
    // Predicated region
    $region82: #{lstm_autoencoder_forward.1} parent=1 // pred_check
      _
    $region83: #{lstm_autoencoder_forward.1} parent=1 // pred_check_branch
      %139 = sbr.rel (0) target = $region85
    $region84: #{lstm_autoencoder_forward.1} parent=1 // pred_region
      _
    $region85: #{lstm_autoencoder_forward.1} parent=1 // pred_fallthru
      _
    // Predicated region
    $region86: #{lstm_autoencoder_forward.1} parent=1 // pred_check
      _
    $region87: #{lstm_autoencoder_forward.1} parent=1 // pred_check_branch
      %141 = sbr.rel (0) target = $region89
    $region88: #{lstm_autoencoder_forward.1} parent=1 // pred_region
      _
    $region89: #{lstm_autoencoder_forward.1} parent=1 // pred_fallthru
      _
    // Predicated region
    $region90: #{lstm_autoencoder_forward.1} parent=1 // pred_check
      _
    $region91: #{lstm_autoencoder_forward.1} parent=1 // pred_check_branch
      %143 = sbr.rel (0) target = $region93
    $region92: #{lstm_autoencoder_forward.1} parent=1 // pred_region
      _
    $region93: #{lstm_autoencoder_forward.1} parent=1 // pred_fallthru
      _
    // Predicated region
    $region94: #{lstm_autoencoder_forward.1} parent=1 // pred_check
      _
    $region95: #{lstm_autoencoder_forward.1} parent=1 // pred_check_branch
      %145 = sbr.rel (0) target = $region97
    $region96: #{lstm_autoencoder_forward.1} parent=1 // pred_region
      _
    $region97: #{lstm_autoencoder_forward.1} parent=1 // pred_fallthru
      _
    // Predicated region
    $region98: #{lstm_autoencoder_forward.1} parent=1 // pred_check
      _
    $region99: #{lstm_autoencoder_forward.1} parent=1 // pred_check_branch
      %147 = sbr.rel (0) target = $region101
    $region100: #{lstm_autoencoder_forward.1} parent=1 // pred_region
      _
    $region101: #{lstm_autoencoder_forward.1} parent=1 // pred_fallthru
      _
    // Predicated region
    $region102: #{lstm_autoencoder_forward.1} parent=1 // pred_check
      _
    $region103: #{lstm_autoencoder_forward.1} parent=1 // pred_check_branch
      %149 = sbr.rel (0) target = $region105
    $region104: #{lstm_autoencoder_forward.1} parent=1 // pred_region
      _
    $region105: #{lstm_autoencoder_forward.1} parent=1 // pred_fallthru
      _
    // Predicated region
    $region106: #{lstm_autoencoder_forward.1} parent=1 // pred_check
      _
    $region107: #{lstm_autoencoder_forward.1} parent=1 // pred_check_branch
      %151 = sbr.rel (0) target = $region109
    $region108: #{lstm_autoencoder_forward.1} parent=1 // pred_region
      _
    $region109: #{lstm_autoencoder_forward.1} parent=1 // pred_fallthru
      _
    // Predicated region
    $region110: #{lstm_autoencoder_forward.1} parent=1 // pred_check
      _
    $region111: #{lstm_autoencoder_forward.1} parent=1 // pred_check_branch
      %153 = sbr.rel (0) target = $region113
    $region112: #{lstm_autoencoder_forward.1} parent=1 // pred_region
      _
    $region113: #{lstm_autoencoder_forward.1} parent=1 // pred_fallthru
      _
    // Predicated region
    $region114: #{lstm_autoencoder_forward.1} parent=1 // pred_check
      _
    $region115: #{lstm_autoencoder_forward.1} parent=1 // pred_check_branch
      %155 = sbr.rel (0) target = $region117
    $region116: #{lstm_autoencoder_forward.1} parent=1 // pred_region
      _
    $region117: #{lstm_autoencoder_forward.1} parent=1 // pred_fallthru
      _
    // Predicated region
    $region118: #{lstm_autoencoder_forward.1} parent=1 // pred_check
      _
    $region119: #{lstm_autoencoder_forward.1} parent=1 // pred_check_branch
      %157 = sbr.rel (0) target = $region121
    $region120: #{lstm_autoencoder_forward.1} parent=1 // pred_region
      _
    $region121: #{lstm_autoencoder_forward.1} parent=1 // pred_fallthru
      _
    // Predicated region
    $region122: #{lstm_autoencoder_forward.1} parent=1 // pred_check
      _
    $region123: #{lstm_autoencoder_forward.1} parent=1 // pred_check_branch
      %159 = sbr.rel (0) target = $region125
    $region124: #{lstm_autoencoder_forward.1} parent=1 // pred_region
      _
    $region125: #{lstm_autoencoder_forward.1} parent=1 // pred_fallthru
      _
    // Predicated region
    $region126: #{lstm_autoencoder_forward.1} parent=1 // pred_check
      _
    $region127: #{lstm_autoencoder_forward.1} parent=1 // pred_check_branch
      %161 = sbr.rel (0) target = $region129
    $region128: #{lstm_autoencoder_forward.1} parent=1 // pred_region
      _
    $region129: #{lstm_autoencoder_forward.1} parent=1 // pred_fallthru
      _
    // Predicated region
    $region130: #{lstm_autoencoder_forward.1} parent=1 // pred_check
      _
    $region131: #{lstm_autoencoder_forward.1} parent=1 // pred_check_branch
      %163 = sbr.rel (0) target = $region133
    $region132: #{lstm_autoencoder_forward.1} parent=1 // pred_region
      %s165 = ssub.s32 16, 16
      %166 = vsyncadd [#allocation8], %s165
      %s168 = sshll.u32 [#allocation7], 4
      %s169 = int_to_ptr.vmem [resolvable:$true] %s168
      %171 = dma.hbm_to_vmem [thread:$0]  %s65, 16, %s169, [#allocation8]
    $region133: #{lstm_autoencoder_forward.1} parent=1 // pred_fallthru
      _
    // Predicated region
    $region134: #{lstm_autoencoder_forward.1} parent=1 // pred_check
      _
    $region135: #{lstm_autoencoder_forward.1} parent=1 // pred_check_branch
      %173 = sbr.rel (0) target = $region137
    $region136: #{lstm_autoencoder_forward.1} parent=1 // pred_region
      _
    $region137: #{lstm_autoencoder_forward.1} parent=1 // pred_fallthru
      _
    // Predicated region
    $region138: #{lstm_autoencoder_forward.1} parent=1 // pred_check
      _
    $region139: #{lstm_autoencoder_forward.1} parent=1 // pred_check_branch
      %175 = sbr.rel (0) target = $region141
    $region140: #{lstm_autoencoder_forward.1} parent=1 // pred_region
      _
    $region141: #{lstm_autoencoder_forward.1} parent=1 // pred_fallthru
      _
    // Predicated region
    $region142: #{lstm_autoencoder_forward.1} parent=1 // pred_check
      _
    $region143: #{lstm_autoencoder_forward.1} parent=1 // pred_check_branch
      %177 = sbr.rel (0) target = $region145
    $region144: #{lstm_autoencoder_forward.1} parent=1 // pred_region
      %s179 = ssub.s32 16, 16
      %180 = vsyncadd [#allocation10], %s179
      %s182 = sshll.u32 [#allocation9], 4
      %s183 = int_to_ptr.vmem [resolvable:$true] %s182
      %185 = dma.hbm_to_vmem [thread:$0]  %s71, 16, %s183, [#allocation10]
    $region145: #{lstm_autoencoder_forward.1} parent=1 // pred_fallthru
      _
    // Predicated region
    $region146: #{lstm_autoencoder_forward.1} parent=1 // pred_check
      _
    $region147: #{lstm_autoencoder_forward.1} parent=1 // pred_check_branch
      %187 = sbr.rel (0) target = $region149
    $region148: #{lstm_autoencoder_forward.1} parent=1 // pred_region
      _
    $region149: #{lstm_autoencoder_forward.1} parent=1 // pred_fallthru
      _
    // Predicated region
    $region150: #{lstm_autoencoder_forward.1} parent=1 // pred_check
      _
    $region151: #{lstm_autoencoder_forward.1} parent=1 // pred_check_branch
      %189 = sbr.rel (0) target = $region153
    $region152: #{lstm_autoencoder_forward.1} parent=1 // pred_region
      %s191 = ssub.s32 16, 16
      %192 = vsyncadd [#allocation10], %s191
      %s194 = sshll.u32 [#allocation11], 4
      %s195 = int_to_ptr.vmem [resolvable:$true] %s194
      %197 = dma.hbm_to_vmem [thread:$0]  %s75, 16, %s195, [#allocation10]
    $region153: #{lstm_autoencoder_forward.1} parent=1 // pred_fallthru
      _
    // Predicated region
    $region154: #{lstm_autoencoder_forward.1} parent=1 // pred_check
      _
    $region155: #{lstm_autoencoder_forward.1} parent=1 // pred_check_branch
      %199 = sbr.rel (0) target = $region157
    $region156: #{lstm_autoencoder_forward.1} parent=1 // pred_region
      _
    $region157: #{lstm_autoencoder_forward.1} parent=1 // pred_fallthru
      _
    // Predicated region
    $region158: #{lstm_autoencoder_forward.1} parent=1 // pred_check
      _
    $region159: #{lstm_autoencoder_forward.1} parent=1 // pred_check_branch
      %201 = sbr.rel (0) target = $region161
    $region160: #{lstm_autoencoder_forward.1} parent=1 // pred_region
      %s203 = ssub.s32 16, 16
      %204 = vsyncadd [#allocation13], %s203
      %s206 = sshll.u32 [#allocation12], 4
      %s207 = int_to_ptr.vmem [resolvable:$true] %s206
      %209 = dma.hbm_to_vmem [thread:$0]  %s79, 16, %s207, [#allocation13]
    $region161: #{lstm_autoencoder_forward.1} parent=1 // pred_fallthru
      _
    // Predicated region
    $region162: #{lstm_autoencoder_forward.1} parent=1 // pred_check
      _
    $region163: #{lstm_autoencoder_forward.1} parent=1 // pred_check_branch
      %211 = sbr.rel (0) target = $region165
    $region164: #{lstm_autoencoder_forward.1} parent=1 // pred_region
      _
    $region165: #{lstm_autoencoder_forward.1} parent=1 // pred_fallthru
      _
    // Predicated region
    $region166: #{lstm_autoencoder_forward.1} parent=1 // pred_check
      _
    $region167: #{lstm_autoencoder_forward.1} parent=1 // pred_check_branch
      %213 = sbr.rel (0) target = $region169
    $region168: #{lstm_autoencoder_forward.1} parent=1 // pred_region
      _
    $region169: #{lstm_autoencoder_forward.1} parent=1 // pred_fallthru
      _
    // Predicated region
    $region170: #{lstm_autoencoder_forward.1} parent=1 // pred_check
      _
    $region171: #{lstm_autoencoder_forward.1} parent=1 // pred_check_branch
      %215 = sbr.rel (0) target = $region173
    $region172: #{lstm_autoencoder_forward.1} parent=1 // pred_region
      %216 = dma.done [#allocation8], 16
    $region173: #{lstm_autoencoder_forward.1} parent=1 // pred_fallthru
      _
    // Predicated region
    $region174: #{lstm_autoencoder_forward.1} parent=1 // pred_check
      _
    $region175: #{lstm_autoencoder_forward.1} parent=1 // pred_check_branch
      %218 = sbr.rel (0) target = $region177
    $region176: #{lstm_autoencoder_forward.1} parent=1 // pred_region
      %219 = dma.done [#allocation10], 16
    $region177: #{lstm_autoencoder_forward.1} parent=1 // pred_fallthru
      _
    // Predicated region
    $region178: #{lstm_autoencoder_forward.1} parent=1 // pred_check
      _
    $region179: #{lstm_autoencoder_forward.1} parent=1 // pred_check_branch
      %221 = sbr.rel (0) target = $region181
    $region180: #{lstm_autoencoder_forward.1} parent=1 // pred_region
      %222 = dma.done [#allocation10], 16
    $region181: #{lstm_autoencoder_forward.1} parent=1 // pred_fallthru
      _
    // Predicated region
    $region182: #{lstm_autoencoder_forward.1} parent=1 // pred_check
      _
    $region183: #{lstm_autoencoder_forward.1} parent=1 // pred_check_branch
      %224 = sbr.rel (0) target = $region185
    $region184: #{lstm_autoencoder_forward.1} parent=1 // pred_region
      %225 = dma.done [#allocation13], 16
    $region185: #{lstm_autoencoder_forward.1} parent=1 // pred_fallthru
      _
    %v226 = vld [vmem:[%s1] sm:$0xff]
    %v227 = vld [vmem:[%s1 + $0x8] sm:$0xff]
    %v228 = vld [vmem:[%s3] sm:$0xff]
    %v229 = vld [vmem:[%s3 + $0x8] sm:$0xff]
    %v230 = vld [vmem:[%s5] sm:$0xf]
    %v231 = vld [vmem:[%s7] sm:$0xff]
    %v232 = vld [vmem:[%s7 + $0x8] sm:$0xff]
    %v233 = vld [vmem:[%s7 + $0x10] sm:$0xff]
    %v234 = vld [vmem:[%s7 + $0x18] sm:$0xff]
    %v235 = vld [vmem:[%s9] sm:$0x1]
    %v236 = vld [vmem:[%s11] sm:$0xf]
    %v237 = vld [vmem:[%s13] sm:$0xff]
    %v238 = vld [vmem:[%s13 + $0x8] sm:$0xff]
    %v239 = vld [vmem:[%s13 + $0x10] sm:$0xff]
    %v240 = vld [vmem:[%s13 + $0x18] sm:$0xff]
    %v241 = vld [vmem:[%s15] sm:$0x1]
    %v243 = vlaneseq
    %v244 = vshrl.u32 %v243, 7
    %v245 = vsub.s32 0, %v244
    %v246 = vrot.slane %v235, %v245
    %vm248 = vcmask 31744
    %v250 = vsel %vm248, %v226, 0
    %v253 = vsel %vm248, %v227, 0
    %vm255 = vcmask 1043456
    %v257 = vsel %vm255, %v230, 0
    %259 = vmatprep.subr.mxu0 0.0
    %260 = vmatpush1.msra.mxu0 0.0
    %261 = vmatprep.subr.mxu0 0.0
    %262 = vmatpush1.msra.mxu0 0.0
    %263 = vmatprep.subr.mxu0 0.0
    %264 = vmatpush1.msra.mxu0 0.0
    %265 = vmatprep.subr.mxu0 0.0
    %266 = vmatpush1.msra.mxu0 0.0
    %267 = vmatprep.subr.mxu0 0.0
    %268 = vmatpush1.msra.mxu0 0.0
    %269 = vmatprep.subr.mxu0 0.0
    %270 = vmatpush1.msra.mxu0 0.0
    %271 = vmatprep.subr.mxu0 0.0
    %272 = vmatpush1.msra.mxu0 0.0
    %273 = vmatprep.subr.mxu0 0.0
    %274 = vmatpush1.msra.mxu0 0.0
    %275 = vmatprep.subr.mxu0 0.0
    %276 = vmatpush1.msra.mxu0 0.0
    %277 = vmatprep.subr.mxu0 0.0
    %278 = vmatpush1.msra.mxu0 0.0
    %279 = vmatprep.subr.mxu0 0.0
    %280 = vmatpush1.msra.mxu0 0.0
    %281 = vmatprep.subr.mxu0 0.0
    %282 = vmatpush1.msra.mxu0 0.0
    %283 = vmatprep.subr.mxu0 0.0
    %284 = vmatpush1.msra.mxu0 0.0
    %285 = vmatprep.subr.mxu0 0.0
    %286 = vmatpush1.msra.mxu0 0.0
    %287 = vmatprep.subr.mxu0 0.0
    %288 = vmatpush1.msra.mxu0 0.0
    %289 = vmatprep.subr.mxu0 0.0
    %290 = vmatpush1.msra.mxu0 %v257
    %291 = vmatprep.subr.mxu0 0.0
    %292 = vmatpush2.msra.mxu0 0.0
    %293 = vmatprep.subr.mxu0 0.0
    %294 = vmatpush2.msra.mxu0 0.0
    %295 = vmatprep.subr.mxu0 0.0
    %296 = vmatpush2.msra.mxu0 0.0
    %297 = vmatprep.subr.mxu0 0.0
    %298 = vmatpush2.msra.mxu0 0.0
    %299 = vmatprep.subr.mxu0 0.0
    %300 = vmatpush2.msra.mxu0 0.0
    %301 = vmatprep.subr.mxu0 0.0
    %302 = vmatpush2.msra.mxu0 0.0
    %303 = vmatprep.subr.mxu0 0.0
    %304 = vmatpush2.msra.mxu0 0.0
    %305 = vmatprep.subr.mxu0 0.0
    %306 = vmatpush2.msra.mxu0 0.0
    %307 = vmatprep.subr.mxu0 0.0
    %308 = vmatpush2.msra.mxu0 0.0
    %309 = vmatprep.subr.mxu0 0.0
    %310 = vmatpush2.msra.mxu0 0.0
    %311 = vmatprep.subr.mxu0 0.0
    %312 = vmatpush2.msra.mxu0 0.0
    %313 = vmatprep.subr.mxu0 0.0
    %314 = vmatpush2.msra.mxu0 0.0
    %315 = vmatprep.subr.mxu0 0.0
    %316 = vmatpush2.msra.mxu0 0.0
    %317 = vmatprep.subr.mxu0 0.0
    %318 = vmatpush2.msra.mxu0 0.0
    %319 = vmatprep.subr.mxu0 0.0
    %320 = vmatpush2.msra.mxu0 0.0
    %321 = vmatprep.subr.mxu0 0.0
    %322 = vmatpush2.msra.mxu0 0.0
    %323 = vmatprep.mubr.f32.mxu0 0.0
    %324 = vmatmul.mubr.f32.gmra.mxu0 %v250
    %v325 = vpop.f32.mrf.mxu0
    %v326 = vadd.f32 %v246, %v325
    %v327 = vpop.f32.mrf.mxu0
    %328 = vmatprep.mubr.f32.mxu0 0.0
    %329 = vmatmul.mubr.f32.gmra.mxu0 %v253
    %v330 = vpop.f32.mrf.mxu0
    %v331 = vadd.f32 %v246, %v330
    %v332 = vpop.f32.mrf.mxu0
    %333 = vdwg.mxu0
    %v335 = vlaneseq
    %v336 = vshrl.u32 %v335, 7
    %v337 = vsub.s32 0, %v336
    %v338 = vrot.slane %v241, %v337
    %v341 = vsel %vm255, %v236, 0
    %343 = vmatprep.subr.mxu0 0.0
    %344 = vmatpush1.msra.mxu0 0.0
    %345 = vmatprep.subr.mxu0 0.0
    %346 = vmatpush1.msra.mxu0 0.0
    %347 = vmatprep.subr.mxu0 0.0
    %348 = vmatpush1.msra.mxu0 0.0
    %349 = vmatprep.subr.mxu0 0.0
    %350 = vmatpush1.msra.mxu0 0.0
    %351 = vmatprep.subr.mxu0 0.0
    %352 = vmatpush1.msra.mxu0 0.0
    %353 = vmatprep.subr.mxu0 0.0
    %354 = vmatpush1.msra.mxu0 0.0
    %355 = vmatprep.subr.mxu0 0.0
    %356 = vmatpush1.msra.mxu0 0.0
    %357 = vmatprep.subr.mxu0 0.0
    %358 = vmatpush1.msra.mxu0 0.0
    %359 = vmatprep.subr.mxu0 0.0
    %360 = vmatpush1.msra.mxu0 0.0
    %361 = vmatprep.subr.mxu0 0.0
    %362 = vmatpush1.msra.mxu0 0.0
    %363 = vmatprep.subr.mxu0 0.0
    %364 = vmatpush1.msra.mxu0 0.0
    %365 = vmatprep.subr.mxu0 0.0
    %366 = vmatpush1.msra.mxu0 0.0
    %367 = vmatprep.subr.mxu0 0.0
    %368 = vmatpush1.msra.mxu0 0.0
    %369 = vmatprep.subr.mxu0 0.0
    %370 = vmatpush1.msra.mxu0 0.0
    %371 = vmatprep.subr.mxu0 0.0
    %372 = vmatpush1.msra.mxu0 0.0
    %373 = vmatprep.subr.mxu0 0.0
    %374 = vmatpush1.msra.mxu0 %v341
    %375 = vmatprep.subr.mxu0 0.0
    %376 = vmatpush2.msra.mxu0 0.0
    %377 = vmatprep.subr.mxu0 0.0
    %378 = vmatpush2.msra.mxu0 0.0
    %379 = vmatprep.subr.mxu0 0.0
    %380 = vmatpush2.msra.mxu0 0.0
    %381 = vmatprep.subr.mxu0 0.0
    %382 = vmatpush2.msra.mxu0 0.0
    %383 = vmatprep.subr.mxu0 0.0
    %384 = vmatpush2.msra.mxu0 0.0
    %385 = vmatprep.subr.mxu0 0.0
    %386 = vmatpush2.msra.mxu0 0.0
    %387 = vmatprep.subr.mxu0 0.0
    %388 = vmatpush2.msra.mxu0 0.0
    %389 = vmatprep.subr.mxu0 0.0
    %390 = vmatpush2.msra.mxu0 0.0
    %391 = vmatprep.subr.mxu0 0.0
    %392 = vmatpush2.msra.mxu0 0.0
    %393 = vmatprep.subr.mxu0 0.0
    %394 = vmatpush2.msra.mxu0 0.0
    %395 = vmatprep.subr.mxu0 0.0
    %396 = vmatpush2.msra.mxu0 0.0
    %397 = vmatprep.subr.mxu0 0.0
    %398 = vmatpush2.msra.mxu0 0.0
    %399 = vmatprep.subr.mxu0 0.0
    %400 = vmatpush2.msra.mxu0 0.0
    %401 = vmatprep.subr.mxu0 0.0
    %402 = vmatpush2.msra.mxu0 0.0
    %403 = vmatprep.subr.mxu0 0.0
    %404 = vmatpush2.msra.mxu0 0.0
    %405 = vmatprep.subr.mxu0 0.0
    %406 = vmatpush2.msra.mxu0 0.0
    %407 = vmatprep.mubr.f32.mxu0 0.0
    %408 = vmatmul.mubr.f32.gmra.mxu0 %v250
    %v409 = vpop.f32.mrf.mxu0
    %v410 = vadd.f32 %v338, %v409
    %v411 = vpop.f32.mrf.mxu0
    %412 = vmatprep.mubr.f32.mxu0 0.0
    %413 = vmatmul.mubr.f32.gmra.mxu0 %v253
    %v414 = vpop.f32.mrf.mxu0
    %v415 = vadd.f32 %v338, %v414
    %v416 = vpop.f32.mrf.mxu0
    %417 = vdwg.mxu0
    %v418 = vxor.u32 %v326, 2147483648
    %v419 = vmul.f32 %v418, 1.442695
    %v420 = vpow.pop %v419
    %v421 = vadd.f32 %v420, 1.0
    %v422 = vrcp.pop %v421
    %v423 = vmul.f32 1.0, %v422
    %v424 = vtanh.pop %v326
    %426 = vrot.lane.b32.xlu0 %v424, 64
    %v427 = vpop.permute.xlu0 %426
    %v429 = vmul.f32 %v423, %v427
    %v430 = vtanh.pop %v429
    %432 = vrot.lane.b32.xlu0 %v430, 96
    %v433 = vpop.permute.xlu0 %432
    %v435 = vmul.f32 %v423, %v433
    %437 = vrot.lane.b32.xlu0 %v435, 32
    %v438 = vpop.permute.xlu0 %437
    %vm440 = vcmask 254976
    %441 = vst.msk [vmem:[#allocation2] sm:$0x3] %vm440, %v438
    %vm442 = vcmask 261120
    %v443 = vsel %vm442, %v438, 0
    %445 = vmatprep.subr.mxu0 0.0
    %446 = vmatpush1.msra.mxu0 0.0
    %447 = vmatprep.subr.mxu0 0.0
    %448 = vmatpush1.msra.mxu0 0.0
    %449 = vmatprep.subr.mxu0 0.0
    %450 = vmatpush1.msra.mxu0 0.0
    %451 = vmatprep.subr.mxu0 0.0
    %452 = vmatpush1.msra.mxu0 0.0
    %453 = vmatprep.subr.mxu0 0.0
    %454 = vmatpush1.msra.mxu0 0.0
    %455 = vmatprep.subr.mxu0 0.0
    %456 = vmatpush1.msra.mxu0 0.0
    %457 = vmatprep.subr.mxu0 0.0
    %458 = vmatpush1.msra.mxu0 0.0
    %459 = vmatprep.subr.mxu0 0.0
    %460 = vmatpush1.msra.mxu0 0.0
    %461 = vmatprep.subr.mxu0 0.0
    %462 = vmatpush1.msra.mxu0 0.0
    %463 = vmatprep.subr.mxu0 0.0
    %464 = vmatpush1.msra.mxu0 0.0
    %465 = vmatprep.subr.mxu0 0.0
    %466 = vmatpush1.msra.mxu0 0.0
    %467 = vmatprep.subr.mxu0 0.0
    %468 = vmatpush1.msra.mxu0 0.0
    %469 = vmatprep.subr.mxu0 0.0
    %470 = vmatpush1.msra.mxu0 %v234
    %471 = vmatprep.subr.mxu0 0.0
    %472 = vmatpush1.msra.mxu0 %v233
    %473 = vmatprep.subr.mxu0 0.0
    %474 = vmatpush1.msra.mxu0 %v232
    %475 = vmatprep.subr.mxu0 0.0
    %476 = vmatpush1.msra.mxu0 %v231
    %477 = vmatprep.subr.mxu0 0.0
    %478 = vmatpush2.msra.mxu0 0.0
    %479 = vmatprep.subr.mxu0 0.0
    %480 = vmatpush2.msra.mxu0 0.0
    %481 = vmatprep.subr.mxu0 0.0
    %482 = vmatpush2.msra.mxu0 0.0
    %483 = vmatprep.subr.mxu0 0.0
    %484 = vmatpush2.msra.mxu0 0.0
    %485 = vmatprep.subr.mxu0 0.0
    %486 = vmatpush2.msra.mxu0 0.0
    %487 = vmatprep.subr.mxu0 0.0
    %488 = vmatpush2.msra.mxu0 0.0
    %489 = vmatprep.subr.mxu0 0.0
    %490 = vmatpush2.msra.mxu0 0.0
    %491 = vmatprep.subr.mxu0 0.0
    %492 = vmatpush2.msra.mxu0 0.0
    %493 = vmatprep.subr.mxu0 0.0
    %494 = vmatpush2.msra.mxu0 0.0
    %495 = vmatprep.subr.mxu0 0.0
    %496 = vmatpush2.msra.mxu0 0.0
    %497 = vmatprep.subr.mxu0 0.0
    %498 = vmatpush2.msra.mxu0 0.0
    %499 = vmatprep.subr.mxu0 0.0
    %500 = vmatpush2.msra.mxu0 0.0
    %501 = vmatprep.subr.mxu0 0.0
    %502 = vmatpush2.msra.mxu0 0.0
    %503 = vmatprep.subr.mxu0 0.0
    %504 = vmatpush2.msra.mxu0 0.0
    %505 = vmatprep.subr.mxu0 0.0
    %506 = vmatpush2.msra.mxu0 0.0
    %507 = vmatprep.subr.mxu0 0.0
    %508 = vmatpush2.msra.mxu0 0.0
    %509 = vmatprep.mubr.f32.mxu0 0.0
    %510 = vmatmul.mubr.f32.gmra.mxu0 %v443
    %v511 = vpop.f32.mrf.mxu0
    %v512 = vadd.f32 0.0, %v511
    %v513 = vpop.f32.mrf.mxu0
    %514 = vdwg.mxu0
    %v516 = vrot.slane %v512, 6
    %v518 = vadd.f32 %v326, %v516
    %v519 = vxor.u32 %v518, 2147483648
    %v520 = vmul.f32 %v519, 1.442695
    %v521 = vpow.pop %v520
    %v522 = vadd.f32 %v521, 1.0
    %v523 = vrcp.pop %v522
    %v524 = vmul.f32 1.0, %v523
    %v525 = vtanh.pop %v518
    %527 = vrot.lane.b32.xlu0 %v525, 64
    %v528 = vpop.permute.xlu0 %527
    %v530 = vmul.f32 %v524, %v528
    %v532 = vrot.slane %v429, 6
    %533 = vrot.lane.b32.xlu0 %v532, 32
    %v534 = vpop.permute.xlu0 %533
    %v536 = vmul.f32 %v524, %v534
    %538 = vrot.lane.b32.xlu0 %v530, 32
    %v539 = vpop.permute.xlu0 %538
    %v541 = vadd.f32 %v536, %v539
    %v542 = vtanh.pop %v541
    %544 = vrot.lane.b32.xlu0 %v542, 64
    %v545 = vpop.permute.xlu0 %544
    %v547 = vmul.f32 %v524, %v545
    %549 = vrot.lane.b32.xlu0 %v547, 32
    %v550 = vpop.permute.xlu0 %549
    %vm552 = vcmask 257026
    %553 = vst.msk [vmem:[#allocation2] sm:$0xc] %vm552, %v550
    %v554 = vrot.slane %v547, 2
    %555 = vrot.lane.b32.xlu0 %v554, 32
    %v556 = vpop.permute.xlu0 %555
    %v557 = vsel %vm442, %v556, 0
    %559 = vmatprep.subr.mxu0 0.0
    %560 = vmatpush1.msra.mxu0 0.0
    %561 = vmatprep.subr.mxu0 0.0
    %562 = vmatpush1.msra.mxu0 0.0
    %563 = vmatprep.subr.mxu0 0.0
    %564 = vmatpush1.msra.mxu0 0.0
    %565 = vmatprep.subr.mxu0 0.0
    %566 = vmatpush1.msra.mxu0 0.0
    %567 = vmatprep.subr.mxu0 0.0
    %568 = vmatpush1.msra.mxu0 0.0
    %569 = vmatprep.subr.mxu0 0.0
    %570 = vmatpush1.msra.mxu0 0.0
    %571 = vmatprep.subr.mxu0 0.0
    %572 = vmatpush1.msra.mxu0 0.0
    %573 = vmatprep.subr.mxu0 0.0
    %574 = vmatpush1.msra.mxu0 0.0
    %575 = vmatprep.subr.mxu0 0.0
    %576 = vmatpush1.msra.mxu0 0.0
    %577 = vmatprep.subr.mxu0 0.0
    %578 = vmatpush1.msra.mxu0 0.0
    %579 = vmatprep.subr.mxu0 0.0
    %580 = vmatpush1.msra.mxu0 0.0
    %581 = vmatprep.subr.mxu0 0.0
    %582 = vmatpush1.msra.mxu0 0.0
    %583 = vmatprep.subr.mxu0 0.0
    %584 = vmatpush1.msra.mxu0 %v234
    %585 = vmatprep.subr.mxu0 0.0
    %586 = vmatpush1.msra.mxu0 %v233
    %587 = vmatprep.subr.mxu0 0.0
    %588 = vmatpush1.msra.mxu0 %v232
    %589 = vmatprep.subr.mxu0 0.0
    %590 = vmatpush1.msra.mxu0 %v231
    %591 = vmatprep.subr.mxu0 0.0
    %592 = vmatpush2.msra.mxu0 0.0
    %593 = vmatprep.subr.mxu0 0.0
    %594 = vmatpush2.msra.mxu0 0.0
    %595 = vmatprep.subr.mxu0 0.0
    %596 = vmatpush2.msra.mxu0 0.0
    %597 = vmatprep.subr.mxu0 0.0
    %598 = vmatpush2.msra.mxu0 0.0
    %599 = vmatprep.subr.mxu0 0.0
    %600 = vmatpush2.msra.mxu0 0.0
    %601 = vmatprep.subr.mxu0 0.0
    %602 = vmatpush2.msra.mxu0 0.0
    %603 = vmatprep.subr.mxu0 0.0
    %604 = vmatpush2.msra.mxu0 0.0
    %605 = vmatprep.subr.mxu0 0.0
    %606 = vmatpush2.msra.mxu0 0.0
    %607 = vmatprep.subr.mxu0 0.0
    %608 = vmatpush2.msra.mxu0 0.0
    %609 = vmatprep.subr.mxu0 0.0
    %610 = vmatpush2.msra.mxu0 0.0
    %611 = vmatprep.subr.mxu0 0.0
    %612 = vmatpush2.msra.mxu0 0.0
    %613 = vmatprep.subr.mxu0 0.0
    %614 = vmatpush2.msra.mxu0 0.0
    %615 = vmatprep.subr.mxu0 0.0
    %616 = vmatpush2.msra.mxu0 0.0
    %617 = vmatprep.subr.mxu0 0.0
    %618 = vmatpush2.msra.mxu0 0.0
    %619 = vmatprep.subr.mxu0 0.0
    %620 = vmatpush2.msra.mxu0 0.0
    %621 = vmatprep.subr.mxu0 0.0
    %622 = vmatpush2.msra.mxu0 0.0
    %623 = vmatprep.mubr.f32.mxu0 0.0
    %624 = vmatmul.mubr.f32.gmra.mxu0 %v557
    %v625 = vpop.f32.mrf.mxu0
    %v626 = vadd.f32 0.0, %v625
    %v627 = vpop.f32.mrf.mxu0
    %628 = vdwg.mxu0
    %v630 = vrot.slane %v626, 4
    %v632 = vadd.f32 %v326, %v630
    %v633 = vxor.u32 %v632, 2147483648
    %v634 = vmul.f32 %v633, 1.442695
    %v635 = vpow.pop %v634
    %v636 = vadd.f32 %v635, 1.0
    %v637 = vrcp.pop %v636
    %v638 = vmul.f32 1.0, %v637
    %v639 = vtanh.pop %v632
    %641 = vrot.lane.b32.xlu0 %v639, 64
    %v642 = vpop.permute.xlu0 %641
    %v644 = vmul.f32 %v638, %v642
    %v646 = vrot.slane %v541, 6
    %v648 = vmul.f32 %v638, %v646
    %650 = vrot.lane.b32.xlu0 %v644, 32
    %v651 = vpop.permute.xlu0 %650
    %v653 = vadd.f32 %v648, %v651
    %v654 = vtanh.pop %v653
    %656 = vrot.lane.b32.xlu0 %v654, 64
    %v657 = vpop.permute.xlu0 %656
    %v659 = vmul.f32 %v638, %v657
    %661 = vrot.lane.b32.xlu0 %v659, 32
    %v662 = vpop.permute.xlu0 %661
    %vm664 = vcmask 259076
    %665 = vst.msk [vmem:[#allocation2] sm:$0x30] %vm664, %v662
    %v666 = vrot.slane %v659, 4
    %667 = vrot.lane.b32.xlu0 %v666, 32
    %v668 = vpop.permute.xlu0 %667
    %v669 = vsel %vm442, %v668, 0
    %671 = vmatprep.subr.mxu0 0.0
    %672 = vmatpush1.msra.mxu0 0.0
    %673 = vmatprep.subr.mxu0 0.0
    %674 = vmatpush1.msra.mxu0 0.0
    %675 = vmatprep.subr.mxu0 0.0
    %676 = vmatpush1.msra.mxu0 0.0
    %677 = vmatprep.subr.mxu0 0.0
    %678 = vmatpush1.msra.mxu0 0.0
    %679 = vmatprep.subr.mxu0 0.0
    %680 = vmatpush1.msra.mxu0 0.0
    %681 = vmatprep.subr.mxu0 0.0
    %682 = vmatpush1.msra.mxu0 0.0
    %683 = vmatprep.subr.mxu0 0.0
    %684 = vmatpush1.msra.mxu0 0.0
    %685 = vmatprep.subr.mxu0 0.0
    %686 = vmatpush1.msra.mxu0 0.0
    %687 = vmatprep.subr.mxu0 0.0
    %688 = vmatpush1.msra.mxu0 0.0
    %689 = vmatprep.subr.mxu0 0.0
    %690 = vmatpush1.msra.mxu0 0.0
    %691 = vmatprep.subr.mxu0 0.0
    %692 = vmatpush1.msra.mxu0 0.0
    %693 = vmatprep.subr.mxu0 0.0
    %694 = vmatpush1.msra.mxu0 0.0
    %695 = vmatprep.subr.mxu0 0.0
    %696 = vmatpush1.msra.mxu0 %v234
    %697 = vmatprep.subr.mxu0 0.0
    %698 = vmatpush1.msra.mxu0 %v233
    %699 = vmatprep.subr.mxu0 0.0
    %700 = vmatpush1.msra.mxu0 %v232
    %701 = vmatprep.subr.mxu0 0.0
    %702 = vmatpush1.msra.mxu0 %v231
    %703 = vmatprep.subr.mxu0 0.0
    %704 = vmatpush2.msra.mxu0 0.0
    %705 = vmatprep.subr.mxu0 0.0
    %706 = vmatpush2.msra.mxu0 0.0
    %707 = vmatprep.subr.mxu0 0.0
    %708 = vmatpush2.msra.mxu0 0.0
    %709 = vmatprep.subr.mxu0 0.0
    %710 = vmatpush2.msra.mxu0 0.0
    %711 = vmatprep.subr.mxu0 0.0
    %712 = vmatpush2.msra.mxu0 0.0
    %713 = vmatprep.subr.mxu0 0.0
    %714 = vmatpush2.msra.mxu0 0.0
    %715 = vmatprep.subr.mxu0 0.0
    %716 = vmatpush2.msra.mxu0 0.0
    %717 = vmatprep.subr.mxu0 0.0
    %718 = vmatpush2.msra.mxu0 0.0
    %719 = vmatprep.subr.mxu0 0.0
    %720 = vmatpush2.msra.mxu0 0.0
    %721 = vmatprep.subr.mxu0 0.0
    %722 = vmatpush2.msra.mxu0 0.0
    %723 = vmatprep.subr.mxu0 0.0
    %724 = vmatpush2.msra.mxu0 0.0
    %725 = vmatprep.subr.mxu0 0.0
    %726 = vmatpush2.msra.mxu0 0.0
    %727 = vmatprep.subr.mxu0 0.0
    %728 = vmatpush2.msra.mxu0 0.0
    %729 = vmatprep.subr.mxu0 0.0
    %730 = vmatpush2.msra.mxu0 0.0
    %731 = vmatprep.subr.mxu0 0.0
    %732 = vmatpush2.msra.mxu0 0.0
    %733 = vmatprep.subr.mxu0 0.0
    %734 = vmatpush2.msra.mxu0 0.0
    %735 = vmatprep.mubr.f32.mxu0 0.0
    %736 = vmatmul.mubr.f32.gmra.mxu0 %v669
    %v737 = vpop.f32.mrf.mxu0
    %v738 = vadd.f32 0.0, %v737
    %v739 = vpop.f32.mrf.mxu0
    %740 = vdwg.mxu0
    %v742 = vrot.slane %v738, 2
    %v744 = vadd.f32 %v326, %v742
    %v745 = vxor.u32 %v744, 2147483648
    %v746 = vmul.f32 %v745, 1.442695
    %v747 = vpow.pop %v746
    %v748 = vadd.f32 %v747, 1.0
    %v749 = vrcp.pop %v748
    %v750 = vmul.f32 1.0, %v749
    %v751 = vtanh.pop %v744
    %753 = vrot.lane.b32.xlu0 %v751, 64
    %v754 = vpop.permute.xlu0 %753
    %v756 = vmul.f32 %v750, %v754
    %v758 = vrot.slane %v653, 6
    %v760 = vmul.f32 %v750, %v758
    %762 = vrot.lane.b32.xlu0 %v756, 32
    %v763 = vpop.permute.xlu0 %762
    %v765 = vadd.f32 %v760, %v763
    %v766 = vtanh.pop %v765
    %768 = vrot.lane.b32.xlu0 %v766, 64
    %v769 = vpop.permute.xlu0 %768
    %v771 = vmul.f32 %v750, %v769
    %773 = vrot.lane.b32.xlu0 %v771, 32
    %v774 = vpop.permute.xlu0 %773
    %vm776 = vcmask 261126
    %777 = vst.msk [vmem:[#allocation2] sm:$0xc0] %vm776, %v774
    %v778 = vrot.slane %v771, 6
    %779 = vrot.lane.b32.xlu0 %v778, 32
    %v780 = vpop.permute.xlu0 %779
    %v781 = vsel %vm442, %v780, 0
    %783 = vmatprep.subr.mxu0 0.0
    %784 = vmatpush1.msra.mxu0 0.0
    %785 = vmatprep.subr.mxu0 0.0
    %786 = vmatpush1.msra.mxu0 0.0
    %787 = vmatprep.subr.mxu0 0.0
    %788 = vmatpush1.msra.mxu0 0.0
    %789 = vmatprep.subr.mxu0 0.0
    %790 = vmatpush1.msra.mxu0 0.0
    %791 = vmatprep.subr.mxu0 0.0
    %792 = vmatpush1.msra.mxu0 0.0
    %793 = vmatprep.subr.mxu0 0.0
    %794 = vmatpush1.msra.mxu0 0.0
    %795 = vmatprep.subr.mxu0 0.0
    %796 = vmatpush1.msra.mxu0 0.0
    %797 = vmatprep.subr.mxu0 0.0
    %798 = vmatpush1.msra.mxu0 0.0
    %799 = vmatprep.subr.mxu0 0.0
    %800 = vmatpush1.msra.mxu0 0.0
    %801 = vmatprep.subr.mxu0 0.0
    %802 = vmatpush1.msra.mxu0 0.0
    %803 = vmatprep.subr.mxu0 0.0
    %804 = vmatpush1.msra.mxu0 0.0
    %805 = vmatprep.subr.mxu0 0.0
    %806 = vmatpush1.msra.mxu0 0.0
    %807 = vmatprep.subr.mxu0 0.0
    %808 = vmatpush1.msra.mxu0 %v234
    %809 = vmatprep.subr.mxu0 0.0
    %810 = vmatpush1.msra.mxu0 %v233
    %811 = vmatprep.subr.mxu0 0.0
    %812 = vmatpush1.msra.mxu0 %v232
    %813 = vmatprep.subr.mxu0 0.0
    %814 = vmatpush1.msra.mxu0 %v231
    %815 = vmatprep.subr.mxu0 0.0
    %816 = vmatpush2.msra.mxu0 0.0
    %817 = vmatprep.subr.mxu0 0.0
    %818 = vmatpush2.msra.mxu0 0.0
    %819 = vmatprep.subr.mxu0 0.0
    %820 = vmatpush2.msra.mxu0 0.0
    %821 = vmatprep.subr.mxu0 0.0
    %822 = vmatpush2.msra.mxu0 0.0
    %823 = vmatprep.subr.mxu0 0.0
    %824 = vmatpush2.msra.mxu0 0.0
    %825 = vmatprep.subr.mxu0 0.0
    %826 = vmatpush2.msra.mxu0 0.0
    %827 = vmatprep.subr.mxu0 0.0
    %828 = vmatpush2.msra.mxu0 0.0
    %829 = vmatprep.subr.mxu0 0.0
    %830 = vmatpush2.msra.mxu0 0.0
    %831 = vmatprep.subr.mxu0 0.0
    %832 = vmatpush2.msra.mxu0 0.0
    %833 = vmatprep.subr.mxu0 0.0
    %834 = vmatpush2.msra.mxu0 0.0
    %835 = vmatprep.subr.mxu0 0.0
    %836 = vmatpush2.msra.mxu0 0.0
    %837 = vmatprep.subr.mxu0 0.0
    %838 = vmatpush2.msra.mxu0 0.0
    %839 = vmatprep.subr.mxu0 0.0
    %840 = vmatpush2.msra.mxu0 0.0
    %841 = vmatprep.subr.mxu0 0.0
    %842 = vmatpush2.msra.mxu0 0.0
    %843 = vmatprep.subr.mxu0 0.0
    %844 = vmatpush2.msra.mxu0 0.0
    %845 = vmatprep.subr.mxu0 0.0
    %846 = vmatpush2.msra.mxu0 0.0
    %847 = vmatprep.mubr.f32.mxu0 0.0
    %848 = vmatmul.mubr.f32.gmra.mxu0 %v781
    %v849 = vpop.f32.mrf.mxu0
    %v850 = vadd.f32 0.0, %v849
    %v851 = vpop.f32.mrf.mxu0
    %852 = vdwg.mxu0
    %v853 = vadd.f32 %v331, %v850
    %v854 = vxor.u32 %v853, 2147483648
    %v855 = vmul.f32 %v854, 1.442695
    %v856 = vpow.pop %v855
    %v857 = vadd.f32 %v856, 1.0
    %v858 = vrcp.pop %v857
    %v859 = vmul.f32 1.0, %v858
    %v860 = vtanh.pop %v853
    %862 = vrot.lane.b32.xlu0 %v860, 64
    %v863 = vpop.permute.xlu0 %862
    %v865 = vmul.f32 %v859, %v863
    %v867 = vrot.slane %v765, 6
    %v869 = vmul.f32 %v859, %v867
    %871 = vrot.lane.b32.xlu0 %v865, 32
    %v872 = vpop.permute.xlu0 %871
    %v874 = vadd.f32 %v869, %v872
    %v875 = vtanh.pop %v874
    %877 = vrot.lane.b32.xlu0 %v875, 64
    %v878 = vpop.permute.xlu0 %877
    %v880 = vmul.f32 %v859, %v878
    %882 = vrot.lane.b32.xlu0 %v880, 32
    %v883 = vpop.permute.xlu0 %882
    %885 = vst.msk [vmem:[#allocation2 + $0x8] sm:$0x3] %vm440, %v883
    %v886 = vsel %vm442, %v883, 0
    %888 = vmatprep.subr.mxu0 0.0
    %889 = vmatpush1.msra.mxu0 0.0
    %890 = vmatprep.subr.mxu0 0.0
    %891 = vmatpush1.msra.mxu0 0.0
    %892 = vmatprep.subr.mxu0 0.0
    %893 = vmatpush1.msra.mxu0 0.0
    %894 = vmatprep.subr.mxu0 0.0
    %895 = vmatpush1.msra.mxu0 0.0
    %896 = vmatprep.subr.mxu0 0.0
    %897 = vmatpush1.msra.mxu0 0.0
    %898 = vmatprep.subr.mxu0 0.0
    %899 = vmatpush1.msra.mxu0 0.0
    %900 = vmatprep.subr.mxu0 0.0
    %901 = vmatpush1.msra.mxu0 0.0
    %902 = vmatprep.subr.mxu0 0.0
    %903 = vmatpush1.msra.mxu0 0.0
    %904 = vmatprep.subr.mxu0 0.0
    %905 = vmatpush1.msra.mxu0 0.0
    %906 = vmatprep.subr.mxu0 0.0
    %907 = vmatpush1.msra.mxu0 0.0
    %908 = vmatprep.subr.mxu0 0.0
    %909 = vmatpush1.msra.mxu0 0.0
    %910 = vmatprep.subr.mxu0 0.0
    %911 = vmatpush1.msra.mxu0 0.0
    %912 = vmatprep.subr.mxu0 0.0
    %913 = vmatpush1.msra.mxu0 %v234
    %914 = vmatprep.subr.mxu0 0.0
    %915 = vmatpush1.msra.mxu0 %v233
    %916 = vmatprep.subr.mxu0 0.0
    %917 = vmatpush1.msra.mxu0 %v232
    %918 = vmatprep.subr.mxu0 0.0
    %919 = vmatpush1.msra.mxu0 %v231
    %920 = vmatprep.subr.mxu0 0.0
    %921 = vmatpush2.msra.mxu0 0.0
    %922 = vmatprep.subr.mxu0 0.0
    %923 = vmatpush2.msra.mxu0 0.0
    %924 = vmatprep.subr.mxu0 0.0
    %925 = vmatpush2.msra.mxu0 0.0
    %926 = vmatprep.subr.mxu0 0.0
    %927 = vmatpush2.msra.mxu0 0.0
    %928 = vmatprep.subr.mxu0 0.0
    %929 = vmatpush2.msra.mxu0 0.0
    %930 = vmatprep.subr.mxu0 0.0
    %931 = vmatpush2.msra.mxu0 0.0
    %932 = vmatprep.subr.mxu0 0.0
    %933 = vmatpush2.msra.mxu0 0.0
    %934 = vmatprep.subr.mxu0 0.0
    %935 = vmatpush2.msra.mxu0 0.0
    %936 = vmatprep.subr.mxu0 0.0
    %937 = vmatpush2.msra.mxu0 0.0
    %938 = vmatprep.subr.mxu0 0.0
    %939 = vmatpush2.msra.mxu0 0.0
    %940 = vmatprep.subr.mxu0 0.0
    %941 = vmatpush2.msra.mxu0 0.0
    %942 = vmatprep.subr.mxu0 0.0
    %943 = vmatpush2.msra.mxu0 0.0
    %944 = vmatprep.subr.mxu0 0.0
    %945 = vmatpush2.msra.mxu0 0.0
    %946 = vmatprep.subr.mxu0 0.0
    %947 = vmatpush2.msra.mxu0 0.0
    %948 = vmatprep.subr.mxu0 0.0
    %949 = vmatpush2.msra.mxu0 0.0
    %950 = vmatprep.subr.mxu0 0.0
    %951 = vmatpush2.msra.mxu0 0.0
    %952 = vmatprep.mubr.f32.mxu0 0.0
    %953 = vmatmul.mubr.f32.gmra.mxu0 %v886
    %v954 = vpop.f32.mrf.mxu0
    %v955 = vadd.f32 0.0, %v954
    %v956 = vpop.f32.mrf.mxu0
    %957 = vdwg.mxu0
    %v959 = vrot.slane %v955, 6
    %v961 = vadd.f32 %v331, %v959
    %v962 = vxor.u32 %v961, 2147483648
    %v963 = vmul.f32 %v962, 1.442695
    %v964 = vpow.pop %v963
    %v965 = vadd.f32 %v964, 1.0
    %v966 = vrcp.pop %v965
    %v967 = vmul.f32 1.0, %v966
    %v968 = vtanh.pop %v961
    %970 = vrot.lane.b32.xlu0 %v968, 64
    %v971 = vpop.permute.xlu0 %970
    %v973 = vmul.f32 %v967, %v971
    %v975 = vrot.slane %v874, 6
    %v977 = vmul.f32 %v967, %v975
    %979 = vrot.lane.b32.xlu0 %v973, 32
    %v980 = vpop.permute.xlu0 %979
    %v982 = vadd.f32 %v977, %v980
    %v983 = vtanh.pop %v982
    %985 = vrot.lane.b32.xlu0 %v983, 64
    %v986 = vpop.permute.xlu0 %985
    %v988 = vmul.f32 %v967, %v986
    %990 = vrot.lane.b32.xlu0 %v988, 32
    %v991 = vpop.permute.xlu0 %990
    %993 = vst.msk [vmem:[#allocation2 + $0x8] sm:$0xc] %vm552, %v991
    %v994 = vrot.slane %v988, 2
    %995 = vrot.lane.b32.xlu0 %v994, 32
    %v996 = vpop.permute.xlu0 %995
    %v997 = vsel %vm442, %v996, 0
    %999 = vmatprep.subr.mxu0 0.0
    %1000 = vmatpush1.msra.mxu0 0.0
    %1001 = vmatprep.subr.mxu0 0.0
    %1002 = vmatpush1.msra.mxu0 0.0
    %1003 = vmatprep.subr.mxu0 0.0
    %1004 = vmatpush1.msra.mxu0 0.0
    %1005 = vmatprep.subr.mxu0 0.0
    %1006 = vmatpush1.msra.mxu0 0.0
    %1007 = vmatprep.subr.mxu0 0.0
    %1008 = vmatpush1.msra.mxu0 0.0
    %1009 = vmatprep.subr.mxu0 0.0
    %1010 = vmatpush1.msra.mxu0 0.0
    %1011 = vmatprep.subr.mxu0 0.0
    %1012 = vmatpush1.msra.mxu0 0.0
    %1013 = vmatprep.subr.mxu0 0.0
    %1014 = vmatpush1.msra.mxu0 0.0
    %1015 = vmatprep.subr.mxu0 0.0
    %1016 = vmatpush1.msra.mxu0 0.0
    %1017 = vmatprep.subr.mxu0 0.0
    %1018 = vmatpush1.msra.mxu0 0.0
    %1019 = vmatprep.subr.mxu0 0.0
    %1020 = vmatpush1.msra.mxu0 0.0
    %1021 = vmatprep.subr.mxu0 0.0
    %1022 = vmatpush1.msra.mxu0 0.0
    %1023 = vmatprep.subr.mxu0 0.0
    %1024 = vmatpush1.msra.mxu0 %v234
    %1025 = vmatprep.subr.mxu0 0.0
    %1026 = vmatpush1.msra.mxu0 %v233
    %1027 = vmatprep.subr.mxu0 0.0
    %1028 = vmatpush1.msra.mxu0 %v232
    %1029 = vmatprep.subr.mxu0 0.0
    %1030 = vmatpush1.msra.mxu0 %v231
    %1031 = vmatprep.subr.mxu0 0.0
    %1032 = vmatpush2.msra.mxu0 0.0
    %1033 = vmatprep.subr.mxu0 0.0
    %1034 = vmatpush2.msra.mxu0 0.0
    %1035 = vmatprep.subr.mxu0 0.0
    %1036 = vmatpush2.msra.mxu0 0.0
    %1037 = vmatprep.subr.mxu0 0.0
    %1038 = vmatpush2.msra.mxu0 0.0
    %1039 = vmatprep.subr.mxu0 0.0
    %1040 = vmatpush2.msra.mxu0 0.0
    %1041 = vmatprep.subr.mxu0 0.0
    %1042 = vmatpush2.msra.mxu0 0.0
    %1043 = vmatprep.subr.mxu0 0.0
    %1044 = vmatpush2.msra.mxu0 0.0
    %1045 = vmatprep.subr.mxu0 0.0
    %1046 = vmatpush2.msra.mxu0 0.0
    %1047 = vmatprep.subr.mxu0 0.0
    %1048 = vmatpush2.msra.mxu0 0.0
    %1049 = vmatprep.subr.mxu0 0.0
    %1050 = vmatpush2.msra.mxu0 0.0
    %1051 = vmatprep.subr.mxu0 0.0
    %1052 = vmatpush2.msra.mxu0 0.0
    %1053 = vmatprep.subr.mxu0 0.0
    %1054 = vmatpush2.msra.mxu0 0.0
    %1055 = vmatprep.subr.mxu0 0.0
    %1056 = vmatpush2.msra.mxu0 0.0
    %1057 = vmatprep.subr.mxu0 0.0
    %1058 = vmatpush2.msra.mxu0 0.0
    %1059 = vmatprep.subr.mxu0 0.0
    %1060 = vmatpush2.msra.mxu0 0.0
    %1061 = vmatprep.subr.mxu0 0.0
    %1062 = vmatpush2.msra.mxu0 0.0
    %1063 = vmatprep.mubr.f32.mxu0 0.0
    %1064 = vmatmul.mubr.f32.gmra.mxu0 %v997
    %v1065 = vpop.f32.mrf.mxu0
    %v1066 = vadd.f32 0.0, %v1065
    %v1067 = vpop.f32.mrf.mxu0
    %1068 = vdwg.mxu0
    %v1070 = vrot.slane %v1066, 4
    %v1072 = vadd.f32 %v331, %v1070
    %v1073 = vxor.u32 %v1072, 2147483648
    %v1074 = vmul.f32 %v1073, 1.442695
    %v1075 = vpow.pop %v1074
    %v1076 = vadd.f32 %v1075, 1.0
    %v1077 = vrcp.pop %v1076
    %v1078 = vmul.f32 1.0, %v1077
    %v1079 = vtanh.pop %v1072
    %1081 = vrot.lane.b32.xlu0 %v1079, 64
    %v1082 = vpop.permute.xlu0 %1081
    %v1084 = vmul.f32 %v1078, %v1082
    %v1086 = vrot.slane %v982, 6
    %v1088 = vmul.f32 %v1078, %v1086
    %1090 = vrot.lane.b32.xlu0 %v1084, 32
    %v1091 = vpop.permute.xlu0 %1090
    %v1093 = vadd.f32 %v1088, %v1091
    %v1094 = vtanh.pop %v1093
    %1096 = vrot.lane.b32.xlu0 %v1094, 64
    %v1097 = vpop.permute.xlu0 %1096
    %v1099 = vmul.f32 %v1078, %v1097
    %1101 = vrot.lane.b32.xlu0 %v1099, 32
    %v1102 = vpop.permute.xlu0 %1101
    %1104 = vst.msk [vmem:[#allocation2 + $0x8] sm:$0x30] %vm664, %v1102
    %v1105 = vrot.slane %v1099, 4
    %1106 = vrot.lane.b32.xlu0 %v1105, 32
    %v1107 = vpop.permute.xlu0 %1106
    %v1108 = vsel %vm442, %v1107, 0
    %1110 = vmatprep.subr.mxu0 0.0
    %1111 = vmatpush1.msra.mxu0 0.0
    %1112 = vmatprep.subr.mxu0 0.0
    %1113 = vmatpush1.msra.mxu0 0.0
    %1114 = vmatprep.subr.mxu0 0.0
    %1115 = vmatpush1.msra.mxu0 0.0
    %1116 = vmatprep.subr.mxu0 0.0
    %1117 = vmatpush1.msra.mxu0 0.0
    %1118 = vmatprep.subr.mxu0 0.0
    %1119 = vmatpush1.msra.mxu0 0.0
    %1120 = vmatprep.subr.mxu0 0.0
    %1121 = vmatpush1.msra.mxu0 0.0
    %1122 = vmatprep.subr.mxu0 0.0
    %1123 = vmatpush1.msra.mxu0 0.0
    %1124 = vmatprep.subr.mxu0 0.0
    %1125 = vmatpush1.msra.mxu0 0.0
    %1126 = vmatprep.subr.mxu0 0.0
    %1127 = vmatpush1.msra.mxu0 0.0
    %1128 = vmatprep.subr.mxu0 0.0
    %1129 = vmatpush1.msra.mxu0 0.0
    %1130 = vmatprep.subr.mxu0 0.0
    %1131 = vmatpush1.msra.mxu0 0.0
    %1132 = vmatprep.subr.mxu0 0.0
    %1133 = vmatpush1.msra.mxu0 0.0
    %1134 = vmatprep.subr.mxu0 0.0
    %1135 = vmatpush1.msra.mxu0 %v234
    %1136 = vmatprep.subr.mxu0 0.0
    %1137 = vmatpush1.msra.mxu0 %v233
    %1138 = vmatprep.subr.mxu0 0.0
    %1139 = vmatpush1.msra.mxu0 %v232
    %1140 = vmatprep.subr.mxu0 0.0
    %1141 = vmatpush1.msra.mxu0 %v231
    %1142 = vmatprep.subr.mxu0 0.0
    %1143 = vmatpush2.msra.mxu0 0.0
    %1144 = vmatprep.subr.mxu0 0.0
    %1145 = vmatpush2.msra.mxu0 0.0
    %1146 = vmatprep.subr.mxu0 0.0
    %1147 = vmatpush2.msra.mxu0 0.0
    %1148 = vmatprep.subr.mxu0 0.0
    %1149 = vmatpush2.msra.mxu0 0.0
    %1150 = vmatprep.subr.mxu0 0.0
    %1151 = vmatpush2.msra.mxu0 0.0
    %1152 = vmatprep.subr.mxu0 0.0
    %1153 = vmatpush2.msra.mxu0 0.0
    %1154 = vmatprep.subr.mxu0 0.0
    %1155 = vmatpush2.msra.mxu0 0.0
    %1156 = vmatprep.subr.mxu0 0.0
    %1157 = vmatpush2.msra.mxu0 0.0
    %1158 = vmatprep.subr.mxu0 0.0
    %1159 = vmatpush2.msra.mxu0 0.0
    %1160 = vmatprep.subr.mxu0 0.0
    %1161 = vmatpush2.msra.mxu0 0.0
    %1162 = vmatprep.subr.mxu0 0.0
    %1163 = vmatpush2.msra.mxu0 0.0
    %1164 = vmatprep.subr.mxu0 0.0
    %1165 = vmatpush2.msra.mxu0 0.0
    %1166 = vmatprep.subr.mxu0 0.0
    %1167 = vmatpush2.msra.mxu0 0.0
    %1168 = vmatprep.subr.mxu0 0.0
    %1169 = vmatpush2.msra.mxu0 0.0
    %1170 = vmatprep.subr.mxu0 0.0
    %1171 = vmatpush2.msra.mxu0 0.0
    %1172 = vmatprep.subr.mxu0 0.0
    %1173 = vmatpush2.msra.mxu0 0.0
    %1174 = vmatprep.mubr.f32.mxu0 0.0
    %1175 = vmatmul.mubr.f32.gmra.mxu0 %v1108
    %v1176 = vpop.f32.mrf.mxu0
    %v1177 = vadd.f32 0.0, %v1176
    %v1178 = vpop.f32.mrf.mxu0
    %1179 = vdwg.mxu0
    %v1181 = vrot.slane %v1177, 2
    %v1183 = vadd.f32 %v331, %v1181
    %v1184 = vxor.u32 %v1183, 2147483648
    %v1185 = vmul.f32 %v1184, 1.442695
    %v1186 = vpow.pop %v1185
    %v1187 = vadd.f32 %v1186, 1.0
    %v1188 = vrcp.pop %v1187
    %v1189 = vmul.f32 1.0, %v1188
    %v1190 = vtanh.pop %v1183
    %1192 = vrot.lane.b32.xlu0 %v1190, 64
    %v1193 = vpop.permute.xlu0 %1192
    %v1195 = vmul.f32 %v1189, %v1193
    %v1197 = vrot.slane %v1093, 6
    %v1199 = vmul.f32 %v1189, %v1197
    %1201 = vrot.lane.b32.xlu0 %v1195, 32
    %v1202 = vpop.permute.xlu0 %1201
    %v1204 = vadd.f32 %v1199, %v1202
    %v1205 = vtanh.pop %v1204
    %1207 = vrot.lane.b32.xlu0 %v1205, 64
    %v1208 = vpop.permute.xlu0 %1207
    %v1210 = vmul.f32 %v1189, %v1208
    %1212 = vrot.lane.b32.xlu0 %v1210, 32
    %v1213 = vpop.permute.xlu0 %1212
    %1215 = vst.msk [vmem:[#allocation2 + $0x8] sm:$0xc0] %vm776, %v1213
    %v1216 = vxor.u32 %v415, 2147483648
    %v1217 = vmul.f32 %v1216, 1.442695
    %v1218 = vpow.pop %v1217
    %v1219 = vadd.f32 %v1218, 1.0
    %v1220 = vrcp.pop %v1219
    %v1221 = vmul.f32 1.0, %v1220
    %v1222 = vtanh.pop %v415
    %1224 = vrot.lane.b32.xlu0 %v1222, 64
    %v1225 = vpop.permute.xlu0 %1224
    %v1227 = vmul.f32 %v1221, %v1225
    %v1228 = vtanh.pop %v1227
    %1230 = vrot.lane.b32.xlu0 %v1228, 96
    %v1231 = vpop.permute.xlu0 %1230
    %v1233 = vmul.f32 %v1221, %v1231
    %1235 = vrot.lane.b32.xlu0 %v1233, 64
    %v1236 = vpop.permute.xlu0 %1235
    %vm1238 = vcmask 523526
    %1239 = vst.msk [vmem:[#allocation2 + $0x8] sm:$0xc0] %vm1238, %v1236
    %v1240 = vrot.slane %v1233, 6
    %1241 = vrot.lane.b32.xlu0 %v1240, 32
    %v1242 = vpop.permute.xlu0 %1241
    %v1243 = vsel %vm442, %v1242, 0
    %1245 = vmatprep.subr.mxu0 0.0
    %1246 = vmatpush1.msra.mxu0 0.0
    %1247 = vmatprep.subr.mxu0 0.0
    %1248 = vmatpush1.msra.mxu0 0.0
    %1249 = vmatprep.subr.mxu0 0.0
    %1250 = vmatpush1.msra.mxu0 0.0
    %1251 = vmatprep.subr.mxu0 0.0
    %1252 = vmatpush1.msra.mxu0 0.0
    %1253 = vmatprep.subr.mxu0 0.0
    %1254 = vmatpush1.msra.mxu0 0.0
    %1255 = vmatprep.subr.mxu0 0.0
    %1256 = vmatpush1.msra.mxu0 0.0
    %1257 = vmatprep.subr.mxu0 0.0
    %1258 = vmatpush1.msra.mxu0 0.0
    %1259 = vmatprep.subr.mxu0 0.0
    %1260 = vmatpush1.msra.mxu0 0.0
    %1261 = vmatprep.subr.mxu0 0.0
    %1262 = vmatpush1.msra.mxu0 0.0
    %1263 = vmatprep.subr.mxu0 0.0
    %1264 = vmatpush1.msra.mxu0 0.0
    %1265 = vmatprep.subr.mxu0 0.0
    %1266 = vmatpush1.msra.mxu0 0.0
    %1267 = vmatprep.subr.mxu0 0.0
    %1268 = vmatpush1.msra.mxu0 0.0
    %1269 = vmatprep.subr.mxu0 0.0
    %1270 = vmatpush1.msra.mxu0 %v240
    %1271 = vmatprep.subr.mxu0 0.0
    %1272 = vmatpush1.msra.mxu0 %v239
    %1273 = vmatprep.subr.mxu0 0.0
    %1274 = vmatpush1.msra.mxu0 %v238
    %1275 = vmatprep.subr.mxu0 0.0
    %1276 = vmatpush1.msra.mxu0 %v237
    %1277 = vmatprep.subr.mxu0 0.0
    %1278 = vmatpush2.msra.mxu0 0.0
    %1279 = vmatprep.subr.mxu0 0.0
    %1280 = vmatpush2.msra.mxu0 0.0
    %1281 = vmatprep.subr.mxu0 0.0
    %1282 = vmatpush2.msra.mxu0 0.0
    %1283 = vmatprep.subr.mxu0 0.0
    %1284 = vmatpush2.msra.mxu0 0.0
    %1285 = vmatprep.subr.mxu0 0.0
    %1286 = vmatpush2.msra.mxu0 0.0
    %1287 = vmatprep.subr.mxu0 0.0
    %1288 = vmatpush2.msra.mxu0 0.0
    %1289 = vmatprep.subr.mxu0 0.0
    %1290 = vmatpush2.msra.mxu0 0.0
    %1291 = vmatprep.subr.mxu0 0.0
    %1292 = vmatpush2.msra.mxu0 0.0
    %1293 = vmatprep.subr.mxu0 0.0
    %1294 = vmatpush2.msra.mxu0 0.0
    %1295 = vmatprep.subr.mxu0 0.0
    %1296 = vmatpush2.msra.mxu0 0.0
    %1297 = vmatprep.subr.mxu0 0.0
    %1298 = vmatpush2.msra.mxu0 0.0
    %1299 = vmatprep.subr.mxu0 0.0
    %1300 = vmatpush2.msra.mxu0 0.0
    %1301 = vmatprep.subr.mxu0 0.0
    %1302 = vmatpush2.msra.mxu0 0.0
    %1303 = vmatprep.subr.mxu0 0.0
    %1304 = vmatpush2.msra.mxu0 0.0
    %1305 = vmatprep.subr.mxu0 0.0
    %1306 = vmatpush2.msra.mxu0 0.0
    %1307 = vmatprep.subr.mxu0 0.0
    %1308 = vmatpush2.msra.mxu0 0.0
    %1309 = vmatprep.mubr.f32.mxu0 0.0
    %1310 = vmatmul.mubr.f32.gmra.mxu0 %v1243
    %v1311 = vpop.f32.mrf.mxu0
    %v1312 = vadd.f32 0.0, %v1311
    %v1313 = vpop.f32.mrf.mxu0
    %1314 = vdwg.mxu0
    %v1316 = vrot.slane %v1312, 4
    %v1318 = vadd.f32 %v415, %v1316
    %v1319 = vxor.u32 %v1318, 2147483648
    %v1320 = vmul.f32 %v1319, 1.442695
    %v1321 = vpow.pop %v1320
    %v1322 = vadd.f32 %v1321, 1.0
    %v1323 = vrcp.pop %v1322
    %v1324 = vmul.f32 1.0, %v1323
    %v1325 = vtanh.pop %v1318
    %1327 = vrot.lane.b32.xlu0 %v1325, 64
    %v1328 = vpop.permute.xlu0 %1327
    %v1330 = vmul.f32 %v1324, %v1328
    %v1332 = vrot.slane %v1227, 2
    %1333 = vrot.lane.b32.xlu0 %v1332, 32
    %v1334 = vpop.permute.xlu0 %1333
    %v1336 = vmul.f32 %v1324, %v1334
    %1338 = vrot.lane.b32.xlu0 %v1330, 32
    %v1339 = vpop.permute.xlu0 %1338
    %v1341 = vadd.f32 %v1336, %v1339
    %v1342 = vtanh.pop %v1341
    %1344 = vrot.lane.b32.xlu0 %v1342, 64
    %v1345 = vpop.permute.xlu0 %1344
    %v1347 = vmul.f32 %v1324, %v1345
    %1349 = vrot.lane.b32.xlu0 %v1347, 64
    %v1350 = vpop.permute.xlu0 %1349
    %vm1352 = vcmask 521476
    %1353 = vst.msk [vmem:[#allocation2 + $0x8] sm:$0x30] %vm1352, %v1350
    %v1354 = vrot.slane %v1347, 4
    %1355 = vrot.lane.b32.xlu0 %v1354, 32
    %v1356 = vpop.permute.xlu0 %1355
    %v1357 = vsel %vm442, %v1356, 0
    %1359 = vmatprep.subr.mxu0 0.0
    %1360 = vmatpush1.msra.mxu0 0.0
    %1361 = vmatprep.subr.mxu0 0.0
    %1362 = vmatpush1.msra.mxu0 0.0
    %1363 = vmatprep.subr.mxu0 0.0
    %1364 = vmatpush1.msra.mxu0 0.0
    %1365 = vmatprep.subr.mxu0 0.0
    %1366 = vmatpush1.msra.mxu0 0.0
    %1367 = vmatprep.subr.mxu0 0.0
    %1368 = vmatpush1.msra.mxu0 0.0
    %1369 = vmatprep.subr.mxu0 0.0
    %1370 = vmatpush1.msra.mxu0 0.0
    %1371 = vmatprep.subr.mxu0 0.0
    %1372 = vmatpush1.msra.mxu0 0.0
    %1373 = vmatprep.subr.mxu0 0.0
    %1374 = vmatpush1.msra.mxu0 0.0
    %1375 = vmatprep.subr.mxu0 0.0
    %1376 = vmatpush1.msra.mxu0 0.0
    %1377 = vmatprep.subr.mxu0 0.0
    %1378 = vmatpush1.msra.mxu0 0.0
    %1379 = vmatprep.subr.mxu0 0.0
    %1380 = vmatpush1.msra.mxu0 0.0
    %1381 = vmatprep.subr.mxu0 0.0
    %1382 = vmatpush1.msra.mxu0 0.0
    %1383 = vmatprep.subr.mxu0 0.0
    %1384 = vmatpush1.msra.mxu0 %v240
    %1385 = vmatprep.subr.mxu0 0.0
    %1386 = vmatpush1.msra.mxu0 %v239
    %1387 = vmatprep.subr.mxu0 0.0
    %1388 = vmatpush1.msra.mxu0 %v238
    %1389 = vmatprep.subr.mxu0 0.0
    %1390 = vmatpush1.msra.mxu0 %v237
    %1391 = vmatprep.subr.mxu0 0.0
    %1392 = vmatpush2.msra.mxu0 0.0
    %1393 = vmatprep.subr.mxu0 0.0
    %1394 = vmatpush2.msra.mxu0 0.0
    %1395 = vmatprep.subr.mxu0 0.0
    %1396 = vmatpush2.msra.mxu0 0.0
    %1397 = vmatprep.subr.mxu0 0.0
    %1398 = vmatpush2.msra.mxu0 0.0
    %1399 = vmatprep.subr.mxu0 0.0
    %1400 = vmatpush2.msra.mxu0 0.0
    %1401 = vmatprep.subr.mxu0 0.0
    %1402 = vmatpush2.msra.mxu0 0.0
    %1403 = vmatprep.subr.mxu0 0.0
    %1404 = vmatpush2.msra.mxu0 0.0
    %1405 = vmatprep.subr.mxu0 0.0
    %1406 = vmatpush2.msra.mxu0 0.0
    %1407 = vmatprep.subr.mxu0 0.0
    %1408 = vmatpush2.msra.mxu0 0.0
    %1409 = vmatprep.subr.mxu0 0.0
    %1410 = vmatpush2.msra.mxu0 0.0
    %1411 = vmatprep.subr.mxu0 0.0
    %1412 = vmatpush2.msra.mxu0 0.0
    %1413 = vmatprep.subr.mxu0 0.0
    %1414 = vmatpush2.msra.mxu0 0.0
    %1415 = vmatprep.subr.mxu0 0.0
    %1416 = vmatpush2.msra.mxu0 0.0
    %1417 = vmatprep.subr.mxu0 0.0
    %1418 = vmatpush2.msra.mxu0 0.0
    %1419 = vmatprep.subr.mxu0 0.0
    %1420 = vmatpush2.msra.mxu0 0.0
    %1421 = vmatprep.subr.mxu0 0.0
    %1422 = vmatpush2.msra.mxu0 0.0
    %1423 = vmatprep.mubr.f32.mxu0 0.0
    %1424 = vmatmul.mubr.f32.gmra.mxu0 %v1357
    %v1425 = vpop.f32.mrf.mxu0
    %v1426 = vadd.f32 0.0, %v1425
    %v1427 = vpop.f32.mrf.mxu0
    %1428 = vdwg.mxu0
    %v1430 = vrot.slane %v1426, 6
    %v1432 = vadd.f32 %v415, %v1430
    %v1433 = vxor.u32 %v1432, 2147483648
    %v1434 = vmul.f32 %v1433, 1.442695
    %v1435 = vpow.pop %v1434
    %v1436 = vadd.f32 %v1435, 1.0
    %v1437 = vrcp.pop %v1436
    %v1438 = vmul.f32 1.0, %v1437
    %v1439 = vtanh.pop %v1432
    %1441 = vrot.lane.b32.xlu0 %v1439, 64
    %v1442 = vpop.permute.xlu0 %1441
    %v1444 = vmul.f32 %v1438, %v1442
    %v1446 = vrot.slane %v1341, 2
    %v1448 = vmul.f32 %v1438, %v1446
    %1450 = vrot.lane.b32.xlu0 %v1444, 32
    %v1451 = vpop.permute.xlu0 %1450
    %v1453 = vadd.f32 %v1448, %v1451
    %v1454 = vtanh.pop %v1453
    %1456 = vrot.lane.b32.xlu0 %v1454, 64
    %v1457 = vpop.permute.xlu0 %1456
    %v1459 = vmul.f32 %v1438, %v1457
    %1461 = vrot.lane.b32.xlu0 %v1459, 64
    %v1462 = vpop.permute.xlu0 %1461
    %vm1464 = vcmask 519426
    %1465 = vst.msk [vmem:[#allocation2 + $0x8] sm:$0xc] %vm1464, %v1462
    %v1466 = vrot.slane %v1459, 2
    %1467 = vrot.lane.b32.xlu0 %v1466, 32
    %v1468 = vpop.permute.xlu0 %1467
    %v1469 = vsel %vm442, %v1468, 0
    %1471 = vmatprep.subr.mxu0 0.0
    %1472 = vmatpush1.msra.mxu0 0.0
    %1473 = vmatprep.subr.mxu0 0.0
    %1474 = vmatpush1.msra.mxu0 0.0
    %1475 = vmatprep.subr.mxu0 0.0
    %1476 = vmatpush1.msra.mxu0 0.0
    %1477 = vmatprep.subr.mxu0 0.0
    %1478 = vmatpush1.msra.mxu0 0.0
    %1479 = vmatprep.subr.mxu0 0.0
    %1480 = vmatpush1.msra.mxu0 0.0
    %1481 = vmatprep.subr.mxu0 0.0
    %1482 = vmatpush1.msra.mxu0 0.0
    %1483 = vmatprep.subr.mxu0 0.0
    %1484 = vmatpush1.msra.mxu0 0.0
    %1485 = vmatprep.subr.mxu0 0.0
    %1486 = vmatpush1.msra.mxu0 0.0
    %1487 = vmatprep.subr.mxu0 0.0
    %1488 = vmatpush1.msra.mxu0 0.0
    %1489 = vmatprep.subr.mxu0 0.0
    %1490 = vmatpush1.msra.mxu0 0.0
    %1491 = vmatprep.subr.mxu0 0.0
    %1492 = vmatpush1.msra.mxu0 0.0
    %1493 = vmatprep.subr.mxu0 0.0
    %1494 = vmatpush1.msra.mxu0 0.0
    %1495 = vmatprep.subr.mxu0 0.0
    %1496 = vmatpush1.msra.mxu0 %v240
    %1497 = vmatprep.subr.mxu0 0.0
    %1498 = vmatpush1.msra.mxu0 %v239
    %1499 = vmatprep.subr.mxu0 0.0
    %1500 = vmatpush1.msra.mxu0 %v238
    %1501 = vmatprep.subr.mxu0 0.0
    %1502 = vmatpush1.msra.mxu0 %v237
    %1503 = vmatprep.subr.mxu0 0.0
    %1504 = vmatpush2.msra.mxu0 0.0
    %1505 = vmatprep.subr.mxu0 0.0
    %1506 = vmatpush2.msra.mxu0 0.0
    %1507 = vmatprep.subr.mxu0 0.0
    %1508 = vmatpush2.msra.mxu0 0.0
    %1509 = vmatprep.subr.mxu0 0.0
    %1510 = vmatpush2.msra.mxu0 0.0
    %1511 = vmatprep.subr.mxu0 0.0
    %1512 = vmatpush2.msra.mxu0 0.0
    %1513 = vmatprep.subr.mxu0 0.0
    %1514 = vmatpush2.msra.mxu0 0.0
    %1515 = vmatprep.subr.mxu0 0.0
    %1516 = vmatpush2.msra.mxu0 0.0
    %1517 = vmatprep.subr.mxu0 0.0
    %1518 = vmatpush2.msra.mxu0 0.0
    %1519 = vmatprep.subr.mxu0 0.0
    %1520 = vmatpush2.msra.mxu0 0.0
    %1521 = vmatprep.subr.mxu0 0.0
    %1522 = vmatpush2.msra.mxu0 0.0
    %1523 = vmatprep.subr.mxu0 0.0
    %1524 = vmatpush2.msra.mxu0 0.0
    %1525 = vmatprep.subr.mxu0 0.0
    %1526 = vmatpush2.msra.mxu0 0.0
    %1527 = vmatprep.subr.mxu0 0.0
    %1528 = vmatpush2.msra.mxu0 0.0
    %1529 = vmatprep.subr.mxu0 0.0
    %1530 = vmatpush2.msra.mxu0 0.0
    %1531 = vmatprep.subr.mxu0 0.0
    %1532 = vmatpush2.msra.mxu0 0.0
    %1533 = vmatprep.subr.mxu0 0.0
    %1534 = vmatpush2.msra.mxu0 0.0
    %1535 = vmatprep.mubr.f32.mxu0 0.0
    %1536 = vmatmul.mubr.f32.gmra.mxu0 %v1469
    %v1537 = vpop.f32.mrf.mxu0
    %v1538 = vadd.f32 0.0, %v1537
    %v1539 = vpop.f32.mrf.mxu0
    %1540 = vdwg.mxu0
    %v1541 = vadd.f32 %v415, %v1538
    %v1542 = vxor.u32 %v1541, 2147483648
    %v1543 = vmul.f32 %v1542, 1.442695
    %v1544 = vpow.pop %v1543
    %v1545 = vadd.f32 %v1544, 1.0
    %v1546 = vrcp.pop %v1545
    %v1547 = vmul.f32 1.0, %v1546
    %v1548 = vtanh.pop %v1541
    %1550 = vrot.lane.b32.xlu0 %v1548, 64
    %v1551 = vpop.permute.xlu0 %1550
    %v1553 = vmul.f32 %v1547, %v1551
    %v1555 = vrot.slane %v1453, 2
    %v1557 = vmul.f32 %v1547, %v1555
    %1559 = vrot.lane.b32.xlu0 %v1553, 32
    %v1560 = vpop.permute.xlu0 %1559
    %v1562 = vadd.f32 %v1557, %v1560
    %v1563 = vtanh.pop %v1562
    %1565 = vrot.lane.b32.xlu0 %v1563, 64
    %v1566 = vpop.permute.xlu0 %1565
    %v1568 = vmul.f32 %v1547, %v1566
    %1570 = vrot.lane.b32.xlu0 %v1568, 64
    %v1571 = vpop.permute.xlu0 %1570
    %vm1573 = vcmask 517376
    %1574 = vst.msk [vmem:[#allocation2 + $0x8] sm:$0x3] %vm1573, %v1571
    %1575 = vrot.lane.b32.xlu0 %v1568, 32
    %v1576 = vpop.permute.xlu0 %1575
    %v1577 = vsel %vm442, %v1576, 0
    %1579 = vmatprep.subr.mxu0 0.0
    %1580 = vmatpush1.msra.mxu0 0.0
    %1581 = vmatprep.subr.mxu0 0.0
    %1582 = vmatpush1.msra.mxu0 0.0
    %1583 = vmatprep.subr.mxu0 0.0
    %1584 = vmatpush1.msra.mxu0 0.0
    %1585 = vmatprep.subr.mxu0 0.0
    %1586 = vmatpush1.msra.mxu0 0.0
    %1587 = vmatprep.subr.mxu0 0.0
    %1588 = vmatpush1.msra.mxu0 0.0
    %1589 = vmatprep.subr.mxu0 0.0
    %1590 = vmatpush1.msra.mxu0 0.0
    %1591 = vmatprep.subr.mxu0 0.0
    %1592 = vmatpush1.msra.mxu0 0.0
    %1593 = vmatprep.subr.mxu0 0.0
    %1594 = vmatpush1.msra.mxu0 0.0
    %1595 = vmatprep.subr.mxu0 0.0
    %1596 = vmatpush1.msra.mxu0 0.0
    %1597 = vmatprep.subr.mxu0 0.0
    %1598 = vmatpush1.msra.mxu0 0.0
    %1599 = vmatprep.subr.mxu0 0.0
    %1600 = vmatpush1.msra.mxu0 0.0
    %1601 = vmatprep.subr.mxu0 0.0
    %1602 = vmatpush1.msra.mxu0 0.0
    %1603 = vmatprep.subr.mxu0 0.0
    %1604 = vmatpush1.msra.mxu0 %v240
    %1605 = vmatprep.subr.mxu0 0.0
    %1606 = vmatpush1.msra.mxu0 %v239
    %1607 = vmatprep.subr.mxu0 0.0
    %1608 = vmatpush1.msra.mxu0 %v238
    %1609 = vmatprep.subr.mxu0 0.0
    %1610 = vmatpush1.msra.mxu0 %v237
    %1611 = vmatprep.subr.mxu0 0.0
    %1612 = vmatpush2.msra.mxu0 0.0
    %1613 = vmatprep.subr.mxu0 0.0
    %1614 = vmatpush2.msra.mxu0 0.0
    %1615 = vmatprep.subr.mxu0 0.0
    %1616 = vmatpush2.msra.mxu0 0.0
    %1617 = vmatprep.subr.mxu0 0.0
    %1618 = vmatpush2.msra.mxu0 0.0
    %1619 = vmatprep.subr.mxu0 0.0
    %1620 = vmatpush2.msra.mxu0 0.0
    %1621 = vmatprep.subr.mxu0 0.0
    %1622 = vmatpush2.msra.mxu0 0.0
    %1623 = vmatprep.subr.mxu0 0.0
    %1624 = vmatpush2.msra.mxu0 0.0
    %1625 = vmatprep.subr.mxu0 0.0
    %1626 = vmatpush2.msra.mxu0 0.0
    %1627 = vmatprep.subr.mxu0 0.0
    %1628 = vmatpush2.msra.mxu0 0.0
    %1629 = vmatprep.subr.mxu0 0.0
    %1630 = vmatpush2.msra.mxu0 0.0
    %1631 = vmatprep.subr.mxu0 0.0
    %1632 = vmatpush2.msra.mxu0 0.0
    %1633 = vmatprep.subr.mxu0 0.0
    %1634 = vmatpush2.msra.mxu0 0.0
    %1635 = vmatprep.subr.mxu0 0.0
    %1636 = vmatpush2.msra.mxu0 0.0
    %1637 = vmatprep.subr.mxu0 0.0
    %1638 = vmatpush2.msra.mxu0 0.0
    %1639 = vmatprep.subr.mxu0 0.0
    %1640 = vmatpush2.msra.mxu0 0.0
    %1641 = vmatprep.subr.mxu0 0.0
    %1642 = vmatpush2.msra.mxu0 0.0
    %1643 = vmatprep.mubr.f32.mxu0 0.0
    %1644 = vmatmul.mubr.f32.gmra.mxu0 %v1577
    %v1645 = vpop.f32.mrf.mxu0
    %v1646 = vadd.f32 0.0, %v1645
    %v1647 = vpop.f32.mrf.mxu0
    %1648 = vdwg.mxu0
    %v1650 = vrot.slane %v1646, 2
    %v1652 = vadd.f32 %v410, %v1650
    %v1653 = vxor.u32 %v1652, 2147483648
    %v1654 = vmul.f32 %v1653, 1.442695
    %v1655 = vpow.pop %v1654
    %v1656 = vadd.f32 %v1655, 1.0
    %v1657 = vrcp.pop %v1656
    %v1658 = vmul.f32 1.0, %v1657
    %v1659 = vtanh.pop %v1652
    %1661 = vrot.lane.b32.xlu0 %v1659, 64
    %v1662 = vpop.permute.xlu0 %1661
    %v1664 = vmul.f32 %v1658, %v1662
    %v1666 = vrot.slane %v1562, 2
    %v1668 = vmul.f32 %v1658, %v1666
    %1670 = vrot.lane.b32.xlu0 %v1664, 32
    %v1671 = vpop.permute.xlu0 %1670
    %v1673 = vadd.f32 %v1668, %v1671
    %v1674 = vtanh.pop %v1673
    %1676 = vrot.lane.b32.xlu0 %v1674, 64
    %v1677 = vpop.permute.xlu0 %1676
    %v1679 = vmul.f32 %v1658, %v1677
    %1681 = vrot.lane.b32.xlu0 %v1679, 64
    %v1682 = vpop.permute.xlu0 %1681
    %1684 = vst.msk [vmem:[#allocation2] sm:$0xc0] %vm1238, %v1682
    %v1685 = vrot.slane %v1679, 6
    %1686 = vrot.lane.b32.xlu0 %v1685, 32
    %v1687 = vpop.permute.xlu0 %1686
    %v1688 = vsel %vm442, %v1687, 0
    %1690 = vmatprep.subr.mxu0 0.0
    %1691 = vmatpush1.msra.mxu0 0.0
    %1692 = vmatprep.subr.mxu0 0.0
    %1693 = vmatpush1.msra.mxu0 0.0
    %1694 = vmatprep.subr.mxu0 0.0
    %1695 = vmatpush1.msra.mxu0 0.0
    %1696 = vmatprep.subr.mxu0 0.0
    %1697 = vmatpush1.msra.mxu0 0.0
    %1698 = vmatprep.subr.mxu0 0.0
    %1699 = vmatpush1.msra.mxu0 0.0
    %1700 = vmatprep.subr.mxu0 0.0
    %1701 = vmatpush1.msra.mxu0 0.0
    %1702 = vmatprep.subr.mxu0 0.0
    %1703 = vmatpush1.msra.mxu0 0.0
    %1704 = vmatprep.subr.mxu0 0.0
    %1705 = vmatpush1.msra.mxu0 0.0
    %1706 = vmatprep.subr.mxu0 0.0
    %1707 = vmatpush1.msra.mxu0 0.0
    %1708 = vmatprep.subr.mxu0 0.0
    %1709 = vmatpush1.msra.mxu0 0.0
    %1710 = vmatprep.subr.mxu0 0.0
    %1711 = vmatpush1.msra.mxu0 0.0
    %1712 = vmatprep.subr.mxu0 0.0
    %1713 = vmatpush1.msra.mxu0 0.0
    %1714 = vmatprep.subr.mxu0 0.0
    %1715 = vmatpush1.msra.mxu0 %v240
    %1716 = vmatprep.subr.mxu0 0.0
    %1717 = vmatpush1.msra.mxu0 %v239
    %1718 = vmatprep.subr.mxu0 0.0
    %1719 = vmatpush1.msra.mxu0 %v238
    %1720 = vmatprep.subr.mxu0 0.0
    %1721 = vmatpush1.msra.mxu0 %v237
    %1722 = vmatprep.subr.mxu0 0.0
    %1723 = vmatpush2.msra.mxu0 0.0
    %1724 = vmatprep.subr.mxu0 0.0
    %1725 = vmatpush2.msra.mxu0 0.0
    %1726 = vmatprep.subr.mxu0 0.0
    %1727 = vmatpush2.msra.mxu0 0.0
    %1728 = vmatprep.subr.mxu0 0.0
    %1729 = vmatpush2.msra.mxu0 0.0
    %1730 = vmatprep.subr.mxu0 0.0
    %1731 = vmatpush2.msra.mxu0 0.0
    %1732 = vmatprep.subr.mxu0 0.0
    %1733 = vmatpush2.msra.mxu0 0.0
    %1734 = vmatprep.subr.mxu0 0.0
    %1735 = vmatpush2.msra.mxu0 0.0
    %1736 = vmatprep.subr.mxu0 0.0
    %1737 = vmatpush2.msra.mxu0 0.0
    %1738 = vmatprep.subr.mxu0 0.0
    %1739 = vmatpush2.msra.mxu0 0.0
    %1740 = vmatprep.subr.mxu0 0.0
    %1741 = vmatpush2.msra.mxu0 0.0
    %1742 = vmatprep.subr.mxu0 0.0
    %1743 = vmatpush2.msra.mxu0 0.0
    %1744 = vmatprep.subr.mxu0 0.0
    %1745 = vmatpush2.msra.mxu0 0.0
    %1746 = vmatprep.subr.mxu0 0.0
    %1747 = vmatpush2.msra.mxu0 0.0
    %1748 = vmatprep.subr.mxu0 0.0
    %1749 = vmatpush2.msra.mxu0 0.0
    %1750 = vmatprep.subr.mxu0 0.0
    %1751 = vmatpush2.msra.mxu0 0.0
    %1752 = vmatprep.subr.mxu0 0.0
    %1753 = vmatpush2.msra.mxu0 0.0
    %1754 = vmatprep.mubr.f32.mxu0 0.0
    %1755 = vmatmul.mubr.f32.gmra.mxu0 %v1688
    %v1756 = vpop.f32.mrf.mxu0
    %v1757 = vadd.f32 0.0, %v1756
    %v1758 = vpop.f32.mrf.mxu0
    %1759 = vdwg.mxu0
    %v1761 = vrot.slane %v1757, 4
    %v1763 = vadd.f32 %v410, %v1761
    %v1764 = vxor.u32 %v1763, 2147483648
    %v1765 = vmul.f32 %v1764, 1.442695
    %v1766 = vpow.pop %v1765
    %v1767 = vadd.f32 %v1766, 1.0
    %v1768 = vrcp.pop %v1767
    %v1769 = vmul.f32 1.0, %v1768
    %v1770 = vtanh.pop %v1763
    %1772 = vrot.lane.b32.xlu0 %v1770, 64
    %v1773 = vpop.permute.xlu0 %1772
    %v1775 = vmul.f32 %v1769, %v1773
    %v1777 = vrot.slane %v1673, 2
    %v1779 = vmul.f32 %v1769, %v1777
    %1781 = vrot.lane.b32.xlu0 %v1775, 32
    %v1782 = vpop.permute.xlu0 %1781
    %v1784 = vadd.f32 %v1779, %v1782
    %v1785 = vtanh.pop %v1784
    %1787 = vrot.lane.b32.xlu0 %v1785, 64
    %v1788 = vpop.permute.xlu0 %1787
    %v1790 = vmul.f32 %v1769, %v1788
    %1792 = vrot.lane.b32.xlu0 %v1790, 64
    %v1793 = vpop.permute.xlu0 %1792
    %1795 = vst.msk [vmem:[#allocation2] sm:$0x30] %vm1352, %v1793
    %v1796 = vrot.slane %v1790, 4
    %1797 = vrot.lane.b32.xlu0 %v1796, 32
    %v1798 = vpop.permute.xlu0 %1797
    %v1799 = vsel %vm442, %v1798, 0
    %1801 = vmatprep.subr.mxu0 0.0
    %1802 = vmatpush1.msra.mxu0 0.0
    %1803 = vmatprep.subr.mxu0 0.0
    %1804 = vmatpush1.msra.mxu0 0.0
    %1805 = vmatprep.subr.mxu0 0.0
    %1806 = vmatpush1.msra.mxu0 0.0
    %1807 = vmatprep.subr.mxu0 0.0
    %1808 = vmatpush1.msra.mxu0 0.0
    %1809 = vmatprep.subr.mxu0 0.0
    %1810 = vmatpush1.msra.mxu0 0.0
    %1811 = vmatprep.subr.mxu0 0.0
    %1812 = vmatpush1.msra.mxu0 0.0
    %1813 = vmatprep.subr.mxu0 0.0
    %1814 = vmatpush1.msra.mxu0 0.0
    %1815 = vmatprep.subr.mxu0 0.0
    %1816 = vmatpush1.msra.mxu0 0.0
    %1817 = vmatprep.subr.mxu0 0.0
    %1818 = vmatpush1.msra.mxu0 0.0
    %1819 = vmatprep.subr.mxu0 0.0
    %1820 = vmatpush1.msra.mxu0 0.0
    %1821 = vmatprep.subr.mxu0 0.0
    %1822 = vmatpush1.msra.mxu0 0.0
    %1823 = vmatprep.subr.mxu0 0.0
    %1824 = vmatpush1.msra.mxu0 0.0
    %1825 = vmatprep.subr.mxu0 0.0
    %1826 = vmatpush1.msra.mxu0 %v240
    %1827 = vmatprep.subr.mxu0 0.0
    %1828 = vmatpush1.msra.mxu0 %v239
    %1829 = vmatprep.subr.mxu0 0.0
    %1830 = vmatpush1.msra.mxu0 %v238
    %1831 = vmatprep.subr.mxu0 0.0
    %1832 = vmatpush1.msra.mxu0 %v237
    %1833 = vmatprep.subr.mxu0 0.0
    %1834 = vmatpush2.msra.mxu0 0.0
    %1835 = vmatprep.subr.mxu0 0.0
    %1836 = vmatpush2.msra.mxu0 0.0
    %1837 = vmatprep.subr.mxu0 0.0
    %1838 = vmatpush2.msra.mxu0 0.0
    %1839 = vmatprep.subr.mxu0 0.0
    %1840 = vmatpush2.msra.mxu0 0.0
    %1841 = vmatprep.subr.mxu0 0.0
    %1842 = vmatpush2.msra.mxu0 0.0
    %1843 = vmatprep.subr.mxu0 0.0
    %1844 = vmatpush2.msra.mxu0 0.0
    %1845 = vmatprep.subr.mxu0 0.0
    %1846 = vmatpush2.msra.mxu0 0.0
    %1847 = vmatprep.subr.mxu0 0.0
    %1848 = vmatpush2.msra.mxu0 0.0
    %1849 = vmatprep.subr.mxu0 0.0
    %1850 = vmatpush2.msra.mxu0 0.0
    %1851 = vmatprep.subr.mxu0 0.0
    %1852 = vmatpush2.msra.mxu0 0.0
    %1853 = vmatprep.subr.mxu0 0.0
    %1854 = vmatpush2.msra.mxu0 0.0
    %1855 = vmatprep.subr.mxu0 0.0
    %1856 = vmatpush2.msra.mxu0 0.0
    %1857 = vmatprep.subr.mxu0 0.0
    %1858 = vmatpush2.msra.mxu0 0.0
    %1859 = vmatprep.subr.mxu0 0.0
    %1860 = vmatpush2.msra.mxu0 0.0
    %1861 = vmatprep.subr.mxu0 0.0
    %1862 = vmatpush2.msra.mxu0 0.0
    %1863 = vmatprep.subr.mxu0 0.0
    %1864 = vmatpush2.msra.mxu0 0.0
    %1865 = vmatprep.mubr.f32.mxu0 0.0
    %1866 = vmatmul.mubr.f32.gmra.mxu0 %v1799
    %v1867 = vpop.f32.mrf.mxu0
    %v1868 = vadd.f32 0.0, %v1867
    %v1869 = vpop.f32.mrf.mxu0
    %1870 = vdwg.mxu0
    %v1872 = vrot.slane %v1868, 6
    %v1874 = vadd.f32 %v410, %v1872
    %v1875 = vxor.u32 %v1874, 2147483648
    %v1876 = vmul.f32 %v1875, 1.442695
    %v1877 = vpow.pop %v1876
    %v1878 = vadd.f32 %v1877, 1.0
    %v1879 = vrcp.pop %v1878
    %v1880 = vmul.f32 1.0, %v1879
    %v1881 = vtanh.pop %v1874
    %1883 = vrot.lane.b32.xlu0 %v1881, 64
    %v1884 = vpop.permute.xlu0 %1883
    %v1886 = vmul.f32 %v1880, %v1884
    %v1888 = vrot.slane %v1784, 2
    %v1890 = vmul.f32 %v1880, %v1888
    %1892 = vrot.lane.b32.xlu0 %v1886, 32
    %v1893 = vpop.permute.xlu0 %1892
    %v1895 = vadd.f32 %v1890, %v1893
    %v1896 = vtanh.pop %v1895
    %1898 = vrot.lane.b32.xlu0 %v1896, 64
    %v1899 = vpop.permute.xlu0 %1898
    %v1901 = vmul.f32 %v1880, %v1899
    %1903 = vrot.lane.b32.xlu0 %v1901, 64
    %v1904 = vpop.permute.xlu0 %1903
    %1906 = vst.msk [vmem:[#allocation2] sm:$0xc] %vm1464, %v1904
    %v1907 = vrot.slane %v1901, 2
    %1908 = vrot.lane.b32.xlu0 %v1907, 32
    %v1909 = vpop.permute.xlu0 %1908
    %v1910 = vsel %vm442, %v1909, 0
    %1912 = vmatprep.subr.mxu0 0.0
    %1913 = vmatpush1.msra.mxu0 0.0
    %1914 = vmatprep.subr.mxu0 0.0
    %1915 = vmatpush1.msra.mxu0 0.0
    %1916 = vmatprep.subr.mxu0 0.0
    %1917 = vmatpush1.msra.mxu0 0.0
    %1918 = vmatprep.subr.mxu0 0.0
    %1919 = vmatpush1.msra.mxu0 0.0
    %1920 = vmatprep.subr.mxu0 0.0
    %1921 = vmatpush1.msra.mxu0 0.0
    %1922 = vmatprep.subr.mxu0 0.0
    %1923 = vmatpush1.msra.mxu0 0.0
    %1924 = vmatprep.subr.mxu0 0.0
    %1925 = vmatpush1.msra.mxu0 0.0
    %1926 = vmatprep.subr.mxu0 0.0
    %1927 = vmatpush1.msra.mxu0 0.0
    %1928 = vmatprep.subr.mxu0 0.0
    %1929 = vmatpush1.msra.mxu0 0.0
    %1930 = vmatprep.subr.mxu0 0.0
    %1931 = vmatpush1.msra.mxu0 0.0
    %1932 = vmatprep.subr.mxu0 0.0
    %1933 = vmatpush1.msra.mxu0 0.0
    %1934 = vmatprep.subr.mxu0 0.0
    %1935 = vmatpush1.msra.mxu0 0.0
    %1936 = vmatprep.subr.mxu0 0.0
    %1937 = vmatpush1.msra.mxu0 %v240
    %1938 = vmatprep.subr.mxu0 0.0
    %1939 = vmatpush1.msra.mxu0 %v239
    %1940 = vmatprep.subr.mxu0 0.0
    %1941 = vmatpush1.msra.mxu0 %v238
    %1942 = vmatprep.subr.mxu0 0.0
    %1943 = vmatpush1.msra.mxu0 %v237
    %1944 = vmatprep.subr.mxu0 0.0
    %1945 = vmatpush2.msra.mxu0 0.0
    %1946 = vmatprep.subr.mxu0 0.0
    %1947 = vmatpush2.msra.mxu0 0.0
    %1948 = vmatprep.subr.mxu0 0.0
    %1949 = vmatpush2.msra.mxu0 0.0
    %1950 = vmatprep.subr.mxu0 0.0
    %1951 = vmatpush2.msra.mxu0 0.0
    %1952 = vmatprep.subr.mxu0 0.0
    %1953 = vmatpush2.msra.mxu0 0.0
    %1954 = vmatprep.subr.mxu0 0.0
    %1955 = vmatpush2.msra.mxu0 0.0
    %1956 = vmatprep.subr.mxu0 0.0
    %1957 = vmatpush2.msra.mxu0 0.0
    %1958 = vmatprep.subr.mxu0 0.0
    %1959 = vmatpush2.msra.mxu0 0.0
    %1960 = vmatprep.subr.mxu0 0.0
    %1961 = vmatpush2.msra.mxu0 0.0
    %1962 = vmatprep.subr.mxu0 0.0
    %1963 = vmatpush2.msra.mxu0 0.0
    %1964 = vmatprep.subr.mxu0 0.0
    %1965 = vmatpush2.msra.mxu0 0.0
    %1966 = vmatprep.subr.mxu0 0.0
    %1967 = vmatpush2.msra.mxu0 0.0
    %1968 = vmatprep.subr.mxu0 0.0
    %1969 = vmatpush2.msra.mxu0 0.0
    %1970 = vmatprep.subr.mxu0 0.0
    %1971 = vmatpush2.msra.mxu0 0.0
    %1972 = vmatprep.subr.mxu0 0.0
    %1973 = vmatpush2.msra.mxu0 0.0
    %1974 = vmatprep.subr.mxu0 0.0
    %1975 = vmatpush2.msra.mxu0 0.0
    %1976 = vmatprep.mubr.f32.mxu0 0.0
    %1977 = vmatmul.mubr.f32.gmra.mxu0 %v1910
    %v1978 = vpop.f32.mrf.mxu0
    %v1979 = vadd.f32 0.0, %v1978
    %v1980 = vpop.f32.mrf.mxu0
    %1981 = vdwg.mxu0
    %v1982 = vadd.f32 %v410, %v1979
    %v1983 = vxor.u32 %v1982, 2147483648
    %v1984 = vmul.f32 %v1983, 1.442695
    %v1985 = vpow.pop %v1984
    %v1986 = vadd.f32 %v1985, 1.0
    %v1987 = vrcp.pop %v1986
    %v1988 = vmul.f32 1.0, %v1987
    %v1989 = vtanh.pop %v1982
    %1991 = vrot.lane.b32.xlu0 %v1989, 64
    %v1992 = vpop.permute.xlu0 %1991
    %v1994 = vmul.f32 %v1988, %v1992
    %v1996 = vrot.slane %v1895, 2
    %v1998 = vmul.f32 %v1988, %v1996
    %2000 = vrot.lane.b32.xlu0 %v1994, 32
    %v2001 = vpop.permute.xlu0 %2000
    %v2003 = vadd.f32 %v1998, %v2001
    %v2004 = vtanh.pop %v2003
    %2006 = vrot.lane.b32.xlu0 %v2004, 64
    %v2007 = vpop.permute.xlu0 %2006
    %v2009 = vmul.f32 %v1988, %v2007
    %2011 = vrot.lane.b32.xlu0 %v2009, 64
    %v2012 = vpop.permute.xlu0 %2011
    %2014 = vst.msk [vmem:[#allocation2] sm:$0x3] %vm1573, %v2012
    %v2015 = vld [vmem:[#allocation2] sm:$0xff]
    %v2016 = vld [vmem:[#allocation2 + $0x8] sm:$0xff]
    %v2017 = vld [vmem:[%s17] sm:$0xff]
    %v2018 = vld [vmem:[%s17 + $0x8] sm:$0xff]
    %v2019 = vld [vmem:[%s17 + $0x10] sm:$0xff]
    %v2020 = vld [vmem:[%s17 + $0x18] sm:$0xff]
    %v2021 = vld [vmem:[%s17 + $0x20] sm:$0xff]
    %v2022 = vld [vmem:[%s17 + $0x28] sm:$0xff]
    %v2023 = vld [vmem:[%s17 + $0x30] sm:$0xff]
    %v2024 = vld [vmem:[%s17 + $0x38] sm:$0xff]
    %v2025 = vld [vmem:[%s19] sm:$0xff]
    %v2026 = vld [vmem:[%s19 + $0x8] sm:$0xff]
    %v2027 = vld [vmem:[%s19 + $0x10] sm:$0xff]
    %v2028 = vld [vmem:[%s19 + $0x18] sm:$0xff]
    %v2029 = vld [vmem:[%s21] sm:$0x1]
    %v2031 = vlaneseq
    %v2032 = vshrl.u32 %v2031, 7
    %v2033 = vsub.s32 0, %v2032
    %v2034 = vrot.slane %v2029, %v2033
    %vm2036 = vcmask 523264
    %v2038 = vsel %vm2036, %v2015, 0
    %v2041 = vsel %vm2036, %v2016, 0
    %2043 = vmatprep.subr.mxu0 0.0
    %2044 = vmatpush1.msra.mxu0 0.0
    %2045 = vmatprep.subr.mxu0 0.0
    %2046 = vmatpush1.msra.mxu0 0.0
    %2047 = vmatprep.subr.mxu0 0.0
    %2048 = vmatpush1.msra.mxu0 0.0
    %2049 = vmatprep.subr.mxu0 0.0
    %2050 = vmatpush1.msra.mxu0 0.0
    %2051 = vmatprep.subr.mxu0 0.0
    %2052 = vmatpush1.msra.mxu0 0.0
    %2053 = vmatprep.subr.mxu0 0.0
    %2054 = vmatpush1.msra.mxu0 0.0
    %2055 = vmatprep.subr.mxu0 0.0
    %2056 = vmatpush1.msra.mxu0 0.0
    %2057 = vmatprep.subr.mxu0 0.0
    %2058 = vmatpush1.msra.mxu0 0.0
    %2059 = vmatprep.subr.mxu0 0.0
    %2060 = vmatpush1.msra.mxu0 %v2024
    %2061 = vmatprep.subr.mxu0 0.0
    %2062 = vmatpush1.msra.mxu0 %v2023
    %2063 = vmatprep.subr.mxu0 0.0
    %2064 = vmatpush1.msra.mxu0 %v2022
    %2065 = vmatprep.subr.mxu0 0.0
    %2066 = vmatpush1.msra.mxu0 %v2021
    %2067 = vmatprep.subr.mxu0 0.0
    %2068 = vmatpush1.msra.mxu0 %v2020
    %2069 = vmatprep.subr.mxu0 0.0
    %2070 = vmatpush1.msra.mxu0 %v2019
    %2071 = vmatprep.subr.mxu0 0.0
    %2072 = vmatpush1.msra.mxu0 %v2018
    %2073 = vmatprep.subr.mxu0 0.0
    %2074 = vmatpush1.msra.mxu0 %v2017
    %2075 = vmatprep.subr.mxu0 0.0
    %2076 = vmatpush2.msra.mxu0 0.0
    %2077 = vmatprep.subr.mxu0 0.0
    %2078 = vmatpush2.msra.mxu0 0.0
    %2079 = vmatprep.subr.mxu0 0.0
    %2080 = vmatpush2.msra.mxu0 0.0
    %2081 = vmatprep.subr.mxu0 0.0
    %2082 = vmatpush2.msra.mxu0 0.0
    %2083 = vmatprep.subr.mxu0 0.0
    %2084 = vmatpush2.msra.mxu0 0.0
    %2085 = vmatprep.subr.mxu0 0.0
    %2086 = vmatpush2.msra.mxu0 0.0
    %2087 = vmatprep.subr.mxu0 0.0
    %2088 = vmatpush2.msra.mxu0 0.0
    %2089 = vmatprep.subr.mxu0 0.0
    %2090 = vmatpush2.msra.mxu0 0.0
    %2091 = vmatprep.subr.mxu0 0.0
    %2092 = vmatpush2.msra.mxu0 0.0
    %2093 = vmatprep.subr.mxu0 0.0
    %2094 = vmatpush2.msra.mxu0 0.0
    %2095 = vmatprep.subr.mxu0 0.0
    %2096 = vmatpush2.msra.mxu0 0.0
    %2097 = vmatprep.subr.mxu0 0.0
    %2098 = vmatpush2.msra.mxu0 0.0
    %2099 = vmatprep.subr.mxu0 0.0
    %2100 = vmatpush2.msra.mxu0 0.0
    %2101 = vmatprep.subr.mxu0 0.0
    %2102 = vmatpush2.msra.mxu0 0.0
    %2103 = vmatprep.subr.mxu0 0.0
    %2104 = vmatpush2.msra.mxu0 0.0
    %2105 = vmatprep.subr.mxu0 0.0
    %2106 = vmatpush2.msra.mxu0 0.0
    %2107 = vmatprep.mubr.f32.mxu0 0.0
    %2108 = vmatmul.mubr.f32.gmra.mxu0 %v2038
    %v2109 = vpop.f32.mrf.mxu0
    %v2110 = vadd.f32 %v2034, %v2109
    %v2111 = vpop.f32.mrf.mxu0
    %2112 = vmatprep.mubr.f32.mxu0 0.0
    %2113 = vmatmul.mubr.f32.gmra.mxu0 %v2041
    %v2114 = vpop.f32.mrf.mxu0
    %v2115 = vadd.f32 %v2034, %v2114
    %v2116 = vpop.f32.mrf.mxu0
    %2117 = vdwg.mxu0
    %v2118 = vxor.u32 %v2110, 2147483648
    %v2119 = vmul.f32 %v2118, 1.442695
    %v2120 = vpow.pop %v2119
    %v2121 = vadd.f32 %v2120, 1.0
    %v2122 = vrcp.pop %v2121
    %v2123 = vmul.f32 1.0, %v2122
    %v2124 = vtanh.pop %v2110
    %2126 = vrot.lane.b32.xlu0 %v2124, 64
    %v2127 = vpop.permute.xlu0 %2126
    %v2129 = vmul.f32 %v2123, %v2127
    %v2130 = vtanh.pop %v2129
    %2132 = vrot.lane.b32.xlu0 %v2130, 96
    %v2133 = vpop.permute.xlu0 %2132
    %v2135 = vmul.f32 %v2123, %v2133
    %2137 = vrot.lane.b32.xlu0 %v2135, 32
    %v2138 = vpop.permute.xlu0 %2137
    %2140 = vst.msk [vmem:[#allocation3] sm:$0x3] %vm440, %v2138
    %v2141 = vsel %vm442, %v2138, 0
    %2143 = vmatprep.subr.mxu0 0.0
    %2144 = vmatpush1.msra.mxu0 0.0
    %2145 = vmatprep.subr.mxu0 0.0
    %2146 = vmatpush1.msra.mxu0 0.0
    %2147 = vmatprep.subr.mxu0 0.0
    %2148 = vmatpush1.msra.mxu0 0.0
    %2149 = vmatprep.subr.mxu0 0.0
    %2150 = vmatpush1.msra.mxu0 0.0
    %2151 = vmatprep.subr.mxu0 0.0
    %2152 = vmatpush1.msra.mxu0 0.0
    %2153 = vmatprep.subr.mxu0 0.0
    %2154 = vmatpush1.msra.mxu0 0.0
    %2155 = vmatprep.subr.mxu0 0.0
    %2156 = vmatpush1.msra.mxu0 0.0
    %2157 = vmatprep.subr.mxu0 0.0
    %2158 = vmatpush1.msra.mxu0 0.0
    %2159 = vmatprep.subr.mxu0 0.0
    %2160 = vmatpush1.msra.mxu0 0.0
    %2161 = vmatprep.subr.mxu0 0.0
    %2162 = vmatpush1.msra.mxu0 0.0
    %2163 = vmatprep.subr.mxu0 0.0
    %2164 = vmatpush1.msra.mxu0 0.0
    %2165 = vmatprep.subr.mxu0 0.0
    %2166 = vmatpush1.msra.mxu0 0.0
    %2167 = vmatprep.subr.mxu0 0.0
    %2168 = vmatpush1.msra.mxu0 %v2028
    %2169 = vmatprep.subr.mxu0 0.0
    %2170 = vmatpush1.msra.mxu0 %v2027
    %2171 = vmatprep.subr.mxu0 0.0
    %2172 = vmatpush1.msra.mxu0 %v2026
    %2173 = vmatprep.subr.mxu0 0.0
    %2174 = vmatpush1.msra.mxu0 %v2025
    %2175 = vmatprep.subr.mxu0 0.0
    %2176 = vmatpush2.msra.mxu0 0.0
    %2177 = vmatprep.subr.mxu0 0.0
    %2178 = vmatpush2.msra.mxu0 0.0
    %2179 = vmatprep.subr.mxu0 0.0
    %2180 = vmatpush2.msra.mxu0 0.0
    %2181 = vmatprep.subr.mxu0 0.0
    %2182 = vmatpush2.msra.mxu0 0.0
    %2183 = vmatprep.subr.mxu0 0.0
    %2184 = vmatpush2.msra.mxu0 0.0
    %2185 = vmatprep.subr.mxu0 0.0
    %2186 = vmatpush2.msra.mxu0 0.0
    %2187 = vmatprep.subr.mxu0 0.0
    %2188 = vmatpush2.msra.mxu0 0.0
    %2189 = vmatprep.subr.mxu0 0.0
    %2190 = vmatpush2.msra.mxu0 0.0
    %2191 = vmatprep.subr.mxu0 0.0
    %2192 = vmatpush2.msra.mxu0 0.0
    %2193 = vmatprep.subr.mxu0 0.0
    %2194 = vmatpush2.msra.mxu0 0.0
    %2195 = vmatprep.subr.mxu0 0.0
    %2196 = vmatpush2.msra.mxu0 0.0
    %2197 = vmatprep.subr.mxu0 0.0
    %2198 = vmatpush2.msra.mxu0 0.0
    %2199 = vmatprep.subr.mxu0 0.0
    %2200 = vmatpush2.msra.mxu0 0.0
    %2201 = vmatprep.subr.mxu0 0.0
    %2202 = vmatpush2.msra.mxu0 0.0
    %2203 = vmatprep.subr.mxu0 0.0
    %2204 = vmatpush2.msra.mxu0 0.0
    %2205 = vmatprep.subr.mxu0 0.0
    %2206 = vmatpush2.msra.mxu0 0.0
    %2207 = vmatprep.mubr.f32.mxu0 0.0
    %2208 = vmatmul.mubr.f32.gmra.mxu0 %v2141
    %v2209 = vpop.f32.mrf.mxu0
    %v2210 = vadd.f32 0.0, %v2209
    %v2211 = vpop.f32.mrf.mxu0
    %2212 = vdwg.mxu0
    %v2214 = vrot.slane %v2210, 6
    %v2216 = vadd.f32 %v2110, %v2214
    %v2217 = vxor.u32 %v2216, 2147483648
    %v2218 = vmul.f32 %v2217, 1.442695
    %v2219 = vpow.pop %v2218
    %v2220 = vadd.f32 %v2219, 1.0
    %v2221 = vrcp.pop %v2220
    %v2222 = vmul.f32 1.0, %v2221
    %v2223 = vtanh.pop %v2216
    %2225 = vrot.lane.b32.xlu0 %v2223, 64
    %v2226 = vpop.permute.xlu0 %2225
    %v2228 = vmul.f32 %v2222, %v2226
    %v2230 = vrot.slane %v2129, 6
    %2231 = vrot.lane.b32.xlu0 %v2230, 32
    %v2232 = vpop.permute.xlu0 %2231
    %v2234 = vmul.f32 %v2222, %v2232
    %2236 = vrot.lane.b32.xlu0 %v2228, 32
    %v2237 = vpop.permute.xlu0 %2236
    %v2239 = vadd.f32 %v2234, %v2237
    %v2240 = vtanh.pop %v2239
    %2242 = vrot.lane.b32.xlu0 %v2240, 64
    %v2243 = vpop.permute.xlu0 %2242
    %v2245 = vmul.f32 %v2222, %v2243
    %2247 = vrot.lane.b32.xlu0 %v2245, 32
    %v2248 = vpop.permute.xlu0 %2247
    %2250 = vst.msk [vmem:[#allocation3] sm:$0xc] %vm552, %v2248
    %v2251 = vrot.slane %v2245, 2
    %2252 = vrot.lane.b32.xlu0 %v2251, 32
    %v2253 = vpop.permute.xlu0 %2252
    %v2254 = vsel %vm442, %v2253, 0
    %2256 = vmatprep.subr.mxu0 0.0
    %2257 = vmatpush1.msra.mxu0 0.0
    %2258 = vmatprep.subr.mxu0 0.0
    %2259 = vmatpush1.msra.mxu0 0.0
    %2260 = vmatprep.subr.mxu0 0.0
    %2261 = vmatpush1.msra.mxu0 0.0
    %2262 = vmatprep.subr.mxu0 0.0
    %2263 = vmatpush1.msra.mxu0 0.0
    %2264 = vmatprep.subr.mxu0 0.0
    %2265 = vmatpush1.msra.mxu0 0.0
    %2266 = vmatprep.subr.mxu0 0.0
    %2267 = vmatpush1.msra.mxu0 0.0
    %2268 = vmatprep.subr.mxu0 0.0
    %2269 = vmatpush1.msra.mxu0 0.0
    %2270 = vmatprep.subr.mxu0 0.0
    %2271 = vmatpush1.msra.mxu0 0.0
    %2272 = vmatprep.subr.mxu0 0.0
    %2273 = vmatpush1.msra.mxu0 0.0
    %2274 = vmatprep.subr.mxu0 0.0
    %2275 = vmatpush1.msra.mxu0 0.0
    %2276 = vmatprep.subr.mxu0 0.0
    %2277 = vmatpush1.msra.mxu0 0.0
    %2278 = vmatprep.subr.mxu0 0.0
    %2279 = vmatpush1.msra.mxu0 0.0
    %2280 = vmatprep.subr.mxu0 0.0
    %2281 = vmatpush1.msra.mxu0 %v2028
    %2282 = vmatprep.subr.mxu0 0.0
    %2283 = vmatpush1.msra.mxu0 %v2027
    %2284 = vmatprep.subr.mxu0 0.0
    %2285 = vmatpush1.msra.mxu0 %v2026
    %2286 = vmatprep.subr.mxu0 0.0
    %2287 = vmatpush1.msra.mxu0 %v2025
    %2288 = vmatprep.subr.mxu0 0.0
    %2289 = vmatpush2.msra.mxu0 0.0
    %2290 = vmatprep.subr.mxu0 0.0
    %2291 = vmatpush2.msra.mxu0 0.0
    %2292 = vmatprep.subr.mxu0 0.0
    %2293 = vmatpush2.msra.mxu0 0.0
    %2294 = vmatprep.subr.mxu0 0.0
    %2295 = vmatpush2.msra.mxu0 0.0
    %2296 = vmatprep.subr.mxu0 0.0
    %2297 = vmatpush2.msra.mxu0 0.0
    %2298 = vmatprep.subr.mxu0 0.0
    %2299 = vmatpush2.msra.mxu0 0.0
    %2300 = vmatprep.subr.mxu0 0.0
    %2301 = vmatpush2.msra.mxu0 0.0
    %2302 = vmatprep.subr.mxu0 0.0
    %2303 = vmatpush2.msra.mxu0 0.0
    %2304 = vmatprep.subr.mxu0 0.0
    %2305 = vmatpush2.msra.mxu0 0.0
    %2306 = vmatprep.subr.mxu0 0.0
    %2307 = vmatpush2.msra.mxu0 0.0
    %2308 = vmatprep.subr.mxu0 0.0
    %2309 = vmatpush2.msra.mxu0 0.0
    %2310 = vmatprep.subr.mxu0 0.0
    %2311 = vmatpush2.msra.mxu0 0.0
    %2312 = vmatprep.subr.mxu0 0.0
    %2313 = vmatpush2.msra.mxu0 0.0
    %2314 = vmatprep.subr.mxu0 0.0
    %2315 = vmatpush2.msra.mxu0 0.0
    %2316 = vmatprep.subr.mxu0 0.0
    %2317 = vmatpush2.msra.mxu0 0.0
    %2318 = vmatprep.subr.mxu0 0.0
    %2319 = vmatpush2.msra.mxu0 0.0
    %2320 = vmatprep.mubr.f32.mxu0 0.0
    %2321 = vmatmul.mubr.f32.gmra.mxu0 %v2254
    %v2322 = vpop.f32.mrf.mxu0
    %v2323 = vadd.f32 0.0, %v2322
    %v2324 = vpop.f32.mrf.mxu0
    %2325 = vdwg.mxu0
    %v2327 = vrot.slane %v2323, 4
    %v2329 = vadd.f32 %v2110, %v2327
    %v2330 = vxor.u32 %v2329, 2147483648
    %v2331 = vmul.f32 %v2330, 1.442695
    %v2332 = vpow.pop %v2331
    %v2333 = vadd.f32 %v2332, 1.0
    %v2334 = vrcp.pop %v2333
    %v2335 = vmul.f32 1.0, %v2334
    %v2336 = vtanh.pop %v2329
    %2338 = vrot.lane.b32.xlu0 %v2336, 64
    %v2339 = vpop.permute.xlu0 %2338
    %v2341 = vmul.f32 %v2335, %v2339
    %v2343 = vrot.slane %v2239, 6
    %v2345 = vmul.f32 %v2335, %v2343
    %2347 = vrot.lane.b32.xlu0 %v2341, 32
    %v2348 = vpop.permute.xlu0 %2347
    %v2350 = vadd.f32 %v2345, %v2348
    %v2351 = vtanh.pop %v2350
    %2353 = vrot.lane.b32.xlu0 %v2351, 64
    %v2354 = vpop.permute.xlu0 %2353
    %v2356 = vmul.f32 %v2335, %v2354
    %2358 = vrot.lane.b32.xlu0 %v2356, 32
    %v2359 = vpop.permute.xlu0 %2358
    %2361 = vst.msk [vmem:[#allocation3] sm:$0x30] %vm664, %v2359
    %v2362 = vrot.slane %v2356, 4
    %2363 = vrot.lane.b32.xlu0 %v2362, 32
    %v2364 = vpop.permute.xlu0 %2363
    %v2365 = vsel %vm442, %v2364, 0
    %2367 = vmatprep.subr.mxu0 0.0
    %2368 = vmatpush1.msra.mxu0 0.0
    %2369 = vmatprep.subr.mxu0 0.0
    %2370 = vmatpush1.msra.mxu0 0.0
    %2371 = vmatprep.subr.mxu0 0.0
    %2372 = vmatpush1.msra.mxu0 0.0
    %2373 = vmatprep.subr.mxu0 0.0
    %2374 = vmatpush1.msra.mxu0 0.0
    %2375 = vmatprep.subr.mxu0 0.0
    %2376 = vmatpush1.msra.mxu0 0.0
    %2377 = vmatprep.subr.mxu0 0.0
    %2378 = vmatpush1.msra.mxu0 0.0
    %2379 = vmatprep.subr.mxu0 0.0
    %2380 = vmatpush1.msra.mxu0 0.0
    %2381 = vmatprep.subr.mxu0 0.0
    %2382 = vmatpush1.msra.mxu0 0.0
    %2383 = vmatprep.subr.mxu0 0.0
    %2384 = vmatpush1.msra.mxu0 0.0
    %2385 = vmatprep.subr.mxu0 0.0
    %2386 = vmatpush1.msra.mxu0 0.0
    %2387 = vmatprep.subr.mxu0 0.0
    %2388 = vmatpush1.msra.mxu0 0.0
    %2389 = vmatprep.subr.mxu0 0.0
    %2390 = vmatpush1.msra.mxu0 0.0
    %2391 = vmatprep.subr.mxu0 0.0
    %2392 = vmatpush1.msra.mxu0 %v2028
    %2393 = vmatprep.subr.mxu0 0.0
    %2394 = vmatpush1.msra.mxu0 %v2027
    %2395 = vmatprep.subr.mxu0 0.0
    %2396 = vmatpush1.msra.mxu0 %v2026
    %2397 = vmatprep.subr.mxu0 0.0
    %2398 = vmatpush1.msra.mxu0 %v2025
    %2399 = vmatprep.subr.mxu0 0.0
    %2400 = vmatpush2.msra.mxu0 0.0
    %2401 = vmatprep.subr.mxu0 0.0
    %2402 = vmatpush2.msra.mxu0 0.0
    %2403 = vmatprep.subr.mxu0 0.0
    %2404 = vmatpush2.msra.mxu0 0.0
    %2405 = vmatprep.subr.mxu0 0.0
    %2406 = vmatpush2.msra.mxu0 0.0
    %2407 = vmatprep.subr.mxu0 0.0
    %2408 = vmatpush2.msra.mxu0 0.0
    %2409 = vmatprep.subr.mxu0 0.0
    %2410 = vmatpush2.msra.mxu0 0.0
    %2411 = vmatprep.subr.mxu0 0.0
    %2412 = vmatpush2.msra.mxu0 0.0
    %2413 = vmatprep.subr.mxu0 0.0
    %2414 = vmatpush2.msra.mxu0 0.0
    %2415 = vmatprep.subr.mxu0 0.0
    %2416 = vmatpush2.msra.mxu0 0.0
    %2417 = vmatprep.subr.mxu0 0.0
    %2418 = vmatpush2.msra.mxu0 0.0
    %2419 = vmatprep.subr.mxu0 0.0
    %2420 = vmatpush2.msra.mxu0 0.0
    %2421 = vmatprep.subr.mxu0 0.0
    %2422 = vmatpush2.msra.mxu0 0.0
    %2423 = vmatprep.subr.mxu0 0.0
    %2424 = vmatpush2.msra.mxu0 0.0
    %2425 = vmatprep.subr.mxu0 0.0
    %2426 = vmatpush2.msra.mxu0 0.0
    %2427 = vmatprep.subr.mxu0 0.0
    %2428 = vmatpush2.msra.mxu0 0.0
    %2429 = vmatprep.subr.mxu0 0.0
    %2430 = vmatpush2.msra.mxu0 0.0
    %2431 = vmatprep.mubr.f32.mxu0 0.0
    %2432 = vmatmul.mubr.f32.gmra.mxu0 %v2365
    %v2433 = vpop.f32.mrf.mxu0
    %v2434 = vadd.f32 0.0, %v2433
    %v2435 = vpop.f32.mrf.mxu0
    %2436 = vdwg.mxu0
    %v2438 = vrot.slane %v2434, 2
    %v2440 = vadd.f32 %v2110, %v2438
    %v2441 = vxor.u32 %v2440, 2147483648
    %v2442 = vmul.f32 %v2441, 1.442695
    %v2443 = vpow.pop %v2442
    %v2444 = vadd.f32 %v2443, 1.0
    %v2445 = vrcp.pop %v2444
    %v2446 = vmul.f32 1.0, %v2445
    %v2447 = vtanh.pop %v2440
    %2449 = vrot.lane.b32.xlu0 %v2447, 64
    %v2450 = vpop.permute.xlu0 %2449
    %v2452 = vmul.f32 %v2446, %v2450
    %v2454 = vrot.slane %v2350, 6
    %v2456 = vmul.f32 %v2446, %v2454
    %2458 = vrot.lane.b32.xlu0 %v2452, 32
    %v2459 = vpop.permute.xlu0 %2458
    %v2461 = vadd.f32 %v2456, %v2459
    %v2462 = vtanh.pop %v2461
    %2464 = vrot.lane.b32.xlu0 %v2462, 64
    %v2465 = vpop.permute.xlu0 %2464
    %v2467 = vmul.f32 %v2446, %v2465
    %2469 = vrot.lane.b32.xlu0 %v2467, 32
    %v2470 = vpop.permute.xlu0 %2469
    %2472 = vst.msk [vmem:[#allocation3] sm:$0xc0] %vm776, %v2470
    %v2473 = vrot.slane %v2467, 6
    %2474 = vrot.lane.b32.xlu0 %v2473, 32
    %v2475 = vpop.permute.xlu0 %2474
    %v2476 = vsel %vm442, %v2475, 0
    %2478 = vmatprep.subr.mxu0 0.0
    %2479 = vmatpush1.msra.mxu0 0.0
    %2480 = vmatprep.subr.mxu0 0.0
    %2481 = vmatpush1.msra.mxu0 0.0
    %2482 = vmatprep.subr.mxu0 0.0
    %2483 = vmatpush1.msra.mxu0 0.0
    %2484 = vmatprep.subr.mxu0 0.0
    %2485 = vmatpush1.msra.mxu0 0.0
    %2486 = vmatprep.subr.mxu0 0.0
    %2487 = vmatpush1.msra.mxu0 0.0
    %2488 = vmatprep.subr.mxu0 0.0
    %2489 = vmatpush1.msra.mxu0 0.0
    %2490 = vmatprep.subr.mxu0 0.0
    %2491 = vmatpush1.msra.mxu0 0.0
    %2492 = vmatprep.subr.mxu0 0.0
    %2493 = vmatpush1.msra.mxu0 0.0
    %2494 = vmatprep.subr.mxu0 0.0
    %2495 = vmatpush1.msra.mxu0 0.0
    %2496 = vmatprep.subr.mxu0 0.0
    %2497 = vmatpush1.msra.mxu0 0.0
    %2498 = vmatprep.subr.mxu0 0.0
    %2499 = vmatpush1.msra.mxu0 0.0
    %2500 = vmatprep.subr.mxu0 0.0
    %2501 = vmatpush1.msra.mxu0 0.0
    %2502 = vmatprep.subr.mxu0 0.0
    %2503 = vmatpush1.msra.mxu0 %v2028
    %2504 = vmatprep.subr.mxu0 0.0
    %2505 = vmatpush1.msra.mxu0 %v2027
    %2506 = vmatprep.subr.mxu0 0.0
    %2507 = vmatpush1.msra.mxu0 %v2026
    %2508 = vmatprep.subr.mxu0 0.0
    %2509 = vmatpush1.msra.mxu0 %v2025
    %2510 = vmatprep.subr.mxu0 0.0
    %2511 = vmatpush2.msra.mxu0 0.0
    %2512 = vmatprep.subr.mxu0 0.0
    %2513 = vmatpush2.msra.mxu0 0.0
    %2514 = vmatprep.subr.mxu0 0.0
    %2515 = vmatpush2.msra.mxu0 0.0
    %2516 = vmatprep.subr.mxu0 0.0
    %2517 = vmatpush2.msra.mxu0 0.0
    %2518 = vmatprep.subr.mxu0 0.0
    %2519 = vmatpush2.msra.mxu0 0.0
    %2520 = vmatprep.subr.mxu0 0.0
    %2521 = vmatpush2.msra.mxu0 0.0
    %2522 = vmatprep.subr.mxu0 0.0
    %2523 = vmatpush2.msra.mxu0 0.0
    %2524 = vmatprep.subr.mxu0 0.0
    %2525 = vmatpush2.msra.mxu0 0.0
    %2526 = vmatprep.subr.mxu0 0.0
    %2527 = vmatpush2.msra.mxu0 0.0
    %2528 = vmatprep.subr.mxu0 0.0
    %2529 = vmatpush2.msra.mxu0 0.0
    %2530 = vmatprep.subr.mxu0 0.0
    %2531 = vmatpush2.msra.mxu0 0.0
    %2532 = vmatprep.subr.mxu0 0.0
    %2533 = vmatpush2.msra.mxu0 0.0
    %2534 = vmatprep.subr.mxu0 0.0
    %2535 = vmatpush2.msra.mxu0 0.0
    %2536 = vmatprep.subr.mxu0 0.0
    %2537 = vmatpush2.msra.mxu0 0.0
    %2538 = vmatprep.subr.mxu0 0.0
    %2539 = vmatpush2.msra.mxu0 0.0
    %2540 = vmatprep.subr.mxu0 0.0
    %2541 = vmatpush2.msra.mxu0 0.0
    %2542 = vmatprep.mubr.f32.mxu0 0.0
    %2543 = vmatmul.mubr.f32.gmra.mxu0 %v2476
    %v2544 = vpop.f32.mrf.mxu0
    %v2545 = vadd.f32 0.0, %v2544
    %v2546 = vpop.f32.mrf.mxu0
    %2547 = vdwg.mxu0
    %v2548 = vadd.f32 %v2115, %v2545
    %v2549 = vxor.u32 %v2548, 2147483648
    %v2550 = vmul.f32 %v2549, 1.442695
    %v2551 = vpow.pop %v2550
    %v2552 = vadd.f32 %v2551, 1.0
    %v2553 = vrcp.pop %v2552
    %v2554 = vmul.f32 1.0, %v2553
    %v2555 = vtanh.pop %v2548
    %2557 = vrot.lane.b32.xlu0 %v2555, 64
    %v2558 = vpop.permute.xlu0 %2557
    %v2560 = vmul.f32 %v2554, %v2558
    %v2562 = vrot.slane %v2461, 6
    %v2564 = vmul.f32 %v2554, %v2562
    %2566 = vrot.lane.b32.xlu0 %v2560, 32
    %v2567 = vpop.permute.xlu0 %2566
    %v2569 = vadd.f32 %v2564, %v2567
    %v2570 = vtanh.pop %v2569
    %2572 = vrot.lane.b32.xlu0 %v2570, 64
    %v2573 = vpop.permute.xlu0 %2572
    %v2575 = vmul.f32 %v2554, %v2573
    %2577 = vrot.lane.b32.xlu0 %v2575, 32
    %v2578 = vpop.permute.xlu0 %2577
    %2580 = vst.msk [vmem:[#allocation3 + $0x8] sm:$0x3] %vm440, %v2578
    %v2581 = vsel %vm442, %v2578, 0
    %2583 = vmatprep.subr.mxu0 0.0
    %2584 = vmatpush1.msra.mxu0 0.0
    %2585 = vmatprep.subr.mxu0 0.0
    %2586 = vmatpush1.msra.mxu0 0.0
    %2587 = vmatprep.subr.mxu0 0.0
    %2588 = vmatpush1.msra.mxu0 0.0
    %2589 = vmatprep.subr.mxu0 0.0
    %2590 = vmatpush1.msra.mxu0 0.0
    %2591 = vmatprep.subr.mxu0 0.0
    %2592 = vmatpush1.msra.mxu0 0.0
    %2593 = vmatprep.subr.mxu0 0.0
    %2594 = vmatpush1.msra.mxu0 0.0
    %2595 = vmatprep.subr.mxu0 0.0
    %2596 = vmatpush1.msra.mxu0 0.0
    %2597 = vmatprep.subr.mxu0 0.0
    %2598 = vmatpush1.msra.mxu0 0.0
    %2599 = vmatprep.subr.mxu0 0.0
    %2600 = vmatpush1.msra.mxu0 0.0
    %2601 = vmatprep.subr.mxu0 0.0
    %2602 = vmatpush1.msra.mxu0 0.0
    %2603 = vmatprep.subr.mxu0 0.0
    %2604 = vmatpush1.msra.mxu0 0.0
    %2605 = vmatprep.subr.mxu0 0.0
    %2606 = vmatpush1.msra.mxu0 0.0
    %2607 = vmatprep.subr.mxu0 0.0
    %2608 = vmatpush1.msra.mxu0 %v2028
    %2609 = vmatprep.subr.mxu0 0.0
    %2610 = vmatpush1.msra.mxu0 %v2027
    %2611 = vmatprep.subr.mxu0 0.0
    %2612 = vmatpush1.msra.mxu0 %v2026
    %2613 = vmatprep.subr.mxu0 0.0
    %2614 = vmatpush1.msra.mxu0 %v2025
    %2615 = vmatprep.subr.mxu0 0.0
    %2616 = vmatpush2.msra.mxu0 0.0
    %2617 = vmatprep.subr.mxu0 0.0
    %2618 = vmatpush2.msra.mxu0 0.0
    %2619 = vmatprep.subr.mxu0 0.0
    %2620 = vmatpush2.msra.mxu0 0.0
    %2621 = vmatprep.subr.mxu0 0.0
    %2622 = vmatpush2.msra.mxu0 0.0
    %2623 = vmatprep.subr.mxu0 0.0
    %2624 = vmatpush2.msra.mxu0 0.0
    %2625 = vmatprep.subr.mxu0 0.0
    %2626 = vmatpush2.msra.mxu0 0.0
    %2627 = vmatprep.subr.mxu0 0.0
    %2628 = vmatpush2.msra.mxu0 0.0
    %2629 = vmatprep.subr.mxu0 0.0
    %2630 = vmatpush2.msra.mxu0 0.0
    %2631 = vmatprep.subr.mxu0 0.0
    %2632 = vmatpush2.msra.mxu0 0.0
    %2633 = vmatprep.subr.mxu0 0.0
    %2634 = vmatpush2.msra.mxu0 0.0
    %2635 = vmatprep.subr.mxu0 0.0
    %2636 = vmatpush2.msra.mxu0 0.0
    %2637 = vmatprep.subr.mxu0 0.0
    %2638 = vmatpush2.msra.mxu0 0.0
    %2639 = vmatprep.subr.mxu0 0.0
    %2640 = vmatpush2.msra.mxu0 0.0
    %2641 = vmatprep.subr.mxu0 0.0
    %2642 = vmatpush2.msra.mxu0 0.0
    %2643 = vmatprep.subr.mxu0 0.0
    %2644 = vmatpush2.msra.mxu0 0.0
    %2645 = vmatprep.subr.mxu0 0.0
    %2646 = vmatpush2.msra.mxu0 0.0
    %2647 = vmatprep.mubr.f32.mxu0 0.0
    %2648 = vmatmul.mubr.f32.gmra.mxu0 %v2581
    %v2649 = vpop.f32.mrf.mxu0
    %v2650 = vadd.f32 0.0, %v2649
    %v2651 = vpop.f32.mrf.mxu0
    %2652 = vdwg.mxu0
    %v2654 = vrot.slane %v2650, 6
    %v2656 = vadd.f32 %v2115, %v2654
    %v2657 = vxor.u32 %v2656, 2147483648
    %v2658 = vmul.f32 %v2657, 1.442695
    %v2659 = vpow.pop %v2658
    %v2660 = vadd.f32 %v2659, 1.0
    %v2661 = vrcp.pop %v2660
    %v2662 = vmul.f32 1.0, %v2661
    %v2663 = vtanh.pop %v2656
    %2665 = vrot.lane.b32.xlu0 %v2663, 64
    %v2666 = vpop.permute.xlu0 %2665
    %v2668 = vmul.f32 %v2662, %v2666
    %v2670 = vrot.slane %v2569, 6
    %v2672 = vmul.f32 %v2662, %v2670
    %2674 = vrot.lane.b32.xlu0 %v2668, 32
    %v2675 = vpop.permute.xlu0 %2674
    %v2677 = vadd.f32 %v2672, %v2675
    %v2678 = vtanh.pop %v2677
    %2680 = vrot.lane.b32.xlu0 %v2678, 64
    %v2681 = vpop.permute.xlu0 %2680
    %v2683 = vmul.f32 %v2662, %v2681
    %2685 = vrot.lane.b32.xlu0 %v2683, 32
    %v2686 = vpop.permute.xlu0 %2685
    %2688 = vst.msk [vmem:[#allocation3 + $0x8] sm:$0xc] %vm552, %v2686
    %v2689 = vrot.slane %v2683, 2
    %2690 = vrot.lane.b32.xlu0 %v2689, 32
    %v2691 = vpop.permute.xlu0 %2690
    %v2692 = vsel %vm442, %v2691, 0
    %2694 = vmatprep.subr.mxu0 0.0
    %2695 = vmatpush1.msra.mxu0 0.0
    %2696 = vmatprep.subr.mxu0 0.0
    %2697 = vmatpush1.msra.mxu0 0.0
    %2698 = vmatprep.subr.mxu0 0.0
    %2699 = vmatpush1.msra.mxu0 0.0
    %2700 = vmatprep.subr.mxu0 0.0
    %2701 = vmatpush1.msra.mxu0 0.0
    %2702 = vmatprep.subr.mxu0 0.0
    %2703 = vmatpush1.msra.mxu0 0.0
    %2704 = vmatprep.subr.mxu0 0.0
    %2705 = vmatpush1.msra.mxu0 0.0
    %2706 = vmatprep.subr.mxu0 0.0
    %2707 = vmatpush1.msra.mxu0 0.0
    %2708 = vmatprep.subr.mxu0 0.0
    %2709 = vmatpush1.msra.mxu0 0.0
    %2710 = vmatprep.subr.mxu0 0.0
    %2711 = vmatpush1.msra.mxu0 0.0
    %2712 = vmatprep.subr.mxu0 0.0
    %2713 = vmatpush1.msra.mxu0 0.0
    %2714 = vmatprep.subr.mxu0 0.0
    %2715 = vmatpush1.msra.mxu0 0.0
    %2716 = vmatprep.subr.mxu0 0.0
    %2717 = vmatpush1.msra.mxu0 0.0
    %2718 = vmatprep.subr.mxu0 0.0
    %2719 = vmatpush1.msra.mxu0 %v2028
    %2720 = vmatprep.subr.mxu0 0.0
    %2721 = vmatpush1.msra.mxu0 %v2027
    %2722 = vmatprep.subr.mxu0 0.0
    %2723 = vmatpush1.msra.mxu0 %v2026
    %2724 = vmatprep.subr.mxu0 0.0
    %2725 = vmatpush1.msra.mxu0 %v2025
    %2726 = vmatprep.subr.mxu0 0.0
    %2727 = vmatpush2.msra.mxu0 0.0
    %2728 = vmatprep.subr.mxu0 0.0
    %2729 = vmatpush2.msra.mxu0 0.0
    %2730 = vmatprep.subr.mxu0 0.0
    %2731 = vmatpush2.msra.mxu0 0.0
    %2732 = vmatprep.subr.mxu0 0.0
    %2733 = vmatpush2.msra.mxu0 0.0
    %2734 = vmatprep.subr.mxu0 0.0
    %2735 = vmatpush2.msra.mxu0 0.0
    %2736 = vmatprep.subr.mxu0 0.0
    %2737 = vmatpush2.msra.mxu0 0.0
    %2738 = vmatprep.subr.mxu0 0.0
    %2739 = vmatpush2.msra.mxu0 0.0
    %2740 = vmatprep.subr.mxu0 0.0
    %2741 = vmatpush2.msra.mxu0 0.0
    %2742 = vmatprep.subr.mxu0 0.0
    %2743 = vmatpush2.msra.mxu0 0.0
    %2744 = vmatprep.subr.mxu0 0.0
    %2745 = vmatpush2.msra.mxu0 0.0
    %2746 = vmatprep.subr.mxu0 0.0
    %2747 = vmatpush2.msra.mxu0 0.0
    %2748 = vmatprep.subr.mxu0 0.0
    %2749 = vmatpush2.msra.mxu0 0.0
    %2750 = vmatprep.subr.mxu0 0.0
    %2751 = vmatpush2.msra.mxu0 0.0
    %2752 = vmatprep.subr.mxu0 0.0
    %2753 = vmatpush2.msra.mxu0 0.0
    %2754 = vmatprep.subr.mxu0 0.0
    %2755 = vmatpush2.msra.mxu0 0.0
    %2756 = vmatprep.subr.mxu0 0.0
    %2757 = vmatpush2.msra.mxu0 0.0
    %2758 = vmatprep.mubr.f32.mxu0 0.0
    %2759 = vmatmul.mubr.f32.gmra.mxu0 %v2692
    %v2760 = vpop.f32.mrf.mxu0
    %v2761 = vadd.f32 0.0, %v2760
    %v2762 = vpop.f32.mrf.mxu0
    %2763 = vdwg.mxu0
    %v2765 = vrot.slane %v2761, 4
    %v2767 = vadd.f32 %v2115, %v2765
    %v2768 = vxor.u32 %v2767, 2147483648
    %v2769 = vmul.f32 %v2768, 1.442695
    %v2770 = vpow.pop %v2769
    %v2771 = vadd.f32 %v2770, 1.0
    %v2772 = vrcp.pop %v2771
    %v2773 = vmul.f32 1.0, %v2772
    %v2774 = vtanh.pop %v2767
    %2776 = vrot.lane.b32.xlu0 %v2774, 64
    %v2777 = vpop.permute.xlu0 %2776
    %v2779 = vmul.f32 %v2773, %v2777
    %v2781 = vrot.slane %v2677, 6
    %v2783 = vmul.f32 %v2773, %v2781
    %2785 = vrot.lane.b32.xlu0 %v2779, 32
    %v2786 = vpop.permute.xlu0 %2785
    %v2788 = vadd.f32 %v2783, %v2786
    %v2789 = vtanh.pop %v2788
    %2791 = vrot.lane.b32.xlu0 %v2789, 64
    %v2792 = vpop.permute.xlu0 %2791
    %v2794 = vmul.f32 %v2773, %v2792
    %2796 = vrot.lane.b32.xlu0 %v2794, 32
    %v2797 = vpop.permute.xlu0 %2796
    %2799 = vst.msk [vmem:[#allocation3 + $0x8] sm:$0x30] %vm664, %v2797
    %v2800 = vrot.slane %v2794, 4
    %2801 = vrot.lane.b32.xlu0 %v2800, 32
    %v2802 = vpop.permute.xlu0 %2801
    %v2803 = vsel %vm442, %v2802, 0
    %2805 = vmatprep.subr.mxu0 0.0
    %2806 = vmatpush1.msra.mxu0 0.0
    %2807 = vmatprep.subr.mxu0 0.0
    %2808 = vmatpush1.msra.mxu0 0.0
    %2809 = vmatprep.subr.mxu0 0.0
    %2810 = vmatpush1.msra.mxu0 0.0
    %2811 = vmatprep.subr.mxu0 0.0
    %2812 = vmatpush1.msra.mxu0 0.0
    %2813 = vmatprep.subr.mxu0 0.0
    %2814 = vmatpush1.msra.mxu0 0.0
    %2815 = vmatprep.subr.mxu0 0.0
    %2816 = vmatpush1.msra.mxu0 0.0
    %2817 = vmatprep.subr.mxu0 0.0
    %2818 = vmatpush1.msra.mxu0 0.0
    %2819 = vmatprep.subr.mxu0 0.0
    %2820 = vmatpush1.msra.mxu0 0.0
    %2821 = vmatprep.subr.mxu0 0.0
    %2822 = vmatpush1.msra.mxu0 0.0
    %2823 = vmatprep.subr.mxu0 0.0
    %2824 = vmatpush1.msra.mxu0 0.0
    %2825 = vmatprep.subr.mxu0 0.0
    %2826 = vmatpush1.msra.mxu0 0.0
    %2827 = vmatprep.subr.mxu0 0.0
    %2828 = vmatpush1.msra.mxu0 0.0
    %2829 = vmatprep.subr.mxu0 0.0
    %2830 = vmatpush1.msra.mxu0 %v2028
    %2831 = vmatprep.subr.mxu0 0.0
    %2832 = vmatpush1.msra.mxu0 %v2027
    %2833 = vmatprep.subr.mxu0 0.0
    %2834 = vmatpush1.msra.mxu0 %v2026
    %2835 = vmatprep.subr.mxu0 0.0
    %2836 = vmatpush1.msra.mxu0 %v2025
    %2837 = vmatprep.subr.mxu0 0.0
    %2838 = vmatpush2.msra.mxu0 0.0
    %2839 = vmatprep.subr.mxu0 0.0
    %2840 = vmatpush2.msra.mxu0 0.0
    %2841 = vmatprep.subr.mxu0 0.0
    %2842 = vmatpush2.msra.mxu0 0.0
    %2843 = vmatprep.subr.mxu0 0.0
    %2844 = vmatpush2.msra.mxu0 0.0
    %2845 = vmatprep.subr.mxu0 0.0
    %2846 = vmatpush2.msra.mxu0 0.0
    %2847 = vmatprep.subr.mxu0 0.0
    %2848 = vmatpush2.msra.mxu0 0.0
    %2849 = vmatprep.subr.mxu0 0.0
    %2850 = vmatpush2.msra.mxu0 0.0
    %2851 = vmatprep.subr.mxu0 0.0
    %2852 = vmatpush2.msra.mxu0 0.0
    %2853 = vmatprep.subr.mxu0 0.0
    %2854 = vmatpush2.msra.mxu0 0.0
    %2855 = vmatprep.subr.mxu0 0.0
    %2856 = vmatpush2.msra.mxu0 0.0
    %2857 = vmatprep.subr.mxu0 0.0
    %2858 = vmatpush2.msra.mxu0 0.0
    %2859 = vmatprep.subr.mxu0 0.0
    %2860 = vmatpush2.msra.mxu0 0.0
    %2861 = vmatprep.subr.mxu0 0.0
    %2862 = vmatpush2.msra.mxu0 0.0
    %2863 = vmatprep.subr.mxu0 0.0
    %2864 = vmatpush2.msra.mxu0 0.0
    %2865 = vmatprep.subr.mxu0 0.0
    %2866 = vmatpush2.msra.mxu0 0.0
    %2867 = vmatprep.subr.mxu0 0.0
    %2868 = vmatpush2.msra.mxu0 0.0
    %2869 = vmatprep.mubr.f32.mxu0 0.0
    %2870 = vmatmul.mubr.f32.gmra.mxu0 %v2803
    %v2871 = vpop.f32.mrf.mxu0
    %v2872 = vadd.f32 0.0, %v2871
    %v2873 = vpop.f32.mrf.mxu0
    %2874 = vdwg.mxu0
    %v2876 = vrot.slane %v2872, 2
    %v2878 = vadd.f32 %v2115, %v2876
    %v2879 = vxor.u32 %v2878, 2147483648
    %v2880 = vmul.f32 %v2879, 1.442695
    %v2881 = vpow.pop %v2880
    %v2882 = vadd.f32 %v2881, 1.0
    %v2883 = vrcp.pop %v2882
    %v2884 = vmul.f32 1.0, %v2883
    %v2885 = vtanh.pop %v2878
    %2887 = vrot.lane.b32.xlu0 %v2885, 64
    %v2888 = vpop.permute.xlu0 %2887
    %v2890 = vmul.f32 %v2884, %v2888
    %v2892 = vrot.slane %v2788, 6
    %v2894 = vmul.f32 %v2884, %v2892
    %2896 = vrot.lane.b32.xlu0 %v2890, 32
    %v2897 = vpop.permute.xlu0 %2896
    %v2899 = vadd.f32 %v2894, %v2897
    %v2900 = vtanh.pop %v2899
    %2902 = vrot.lane.b32.xlu0 %v2900, 64
    %v2903 = vpop.permute.xlu0 %2902
    %v2905 = vmul.f32 %v2884, %v2903
    %2907 = vrot.lane.b32.xlu0 %v2905, 32
    %v2908 = vpop.permute.xlu0 %2907
    %2910 = vst.msk [vmem:[#allocation3 + $0x8] sm:$0xc0] %vm776, %v2908
    %v2911 = vld [vmem:[#allocation3] sm:$0xff]
    %v2912 = vld [vmem:[#allocation3 + $0x8] sm:$0xff]
    %v2913 = vld [vmem:[%s23] sm:$0xff]
    %v2914 = vld [vmem:[%s23 + $0x8] sm:$0xff]
    %v2915 = vld [vmem:[%s23 + $0x10] sm:$0xff]
    %v2916 = vld [vmem:[%s23 + $0x18] sm:$0xff]
    %v2917 = vld [vmem:[%s25] sm:$0x1]
    %v2919 = vlaneseq
    %v2920 = vshrl.u32 %v2919, 7
    %v2921 = vsub.s32 0, %v2920
    %v2922 = vrot.slane %v2917, %v2921
    %v2925 = vsel %vm442, %v2911, 0
    %v2928 = vsel %vm442, %v2912, 0
    %2930 = vmatprep.subr.mxu0 0.0
    %2931 = vmatpush1.msra.mxu0 0.0
    %2932 = vmatprep.subr.mxu0 0.0
    %2933 = vmatpush1.msra.mxu0 0.0
    %2934 = vmatprep.subr.mxu0 0.0
    %2935 = vmatpush1.msra.mxu0 0.0
    %2936 = vmatprep.subr.mxu0 0.0
    %2937 = vmatpush1.msra.mxu0 0.0
    %2938 = vmatprep.subr.mxu0 0.0
    %2939 = vmatpush1.msra.mxu0 0.0
    %2940 = vmatprep.subr.mxu0 0.0
    %2941 = vmatpush1.msra.mxu0 0.0
    %2942 = vmatprep.subr.mxu0 0.0
    %2943 = vmatpush1.msra.mxu0 0.0
    %2944 = vmatprep.subr.mxu0 0.0
    %2945 = vmatpush1.msra.mxu0 0.0
    %2946 = vmatprep.subr.mxu0 0.0
    %2947 = vmatpush1.msra.mxu0 0.0
    %2948 = vmatprep.subr.mxu0 0.0
    %2949 = vmatpush1.msra.mxu0 0.0
    %2950 = vmatprep.subr.mxu0 0.0
    %2951 = vmatpush1.msra.mxu0 0.0
    %2952 = vmatprep.subr.mxu0 0.0
    %2953 = vmatpush1.msra.mxu0 0.0
    %2954 = vmatprep.subr.mxu0 0.0
    %2955 = vmatpush1.msra.mxu0 %v2916
    %2956 = vmatprep.subr.mxu0 0.0
    %2957 = vmatpush1.msra.mxu0 %v2915
    %2958 = vmatprep.subr.mxu0 0.0
    %2959 = vmatpush1.msra.mxu0 %v2914
    %2960 = vmatprep.subr.mxu0 0.0
    %2961 = vmatpush1.msra.mxu0 %v2913
    %2962 = vmatprep.subr.mxu0 0.0
    %2963 = vmatpush2.msra.mxu0 0.0
    %2964 = vmatprep.subr.mxu0 0.0
    %2965 = vmatpush2.msra.mxu0 0.0
    %2966 = vmatprep.subr.mxu0 0.0
    %2967 = vmatpush2.msra.mxu0 0.0
    %2968 = vmatprep.subr.mxu0 0.0
    %2969 = vmatpush2.msra.mxu0 0.0
    %2970 = vmatprep.subr.mxu0 0.0
    %2971 = vmatpush2.msra.mxu0 0.0
    %2972 = vmatprep.subr.mxu0 0.0
    %2973 = vmatpush2.msra.mxu0 0.0
    %2974 = vmatprep.subr.mxu0 0.0
    %2975 = vmatpush2.msra.mxu0 0.0
    %2976 = vmatprep.subr.mxu0 0.0
    %2977 = vmatpush2.msra.mxu0 0.0
    %2978 = vmatprep.subr.mxu0 0.0
    %2979 = vmatpush2.msra.mxu0 0.0
    %2980 = vmatprep.subr.mxu0 0.0
    %2981 = vmatpush2.msra.mxu0 0.0
    %2982 = vmatprep.subr.mxu0 0.0
    %2983 = vmatpush2.msra.mxu0 0.0
    %2984 = vmatprep.subr.mxu0 0.0
    %2985 = vmatpush2.msra.mxu0 0.0
    %2986 = vmatprep.subr.mxu0 0.0
    %2987 = vmatpush2.msra.mxu0 0.0
    %2988 = vmatprep.subr.mxu0 0.0
    %2989 = vmatpush2.msra.mxu0 0.0
    %2990 = vmatprep.subr.mxu0 0.0
    %2991 = vmatpush2.msra.mxu0 0.0
    %2992 = vmatprep.subr.mxu0 0.0
    %2993 = vmatpush2.msra.mxu0 0.0
    %2994 = vmatprep.mubr.f32.mxu0 0.0
    %2995 = vmatmul.mubr.f32.gmra.mxu0 %v2925
    %v2996 = vpop.f32.mrf.mxu0
    %v2997 = vadd.f32 %v2922, %v2996
    %v2998 = vpop.f32.mrf.mxu0
    %2999 = vmatprep.mubr.f32.mxu0 0.0
    %3000 = vmatmul.mubr.f32.gmra.mxu0 %v2928
    %v3001 = vpop.f32.mrf.mxu0
    %v3002 = vadd.f32 %v2922, %v3001
    %v3003 = vpop.f32.mrf.mxu0
    %3004 = vdwg.mxu0
    %v3005 = vmax.f32 %v2997, 0.0
    %v3006 = vmax.f32 %v3002, 0.0
    %v3007 = vld [vmem:[%s27] sm:$0xff]
    %v3008 = vld [vmem:[%s27 + $0x8] sm:$0xff]
    %v3009 = vld [vmem:[%s29] sm:$0x1]
    %v3011 = vlaneseq
    %v3012 = vshrl.u32 %v3011, 7
    %v3013 = vsub.s32 0, %v3012
    %v3014 = vrot.slane %v3009, %v3013
    %vm3016 = vcmask 130048
    %v3018 = vsel %vm3016, %v3005, 0
    %v3021 = vsel %vm3016, %v3006, 0
    %3023 = vmatprep.subr.mxu0 0.0
    %3024 = vmatpush1.msra.mxu0 0.0
    %3025 = vmatprep.subr.mxu0 0.0
    %3026 = vmatpush1.msra.mxu0 0.0
    %3027 = vmatprep.subr.mxu0 0.0
    %3028 = vmatpush1.msra.mxu0 0.0
    %3029 = vmatprep.subr.mxu0 0.0
    %3030 = vmatpush1.msra.mxu0 0.0
    %3031 = vmatprep.subr.mxu0 0.0
    %3032 = vmatpush1.msra.mxu0 0.0
    %3033 = vmatprep.subr.mxu0 0.0
    %3034 = vmatpush1.msra.mxu0 0.0
    %3035 = vmatprep.subr.mxu0 0.0
    %3036 = vmatpush1.msra.mxu0 0.0
    %3037 = vmatprep.subr.mxu0 0.0
    %3038 = vmatpush1.msra.mxu0 0.0
    %3039 = vmatprep.subr.mxu0 0.0
    %3040 = vmatpush1.msra.mxu0 0.0
    %3041 = vmatprep.subr.mxu0 0.0
    %3042 = vmatpush1.msra.mxu0 0.0
    %3043 = vmatprep.subr.mxu0 0.0
    %3044 = vmatpush1.msra.mxu0 0.0
    %3045 = vmatprep.subr.mxu0 0.0
    %3046 = vmatpush1.msra.mxu0 0.0
    %3047 = vmatprep.subr.mxu0 0.0
    %3048 = vmatpush1.msra.mxu0 0.0
    %3049 = vmatprep.subr.mxu0 0.0
    %3050 = vmatpush1.msra.mxu0 0.0
    %3051 = vmatprep.subr.mxu0 0.0
    %3052 = vmatpush1.msra.mxu0 %v3008
    %3053 = vmatprep.subr.mxu0 0.0
    %3054 = vmatpush1.msra.mxu0 %v3007
    %3055 = vmatprep.subr.mxu0 0.0
    %3056 = vmatpush2.msra.mxu0 0.0
    %3057 = vmatprep.subr.mxu0 0.0
    %3058 = vmatpush2.msra.mxu0 0.0
    %3059 = vmatprep.subr.mxu0 0.0
    %3060 = vmatpush2.msra.mxu0 0.0
    %3061 = vmatprep.subr.mxu0 0.0
    %3062 = vmatpush2.msra.mxu0 0.0
    %3063 = vmatprep.subr.mxu0 0.0
    %3064 = vmatpush2.msra.mxu0 0.0
    %3065 = vmatprep.subr.mxu0 0.0
    %3066 = vmatpush2.msra.mxu0 0.0
    %3067 = vmatprep.subr.mxu0 0.0
    %3068 = vmatpush2.msra.mxu0 0.0
    %3069 = vmatprep.subr.mxu0 0.0
    %3070 = vmatpush2.msra.mxu0 0.0
    %3071 = vmatprep.subr.mxu0 0.0
    %3072 = vmatpush2.msra.mxu0 0.0
    %3073 = vmatprep.subr.mxu0 0.0
    %3074 = vmatpush2.msra.mxu0 0.0
    %3075 = vmatprep.subr.mxu0 0.0
    %3076 = vmatpush2.msra.mxu0 0.0
    %3077 = vmatprep.subr.mxu0 0.0
    %3078 = vmatpush2.msra.mxu0 0.0
    %3079 = vmatprep.subr.mxu0 0.0
    %3080 = vmatpush2.msra.mxu0 0.0
    %3081 = vmatprep.subr.mxu0 0.0
    %3082 = vmatpush2.msra.mxu0 0.0
    %3083 = vmatprep.subr.mxu0 0.0
    %3084 = vmatpush2.msra.mxu0 0.0
    %3085 = vmatprep.subr.mxu0 0.0
    %3086 = vmatpush2.msra.mxu0 0.0
    %3087 = vmatprep.mubr.f32.mxu0 0.0
    %3088 = vmatmul.mubr.f32.gmra.mxu0 %v3018
    %v3089 = vpop.f32.mrf.mxu0
    %v3090 = vadd.f32 %v3014, %v3089
    %v3091 = vpop.f32.mrf.mxu0
    %3092 = vmatprep.mubr.f32.mxu0 0.0
    %3093 = vmatmul.mubr.f32.gmra.mxu0 %v3021
    %v3094 = vpop.f32.mrf.mxu0
    %v3095 = vadd.f32 %v3014, %v3094
    %v3096 = vpop.f32.mrf.mxu0
    %3097 = vdwg.mxu0
    %v3098 = vmax.f32 %v3090, 0.0
    %v3099 = vmax.f32 %v3095, 0.0
    %v3100 = vld [vmem:[%s31] sm:$0xff]
    %v3101 = vld [vmem:[%s33] sm:$0xf]
    %v3102 = vld [vmem:[%s35] sm:$0x1]
    %v3103 = vld [vmem:[%s37] sm:$0xff]
    %v3104 = vld [vmem:[%s39] sm:$0xf]
    %v3105 = vld [vmem:[%s41] sm:$0x1]
    %v3107 = vlaneseq
    %v3108 = vshrl.u32 %v3107, 7
    %v3109 = vsub.s32 0, %v3108
    %v3110 = vrot.slane %v3102, %v3109
    %vm3112 = vcmask 64512
    %v3114 = vsel %vm3112, %v3098, 0
    %v3117 = vsel %vm3112, %v3099, 0
    %3119 = vmatprep.subr.mxu0 0.0
    %3120 = vmatpush1.msra.mxu0 0.0
    %3121 = vmatprep.subr.mxu0 0.0
    %3122 = vmatpush1.msra.mxu0 0.0
    %3123 = vmatprep.subr.mxu0 0.0
    %3124 = vmatpush1.msra.mxu0 0.0
    %3125 = vmatprep.subr.mxu0 0.0
    %3126 = vmatpush1.msra.mxu0 0.0
    %3127 = vmatprep.subr.mxu0 0.0
    %3128 = vmatpush1.msra.mxu0 0.0
    %3129 = vmatprep.subr.mxu0 0.0
    %3130 = vmatpush1.msra.mxu0 0.0
    %3131 = vmatprep.subr.mxu0 0.0
    %3132 = vmatpush1.msra.mxu0 0.0
    %3133 = vmatprep.subr.mxu0 0.0
    %3134 = vmatpush1.msra.mxu0 0.0
    %3135 = vmatprep.subr.mxu0 0.0
    %3136 = vmatpush1.msra.mxu0 0.0
    %3137 = vmatprep.subr.mxu0 0.0
    %3138 = vmatpush1.msra.mxu0 0.0
    %3139 = vmatprep.subr.mxu0 0.0
    %3140 = vmatpush1.msra.mxu0 0.0
    %3141 = vmatprep.subr.mxu0 0.0
    %3142 = vmatpush1.msra.mxu0 0.0
    %3143 = vmatprep.subr.mxu0 0.0
    %3144 = vmatpush1.msra.mxu0 0.0
    %3145 = vmatprep.subr.mxu0 0.0
    %3146 = vmatpush1.msra.mxu0 0.0
    %3147 = vmatprep.subr.mxu0 0.0
    %3148 = vmatpush1.msra.mxu0 0.0
    %3149 = vmatprep.subr.mxu0 0.0
    %3150 = vmatpush1.msra.mxu0 %v3100
    %3151 = vmatprep.subr.mxu0 0.0
    %3152 = vmatpush2.msra.mxu0 0.0
    %3153 = vmatprep.subr.mxu0 0.0
    %3154 = vmatpush2.msra.mxu0 0.0
    %3155 = vmatprep.subr.mxu0 0.0
    %3156 = vmatpush2.msra.mxu0 0.0
    %3157 = vmatprep.subr.mxu0 0.0
    %3158 = vmatpush2.msra.mxu0 0.0
    %3159 = vmatprep.subr.mxu0 0.0
    %3160 = vmatpush2.msra.mxu0 0.0
    %3161 = vmatprep.subr.mxu0 0.0
    %3162 = vmatpush2.msra.mxu0 0.0
    %3163 = vmatprep.subr.mxu0 0.0
    %3164 = vmatpush2.msra.mxu0 0.0
    %3165 = vmatprep.subr.mxu0 0.0
    %3166 = vmatpush2.msra.mxu0 0.0
    %3167 = vmatprep.subr.mxu0 0.0
    %3168 = vmatpush2.msra.mxu0 0.0
    %3169 = vmatprep.subr.mxu0 0.0
    %3170 = vmatpush2.msra.mxu0 0.0
    %3171 = vmatprep.subr.mxu0 0.0
    %3172 = vmatpush2.msra.mxu0 0.0
    %3173 = vmatprep.subr.mxu0 0.0
    %3174 = vmatpush2.msra.mxu0 0.0
    %3175 = vmatprep.subr.mxu0 0.0
    %3176 = vmatpush2.msra.mxu0 0.0
    %3177 = vmatprep.subr.mxu0 0.0
    %3178 = vmatpush2.msra.mxu0 0.0
    %3179 = vmatprep.subr.mxu0 0.0
    %3180 = vmatpush2.msra.mxu0 0.0
    %3181 = vmatprep.subr.mxu0 0.0
    %3182 = vmatpush2.msra.mxu0 0.0
    %3183 = vmatprep.mubr.f32.mxu0 0.0
    %3184 = vmatmul.mubr.f32.gmra.mxu0 %v3114
    %v3185 = vpop.f32.mrf.mxu0
    %v3186 = vadd.f32 %v3110, %v3185
    %v3187 = vpop.f32.mrf.mxu0
    %3188 = vmatprep.mubr.f32.mxu0 0.0
    %3189 = vmatmul.mubr.f32.gmra.mxu0 %v3117
    %v3190 = vpop.f32.mrf.mxu0
    %v3191 = vadd.f32 %v3110, %v3190
    %v3192 = vpop.f32.mrf.mxu0
    %3193 = vdwg.mxu0
    %v3195 = vlaneseq
    %v3196 = vshrl.u32 %v3195, 7
    %v3197 = vsub.s32 0, %v3196
    %v3198 = vrot.slane %v3105, %v3197
    %3200 = vmatprep.subr.mxu0 0.0
    %3201 = vmatpush1.msra.mxu0 0.0
    %3202 = vmatprep.subr.mxu0 0.0
    %3203 = vmatpush1.msra.mxu0 0.0
    %3204 = vmatprep.subr.mxu0 0.0
    %3205 = vmatpush1.msra.mxu0 0.0
    %3206 = vmatprep.subr.mxu0 0.0
    %3207 = vmatpush1.msra.mxu0 0.0
    %3208 = vmatprep.subr.mxu0 0.0
    %3209 = vmatpush1.msra.mxu0 0.0
    %3210 = vmatprep.subr.mxu0 0.0
    %3211 = vmatpush1.msra.mxu0 0.0
    %3212 = vmatprep.subr.mxu0 0.0
    %3213 = vmatpush1.msra.mxu0 0.0
    %3214 = vmatprep.subr.mxu0 0.0
    %3215 = vmatpush1.msra.mxu0 0.0
    %3216 = vmatprep.subr.mxu0 0.0
    %3217 = vmatpush1.msra.mxu0 0.0
    %3218 = vmatprep.subr.mxu0 0.0
    %3219 = vmatpush1.msra.mxu0 0.0
    %3220 = vmatprep.subr.mxu0 0.0
    %3221 = vmatpush1.msra.mxu0 0.0
    %3222 = vmatprep.subr.mxu0 0.0
    %3223 = vmatpush1.msra.mxu0 0.0
    %3224 = vmatprep.subr.mxu0 0.0
    %3225 = vmatpush1.msra.mxu0 0.0
    %3226 = vmatprep.subr.mxu0 0.0
    %3227 = vmatpush1.msra.mxu0 0.0
    %3228 = vmatprep.subr.mxu0 0.0
    %3229 = vmatpush1.msra.mxu0 0.0
    %3230 = vmatprep.subr.mxu0 0.0
    %3231 = vmatpush1.msra.mxu0 %v3103
    %3232 = vmatprep.subr.mxu0 0.0
    %3233 = vmatpush2.msra.mxu0 0.0
    %3234 = vmatprep.subr.mxu0 0.0
    %3235 = vmatpush2.msra.mxu0 0.0
    %3236 = vmatprep.subr.mxu0 0.0
    %3237 = vmatpush2.msra.mxu0 0.0
    %3238 = vmatprep.subr.mxu0 0.0
    %3239 = vmatpush2.msra.mxu0 0.0
    %3240 = vmatprep.subr.mxu0 0.0
    %3241 = vmatpush2.msra.mxu0 0.0
    %3242 = vmatprep.subr.mxu0 0.0
    %3243 = vmatpush2.msra.mxu0 0.0
    %3244 = vmatprep.subr.mxu0 0.0
    %3245 = vmatpush2.msra.mxu0 0.0
    %3246 = vmatprep.subr.mxu0 0.0
    %3247 = vmatpush2.msra.mxu0 0.0
    %3248 = vmatprep.subr.mxu0 0.0
    %3249 = vmatpush2.msra.mxu0 0.0
    %3250 = vmatprep.subr.mxu0 0.0
    %3251 = vmatpush2.msra.mxu0 0.0
    %3252 = vmatprep.subr.mxu0 0.0
    %3253 = vmatpush2.msra.mxu0 0.0
    %3254 = vmatprep.subr.mxu0 0.0
    %3255 = vmatpush2.msra.mxu0 0.0
    %3256 = vmatprep.subr.mxu0 0.0
    %3257 = vmatpush2.msra.mxu0 0.0
    %3258 = vmatprep.subr.mxu0 0.0
    %3259 = vmatpush2.msra.mxu0 0.0
    %3260 = vmatprep.subr.mxu0 0.0
    %3261 = vmatpush2.msra.mxu0 0.0
    %3262 = vmatprep.subr.mxu0 0.0
    %3263 = vmatpush2.msra.mxu0 0.0
    %3264 = vmatprep.mubr.f32.mxu0 0.0
    %3265 = vmatmul.mubr.f32.gmra.mxu0 %v3114
    %v3266 = vpop.f32.mrf.mxu0
    %v3267 = vadd.f32 %v3198, %v3266
    %v3268 = vpop.f32.mrf.mxu0
    %3269 = vmatprep.mubr.f32.mxu0 0.0
    %3270 = vmatmul.mubr.f32.gmra.mxu0 %v3117
    %v3271 = vpop.f32.mrf.mxu0
    %v3272 = vadd.f32 %v3198, %v3271
    %v3273 = vpop.f32.mrf.mxu0
    %3274 = vdwg.mxu0
    %v3275 = vxor.u32 %v3186, 2147483648
    %v3276 = vmul.f32 %v3275, 1.442695
    %v3277 = vpow.pop %v3276
    %v3278 = vadd.f32 %v3277, 1.0
    %v3279 = vrcp.pop %v3278
    %v3280 = vmul.f32 1.0, %v3279
    %v3281 = vtanh.pop %v3186
    %3283 = vrot.lane.b32.xlu0 %v3281, 120
    %v3284 = vpop.permute.xlu0 %3283
    %v3286 = vmul.f32 %v3280, %v3284
    %v3287 = vtanh.pop %v3286
    %3289 = vrot.lane.b32.xlu0 %v3287, 12
    %v3290 = vpop.permute.xlu0 %3289
    %v3292 = vmul.f32 %v3280, %v3290
    %3294 = vrot.lane.b32.xlu0 %v3292, 116
    %v3295 = vpop.permute.xlu0 %3294
    %vm3297 = vcmask 25600
    %3298 = vst.msk [vmem:[#allocation4] sm:$0x3] %vm3297, %v3295
    %v3299 = vsel %vm248, %v3295, 0
    %v3302 = vsel %vm255, %v3101, 0
    %3304 = vmatprep.subr.mxu0 0.0
    %3305 = vmatpush1.msra.mxu0 0.0
    %3306 = vmatprep.subr.mxu0 0.0
    %3307 = vmatpush1.msra.mxu0 0.0
    %3308 = vmatprep.subr.mxu0 0.0
    %3309 = vmatpush1.msra.mxu0 0.0
    %3310 = vmatprep.subr.mxu0 0.0
    %3311 = vmatpush1.msra.mxu0 0.0
    %3312 = vmatprep.subr.mxu0 0.0
    %3313 = vmatpush1.msra.mxu0 0.0
    %3314 = vmatprep.subr.mxu0 0.0
    %3315 = vmatpush1.msra.mxu0 0.0
    %3316 = vmatprep.subr.mxu0 0.0
    %3317 = vmatpush1.msra.mxu0 0.0
    %3318 = vmatprep.subr.mxu0 0.0
    %3319 = vmatpush1.msra.mxu0 0.0
    %3320 = vmatprep.subr.mxu0 0.0
    %3321 = vmatpush1.msra.mxu0 0.0
    %3322 = vmatprep.subr.mxu0 0.0
    %3323 = vmatpush1.msra.mxu0 0.0
    %3324 = vmatprep.subr.mxu0 0.0
    %3325 = vmatpush1.msra.mxu0 0.0
    %3326 = vmatprep.subr.mxu0 0.0
    %3327 = vmatpush1.msra.mxu0 0.0
    %3328 = vmatprep.subr.mxu0 0.0
    %3329 = vmatpush1.msra.mxu0 0.0
    %3330 = vmatprep.subr.mxu0 0.0
    %3331 = vmatpush1.msra.mxu0 0.0
    %3332 = vmatprep.subr.mxu0 0.0
    %3333 = vmatpush1.msra.mxu0 0.0
    %3334 = vmatprep.subr.mxu0 0.0
    %3335 = vmatpush1.msra.mxu0 %v3302
    %3336 = vmatprep.subr.mxu0 0.0
    %3337 = vmatpush2.msra.mxu0 0.0
    %3338 = vmatprep.subr.mxu0 0.0
    %3339 = vmatpush2.msra.mxu0 0.0
    %3340 = vmatprep.subr.mxu0 0.0
    %3341 = vmatpush2.msra.mxu0 0.0
    %3342 = vmatprep.subr.mxu0 0.0
    %3343 = vmatpush2.msra.mxu0 0.0
    %3344 = vmatprep.subr.mxu0 0.0
    %3345 = vmatpush2.msra.mxu0 0.0
    %3346 = vmatprep.subr.mxu0 0.0
    %3347 = vmatpush2.msra.mxu0 0.0
    %3348 = vmatprep.subr.mxu0 0.0
    %3349 = vmatpush2.msra.mxu0 0.0
    %3350 = vmatprep.subr.mxu0 0.0
    %3351 = vmatpush2.msra.mxu0 0.0
    %3352 = vmatprep.subr.mxu0 0.0
    %3353 = vmatpush2.msra.mxu0 0.0
    %3354 = vmatprep.subr.mxu0 0.0
    %3355 = vmatpush2.msra.mxu0 0.0
    %3356 = vmatprep.subr.mxu0 0.0
    %3357 = vmatpush2.msra.mxu0 0.0
    %3358 = vmatprep.subr.mxu0 0.0
    %3359 = vmatpush2.msra.mxu0 0.0
    %3360 = vmatprep.subr.mxu0 0.0
    %3361 = vmatpush2.msra.mxu0 0.0
    %3362 = vmatprep.subr.mxu0 0.0
    %3363 = vmatpush2.msra.mxu0 0.0
    %3364 = vmatprep.subr.mxu0 0.0
    %3365 = vmatpush2.msra.mxu0 0.0
    %3366 = vmatprep.subr.mxu0 0.0
    %3367 = vmatpush2.msra.mxu0 0.0
    %3368 = vmatprep.mubr.f32.mxu0 0.0
    %3369 = vmatmul.mubr.f32.gmra.mxu0 %v3299
    %v3370 = vpop.f32.mrf.mxu0
    %v3371 = vadd.f32 0.0, %v3370
    %v3372 = vpop.f32.mrf.mxu0
    %3373 = vdwg.mxu0
    %v3375 = vrot.slane %v3371, 6
    %v3377 = vadd.f32 %v3186, %v3375
    %v3378 = vxor.u32 %v3377, 2147483648
    %v3379 = vmul.f32 %v3378, 1.442695
    %v3380 = vpow.pop %v3379
    %v3381 = vadd.f32 %v3380, 1.0
    %v3382 = vrcp.pop %v3381
    %v3383 = vmul.f32 1.0, %v3382
    %v3384 = vtanh.pop %v3377
    %3386 = vrot.lane.b32.xlu0 %v3384, 120
    %v3387 = vpop.permute.xlu0 %3386
    %v3389 = vmul.f32 %v3383, %v3387
    %v3391 = vrot.slane %v3286, 6
    %3392 = vrot.lane.b32.xlu0 %v3391, 4
    %v3393 = vpop.permute.xlu0 %3392
    %v3395 = vmul.f32 %v3383, %v3393
    %3397 = vrot.lane.b32.xlu0 %v3389, 4
    %v3398 = vpop.permute.xlu0 %3397
    %v3400 = vadd.f32 %v3395, %v3398
    %v3401 = vtanh.pop %v3400
    %3403 = vrot.lane.b32.xlu0 %v3401, 8
    %v3404 = vpop.permute.xlu0 %3403
    %v3406 = vmul.f32 %v3383, %v3404
    %3408 = vrot.lane.b32.xlu0 %v3406, 116
    %v3409 = vpop.permute.xlu0 %3408
    %vm3411 = vcmask 27650
    %3412 = vst.msk [vmem:[#allocation4] sm:$0xc] %vm3411, %v3409
    %v3413 = vrot.slane %v3406, 2
    %3414 = vrot.lane.b32.xlu0 %v3413, 116
    %v3415 = vpop.permute.xlu0 %3414
    %v3416 = vsel %vm248, %v3415, 0
    %3418 = vmatprep.subr.mxu0 0.0
    %3419 = vmatpush1.msra.mxu0 0.0
    %3420 = vmatprep.subr.mxu0 0.0
    %3421 = vmatpush1.msra.mxu0 0.0
    %3422 = vmatprep.subr.mxu0 0.0
    %3423 = vmatpush1.msra.mxu0 0.0
    %3424 = vmatprep.subr.mxu0 0.0
    %3425 = vmatpush1.msra.mxu0 0.0
    %3426 = vmatprep.subr.mxu0 0.0
    %3427 = vmatpush1.msra.mxu0 0.0
    %3428 = vmatprep.subr.mxu0 0.0
    %3429 = vmatpush1.msra.mxu0 0.0
    %3430 = vmatprep.subr.mxu0 0.0
    %3431 = vmatpush1.msra.mxu0 0.0
    %3432 = vmatprep.subr.mxu0 0.0
    %3433 = vmatpush1.msra.mxu0 0.0
    %3434 = vmatprep.subr.mxu0 0.0
    %3435 = vmatpush1.msra.mxu0 0.0
    %3436 = vmatprep.subr.mxu0 0.0
    %3437 = vmatpush1.msra.mxu0 0.0
    %3438 = vmatprep.subr.mxu0 0.0
    %3439 = vmatpush1.msra.mxu0 0.0
    %3440 = vmatprep.subr.mxu0 0.0
    %3441 = vmatpush1.msra.mxu0 0.0
    %3442 = vmatprep.subr.mxu0 0.0
    %3443 = vmatpush1.msra.mxu0 0.0
    %3444 = vmatprep.subr.mxu0 0.0
    %3445 = vmatpush1.msra.mxu0 0.0
    %3446 = vmatprep.subr.mxu0 0.0
    %3447 = vmatpush1.msra.mxu0 0.0
    %3448 = vmatprep.subr.mxu0 0.0
    %3449 = vmatpush1.msra.mxu0 %v3302
    %3450 = vmatprep.subr.mxu0 0.0
    %3451 = vmatpush2.msra.mxu0 0.0
    %3452 = vmatprep.subr.mxu0 0.0
    %3453 = vmatpush2.msra.mxu0 0.0
    %3454 = vmatprep.subr.mxu0 0.0
    %3455 = vmatpush2.msra.mxu0 0.0
    %3456 = vmatprep.subr.mxu0 0.0
    %3457 = vmatpush2.msra.mxu0 0.0
    %3458 = vmatprep.subr.mxu0 0.0
    %3459 = vmatpush2.msra.mxu0 0.0
    %3460 = vmatprep.subr.mxu0 0.0
    %3461 = vmatpush2.msra.mxu0 0.0
    %3462 = vmatprep.subr.mxu0 0.0
    %3463 = vmatpush2.msra.mxu0 0.0
    %3464 = vmatprep.subr.mxu0 0.0
    %3465 = vmatpush2.msra.mxu0 0.0
    %3466 = vmatprep.subr.mxu0 0.0
    %3467 = vmatpush2.msra.mxu0 0.0
    %3468 = vmatprep.subr.mxu0 0.0
    %3469 = vmatpush2.msra.mxu0 0.0
    %3470 = vmatprep.subr.mxu0 0.0
    %3471 = vmatpush2.msra.mxu0 0.0
    %3472 = vmatprep.subr.mxu0 0.0
    %3473 = vmatpush2.msra.mxu0 0.0
    %3474 = vmatprep.subr.mxu0 0.0
    %3475 = vmatpush2.msra.mxu0 0.0
    %3476 = vmatprep.subr.mxu0 0.0
    %3477 = vmatpush2.msra.mxu0 0.0
    %3478 = vmatprep.subr.mxu0 0.0
    %3479 = vmatpush2.msra.mxu0 0.0
    %3480 = vmatprep.subr.mxu0 0.0
    %3481 = vmatpush2.msra.mxu0 0.0
    %3482 = vmatprep.mubr.f32.mxu0 0.0
    %3483 = vmatmul.mubr.f32.gmra.mxu0 %v3416
    %v3484 = vpop.f32.mrf.mxu0
    %v3485 = vadd.f32 0.0, %v3484
    %v3486 = vpop.f32.mrf.mxu0
    %3487 = vdwg.mxu0
    %v3489 = vrot.slane %v3485, 4
    %v3491 = vadd.f32 %v3186, %v3489
    %v3492 = vxor.u32 %v3491, 2147483648
    %v3493 = vmul.f32 %v3492, 1.442695
    %v3494 = vpow.pop %v3493
    %v3495 = vadd.f32 %v3494, 1.0
    %v3496 = vrcp.pop %v3495
    %v3497 = vmul.f32 1.0, %v3496
    %v3498 = vtanh.pop %v3491
    %3500 = vrot.lane.b32.xlu0 %v3498, 120
    %v3501 = vpop.permute.xlu0 %3500
    %v3503 = vmul.f32 %v3497, %v3501
    %v3505 = vrot.slane %v3400, 6
    %v3507 = vmul.f32 %v3497, %v3505
    %3509 = vrot.lane.b32.xlu0 %v3503, 4
    %v3510 = vpop.permute.xlu0 %3509
    %v3512 = vadd.f32 %v3507, %v3510
    %v3513 = vtanh.pop %v3512
    %3515 = vrot.lane.b32.xlu0 %v3513, 8
    %v3516 = vpop.permute.xlu0 %3515
    %v3518 = vmul.f32 %v3497, %v3516
    %3520 = vrot.lane.b32.xlu0 %v3518, 116
    %v3521 = vpop.permute.xlu0 %3520
    %vm3523 = vcmask 29700
    %3524 = vst.msk [vmem:[#allocation4] sm:$0x30] %vm3523, %v3521
    %v3525 = vrot.slane %v3518, 4
    %3526 = vrot.lane.b32.xlu0 %v3525, 116
    %v3527 = vpop.permute.xlu0 %3526
    %v3528 = vsel %vm248, %v3527, 0
    %3530 = vmatprep.subr.mxu0 0.0
    %3531 = vmatpush1.msra.mxu0 0.0
    %3532 = vmatprep.subr.mxu0 0.0
    %3533 = vmatpush1.msra.mxu0 0.0
    %3534 = vmatprep.subr.mxu0 0.0
    %3535 = vmatpush1.msra.mxu0 0.0
    %3536 = vmatprep.subr.mxu0 0.0
    %3537 = vmatpush1.msra.mxu0 0.0
    %3538 = vmatprep.subr.mxu0 0.0
    %3539 = vmatpush1.msra.mxu0 0.0
    %3540 = vmatprep.subr.mxu0 0.0
    %3541 = vmatpush1.msra.mxu0 0.0
    %3542 = vmatprep.subr.mxu0 0.0
    %3543 = vmatpush1.msra.mxu0 0.0
    %3544 = vmatprep.subr.mxu0 0.0
    %3545 = vmatpush1.msra.mxu0 0.0
    %3546 = vmatprep.subr.mxu0 0.0
    %3547 = vmatpush1.msra.mxu0 0.0
    %3548 = vmatprep.subr.mxu0 0.0
    %3549 = vmatpush1.msra.mxu0 0.0
    %3550 = vmatprep.subr.mxu0 0.0
    %3551 = vmatpush1.msra.mxu0 0.0
    %3552 = vmatprep.subr.mxu0 0.0
    %3553 = vmatpush1.msra.mxu0 0.0
    %3554 = vmatprep.subr.mxu0 0.0
    %3555 = vmatpush1.msra.mxu0 0.0
    %3556 = vmatprep.subr.mxu0 0.0
    %3557 = vmatpush1.msra.mxu0 0.0
    %3558 = vmatprep.subr.mxu0 0.0
    %3559 = vmatpush1.msra.mxu0 0.0
    %3560 = vmatprep.subr.mxu0 0.0
    %3561 = vmatpush1.msra.mxu0 %v3302
    %3562 = vmatprep.subr.mxu0 0.0
    %3563 = vmatpush2.msra.mxu0 0.0
    %3564 = vmatprep.subr.mxu0 0.0
    %3565 = vmatpush2.msra.mxu0 0.0
    %3566 = vmatprep.subr.mxu0 0.0
    %3567 = vmatpush2.msra.mxu0 0.0
    %3568 = vmatprep.subr.mxu0 0.0
    %3569 = vmatpush2.msra.mxu0 0.0
    %3570 = vmatprep.subr.mxu0 0.0
    %3571 = vmatpush2.msra.mxu0 0.0
    %3572 = vmatprep.subr.mxu0 0.0
    %3573 = vmatpush2.msra.mxu0 0.0
    %3574 = vmatprep.subr.mxu0 0.0
    %3575 = vmatpush2.msra.mxu0 0.0
    %3576 = vmatprep.subr.mxu0 0.0
    %3577 = vmatpush2.msra.mxu0 0.0
    %3578 = vmatprep.subr.mxu0 0.0
    %3579 = vmatpush2.msra.mxu0 0.0
    %3580 = vmatprep.subr.mxu0 0.0
    %3581 = vmatpush2.msra.mxu0 0.0
    %3582 = vmatprep.subr.mxu0 0.0
    %3583 = vmatpush2.msra.mxu0 0.0
    %3584 = vmatprep.subr.mxu0 0.0
    %3585 = vmatpush2.msra.mxu0 0.0
    %3586 = vmatprep.subr.mxu0 0.0
    %3587 = vmatpush2.msra.mxu0 0.0
    %3588 = vmatprep.subr.mxu0 0.0
    %3589 = vmatpush2.msra.mxu0 0.0
    %3590 = vmatprep.subr.mxu0 0.0
    %3591 = vmatpush2.msra.mxu0 0.0
    %3592 = vmatprep.subr.mxu0 0.0
    %3593 = vmatpush2.msra.mxu0 0.0
    %3594 = vmatprep.mubr.f32.mxu0 0.0
    %3595 = vmatmul.mubr.f32.gmra.mxu0 %v3528
    %v3596 = vpop.f32.mrf.mxu0
    %v3597 = vadd.f32 0.0, %v3596
    %v3598 = vpop.f32.mrf.mxu0
    %3599 = vdwg.mxu0
    %v3601 = vrot.slane %v3597, 2
    %v3603 = vadd.f32 %v3186, %v3601
    %v3604 = vxor.u32 %v3603, 2147483648
    %v3605 = vmul.f32 %v3604, 1.442695
    %v3606 = vpow.pop %v3605
    %v3607 = vadd.f32 %v3606, 1.0
    %v3608 = vrcp.pop %v3607
    %v3609 = vmul.f32 1.0, %v3608
    %v3610 = vtanh.pop %v3603
    %3612 = vrot.lane.b32.xlu0 %v3610, 120
    %v3613 = vpop.permute.xlu0 %3612
    %v3615 = vmul.f32 %v3609, %v3613
    %v3617 = vrot.slane %v3512, 6
    %v3619 = vmul.f32 %v3609, %v3617
    %3621 = vrot.lane.b32.xlu0 %v3615, 4
    %v3622 = vpop.permute.xlu0 %3621
    %v3624 = vadd.f32 %v3619, %v3622
    %v3625 = vtanh.pop %v3624
    %3627 = vrot.lane.b32.xlu0 %v3625, 8
    %v3628 = vpop.permute.xlu0 %3627
    %v3630 = vmul.f32 %v3609, %v3628
    %3632 = vrot.lane.b32.xlu0 %v3630, 116
    %v3633 = vpop.permute.xlu0 %3632
    %vm3635 = vcmask 31750
    %3636 = vst.msk [vmem:[#allocation4] sm:$0xc0] %vm3635, %v3633
    %v3637 = vrot.slane %v3630, 6
    %3638 = vrot.lane.b32.xlu0 %v3637, 116
    %v3639 = vpop.permute.xlu0 %3638
    %v3640 = vsel %vm248, %v3639, 0
    %3642 = vmatprep.subr.mxu0 0.0
    %3643 = vmatpush1.msra.mxu0 0.0
    %3644 = vmatprep.subr.mxu0 0.0
    %3645 = vmatpush1.msra.mxu0 0.0
    %3646 = vmatprep.subr.mxu0 0.0
    %3647 = vmatpush1.msra.mxu0 0.0
    %3648 = vmatprep.subr.mxu0 0.0
    %3649 = vmatpush1.msra.mxu0 0.0
    %3650 = vmatprep.subr.mxu0 0.0
    %3651 = vmatpush1.msra.mxu0 0.0
    %3652 = vmatprep.subr.mxu0 0.0
    %3653 = vmatpush1.msra.mxu0 0.0
    %3654 = vmatprep.subr.mxu0 0.0
    %3655 = vmatpush1.msra.mxu0 0.0
    %3656 = vmatprep.subr.mxu0 0.0
    %3657 = vmatpush1.msra.mxu0 0.0
    %3658 = vmatprep.subr.mxu0 0.0
    %3659 = vmatpush1.msra.mxu0 0.0
    %3660 = vmatprep.subr.mxu0 0.0
    %3661 = vmatpush1.msra.mxu0 0.0
    %3662 = vmatprep.subr.mxu0 0.0
    %3663 = vmatpush1.msra.mxu0 0.0
    %3664 = vmatprep.subr.mxu0 0.0
    %3665 = vmatpush1.msra.mxu0 0.0
    %3666 = vmatprep.subr.mxu0 0.0
    %3667 = vmatpush1.msra.mxu0 0.0
    %3668 = vmatprep.subr.mxu0 0.0
    %3669 = vmatpush1.msra.mxu0 0.0
    %3670 = vmatprep.subr.mxu0 0.0
    %3671 = vmatpush1.msra.mxu0 0.0
    %3672 = vmatprep.subr.mxu0 0.0
    %3673 = vmatpush1.msra.mxu0 %v3302
    %3674 = vmatprep.subr.mxu0 0.0
    %3675 = vmatpush2.msra.mxu0 0.0
    %3676 = vmatprep.subr.mxu0 0.0
    %3677 = vmatpush2.msra.mxu0 0.0
    %3678 = vmatprep.subr.mxu0 0.0
    %3679 = vmatpush2.msra.mxu0 0.0
    %3680 = vmatprep.subr.mxu0 0.0
    %3681 = vmatpush2.msra.mxu0 0.0
    %3682 = vmatprep.subr.mxu0 0.0
    %3683 = vmatpush2.msra.mxu0 0.0
    %3684 = vmatprep.subr.mxu0 0.0
    %3685 = vmatpush2.msra.mxu0 0.0
    %3686 = vmatprep.subr.mxu0 0.0
    %3687 = vmatpush2.msra.mxu0 0.0
    %3688 = vmatprep.subr.mxu0 0.0
    %3689 = vmatpush2.msra.mxu0 0.0
    %3690 = vmatprep.subr.mxu0 0.0
    %3691 = vmatpush2.msra.mxu0 0.0
    %3692 = vmatprep.subr.mxu0 0.0
    %3693 = vmatpush2.msra.mxu0 0.0
    %3694 = vmatprep.subr.mxu0 0.0
    %3695 = vmatpush2.msra.mxu0 0.0
    %3696 = vmatprep.subr.mxu0 0.0
    %3697 = vmatpush2.msra.mxu0 0.0
    %3698 = vmatprep.subr.mxu0 0.0
    %3699 = vmatpush2.msra.mxu0 0.0
    %3700 = vmatprep.subr.mxu0 0.0
    %3701 = vmatpush2.msra.mxu0 0.0
    %3702 = vmatprep.subr.mxu0 0.0
    %3703 = vmatpush2.msra.mxu0 0.0
    %3704 = vmatprep.subr.mxu0 0.0
    %3705 = vmatpush2.msra.mxu0 0.0
    %3706 = vmatprep.mubr.f32.mxu0 0.0
    %3707 = vmatmul.mubr.f32.gmra.mxu0 %v3640
    %v3708 = vpop.f32.mrf.mxu0
    %v3709 = vadd.f32 0.0, %v3708
    %v3710 = vpop.f32.mrf.mxu0
    %3711 = vdwg.mxu0
    %v3712 = vadd.f32 %v3191, %v3709
    %v3713 = vxor.u32 %v3712, 2147483648
    %v3714 = vmul.f32 %v3713, 1.442695
    %v3715 = vpow.pop %v3714
    %v3716 = vadd.f32 %v3715, 1.0
    %v3717 = vrcp.pop %v3716
    %v3718 = vmul.f32 1.0, %v3717
    %v3719 = vtanh.pop %v3712
    %3721 = vrot.lane.b32.xlu0 %v3719, 120
    %v3722 = vpop.permute.xlu0 %3721
    %v3724 = vmul.f32 %v3718, %v3722
    %v3726 = vrot.slane %v3624, 6
    %v3728 = vmul.f32 %v3718, %v3726
    %3730 = vrot.lane.b32.xlu0 %v3724, 4
    %v3731 = vpop.permute.xlu0 %3730
    %v3733 = vadd.f32 %v3728, %v3731
    %v3734 = vtanh.pop %v3733
    %3736 = vrot.lane.b32.xlu0 %v3734, 8
    %v3737 = vpop.permute.xlu0 %3736
    %v3739 = vmul.f32 %v3718, %v3737
    %3741 = vrot.lane.b32.xlu0 %v3739, 116
    %v3742 = vpop.permute.xlu0 %3741
    %3744 = vst.msk [vmem:[#allocation4 + $0x8] sm:$0x3] %vm3297, %v3742
    %v3745 = vsel %vm248, %v3742, 0
    %3747 = vmatprep.subr.mxu0 0.0
    %3748 = vmatpush1.msra.mxu0 0.0
    %3749 = vmatprep.subr.mxu0 0.0
    %3750 = vmatpush1.msra.mxu0 0.0
    %3751 = vmatprep.subr.mxu0 0.0
    %3752 = vmatpush1.msra.mxu0 0.0
    %3753 = vmatprep.subr.mxu0 0.0
    %3754 = vmatpush1.msra.mxu0 0.0
    %3755 = vmatprep.subr.mxu0 0.0
    %3756 = vmatpush1.msra.mxu0 0.0
    %3757 = vmatprep.subr.mxu0 0.0
    %3758 = vmatpush1.msra.mxu0 0.0
    %3759 = vmatprep.subr.mxu0 0.0
    %3760 = vmatpush1.msra.mxu0 0.0
    %3761 = vmatprep.subr.mxu0 0.0
    %3762 = vmatpush1.msra.mxu0 0.0
    %3763 = vmatprep.subr.mxu0 0.0
    %3764 = vmatpush1.msra.mxu0 0.0
    %3765 = vmatprep.subr.mxu0 0.0
    %3766 = vmatpush1.msra.mxu0 0.0
    %3767 = vmatprep.subr.mxu0 0.0
    %3768 = vmatpush1.msra.mxu0 0.0
    %3769 = vmatprep.subr.mxu0 0.0
    %3770 = vmatpush1.msra.mxu0 0.0
    %3771 = vmatprep.subr.mxu0 0.0
    %3772 = vmatpush1.msra.mxu0 0.0
    %3773 = vmatprep.subr.mxu0 0.0
    %3774 = vmatpush1.msra.mxu0 0.0
    %3775 = vmatprep.subr.mxu0 0.0
    %3776 = vmatpush1.msra.mxu0 0.0
    %3777 = vmatprep.subr.mxu0 0.0
    %3778 = vmatpush1.msra.mxu0 %v3302
    %3779 = vmatprep.subr.mxu0 0.0
    %3780 = vmatpush2.msra.mxu0 0.0
    %3781 = vmatprep.subr.mxu0 0.0
    %3782 = vmatpush2.msra.mxu0 0.0
    %3783 = vmatprep.subr.mxu0 0.0
    %3784 = vmatpush2.msra.mxu0 0.0
    %3785 = vmatprep.subr.mxu0 0.0
    %3786 = vmatpush2.msra.mxu0 0.0
    %3787 = vmatprep.subr.mxu0 0.0
    %3788 = vmatpush2.msra.mxu0 0.0
    %3789 = vmatprep.subr.mxu0 0.0
    %3790 = vmatpush2.msra.mxu0 0.0
    %3791 = vmatprep.subr.mxu0 0.0
    %3792 = vmatpush2.msra.mxu0 0.0
    %3793 = vmatprep.subr.mxu0 0.0
    %3794 = vmatpush2.msra.mxu0 0.0
    %3795 = vmatprep.subr.mxu0 0.0
    %3796 = vmatpush2.msra.mxu0 0.0
    %3797 = vmatprep.subr.mxu0 0.0
    %3798 = vmatpush2.msra.mxu0 0.0
    %3799 = vmatprep.subr.mxu0 0.0
    %3800 = vmatpush2.msra.mxu0 0.0
    %3801 = vmatprep.subr.mxu0 0.0
    %3802 = vmatpush2.msra.mxu0 0.0
    %3803 = vmatprep.subr.mxu0 0.0
    %3804 = vmatpush2.msra.mxu0 0.0
    %3805 = vmatprep.subr.mxu0 0.0
    %3806 = vmatpush2.msra.mxu0 0.0
    %3807 = vmatprep.subr.mxu0 0.0
    %3808 = vmatpush2.msra.mxu0 0.0
    %3809 = vmatprep.subr.mxu0 0.0
    %3810 = vmatpush2.msra.mxu0 0.0
    %3811 = vmatprep.mubr.f32.mxu0 0.0
    %3812 = vmatmul.mubr.f32.gmra.mxu0 %v3745
    %v3813 = vpop.f32.mrf.mxu0
    %v3814 = vadd.f32 0.0, %v3813
    %v3815 = vpop.f32.mrf.mxu0
    %3816 = vdwg.mxu0
    %v3818 = vrot.slane %v3814, 6
    %v3820 = vadd.f32 %v3191, %v3818
    %v3821 = vxor.u32 %v3820, 2147483648
    %v3822 = vmul.f32 %v3821, 1.442695
    %v3823 = vpow.pop %v3822
    %v3824 = vadd.f32 %v3823, 1.0
    %v3825 = vrcp.pop %v3824
    %v3826 = vmul.f32 1.0, %v3825
    %v3827 = vtanh.pop %v3820
    %3829 = vrot.lane.b32.xlu0 %v3827, 120
    %v3830 = vpop.permute.xlu0 %3829
    %v3832 = vmul.f32 %v3826, %v3830
    %v3834 = vrot.slane %v3733, 6
    %v3836 = vmul.f32 %v3826, %v3834
    %3838 = vrot.lane.b32.xlu0 %v3832, 4
    %v3839 = vpop.permute.xlu0 %3838
    %v3841 = vadd.f32 %v3836, %v3839
    %v3842 = vtanh.pop %v3841
    %3844 = vrot.lane.b32.xlu0 %v3842, 8
    %v3845 = vpop.permute.xlu0 %3844
    %v3847 = vmul.f32 %v3826, %v3845
    %3849 = vrot.lane.b32.xlu0 %v3847, 116
    %v3850 = vpop.permute.xlu0 %3849
    %3852 = vst.msk [vmem:[#allocation4 + $0x8] sm:$0xc] %vm3411, %v3850
    %v3853 = vrot.slane %v3847, 2
    %3854 = vrot.lane.b32.xlu0 %v3853, 116
    %v3855 = vpop.permute.xlu0 %3854
    %v3856 = vsel %vm248, %v3855, 0
    %3858 = vmatprep.subr.mxu0 0.0
    %3859 = vmatpush1.msra.mxu0 0.0
    %3860 = vmatprep.subr.mxu0 0.0
    %3861 = vmatpush1.msra.mxu0 0.0
    %3862 = vmatprep.subr.mxu0 0.0
    %3863 = vmatpush1.msra.mxu0 0.0
    %3864 = vmatprep.subr.mxu0 0.0
    %3865 = vmatpush1.msra.mxu0 0.0
    %3866 = vmatprep.subr.mxu0 0.0
    %3867 = vmatpush1.msra.mxu0 0.0
    %3868 = vmatprep.subr.mxu0 0.0
    %3869 = vmatpush1.msra.mxu0 0.0
    %3870 = vmatprep.subr.mxu0 0.0
    %3871 = vmatpush1.msra.mxu0 0.0
    %3872 = vmatprep.subr.mxu0 0.0
    %3873 = vmatpush1.msra.mxu0 0.0
    %3874 = vmatprep.subr.mxu0 0.0
    %3875 = vmatpush1.msra.mxu0 0.0
    %3876 = vmatprep.subr.mxu0 0.0
    %3877 = vmatpush1.msra.mxu0 0.0
    %3878 = vmatprep.subr.mxu0 0.0
    %3879 = vmatpush1.msra.mxu0 0.0
    %3880 = vmatprep.subr.mxu0 0.0
    %3881 = vmatpush1.msra.mxu0 0.0
    %3882 = vmatprep.subr.mxu0 0.0
    %3883 = vmatpush1.msra.mxu0 0.0
    %3884 = vmatprep.subr.mxu0 0.0
    %3885 = vmatpush1.msra.mxu0 0.0
    %3886 = vmatprep.subr.mxu0 0.0
    %3887 = vmatpush1.msra.mxu0 0.0
    %3888 = vmatprep.subr.mxu0 0.0
    %3889 = vmatpush1.msra.mxu0 %v3302
    %3890 = vmatprep.subr.mxu0 0.0
    %3891 = vmatpush2.msra.mxu0 0.0
    %3892 = vmatprep.subr.mxu0 0.0
    %3893 = vmatpush2.msra.mxu0 0.0
    %3894 = vmatprep.subr.mxu0 0.0
    %3895 = vmatpush2.msra.mxu0 0.0
    %3896 = vmatprep.subr.mxu0 0.0
    %3897 = vmatpush2.msra.mxu0 0.0
    %3898 = vmatprep.subr.mxu0 0.0
    %3899 = vmatpush2.msra.mxu0 0.0
    %3900 = vmatprep.subr.mxu0 0.0
    %3901 = vmatpush2.msra.mxu0 0.0
    %3902 = vmatprep.subr.mxu0 0.0
    %3903 = vmatpush2.msra.mxu0 0.0
    %3904 = vmatprep.subr.mxu0 0.0
    %3905 = vmatpush2.msra.mxu0 0.0
    %3906 = vmatprep.subr.mxu0 0.0
    %3907 = vmatpush2.msra.mxu0 0.0
    %3908 = vmatprep.subr.mxu0 0.0
    %3909 = vmatpush2.msra.mxu0 0.0
    %3910 = vmatprep.subr.mxu0 0.0
    %3911 = vmatpush2.msra.mxu0 0.0
    %3912 = vmatprep.subr.mxu0 0.0
    %3913 = vmatpush2.msra.mxu0 0.0
    %3914 = vmatprep.subr.mxu0 0.0
    %3915 = vmatpush2.msra.mxu0 0.0
    %3916 = vmatprep.subr.mxu0 0.0
    %3917 = vmatpush2.msra.mxu0 0.0
    %3918 = vmatprep.subr.mxu0 0.0
    %3919 = vmatpush2.msra.mxu0 0.0
    %3920 = vmatprep.subr.mxu0 0.0
    %3921 = vmatpush2.msra.mxu0 0.0
    %3922 = vmatprep.mubr.f32.mxu0 0.0
    %3923 = vmatmul.mubr.f32.gmra.mxu0 %v3856
    %v3924 = vpop.f32.mrf.mxu0
    %v3925 = vadd.f32 0.0, %v3924
    %v3926 = vpop.f32.mrf.mxu0
    %3927 = vdwg.mxu0
    %v3929 = vrot.slane %v3925, 4
    %v3931 = vadd.f32 %v3191, %v3929
    %v3932 = vxor.u32 %v3931, 2147483648
    %v3933 = vmul.f32 %v3932, 1.442695
    %v3934 = vpow.pop %v3933
    %v3935 = vadd.f32 %v3934, 1.0
    %v3936 = vrcp.pop %v3935
    %v3937 = vmul.f32 1.0, %v3936
    %v3938 = vtanh.pop %v3931
    %3940 = vrot.lane.b32.xlu0 %v3938, 120
    %v3941 = vpop.permute.xlu0 %3940
    %v3943 = vmul.f32 %v3937, %v3941
    %v3945 = vrot.slane %v3841, 6
    %v3947 = vmul.f32 %v3937, %v3945
    %3949 = vrot.lane.b32.xlu0 %v3943, 4
    %v3950 = vpop.permute.xlu0 %3949
    %v3952 = vadd.f32 %v3947, %v3950
    %v3953 = vtanh.pop %v3952
    %3955 = vrot.lane.b32.xlu0 %v3953, 8
    %v3956 = vpop.permute.xlu0 %3955
    %v3958 = vmul.f32 %v3937, %v3956
    %3960 = vrot.lane.b32.xlu0 %v3958, 116
    %v3961 = vpop.permute.xlu0 %3960
    %3963 = vst.msk [vmem:[#allocation4 + $0x8] sm:$0x30] %vm3523, %v3961
    %v3964 = vrot.slane %v3958, 4
    %3965 = vrot.lane.b32.xlu0 %v3964, 116
    %v3966 = vpop.permute.xlu0 %3965
    %v3967 = vsel %vm248, %v3966, 0
    %3969 = vmatprep.subr.mxu0 0.0
    %3970 = vmatpush1.msra.mxu0 0.0
    %3971 = vmatprep.subr.mxu0 0.0
    %3972 = vmatpush1.msra.mxu0 0.0
    %3973 = vmatprep.subr.mxu0 0.0
    %3974 = vmatpush1.msra.mxu0 0.0
    %3975 = vmatprep.subr.mxu0 0.0
    %3976 = vmatpush1.msra.mxu0 0.0
    %3977 = vmatprep.subr.mxu0 0.0
    %3978 = vmatpush1.msra.mxu0 0.0
    %3979 = vmatprep.subr.mxu0 0.0
    %3980 = vmatpush1.msra.mxu0 0.0
    %3981 = vmatprep.subr.mxu0 0.0
    %3982 = vmatpush1.msra.mxu0 0.0
    %3983 = vmatprep.subr.mxu0 0.0
    %3984 = vmatpush1.msra.mxu0 0.0
    %3985 = vmatprep.subr.mxu0 0.0
    %3986 = vmatpush1.msra.mxu0 0.0
    %3987 = vmatprep.subr.mxu0 0.0
    %3988 = vmatpush1.msra.mxu0 0.0
    %3989 = vmatprep.subr.mxu0 0.0
    %3990 = vmatpush1.msra.mxu0 0.0
    %3991 = vmatprep.subr.mxu0 0.0
    %3992 = vmatpush1.msra.mxu0 0.0
    %3993 = vmatprep.subr.mxu0 0.0
    %3994 = vmatpush1.msra.mxu0 0.0
    %3995 = vmatprep.subr.mxu0 0.0
    %3996 = vmatpush1.msra.mxu0 0.0
    %3997 = vmatprep.subr.mxu0 0.0
    %3998 = vmatpush1.msra.mxu0 0.0
    %3999 = vmatprep.subr.mxu0 0.0
    %4000 = vmatpush1.msra.mxu0 %v3302
    %4001 = vmatprep.subr.mxu0 0.0
    %4002 = vmatpush2.msra.mxu0 0.0
    %4003 = vmatprep.subr.mxu0 0.0
    %4004 = vmatpush2.msra.mxu0 0.0
    %4005 = vmatprep.subr.mxu0 0.0
    %4006 = vmatpush2.msra.mxu0 0.0
    %4007 = vmatprep.subr.mxu0 0.0
    %4008 = vmatpush2.msra.mxu0 0.0
    %4009 = vmatprep.subr.mxu0 0.0
    %4010 = vmatpush2.msra.mxu0 0.0
    %4011 = vmatprep.subr.mxu0 0.0
    %4012 = vmatpush2.msra.mxu0 0.0
    %4013 = vmatprep.subr.mxu0 0.0
    %4014 = vmatpush2.msra.mxu0 0.0
    %4015 = vmatprep.subr.mxu0 0.0
    %4016 = vmatpush2.msra.mxu0 0.0
    %4017 = vmatprep.subr.mxu0 0.0
    %4018 = vmatpush2.msra.mxu0 0.0
    %4019 = vmatprep.subr.mxu0 0.0
    %4020 = vmatpush2.msra.mxu0 0.0
    %4021 = vmatprep.subr.mxu0 0.0
    %4022 = vmatpush2.msra.mxu0 0.0
    %4023 = vmatprep.subr.mxu0 0.0
    %4024 = vmatpush2.msra.mxu0 0.0
    %4025 = vmatprep.subr.mxu0 0.0
    %4026 = vmatpush2.msra.mxu0 0.0
    %4027 = vmatprep.subr.mxu0 0.0
    %4028 = vmatpush2.msra.mxu0 0.0
    %4029 = vmatprep.subr.mxu0 0.0
    %4030 = vmatpush2.msra.mxu0 0.0
    %4031 = vmatprep.subr.mxu0 0.0
    %4032 = vmatpush2.msra.mxu0 0.0
    %4033 = vmatprep.mubr.f32.mxu0 0.0
    %4034 = vmatmul.mubr.f32.gmra.mxu0 %v3967
    %v4035 = vpop.f32.mrf.mxu0
    %v4036 = vadd.f32 0.0, %v4035
    %v4037 = vpop.f32.mrf.mxu0
    %4038 = vdwg.mxu0
    %v4040 = vrot.slane %v4036, 2
    %v4042 = vadd.f32 %v3191, %v4040
    %v4043 = vxor.u32 %v4042, 2147483648
    %v4044 = vmul.f32 %v4043, 1.442695
    %v4045 = vpow.pop %v4044
    %v4046 = vadd.f32 %v4045, 1.0
    %v4047 = vrcp.pop %v4046
    %v4048 = vmul.f32 1.0, %v4047
    %v4049 = vtanh.pop %v4042
    %4051 = vrot.lane.b32.xlu0 %v4049, 120
    %v4052 = vpop.permute.xlu0 %4051
    %v4054 = vmul.f32 %v4048, %v4052
    %v4056 = vrot.slane %v3952, 6
    %v4058 = vmul.f32 %v4048, %v4056
    %4060 = vrot.lane.b32.xlu0 %v4054, 4
    %v4061 = vpop.permute.xlu0 %4060
    %v4063 = vadd.f32 %v4058, %v4061
    %v4064 = vtanh.pop %v4063
    %4066 = vrot.lane.b32.xlu0 %v4064, 8
    %v4067 = vpop.permute.xlu0 %4066
    %v4069 = vmul.f32 %v4048, %v4067
    %4071 = vrot.lane.b32.xlu0 %v4069, 116
    %v4072 = vpop.permute.xlu0 %4071
    %4074 = vst.msk [vmem:[#allocation4 + $0x8] sm:$0xc0] %vm3635, %v4072
    %v4075 = vxor.u32 %v3272, 2147483648
    %v4076 = vmul.f32 %v4075, 1.442695
    %v4077 = vpow.pop %v4076
    %v4078 = vadd.f32 %v4077, 1.0
    %v4079 = vrcp.pop %v4078
    %v4080 = vmul.f32 1.0, %v4079
    %v4081 = vtanh.pop %v3272
    %4083 = vrot.lane.b32.xlu0 %v4081, 120
    %v4084 = vpop.permute.xlu0 %4083
    %v4086 = vmul.f32 %v4080, %v4084
    %v4087 = vtanh.pop %v4086
    %4089 = vrot.lane.b32.xlu0 %v4087, 12
    %v4090 = vpop.permute.xlu0 %4089
    %v4092 = vmul.f32 %v4080, %v4090
    %4094 = vrot.lane.b32.xlu0 %v4092, 120
    %v4095 = vpop.permute.xlu0 %4094
    %vm4097 = vcmask 64550
    %4098 = vst.msk [vmem:[#allocation4 + $0x8] sm:$0xc0] %vm4097, %v4095
    %v4099 = vrot.slane %v4092, 6
    %4100 = vrot.lane.b32.xlu0 %v4099, 116
    %v4101 = vpop.permute.xlu0 %4100
    %v4102 = vsel %vm248, %v4101, 0
    %v4105 = vsel %vm255, %v3104, 0
    %4107 = vmatprep.subr.mxu0 0.0
    %4108 = vmatpush1.msra.mxu0 0.0
    %4109 = vmatprep.subr.mxu0 0.0
    %4110 = vmatpush1.msra.mxu0 0.0
    %4111 = vmatprep.subr.mxu0 0.0
    %4112 = vmatpush1.msra.mxu0 0.0
    %4113 = vmatprep.subr.mxu0 0.0
    %4114 = vmatpush1.msra.mxu0 0.0
    %4115 = vmatprep.subr.mxu0 0.0
    %4116 = vmatpush1.msra.mxu0 0.0
    %4117 = vmatprep.subr.mxu0 0.0
    %4118 = vmatpush1.msra.mxu0 0.0
    %4119 = vmatprep.subr.mxu0 0.0
    %4120 = vmatpush1.msra.mxu0 0.0
    %4121 = vmatprep.subr.mxu0 0.0
    %4122 = vmatpush1.msra.mxu0 0.0
    %4123 = vmatprep.subr.mxu0 0.0
    %4124 = vmatpush1.msra.mxu0 0.0
    %4125 = vmatprep.subr.mxu0 0.0
    %4126 = vmatpush1.msra.mxu0 0.0
    %4127 = vmatprep.subr.mxu0 0.0
    %4128 = vmatpush1.msra.mxu0 0.0
    %4129 = vmatprep.subr.mxu0 0.0
    %4130 = vmatpush1.msra.mxu0 0.0
    %4131 = vmatprep.subr.mxu0 0.0
    %4132 = vmatpush1.msra.mxu0 0.0
    %4133 = vmatprep.subr.mxu0 0.0
    %4134 = vmatpush1.msra.mxu0 0.0
    %4135 = vmatprep.subr.mxu0 0.0
    %4136 = vmatpush1.msra.mxu0 0.0
    %4137 = vmatprep.subr.mxu0 0.0
    %4138 = vmatpush1.msra.mxu0 %v4105
    %4139 = vmatprep.subr.mxu0 0.0
    %4140 = vmatpush2.msra.mxu0 0.0
    %4141 = vmatprep.subr.mxu0 0.0
    %4142 = vmatpush2.msra.mxu0 0.0
    %4143 = vmatprep.subr.mxu0 0.0
    %4144 = vmatpush2.msra.mxu0 0.0
    %4145 = vmatprep.subr.mxu0 0.0
    %4146 = vmatpush2.msra.mxu0 0.0
    %4147 = vmatprep.subr.mxu0 0.0
    %4148 = vmatpush2.msra.mxu0 0.0
    %4149 = vmatprep.subr.mxu0 0.0
    %4150 = vmatpush2.msra.mxu0 0.0
    %4151 = vmatprep.subr.mxu0 0.0
    %4152 = vmatpush2.msra.mxu0 0.0
    %4153 = vmatprep.subr.mxu0 0.0
    %4154 = vmatpush2.msra.mxu0 0.0
    %4155 = vmatprep.subr.mxu0 0.0
    %4156 = vmatpush2.msra.mxu0 0.0
    %4157 = vmatprep.subr.mxu0 0.0
    %4158 = vmatpush2.msra.mxu0 0.0
    %4159 = vmatprep.subr.mxu0 0.0
    %4160 = vmatpush2.msra.mxu0 0.0
    %4161 = vmatprep.subr.mxu0 0.0
    %4162 = vmatpush2.msra.mxu0 0.0
    %4163 = vmatprep.subr.mxu0 0.0
    %4164 = vmatpush2.msra.mxu0 0.0
    %4165 = vmatprep.subr.mxu0 0.0
    %4166 = vmatpush2.msra.mxu0 0.0
    %4167 = vmatprep.subr.mxu0 0.0
    %4168 = vmatpush2.msra.mxu0 0.0
    %4169 = vmatprep.subr.mxu0 0.0
    %4170 = vmatpush2.msra.mxu0 0.0
    %4171 = vmatprep.mubr.f32.mxu0 0.0
    %4172 = vmatmul.mubr.f32.gmra.mxu0 %v4102
    %v4173 = vpop.f32.mrf.mxu0
    %v4174 = vadd.f32 0.0, %v4173
    %v4175 = vpop.f32.mrf.mxu0
    %4176 = vdwg.mxu0
    %v4178 = vrot.slane %v4174, 4
    %v4180 = vadd.f32 %v3272, %v4178
    %v4181 = vxor.u32 %v4180, 2147483648
    %v4182 = vmul.f32 %v4181, 1.442695
    %v4183 = vpow.pop %v4182
    %v4184 = vadd.f32 %v4183, 1.0
    %v4185 = vrcp.pop %v4184
    %v4186 = vmul.f32 1.0, %v4185
    %v4187 = vtanh.pop %v4180
    %4189 = vrot.lane.b32.xlu0 %v4187, 120
    %v4190 = vpop.permute.xlu0 %4189
    %v4192 = vmul.f32 %v4186, %v4190
    %v4194 = vrot.slane %v4086, 2
    %4195 = vrot.lane.b32.xlu0 %v4194, 4
    %v4196 = vpop.permute.xlu0 %4195
    %v4198 = vmul.f32 %v4186, %v4196
    %4200 = vrot.lane.b32.xlu0 %v4192, 4
    %v4201 = vpop.permute.xlu0 %4200
    %v4203 = vadd.f32 %v4198, %v4201
    %v4204 = vtanh.pop %v4203
    %4206 = vrot.lane.b32.xlu0 %v4204, 8
    %v4207 = vpop.permute.xlu0 %4206
    %v4209 = vmul.f32 %v4186, %v4207
    %4211 = vrot.lane.b32.xlu0 %v4209, 120
    %v4212 = vpop.permute.xlu0 %4211
    %vm4214 = vcmask 62500
    %4215 = vst.msk [vmem:[#allocation4 + $0x8] sm:$0x30] %vm4214, %v4212
    %v4216 = vrot.slane %v4209, 4
    %4217 = vrot.lane.b32.xlu0 %v4216, 116
    %v4218 = vpop.permute.xlu0 %4217
    %v4219 = vsel %vm248, %v4218, 0
    %4221 = vmatprep.subr.mxu0 0.0
    %4222 = vmatpush1.msra.mxu0 0.0
    %4223 = vmatprep.subr.mxu0 0.0
    %4224 = vmatpush1.msra.mxu0 0.0
    %4225 = vmatprep.subr.mxu0 0.0
    %4226 = vmatpush1.msra.mxu0 0.0
    %4227 = vmatprep.subr.mxu0 0.0
    %4228 = vmatpush1.msra.mxu0 0.0
    %4229 = vmatprep.subr.mxu0 0.0
    %4230 = vmatpush1.msra.mxu0 0.0
    %4231 = vmatprep.subr.mxu0 0.0
    %4232 = vmatpush1.msra.mxu0 0.0
    %4233 = vmatprep.subr.mxu0 0.0
    %4234 = vmatpush1.msra.mxu0 0.0
    %4235 = vmatprep.subr.mxu0 0.0
    %4236 = vmatpush1.msra.mxu0 0.0
    %4237 = vmatprep.subr.mxu0 0.0
    %4238 = vmatpush1.msra.mxu0 0.0
    %4239 = vmatprep.subr.mxu0 0.0
    %4240 = vmatpush1.msra.mxu0 0.0
    %4241 = vmatprep.subr.mxu0 0.0
    %4242 = vmatpush1.msra.mxu0 0.0
    %4243 = vmatprep.subr.mxu0 0.0
    %4244 = vmatpush1.msra.mxu0 0.0
    %4245 = vmatprep.subr.mxu0 0.0
    %4246 = vmatpush1.msra.mxu0 0.0
    %4247 = vmatprep.subr.mxu0 0.0
    %4248 = vmatpush1.msra.mxu0 0.0
    %4249 = vmatprep.subr.mxu0 0.0
    %4250 = vmatpush1.msra.mxu0 0.0
    %4251 = vmatprep.subr.mxu0 0.0
    %4252 = vmatpush1.msra.mxu0 %v4105
    %4253 = vmatprep.subr.mxu0 0.0
    %4254 = vmatpush2.msra.mxu0 0.0
    %4255 = vmatprep.subr.mxu0 0.0
    %4256 = vmatpush2.msra.mxu0 0.0
    %4257 = vmatprep.subr.mxu0 0.0
    %4258 = vmatpush2.msra.mxu0 0.0
    %4259 = vmatprep.subr.mxu0 0.0
    %4260 = vmatpush2.msra.mxu0 0.0
    %4261 = vmatprep.subr.mxu0 0.0
    %4262 = vmatpush2.msra.mxu0 0.0
    %4263 = vmatprep.subr.mxu0 0.0
    %4264 = vmatpush2.msra.mxu0 0.0
    %4265 = vmatprep.subr.mxu0 0.0
    %4266 = vmatpush2.msra.mxu0 0.0
    %4267 = vmatprep.subr.mxu0 0.0
    %4268 = vmatpush2.msra.mxu0 0.0
    %4269 = vmatprep.subr.mxu0 0.0
    %4270 = vmatpush2.msra.mxu0 0.0
    %4271 = vmatprep.subr.mxu0 0.0
    %4272 = vmatpush2.msra.mxu0 0.0
    %4273 = vmatprep.subr.mxu0 0.0
    %4274 = vmatpush2.msra.mxu0 0.0
    %4275 = vmatprep.subr.mxu0 0.0
    %4276 = vmatpush2.msra.mxu0 0.0
    %4277 = vmatprep.subr.mxu0 0.0
    %4278 = vmatpush2.msra.mxu0 0.0
    %4279 = vmatprep.subr.mxu0 0.0
    %4280 = vmatpush2.msra.mxu0 0.0
    %4281 = vmatprep.subr.mxu0 0.0
    %4282 = vmatpush2.msra.mxu0 0.0
    %4283 = vmatprep.subr.mxu0 0.0
    %4284 = vmatpush2.msra.mxu0 0.0
    %4285 = vmatprep.mubr.f32.mxu0 0.0
    %4286 = vmatmul.mubr.f32.gmra.mxu0 %v4219
    %v4287 = vpop.f32.mrf.mxu0
    %v4288 = vadd.f32 0.0, %v4287
    %v4289 = vpop.f32.mrf.mxu0
    %4290 = vdwg.mxu0
    %v4292 = vrot.slane %v4288, 6
    %v4294 = vadd.f32 %v3272, %v4292
    %v4295 = vxor.u32 %v4294, 2147483648
    %v4296 = vmul.f32 %v4295, 1.442695
    %v4297 = vpow.pop %v4296
    %v4298 = vadd.f32 %v4297, 1.0
    %v4299 = vrcp.pop %v4298
    %v4300 = vmul.f32 1.0, %v4299
    %v4301 = vtanh.pop %v4294
    %4303 = vrot.lane.b32.xlu0 %v4301, 120
    %v4304 = vpop.permute.xlu0 %4303
    %v4306 = vmul.f32 %v4300, %v4304
    %v4308 = vrot.slane %v4203, 2
    %v4310 = vmul.f32 %v4300, %v4308
    %4312 = vrot.lane.b32.xlu0 %v4306, 4
    %v4313 = vpop.permute.xlu0 %4312
    %v4315 = vadd.f32 %v4310, %v4313
    %v4316 = vtanh.pop %v4315
    %4318 = vrot.lane.b32.xlu0 %v4316, 8
    %v4319 = vpop.permute.xlu0 %4318
    %v4321 = vmul.f32 %v4300, %v4319
    %4323 = vrot.lane.b32.xlu0 %v4321, 120
    %v4324 = vpop.permute.xlu0 %4323
    %vm4326 = vcmask 60450
    %4327 = vst.msk [vmem:[#allocation4 + $0x8] sm:$0xc] %vm4326, %v4324
    %v4328 = vrot.slane %v4321, 2
    %4329 = vrot.lane.b32.xlu0 %v4328, 116
    %v4330 = vpop.permute.xlu0 %4329
    %v4331 = vsel %vm248, %v4330, 0
    %4333 = vmatprep.subr.mxu0 0.0
    %4334 = vmatpush1.msra.mxu0 0.0
    %4335 = vmatprep.subr.mxu0 0.0
    %4336 = vmatpush1.msra.mxu0 0.0
    %4337 = vmatprep.subr.mxu0 0.0
    %4338 = vmatpush1.msra.mxu0 0.0
    %4339 = vmatprep.subr.mxu0 0.0
    %4340 = vmatpush1.msra.mxu0 0.0
    %4341 = vmatprep.subr.mxu0 0.0
    %4342 = vmatpush1.msra.mxu0 0.0
    %4343 = vmatprep.subr.mxu0 0.0
    %4344 = vmatpush1.msra.mxu0 0.0
    %4345 = vmatprep.subr.mxu0 0.0
    %4346 = vmatpush1.msra.mxu0 0.0
    %4347 = vmatprep.subr.mxu0 0.0
    %4348 = vmatpush1.msra.mxu0 0.0
    %4349 = vmatprep.subr.mxu0 0.0
    %4350 = vmatpush1.msra.mxu0 0.0
    %4351 = vmatprep.subr.mxu0 0.0
    %4352 = vmatpush1.msra.mxu0 0.0
    %4353 = vmatprep.subr.mxu0 0.0
    %4354 = vmatpush1.msra.mxu0 0.0
    %4355 = vmatprep.subr.mxu0 0.0
    %4356 = vmatpush1.msra.mxu0 0.0
    %4357 = vmatprep.subr.mxu0 0.0
    %4358 = vmatpush1.msra.mxu0 0.0
    %4359 = vmatprep.subr.mxu0 0.0
    %4360 = vmatpush1.msra.mxu0 0.0
    %4361 = vmatprep.subr.mxu0 0.0
    %4362 = vmatpush1.msra.mxu0 0.0
    %4363 = vmatprep.subr.mxu0 0.0
    %4364 = vmatpush1.msra.mxu0 %v4105
    %4365 = vmatprep.subr.mxu0 0.0
    %4366 = vmatpush2.msra.mxu0 0.0
    %4367 = vmatprep.subr.mxu0 0.0
    %4368 = vmatpush2.msra.mxu0 0.0
    %4369 = vmatprep.subr.mxu0 0.0
    %4370 = vmatpush2.msra.mxu0 0.0
    %4371 = vmatprep.subr.mxu0 0.0
    %4372 = vmatpush2.msra.mxu0 0.0
    %4373 = vmatprep.subr.mxu0 0.0
    %4374 = vmatpush2.msra.mxu0 0.0
    %4375 = vmatprep.subr.mxu0 0.0
    %4376 = vmatpush2.msra.mxu0 0.0
    %4377 = vmatprep.subr.mxu0 0.0
    %4378 = vmatpush2.msra.mxu0 0.0
    %4379 = vmatprep.subr.mxu0 0.0
    %4380 = vmatpush2.msra.mxu0 0.0
    %4381 = vmatprep.subr.mxu0 0.0
    %4382 = vmatpush2.msra.mxu0 0.0
    %4383 = vmatprep.subr.mxu0 0.0
    %4384 = vmatpush2.msra.mxu0 0.0
    %4385 = vmatprep.subr.mxu0 0.0
    %4386 = vmatpush2.msra.mxu0 0.0
    %4387 = vmatprep.subr.mxu0 0.0
    %4388 = vmatpush2.msra.mxu0 0.0
    %4389 = vmatprep.subr.mxu0 0.0
    %4390 = vmatpush2.msra.mxu0 0.0
    %4391 = vmatprep.subr.mxu0 0.0
    %4392 = vmatpush2.msra.mxu0 0.0
    %4393 = vmatprep.subr.mxu0 0.0
    %4394 = vmatpush2.msra.mxu0 0.0
    %4395 = vmatprep.subr.mxu0 0.0
    %4396 = vmatpush2.msra.mxu0 0.0
    %4397 = vmatprep.mubr.f32.mxu0 0.0
    %4398 = vmatmul.mubr.f32.gmra.mxu0 %v4331
    %v4399 = vpop.f32.mrf.mxu0
    %v4400 = vadd.f32 0.0, %v4399
    %v4401 = vpop.f32.mrf.mxu0
    %4402 = vdwg.mxu0
    %v4403 = vadd.f32 %v3272, %v4400
    %v4404 = vxor.u32 %v4403, 2147483648
    %v4405 = vmul.f32 %v4404, 1.442695
    %v4406 = vpow.pop %v4405
    %v4407 = vadd.f32 %v4406, 1.0
    %v4408 = vrcp.pop %v4407
    %v4409 = vmul.f32 1.0, %v4408
    %v4410 = vtanh.pop %v4403
    %4412 = vrot.lane.b32.xlu0 %v4410, 120
    %v4413 = vpop.permute.xlu0 %4412
    %v4415 = vmul.f32 %v4409, %v4413
    %v4417 = vrot.slane %v4315, 2
    %v4419 = vmul.f32 %v4409, %v4417
    %4421 = vrot.lane.b32.xlu0 %v4415, 4
    %v4422 = vpop.permute.xlu0 %4421
    %v4424 = vadd.f32 %v4419, %v4422
    %v4425 = vtanh.pop %v4424
    %4427 = vrot.lane.b32.xlu0 %v4425, 8
    %v4428 = vpop.permute.xlu0 %4427
    %v4430 = vmul.f32 %v4409, %v4428
    %4432 = vrot.lane.b32.xlu0 %v4430, 120
    %v4433 = vpop.permute.xlu0 %4432
    %vm4435 = vcmask 58400
    %4436 = vst.msk [vmem:[#allocation4 + $0x8] sm:$0x3] %vm4435, %v4433
    %4437 = vrot.lane.b32.xlu0 %v4430, 116
    %v4438 = vpop.permute.xlu0 %4437
    %v4439 = vsel %vm248, %v4438, 0
    %4441 = vmatprep.subr.mxu0 0.0
    %4442 = vmatpush1.msra.mxu0 0.0
    %4443 = vmatprep.subr.mxu0 0.0
    %4444 = vmatpush1.msra.mxu0 0.0
    %4445 = vmatprep.subr.mxu0 0.0
    %4446 = vmatpush1.msra.mxu0 0.0
    %4447 = vmatprep.subr.mxu0 0.0
    %4448 = vmatpush1.msra.mxu0 0.0
    %4449 = vmatprep.subr.mxu0 0.0
    %4450 = vmatpush1.msra.mxu0 0.0
    %4451 = vmatprep.subr.mxu0 0.0
    %4452 = vmatpush1.msra.mxu0 0.0
    %4453 = vmatprep.subr.mxu0 0.0
    %4454 = vmatpush1.msra.mxu0 0.0
    %4455 = vmatprep.subr.mxu0 0.0
    %4456 = vmatpush1.msra.mxu0 0.0
    %4457 = vmatprep.subr.mxu0 0.0
    %4458 = vmatpush1.msra.mxu0 0.0
    %4459 = vmatprep.subr.mxu0 0.0
    %4460 = vmatpush1.msra.mxu0 0.0
    %4461 = vmatprep.subr.mxu0 0.0
    %4462 = vmatpush1.msra.mxu0 0.0
    %4463 = vmatprep.subr.mxu0 0.0
    %4464 = vmatpush1.msra.mxu0 0.0
    %4465 = vmatprep.subr.mxu0 0.0
    %4466 = vmatpush1.msra.mxu0 0.0
    %4467 = vmatprep.subr.mxu0 0.0
    %4468 = vmatpush1.msra.mxu0 0.0
    %4469 = vmatprep.subr.mxu0 0.0
    %4470 = vmatpush1.msra.mxu0 0.0
    %4471 = vmatprep.subr.mxu0 0.0
    %4472 = vmatpush1.msra.mxu0 %v4105
    %4473 = vmatprep.subr.mxu0 0.0
    %4474 = vmatpush2.msra.mxu0 0.0
    %4475 = vmatprep.subr.mxu0 0.0
    %4476 = vmatpush2.msra.mxu0 0.0
    %4477 = vmatprep.subr.mxu0 0.0
    %4478 = vmatpush2.msra.mxu0 0.0
    %4479 = vmatprep.subr.mxu0 0.0
    %4480 = vmatpush2.msra.mxu0 0.0
    %4481 = vmatprep.subr.mxu0 0.0
    %4482 = vmatpush2.msra.mxu0 0.0
    %4483 = vmatprep.subr.mxu0 0.0
    %4484 = vmatpush2.msra.mxu0 0.0
    %4485 = vmatprep.subr.mxu0 0.0
    %4486 = vmatpush2.msra.mxu0 0.0
    %4487 = vmatprep.subr.mxu0 0.0
    %4488 = vmatpush2.msra.mxu0 0.0
    %4489 = vmatprep.subr.mxu0 0.0
    %4490 = vmatpush2.msra.mxu0 0.0
    %4491 = vmatprep.subr.mxu0 0.0
    %4492 = vmatpush2.msra.mxu0 0.0
    %4493 = vmatprep.subr.mxu0 0.0
    %4494 = vmatpush2.msra.mxu0 0.0
    %4495 = vmatprep.subr.mxu0 0.0
    %4496 = vmatpush2.msra.mxu0 0.0
    %4497 = vmatprep.subr.mxu0 0.0
    %4498 = vmatpush2.msra.mxu0 0.0
    %4499 = vmatprep.subr.mxu0 0.0
    %4500 = vmatpush2.msra.mxu0 0.0
    %4501 = vmatprep.subr.mxu0 0.0
    %4502 = vmatpush2.msra.mxu0 0.0
    %4503 = vmatprep.subr.mxu0 0.0
    %4504 = vmatpush2.msra.mxu0 0.0
    %4505 = vmatprep.mubr.f32.mxu0 0.0
    %4506 = vmatmul.mubr.f32.gmra.mxu0 %v4439
    %v4507 = vpop.f32.mrf.mxu0
    %v4508 = vadd.f32 0.0, %v4507
    %v4509 = vpop.f32.mrf.mxu0
    %4510 = vdwg.mxu0
    %v4512 = vrot.slane %v4508, 2
    %v4514 = vadd.f32 %v3267, %v4512
    %v4515 = vxor.u32 %v4514, 2147483648
    %v4516 = vmul.f32 %v4515, 1.442695
    %v4517 = vpow.pop %v4516
    %v4518 = vadd.f32 %v4517, 1.0
    %v4519 = vrcp.pop %v4518
    %v4520 = vmul.f32 1.0, %v4519
    %v4521 = vtanh.pop %v4514
    %4523 = vrot.lane.b32.xlu0 %v4521, 120
    %v4524 = vpop.permute.xlu0 %4523
    %v4526 = vmul.f32 %v4520, %v4524
    %v4528 = vrot.slane %v4424, 2
    %v4530 = vmul.f32 %v4520, %v4528
    %4532 = vrot.lane.b32.xlu0 %v4526, 4
    %v4533 = vpop.permute.xlu0 %4532
    %v4535 = vadd.f32 %v4530, %v4533
    %v4536 = vtanh.pop %v4535
    %4538 = vrot.lane.b32.xlu0 %v4536, 8
    %v4539 = vpop.permute.xlu0 %4538
    %v4541 = vmul.f32 %v4520, %v4539
    %4543 = vrot.lane.b32.xlu0 %v4541, 120
    %v4544 = vpop.permute.xlu0 %4543
    %4546 = vst.msk [vmem:[#allocation4] sm:$0xc0] %vm4097, %v4544
    %v4547 = vrot.slane %v4541, 6
    %4548 = vrot.lane.b32.xlu0 %v4547, 116
    %v4549 = vpop.permute.xlu0 %4548
    %v4550 = vsel %vm248, %v4549, 0
    %4552 = vmatprep.subr.mxu0 0.0
    %4553 = vmatpush1.msra.mxu0 0.0
    %4554 = vmatprep.subr.mxu0 0.0
    %4555 = vmatpush1.msra.mxu0 0.0
    %4556 = vmatprep.subr.mxu0 0.0
    %4557 = vmatpush1.msra.mxu0 0.0
    %4558 = vmatprep.subr.mxu0 0.0
    %4559 = vmatpush1.msra.mxu0 0.0
    %4560 = vmatprep.subr.mxu0 0.0
    %4561 = vmatpush1.msra.mxu0 0.0
    %4562 = vmatprep.subr.mxu0 0.0
    %4563 = vmatpush1.msra.mxu0 0.0
    %4564 = vmatprep.subr.mxu0 0.0
    %4565 = vmatpush1.msra.mxu0 0.0
    %4566 = vmatprep.subr.mxu0 0.0
    %4567 = vmatpush1.msra.mxu0 0.0
    %4568 = vmatprep.subr.mxu0 0.0
    %4569 = vmatpush1.msra.mxu0 0.0
    %4570 = vmatprep.subr.mxu0 0.0
    %4571 = vmatpush1.msra.mxu0 0.0
    %4572 = vmatprep.subr.mxu0 0.0
    %4573 = vmatpush1.msra.mxu0 0.0
    %4574 = vmatprep.subr.mxu0 0.0
    %4575 = vmatpush1.msra.mxu0 0.0
    %4576 = vmatprep.subr.mxu0 0.0
    %4577 = vmatpush1.msra.mxu0 0.0
    %4578 = vmatprep.subr.mxu0 0.0
    %4579 = vmatpush1.msra.mxu0 0.0
    %4580 = vmatprep.subr.mxu0 0.0
    %4581 = vmatpush1.msra.mxu0 0.0
    %4582 = vmatprep.subr.mxu0 0.0
    %4583 = vmatpush1.msra.mxu0 %v4105
    %4584 = vmatprep.subr.mxu0 0.0
    %4585 = vmatpush2.msra.mxu0 0.0
    %4586 = vmatprep.subr.mxu0 0.0
    %4587 = vmatpush2.msra.mxu0 0.0
    %4588 = vmatprep.subr.mxu0 0.0
    %4589 = vmatpush2.msra.mxu0 0.0
    %4590 = vmatprep.subr.mxu0 0.0
    %4591 = vmatpush2.msra.mxu0 0.0
    %4592 = vmatprep.subr.mxu0 0.0
    %4593 = vmatpush2.msra.mxu0 0.0
    %4594 = vmatprep.subr.mxu0 0.0
    %4595 = vmatpush2.msra.mxu0 0.0
    %4596 = vmatprep.subr.mxu0 0.0
    %4597 = vmatpush2.msra.mxu0 0.0
    %4598 = vmatprep.subr.mxu0 0.0
    %4599 = vmatpush2.msra.mxu0 0.0
    %4600 = vmatprep.subr.mxu0 0.0
    %4601 = vmatpush2.msra.mxu0 0.0
    %4602 = vmatprep.subr.mxu0 0.0
    %4603 = vmatpush2.msra.mxu0 0.0
    %4604 = vmatprep.subr.mxu0 0.0
    %4605 = vmatpush2.msra.mxu0 0.0
    %4606 = vmatprep.subr.mxu0 0.0
    %4607 = vmatpush2.msra.mxu0 0.0
    %4608 = vmatprep.subr.mxu0 0.0
    %4609 = vmatpush2.msra.mxu0 0.0
    %4610 = vmatprep.subr.mxu0 0.0
    %4611 = vmatpush2.msra.mxu0 0.0
    %4612 = vmatprep.subr.mxu0 0.0
    %4613 = vmatpush2.msra.mxu0 0.0
    %4614 = vmatprep.subr.mxu0 0.0
    %4615 = vmatpush2.msra.mxu0 0.0
    %4616 = vmatprep.mubr.f32.mxu0 0.0
    %4617 = vmatmul.mubr.f32.gmra.mxu0 %v4550
    %v4618 = vpop.f32.mrf.mxu0
    %v4619 = vadd.f32 0.0, %v4618
    %v4620 = vpop.f32.mrf.mxu0
    %4621 = vdwg.mxu0
    %v4623 = vrot.slane %v4619, 4
    %v4625 = vadd.f32 %v3267, %v4623
    %v4626 = vxor.u32 %v4625, 2147483648
    %v4627 = vmul.f32 %v4626, 1.442695
    %v4628 = vpow.pop %v4627
    %v4629 = vadd.f32 %v4628, 1.0
    %v4630 = vrcp.pop %v4629
    %v4631 = vmul.f32 1.0, %v4630
    %v4632 = vtanh.pop %v4625
    %4634 = vrot.lane.b32.xlu0 %v4632, 120
    %v4635 = vpop.permute.xlu0 %4634
    %v4637 = vmul.f32 %v4631, %v4635
    %v4639 = vrot.slane %v4535, 2
    %v4641 = vmul.f32 %v4631, %v4639
    %4643 = vrot.lane.b32.xlu0 %v4637, 4
    %v4644 = vpop.permute.xlu0 %4643
    %v4646 = vadd.f32 %v4641, %v4644
    %v4647 = vtanh.pop %v4646
    %4649 = vrot.lane.b32.xlu0 %v4647, 8
    %v4650 = vpop.permute.xlu0 %4649
    %v4652 = vmul.f32 %v4631, %v4650
    %4654 = vrot.lane.b32.xlu0 %v4652, 120
    %v4655 = vpop.permute.xlu0 %4654
    %4657 = vst.msk [vmem:[#allocation4] sm:$0x30] %vm4214, %v4655
    %v4658 = vrot.slane %v4652, 4
    %4659 = vrot.lane.b32.xlu0 %v4658, 116
    %v4660 = vpop.permute.xlu0 %4659
    %v4661 = vsel %vm248, %v4660, 0
    %4663 = vmatprep.subr.mxu0 0.0
    %4664 = vmatpush1.msra.mxu0 0.0
    %4665 = vmatprep.subr.mxu0 0.0
    %4666 = vmatpush1.msra.mxu0 0.0
    %4667 = vmatprep.subr.mxu0 0.0
    %4668 = vmatpush1.msra.mxu0 0.0
    %4669 = vmatprep.subr.mxu0 0.0
    %4670 = vmatpush1.msra.mxu0 0.0
    %4671 = vmatprep.subr.mxu0 0.0
    %4672 = vmatpush1.msra.mxu0 0.0
    %4673 = vmatprep.subr.mxu0 0.0
    %4674 = vmatpush1.msra.mxu0 0.0
    %4675 = vmatprep.subr.mxu0 0.0
    %4676 = vmatpush1.msra.mxu0 0.0
    %4677 = vmatprep.subr.mxu0 0.0
    %4678 = vmatpush1.msra.mxu0 0.0
    %4679 = vmatprep.subr.mxu0 0.0
    %4680 = vmatpush1.msra.mxu0 0.0
    %4681 = vmatprep.subr.mxu0 0.0
    %4682 = vmatpush1.msra.mxu0 0.0
    %4683 = vmatprep.subr.mxu0 0.0
    %4684 = vmatpush1.msra.mxu0 0.0
    %4685 = vmatprep.subr.mxu0 0.0
    %4686 = vmatpush1.msra.mxu0 0.0
    %4687 = vmatprep.subr.mxu0 0.0
    %4688 = vmatpush1.msra.mxu0 0.0
    %4689 = vmatprep.subr.mxu0 0.0
    %4690 = vmatpush1.msra.mxu0 0.0
    %4691 = vmatprep.subr.mxu0 0.0
    %4692 = vmatpush1.msra.mxu0 0.0
    %4693 = vmatprep.subr.mxu0 0.0
    %4694 = vmatpush1.msra.mxu0 %v4105
    %4695 = vmatprep.subr.mxu0 0.0
    %4696 = vmatpush2.msra.mxu0 0.0
    %4697 = vmatprep.subr.mxu0 0.0
    %4698 = vmatpush2.msra.mxu0 0.0
    %4699 = vmatprep.subr.mxu0 0.0
    %4700 = vmatpush2.msra.mxu0 0.0
    %4701 = vmatprep.subr.mxu0 0.0
    %4702 = vmatpush2.msra.mxu0 0.0
    %4703 = vmatprep.subr.mxu0 0.0
    %4704 = vmatpush2.msra.mxu0 0.0
    %4705 = vmatprep.subr.mxu0 0.0
    %4706 = vmatpush2.msra.mxu0 0.0
    %4707 = vmatprep.subr.mxu0 0.0
    %4708 = vmatpush2.msra.mxu0 0.0
    %4709 = vmatprep.subr.mxu0 0.0
    %4710 = vmatpush2.msra.mxu0 0.0
    %4711 = vmatprep.subr.mxu0 0.0
    %4712 = vmatpush2.msra.mxu0 0.0
    %4713 = vmatprep.subr.mxu0 0.0
    %4714 = vmatpush2.msra.mxu0 0.0
    %4715 = vmatprep.subr.mxu0 0.0
    %4716 = vmatpush2.msra.mxu0 0.0
    %4717 = vmatprep.subr.mxu0 0.0
    %4718 = vmatpush2.msra.mxu0 0.0
    %4719 = vmatprep.subr.mxu0 0.0
    %4720 = vmatpush2.msra.mxu0 0.0
    %4721 = vmatprep.subr.mxu0 0.0
    %4722 = vmatpush2.msra.mxu0 0.0
    %4723 = vmatprep.subr.mxu0 0.0
    %4724 = vmatpush2.msra.mxu0 0.0
    %4725 = vmatprep.subr.mxu0 0.0
    %4726 = vmatpush2.msra.mxu0 0.0
    %4727 = vmatprep.mubr.f32.mxu0 0.0
    %4728 = vmatmul.mubr.f32.gmra.mxu0 %v4661
    %v4729 = vpop.f32.mrf.mxu0
    %v4730 = vadd.f32 0.0, %v4729
    %v4731 = vpop.f32.mrf.mxu0
    %4732 = vdwg.mxu0
    %v4734 = vrot.slane %v4730, 6
    %v4736 = vadd.f32 %v3267, %v4734
    %v4737 = vxor.u32 %v4736, 2147483648
    %v4738 = vmul.f32 %v4737, 1.442695
    %v4739 = vpow.pop %v4738
    %v4740 = vadd.f32 %v4739, 1.0
    %v4741 = vrcp.pop %v4740
    %v4742 = vmul.f32 1.0, %v4741
    %v4743 = vtanh.pop %v4736
    %4745 = vrot.lane.b32.xlu0 %v4743, 120
    %v4746 = vpop.permute.xlu0 %4745
    %v4748 = vmul.f32 %v4742, %v4746
    %v4750 = vrot.slane %v4646, 2
    %v4752 = vmul.f32 %v4742, %v4750
    %4754 = vrot.lane.b32.xlu0 %v4748, 4
    %v4755 = vpop.permute.xlu0 %4754
    %v4757 = vadd.f32 %v4752, %v4755
    %v4758 = vtanh.pop %v4757
    %4760 = vrot.lane.b32.xlu0 %v4758, 8
    %v4761 = vpop.permute.xlu0 %4760
    %v4763 = vmul.f32 %v4742, %v4761
    %4765 = vrot.lane.b32.xlu0 %v4763, 120
    %v4766 = vpop.permute.xlu0 %4765
    %4768 = vst.msk [vmem:[#allocation4] sm:$0xc] %vm4326, %v4766
    %v4769 = vrot.slane %v4763, 2
    %4770 = vrot.lane.b32.xlu0 %v4769, 116
    %v4771 = vpop.permute.xlu0 %4770
    %v4772 = vsel %vm248, %v4771, 0
    %4774 = vmatprep.subr.mxu0 0.0
    %4775 = vmatpush1.msra.mxu0 0.0
    %4776 = vmatprep.subr.mxu0 0.0
    %4777 = vmatpush1.msra.mxu0 0.0
    %4778 = vmatprep.subr.mxu0 0.0
    %4779 = vmatpush1.msra.mxu0 0.0
    %4780 = vmatprep.subr.mxu0 0.0
    %4781 = vmatpush1.msra.mxu0 0.0
    %4782 = vmatprep.subr.mxu0 0.0
    %4783 = vmatpush1.msra.mxu0 0.0
    %4784 = vmatprep.subr.mxu0 0.0
    %4785 = vmatpush1.msra.mxu0 0.0
    %4786 = vmatprep.subr.mxu0 0.0
    %4787 = vmatpush1.msra.mxu0 0.0
    %4788 = vmatprep.subr.mxu0 0.0
    %4789 = vmatpush1.msra.mxu0 0.0
    %4790 = vmatprep.subr.mxu0 0.0
    %4791 = vmatpush1.msra.mxu0 0.0
    %4792 = vmatprep.subr.mxu0 0.0
    %4793 = vmatpush1.msra.mxu0 0.0
    %4794 = vmatprep.subr.mxu0 0.0
    %4795 = vmatpush1.msra.mxu0 0.0
    %4796 = vmatprep.subr.mxu0 0.0
    %4797 = vmatpush1.msra.mxu0 0.0
    %4798 = vmatprep.subr.mxu0 0.0
    %4799 = vmatpush1.msra.mxu0 0.0
    %4800 = vmatprep.subr.mxu0 0.0
    %4801 = vmatpush1.msra.mxu0 0.0
    %4802 = vmatprep.subr.mxu0 0.0
    %4803 = vmatpush1.msra.mxu0 0.0
    %4804 = vmatprep.subr.mxu0 0.0
    %4805 = vmatpush1.msra.mxu0 %v4105
    %4806 = vmatprep.subr.mxu0 0.0
    %4807 = vmatpush2.msra.mxu0 0.0
    %4808 = vmatprep.subr.mxu0 0.0
    %4809 = vmatpush2.msra.mxu0 0.0
    %4810 = vmatprep.subr.mxu0 0.0
    %4811 = vmatpush2.msra.mxu0 0.0
    %4812 = vmatprep.subr.mxu0 0.0
    %4813 = vmatpush2.msra.mxu0 0.0
    %4814 = vmatprep.subr.mxu0 0.0
    %4815 = vmatpush2.msra.mxu0 0.0
    %4816 = vmatprep.subr.mxu0 0.0
    %4817 = vmatpush2.msra.mxu0 0.0
    %4818 = vmatprep.subr.mxu0 0.0
    %4819 = vmatpush2.msra.mxu0 0.0
    %4820 = vmatprep.subr.mxu0 0.0
    %4821 = vmatpush2.msra.mxu0 0.0
    %4822 = vmatprep.subr.mxu0 0.0
    %4823 = vmatpush2.msra.mxu0 0.0
    %4824 = vmatprep.subr.mxu0 0.0
    %4825 = vmatpush2.msra.mxu0 0.0
    %4826 = vmatprep.subr.mxu0 0.0
    %4827 = vmatpush2.msra.mxu0 0.0
    %4828 = vmatprep.subr.mxu0 0.0
    %4829 = vmatpush2.msra.mxu0 0.0
    %4830 = vmatprep.subr.mxu0 0.0
    %4831 = vmatpush2.msra.mxu0 0.0
    %4832 = vmatprep.subr.mxu0 0.0
    %4833 = vmatpush2.msra.mxu0 0.0
    %4834 = vmatprep.subr.mxu0 0.0
    %4835 = vmatpush2.msra.mxu0 0.0
    %4836 = vmatprep.subr.mxu0 0.0
    %4837 = vmatpush2.msra.mxu0 0.0
    %4838 = vmatprep.mubr.f32.mxu0 0.0
    %4839 = vmatmul.mubr.f32.gmra.mxu0 %v4772
    %v4840 = vpop.f32.mrf.mxu0
    %v4841 = vadd.f32 0.0, %v4840
    %v4842 = vpop.f32.mrf.mxu0
    %4843 = vdwg.mxu0
    %v4844 = vadd.f32 %v3267, %v4841
    %v4845 = vxor.u32 %v4844, 2147483648
    %v4846 = vmul.f32 %v4845, 1.442695
    %v4847 = vpow.pop %v4846
    %v4848 = vadd.f32 %v4847, 1.0
    %v4849 = vrcp.pop %v4848
    %v4850 = vmul.f32 1.0, %v4849
    %v4851 = vtanh.pop %v4844
    %4853 = vrot.lane.b32.xlu0 %v4851, 120
    %v4854 = vpop.permute.xlu0 %4853
    %v4856 = vmul.f32 %v4850, %v4854
    %v4858 = vrot.slane %v4757, 2
    %v4860 = vmul.f32 %v4850, %v4858
    %4862 = vrot.lane.b32.xlu0 %v4856, 4
    %v4863 = vpop.permute.xlu0 %4862
    %v4865 = vadd.f32 %v4860, %v4863
    %v4866 = vtanh.pop %v4865
    %4868 = vrot.lane.b32.xlu0 %v4866, 8
    %v4869 = vpop.permute.xlu0 %4868
    %v4871 = vmul.f32 %v4850, %v4869
    %4873 = vrot.lane.b32.xlu0 %v4871, 120
    %v4874 = vpop.permute.xlu0 %4873
    %4876 = vst.msk [vmem:[#allocation4] sm:$0x3] %vm4435, %v4874
    %v4877 = vld [vmem:[#allocation4] sm:$0xff]
    %v4878 = vld [vmem:[#allocation4 + $0x8] sm:$0xff]
    %v4879 = vld [vmem:[%s43] sm:$0xff]
    %v4880 = vld [vmem:[%s45] sm:$0xf]
    %v4881 = vld [vmem:[%s47] sm:$0x1]
    %v4883 = vlaneseq
    %v4884 = vshrl.u32 %v4883, 7
    %v4885 = vsub.s32 0, %v4884
    %v4886 = vrot.slane %v4881, %v4885
    %v4889 = vsel %vm3112, %v4877, 0
    %v4892 = vsel %vm3112, %v4878, 0
    %4894 = vmatprep.subr.mxu0 0.0
    %4895 = vmatpush1.msra.mxu0 0.0
    %4896 = vmatprep.subr.mxu0 0.0
    %4897 = vmatpush1.msra.mxu0 0.0
    %4898 = vmatprep.subr.mxu0 0.0
    %4899 = vmatpush1.msra.mxu0 0.0
    %4900 = vmatprep.subr.mxu0 0.0
    %4901 = vmatpush1.msra.mxu0 0.0
    %4902 = vmatprep.subr.mxu0 0.0
    %4903 = vmatpush1.msra.mxu0 0.0
    %4904 = vmatprep.subr.mxu0 0.0
    %4905 = vmatpush1.msra.mxu0 0.0
    %4906 = vmatprep.subr.mxu0 0.0
    %4907 = vmatpush1.msra.mxu0 0.0
    %4908 = vmatprep.subr.mxu0 0.0
    %4909 = vmatpush1.msra.mxu0 0.0
    %4910 = vmatprep.subr.mxu0 0.0
    %4911 = vmatpush1.msra.mxu0 0.0
    %4912 = vmatprep.subr.mxu0 0.0
    %4913 = vmatpush1.msra.mxu0 0.0
    %4914 = vmatprep.subr.mxu0 0.0
    %4915 = vmatpush1.msra.mxu0 0.0
    %4916 = vmatprep.subr.mxu0 0.0
    %4917 = vmatpush1.msra.mxu0 0.0
    %4918 = vmatprep.subr.mxu0 0.0
    %4919 = vmatpush1.msra.mxu0 0.0
    %4920 = vmatprep.subr.mxu0 0.0
    %4921 = vmatpush1.msra.mxu0 0.0
    %4922 = vmatprep.subr.mxu0 0.0
    %4923 = vmatpush1.msra.mxu0 0.0
    %4924 = vmatprep.subr.mxu0 0.0
    %4925 = vmatpush1.msra.mxu0 %v4879
    %4926 = vmatprep.subr.mxu0 0.0
    %4927 = vmatpush2.msra.mxu0 0.0
    %4928 = vmatprep.subr.mxu0 0.0
    %4929 = vmatpush2.msra.mxu0 0.0
    %4930 = vmatprep.subr.mxu0 0.0
    %4931 = vmatpush2.msra.mxu0 0.0
    %4932 = vmatprep.subr.mxu0 0.0
    %4933 = vmatpush2.msra.mxu0 0.0
    %4934 = vmatprep.subr.mxu0 0.0
    %4935 = vmatpush2.msra.mxu0 0.0
    %4936 = vmatprep.subr.mxu0 0.0
    %4937 = vmatpush2.msra.mxu0 0.0
    %4938 = vmatprep.subr.mxu0 0.0
    %4939 = vmatpush2.msra.mxu0 0.0
    %4940 = vmatprep.subr.mxu0 0.0
    %4941 = vmatpush2.msra.mxu0 0.0
    %4942 = vmatprep.subr.mxu0 0.0
    %4943 = vmatpush2.msra.mxu0 0.0
    %4944 = vmatprep.subr.mxu0 0.0
    %4945 = vmatpush2.msra.mxu0 0.0
    %4946 = vmatprep.subr.mxu0 0.0
    %4947 = vmatpush2.msra.mxu0 0.0
    %4948 = vmatprep.subr.mxu0 0.0
    %4949 = vmatpush2.msra.mxu0 0.0
    %4950 = vmatprep.subr.mxu0 0.0
    %4951 = vmatpush2.msra.mxu0 0.0
    %4952 = vmatprep.subr.mxu0 0.0
    %4953 = vmatpush2.msra.mxu0 0.0
    %4954 = vmatprep.subr.mxu0 0.0
    %4955 = vmatpush2.msra.mxu0 0.0
    %4956 = vmatprep.subr.mxu0 0.0
    %4957 = vmatpush2.msra.mxu0 0.0
    %4958 = vmatprep.mubr.f32.mxu0 0.0
    %4959 = vmatmul.mubr.f32.gmra.mxu0 %v4889
    %v4960 = vpop.f32.mrf.mxu0
    %v4961 = vadd.f32 %v4886, %v4960
    %v4962 = vpop.f32.mrf.mxu0
    %4963 = vmatprep.mubr.f32.mxu0 0.0
    %4964 = vmatmul.mubr.f32.gmra.mxu0 %v4892
    %v4965 = vpop.f32.mrf.mxu0
    %v4966 = vadd.f32 %v4886, %v4965
    %v4967 = vpop.f32.mrf.mxu0
    %4968 = vdwg.mxu0
    %v4969 = vxor.u32 %v4961, 2147483648
    %v4970 = vmul.f32 %v4969, 1.442695
    %v4971 = vpow.pop %v4970
    %v4972 = vadd.f32 %v4971, 1.0
    %v4973 = vrcp.pop %v4972
    %v4974 = vmul.f32 1.0, %v4973
    %v4975 = vtanh.pop %v4961
    %4977 = vrot.lane.b32.xlu0 %v4975, 120
    %v4978 = vpop.permute.xlu0 %4977
    %v4980 = vmul.f32 %v4974, %v4978
    %v4981 = vtanh.pop %v4980
    %4983 = vrot.lane.b32.xlu0 %v4981, 12
    %v4984 = vpop.permute.xlu0 %4983
    %v4986 = vmul.f32 %v4974, %v4984
    %4988 = vrot.lane.b32.xlu0 %v4986, 116
    %v4989 = vpop.permute.xlu0 %4988
    %4991 = vst.msk [vmem:[%s87] sm:$0x3] %vm3297, %v4989
    %v4992 = vsel %vm248, %v4989, 0
    %v4995 = vsel %vm255, %v4880, 0
    %4997 = vmatprep.subr.mxu0 0.0
    %4998 = vmatpush1.msra.mxu0 0.0
    %4999 = vmatprep.subr.mxu0 0.0
    %5000 = vmatpush1.msra.mxu0 0.0
    %5001 = vmatprep.subr.mxu0 0.0
    %5002 = vmatpush1.msra.mxu0 0.0
    %5003 = vmatprep.subr.mxu0 0.0
    %5004 = vmatpush1.msra.mxu0 0.0
    %5005 = vmatprep.subr.mxu0 0.0
    %5006 = vmatpush1.msra.mxu0 0.0
    %5007 = vmatprep.subr.mxu0 0.0
    %5008 = vmatpush1.msra.mxu0 0.0
    %5009 = vmatprep.subr.mxu0 0.0
    %5010 = vmatpush1.msra.mxu0 0.0
    %5011 = vmatprep.subr.mxu0 0.0
    %5012 = vmatpush1.msra.mxu0 0.0
    %5013 = vmatprep.subr.mxu0 0.0
    %5014 = vmatpush1.msra.mxu0 0.0
    %5015 = vmatprep.subr.mxu0 0.0
    %5016 = vmatpush1.msra.mxu0 0.0
    %5017 = vmatprep.subr.mxu0 0.0
    %5018 = vmatpush1.msra.mxu0 0.0
    %5019 = vmatprep.subr.mxu0 0.0
    %5020 = vmatpush1.msra.mxu0 0.0
    %5021 = vmatprep.subr.mxu0 0.0
    %5022 = vmatpush1.msra.mxu0 0.0
    %5023 = vmatprep.subr.mxu0 0.0
    %5024 = vmatpush1.msra.mxu0 0.0
    %5025 = vmatprep.subr.mxu0 0.0
    %5026 = vmatpush1.msra.mxu0 0.0
    %5027 = vmatprep.subr.mxu0 0.0
    %5028 = vmatpush1.msra.mxu0 %v4995
    %5029 = vmatprep.subr.mxu0 0.0
    %5030 = vmatpush2.msra.mxu0 0.0
    %5031 = vmatprep.subr.mxu0 0.0
    %5032 = vmatpush2.msra.mxu0 0.0
    %5033 = vmatprep.subr.mxu0 0.0
    %5034 = vmatpush2.msra.mxu0 0.0
    %5035 = vmatprep.subr.mxu0 0.0
    %5036 = vmatpush2.msra.mxu0 0.0
    %5037 = vmatprep.subr.mxu0 0.0
    %5038 = vmatpush2.msra.mxu0 0.0
    %5039 = vmatprep.subr.mxu0 0.0
    %5040 = vmatpush2.msra.mxu0 0.0
    %5041 = vmatprep.subr.mxu0 0.0
    %5042 = vmatpush2.msra.mxu0 0.0
    %5043 = vmatprep.subr.mxu0 0.0
    %5044 = vmatpush2.msra.mxu0 0.0
    %5045 = vmatprep.subr.mxu0 0.0
    %5046 = vmatpush2.msra.mxu0 0.0
    %5047 = vmatprep.subr.mxu0 0.0
    %5048 = vmatpush2.msra.mxu0 0.0
    %5049 = vmatprep.subr.mxu0 0.0
    %5050 = vmatpush2.msra.mxu0 0.0
    %5051 = vmatprep.subr.mxu0 0.0
    %5052 = vmatpush2.msra.mxu0 0.0
    %5053 = vmatprep.subr.mxu0 0.0
    %5054 = vmatpush2.msra.mxu0 0.0
    %5055 = vmatprep.subr.mxu0 0.0
    %5056 = vmatpush2.msra.mxu0 0.0
    %5057 = vmatprep.subr.mxu0 0.0
    %5058 = vmatpush2.msra.mxu0 0.0
    %5059 = vmatprep.subr.mxu0 0.0
    %5060 = vmatpush2.msra.mxu0 0.0
    %5061 = vmatprep.mubr.f32.mxu0 0.0
    %5062 = vmatmul.mubr.f32.gmra.mxu0 %v4992
    %v5063 = vpop.f32.mrf.mxu0
    %v5064 = vadd.f32 0.0, %v5063
    %v5065 = vpop.f32.mrf.mxu0
    %5066 = vdwg.mxu0
    %v5068 = vrot.slane %v5064, 6
    %v5070 = vadd.f32 %v4961, %v5068
    %v5071 = vxor.u32 %v5070, 2147483648
    %v5072 = vmul.f32 %v5071, 1.442695
    %v5073 = vpow.pop %v5072
    %v5074 = vadd.f32 %v5073, 1.0
    %v5075 = vrcp.pop %v5074
    %v5076 = vmul.f32 1.0, %v5075
    %v5077 = vtanh.pop %v5070
    %5079 = vrot.lane.b32.xlu0 %v5077, 120
    %v5080 = vpop.permute.xlu0 %5079
    %v5082 = vmul.f32 %v5076, %v5080
    %v5084 = vrot.slane %v4980, 6
    %5085 = vrot.lane.b32.xlu0 %v5084, 4
    %v5086 = vpop.permute.xlu0 %5085
    %v5088 = vmul.f32 %v5076, %v5086
    %5090 = vrot.lane.b32.xlu0 %v5082, 4
    %v5091 = vpop.permute.xlu0 %5090
    %v5093 = vadd.f32 %v5088, %v5091
    %v5094 = vtanh.pop %v5093
    %5096 = vrot.lane.b32.xlu0 %v5094, 8
    %v5097 = vpop.permute.xlu0 %5096
    %v5099 = vmul.f32 %v5076, %v5097
    %5101 = vrot.lane.b32.xlu0 %v5099, 116
    %v5102 = vpop.permute.xlu0 %5101
    %5104 = vst.msk [vmem:[%s87] sm:$0xc] %vm3411, %v5102
    %v5105 = vrot.slane %v5099, 2
    %5106 = vrot.lane.b32.xlu0 %v5105, 116
    %v5107 = vpop.permute.xlu0 %5106
    %v5108 = vsel %vm248, %v5107, 0
    %5110 = vmatprep.subr.mxu0 0.0
    %5111 = vmatpush1.msra.mxu0 0.0
    %5112 = vmatprep.subr.mxu0 0.0
    %5113 = vmatpush1.msra.mxu0 0.0
    %5114 = vmatprep.subr.mxu0 0.0
    %5115 = vmatpush1.msra.mxu0 0.0
    %5116 = vmatprep.subr.mxu0 0.0
    %5117 = vmatpush1.msra.mxu0 0.0
    %5118 = vmatprep.subr.mxu0 0.0
    %5119 = vmatpush1.msra.mxu0 0.0
    %5120 = vmatprep.subr.mxu0 0.0
    %5121 = vmatpush1.msra.mxu0 0.0
    %5122 = vmatprep.subr.mxu0 0.0
    %5123 = vmatpush1.msra.mxu0 0.0
    %5124 = vmatprep.subr.mxu0 0.0
    %5125 = vmatpush1.msra.mxu0 0.0
    %5126 = vmatprep.subr.mxu0 0.0
    %5127 = vmatpush1.msra.mxu0 0.0
    %5128 = vmatprep.subr.mxu0 0.0
    %5129 = vmatpush1.msra.mxu0 0.0
    %5130 = vmatprep.subr.mxu0 0.0
    %5131 = vmatpush1.msra.mxu0 0.0
    %5132 = vmatprep.subr.mxu0 0.0
    %5133 = vmatpush1.msra.mxu0 0.0
    %5134 = vmatprep.subr.mxu0 0.0
    %5135 = vmatpush1.msra.mxu0 0.0
    %5136 = vmatprep.subr.mxu0 0.0
    %5137 = vmatpush1.msra.mxu0 0.0
    %5138 = vmatprep.subr.mxu0 0.0
    %5139 = vmatpush1.msra.mxu0 0.0
    %5140 = vmatprep.subr.mxu0 0.0
    %5141 = vmatpush1.msra.mxu0 %v4995
    %5142 = vmatprep.subr.mxu0 0.0
    %5143 = vmatpush2.msra.mxu0 0.0
    %5144 = vmatprep.subr.mxu0 0.0
    %5145 = vmatpush2.msra.mxu0 0.0
    %5146 = vmatprep.subr.mxu0 0.0
    %5147 = vmatpush2.msra.mxu0 0.0
    %5148 = vmatprep.subr.mxu0 0.0
    %5149 = vmatpush2.msra.mxu0 0.0
    %5150 = vmatprep.subr.mxu0 0.0
    %5151 = vmatpush2.msra.mxu0 0.0
    %5152 = vmatprep.subr.mxu0 0.0
    %5153 = vmatpush2.msra.mxu0 0.0
    %5154 = vmatprep.subr.mxu0 0.0
    %5155 = vmatpush2.msra.mxu0 0.0
    %5156 = vmatprep.subr.mxu0 0.0
    %5157 = vmatpush2.msra.mxu0 0.0
    %5158 = vmatprep.subr.mxu0 0.0
    %5159 = vmatpush2.msra.mxu0 0.0
    %5160 = vmatprep.subr.mxu0 0.0
    %5161 = vmatpush2.msra.mxu0 0.0
    %5162 = vmatprep.subr.mxu0 0.0
    %5163 = vmatpush2.msra.mxu0 0.0
    %5164 = vmatprep.subr.mxu0 0.0
    %5165 = vmatpush2.msra.mxu0 0.0
    %5166 = vmatprep.subr.mxu0 0.0
    %5167 = vmatpush2.msra.mxu0 0.0
    %5168 = vmatprep.subr.mxu0 0.0
    %5169 = vmatpush2.msra.mxu0 0.0
    %5170 = vmatprep.subr.mxu0 0.0
    %5171 = vmatpush2.msra.mxu0 0.0
    %5172 = vmatprep.subr.mxu0 0.0
    %5173 = vmatpush2.msra.mxu0 0.0
    %5174 = vmatprep.mubr.f32.mxu0 0.0
    %5175 = vmatmul.mubr.f32.gmra.mxu0 %v5108
    %v5176 = vpop.f32.mrf.mxu0
    %v5177 = vadd.f32 0.0, %v5176
    %v5178 = vpop.f32.mrf.mxu0
    %5179 = vdwg.mxu0
    %v5181 = vrot.slane %v5177, 4
    %v5183 = vadd.f32 %v4961, %v5181
    %v5184 = vxor.u32 %v5183, 2147483648
    %v5185 = vmul.f32 %v5184, 1.442695
    %v5186 = vpow.pop %v5185
    %v5187 = vadd.f32 %v5186, 1.0
    %v5188 = vrcp.pop %v5187
    %v5189 = vmul.f32 1.0, %v5188
    %v5190 = vtanh.pop %v5183
    %5192 = vrot.lane.b32.xlu0 %v5190, 120
    %v5193 = vpop.permute.xlu0 %5192
    %v5195 = vmul.f32 %v5189, %v5193
    %v5197 = vrot.slane %v5093, 6
    %v5199 = vmul.f32 %v5189, %v5197
    %5201 = vrot.lane.b32.xlu0 %v5195, 4
    %v5202 = vpop.permute.xlu0 %5201
    %v5204 = vadd.f32 %v5199, %v5202
    %v5205 = vtanh.pop %v5204
    %5207 = vrot.lane.b32.xlu0 %v5205, 8
    %v5208 = vpop.permute.xlu0 %5207
    %v5210 = vmul.f32 %v5189, %v5208
    %5212 = vrot.lane.b32.xlu0 %v5210, 116
    %v5213 = vpop.permute.xlu0 %5212
    %5215 = vst.msk [vmem:[%s87] sm:$0x30] %vm3523, %v5213
    %v5216 = vrot.slane %v5210, 4
    %5217 = vrot.lane.b32.xlu0 %v5216, 116
    %v5218 = vpop.permute.xlu0 %5217
    %v5219 = vsel %vm248, %v5218, 0
    %5221 = vmatprep.subr.mxu0 0.0
    %5222 = vmatpush1.msra.mxu0 0.0
    %5223 = vmatprep.subr.mxu0 0.0
    %5224 = vmatpush1.msra.mxu0 0.0
    %5225 = vmatprep.subr.mxu0 0.0
    %5226 = vmatpush1.msra.mxu0 0.0
    %5227 = vmatprep.subr.mxu0 0.0
    %5228 = vmatpush1.msra.mxu0 0.0
    %5229 = vmatprep.subr.mxu0 0.0
    %5230 = vmatpush1.msra.mxu0 0.0
    %5231 = vmatprep.subr.mxu0 0.0
    %5232 = vmatpush1.msra.mxu0 0.0
    %5233 = vmatprep.subr.mxu0 0.0
    %5234 = vmatpush1.msra.mxu0 0.0
    %5235 = vmatprep.subr.mxu0 0.0
    %5236 = vmatpush1.msra.mxu0 0.0
    %5237 = vmatprep.subr.mxu0 0.0
    %5238 = vmatpush1.msra.mxu0 0.0
    %5239 = vmatprep.subr.mxu0 0.0
    %5240 = vmatpush1.msra.mxu0 0.0
    %5241 = vmatprep.subr.mxu0 0.0
    %5242 = vmatpush1.msra.mxu0 0.0
    %5243 = vmatprep.subr.mxu0 0.0
    %5244 = vmatpush1.msra.mxu0 0.0
    %5245 = vmatprep.subr.mxu0 0.0
    %5246 = vmatpush1.msra.mxu0 0.0
    %5247 = vmatprep.subr.mxu0 0.0
    %5248 = vmatpush1.msra.mxu0 0.0
    %5249 = vmatprep.subr.mxu0 0.0
    %5250 = vmatpush1.msra.mxu0 0.0
    %5251 = vmatprep.subr.mxu0 0.0
    %5252 = vmatpush1.msra.mxu0 %v4995
    %5253 = vmatprep.subr.mxu0 0.0
    %5254 = vmatpush2.msra.mxu0 0.0
    %5255 = vmatprep.subr.mxu0 0.0
    %5256 = vmatpush2.msra.mxu0 0.0
    %5257 = vmatprep.subr.mxu0 0.0
    %5258 = vmatpush2.msra.mxu0 0.0
    %5259 = vmatprep.subr.mxu0 0.0
    %5260 = vmatpush2.msra.mxu0 0.0
    %5261 = vmatprep.subr.mxu0 0.0
    %5262 = vmatpush2.msra.mxu0 0.0
    %5263 = vmatprep.subr.mxu0 0.0
    %5264 = vmatpush2.msra.mxu0 0.0
    %5265 = vmatprep.subr.mxu0 0.0
    %5266 = vmatpush2.msra.mxu0 0.0
    %5267 = vmatprep.subr.mxu0 0.0
    %5268 = vmatpush2.msra.mxu0 0.0
    %5269 = vmatprep.subr.mxu0 0.0
    %5270 = vmatpush2.msra.mxu0 0.0
    %5271 = vmatprep.subr.mxu0 0.0
    %5272 = vmatpush2.msra.mxu0 0.0
    %5273 = vmatprep.subr.mxu0 0.0
    %5274 = vmatpush2.msra.mxu0 0.0
    %5275 = vmatprep.subr.mxu0 0.0
    %5276 = vmatpush2.msra.mxu0 0.0
    %5277 = vmatprep.subr.mxu0 0.0
    %5278 = vmatpush2.msra.mxu0 0.0
    %5279 = vmatprep.subr.mxu0 0.0
    %5280 = vmatpush2.msra.mxu0 0.0
    %5281 = vmatprep.subr.mxu0 0.0
    %5282 = vmatpush2.msra.mxu0 0.0
    %5283 = vmatprep.subr.mxu0 0.0
    %5284 = vmatpush2.msra.mxu0 0.0
    %5285 = vmatprep.mubr.f32.mxu0 0.0
    %5286 = vmatmul.mubr.f32.gmra.mxu0 %v5219
    %v5287 = vpop.f32.mrf.mxu0
    %v5288 = vadd.f32 0.0, %v5287
    %v5289 = vpop.f32.mrf.mxu0
    %5290 = vdwg.mxu0
    %v5292 = vrot.slane %v5288, 2
    %v5294 = vadd.f32 %v4961, %v5292
    %v5295 = vxor.u32 %v5294, 2147483648
    %v5296 = vmul.f32 %v5295, 1.442695
    %v5297 = vpow.pop %v5296
    %v5298 = vadd.f32 %v5297, 1.0
    %v5299 = vrcp.pop %v5298
    %v5300 = vmul.f32 1.0, %v5299
    %v5301 = vtanh.pop %v5294
    %5303 = vrot.lane.b32.xlu0 %v5301, 120
    %v5304 = vpop.permute.xlu0 %5303
    %v5306 = vmul.f32 %v5300, %v5304
    %v5308 = vrot.slane %v5204, 6
    %v5310 = vmul.f32 %v5300, %v5308
    %5312 = vrot.lane.b32.xlu0 %v5306, 4
    %v5313 = vpop.permute.xlu0 %5312
    %v5315 = vadd.f32 %v5310, %v5313
    %v5316 = vtanh.pop %v5315
    %5318 = vrot.lane.b32.xlu0 %v5316, 8
    %v5319 = vpop.permute.xlu0 %5318
    %v5321 = vmul.f32 %v5300, %v5319
    %5323 = vrot.lane.b32.xlu0 %v5321, 116
    %v5324 = vpop.permute.xlu0 %5323
    %5326 = vst.msk [vmem:[%s87] sm:$0xc0] %vm3635, %v5324
    %v5327 = vrot.slane %v5321, 6
    %5328 = vrot.lane.b32.xlu0 %v5327, 116
    %v5329 = vpop.permute.xlu0 %5328
    %v5330 = vsel %vm248, %v5329, 0
    %5332 = vmatprep.subr.mxu0 0.0
    %5333 = vmatpush1.msra.mxu0 0.0
    %5334 = vmatprep.subr.mxu0 0.0
    %5335 = vmatpush1.msra.mxu0 0.0
    %5336 = vmatprep.subr.mxu0 0.0
    %5337 = vmatpush1.msra.mxu0 0.0
    %5338 = vmatprep.subr.mxu0 0.0
    %5339 = vmatpush1.msra.mxu0 0.0
    %5340 = vmatprep.subr.mxu0 0.0
    %5341 = vmatpush1.msra.mxu0 0.0
    %5342 = vmatprep.subr.mxu0 0.0
    %5343 = vmatpush1.msra.mxu0 0.0
    %5344 = vmatprep.subr.mxu0 0.0
    %5345 = vmatpush1.msra.mxu0 0.0
    %5346 = vmatprep.subr.mxu0 0.0
    %5347 = vmatpush1.msra.mxu0 0.0
    %5348 = vmatprep.subr.mxu0 0.0
    %5349 = vmatpush1.msra.mxu0 0.0
    %5350 = vmatprep.subr.mxu0 0.0
    %5351 = vmatpush1.msra.mxu0 0.0
    %5352 = vmatprep.subr.mxu0 0.0
    %5353 = vmatpush1.msra.mxu0 0.0
    %5354 = vmatprep.subr.mxu0 0.0
    %5355 = vmatpush1.msra.mxu0 0.0
    %5356 = vmatprep.subr.mxu0 0.0
    %5357 = vmatpush1.msra.mxu0 0.0
    %5358 = vmatprep.subr.mxu0 0.0
    %5359 = vmatpush1.msra.mxu0 0.0
    %5360 = vmatprep.subr.mxu0 0.0
    %5361 = vmatpush1.msra.mxu0 0.0
    %5362 = vmatprep.subr.mxu0 0.0
    %5363 = vmatpush1.msra.mxu0 %v4995
    %5364 = vmatprep.subr.mxu0 0.0
    %5365 = vmatpush2.msra.mxu0 0.0
    %5366 = vmatprep.subr.mxu0 0.0
    %5367 = vmatpush2.msra.mxu0 0.0
    %5368 = vmatprep.subr.mxu0 0.0
    %5369 = vmatpush2.msra.mxu0 0.0
    %5370 = vmatprep.subr.mxu0 0.0
    %5371 = vmatpush2.msra.mxu0 0.0
    %5372 = vmatprep.subr.mxu0 0.0
    %5373 = vmatpush2.msra.mxu0 0.0
    %5374 = vmatprep.subr.mxu0 0.0
    %5375 = vmatpush2.msra.mxu0 0.0
    %5376 = vmatprep.subr.mxu0 0.0
    %5377 = vmatpush2.msra.mxu0 0.0
    %5378 = vmatprep.subr.mxu0 0.0
    %5379 = vmatpush2.msra.mxu0 0.0
    %5380 = vmatprep.subr.mxu0 0.0
    %5381 = vmatpush2.msra.mxu0 0.0
    %5382 = vmatprep.subr.mxu0 0.0
    %5383 = vmatpush2.msra.mxu0 0.0
    %5384 = vmatprep.subr.mxu0 0.0
    %5385 = vmatpush2.msra.mxu0 0.0
    %5386 = vmatprep.subr.mxu0 0.0
    %5387 = vmatpush2.msra.mxu0 0.0
    %5388 = vmatprep.subr.mxu0 0.0
    %5389 = vmatpush2.msra.mxu0 0.0
    %5390 = vmatprep.subr.mxu0 0.0
    %5391 = vmatpush2.msra.mxu0 0.0
    %5392 = vmatprep.subr.mxu0 0.0
    %5393 = vmatpush2.msra.mxu0 0.0
    %5394 = vmatprep.subr.mxu0 0.0
    %5395 = vmatpush2.msra.mxu0 0.0
    %5396 = vmatprep.mubr.f32.mxu0 0.0
    %5397 = vmatmul.mubr.f32.gmra.mxu0 %v5330
    %v5398 = vpop.f32.mrf.mxu0
    %v5399 = vadd.f32 0.0, %v5398
    %v5400 = vpop.f32.mrf.mxu0
    %5401 = vdwg.mxu0
    %v5402 = vadd.f32 %v4966, %v5399
    %v5403 = vxor.u32 %v5402, 2147483648
    %v5404 = vmul.f32 %v5403, 1.442695
    %v5405 = vpow.pop %v5404
    %v5406 = vadd.f32 %v5405, 1.0
    %v5407 = vrcp.pop %v5406
    %v5408 = vmul.f32 1.0, %v5407
    %v5409 = vtanh.pop %v5402
    %5411 = vrot.lane.b32.xlu0 %v5409, 120
    %v5412 = vpop.permute.xlu0 %5411
    %v5414 = vmul.f32 %v5408, %v5412
    %v5416 = vrot.slane %v5315, 6
    %v5418 = vmul.f32 %v5408, %v5416
    %5420 = vrot.lane.b32.xlu0 %v5414, 4
    %v5421 = vpop.permute.xlu0 %5420
    %v5423 = vadd.f32 %v5418, %v5421
    %v5424 = vtanh.pop %v5423
    %5426 = vrot.lane.b32.xlu0 %v5424, 8
    %v5427 = vpop.permute.xlu0 %5426
    %v5429 = vmul.f32 %v5408, %v5427
    %5431 = vrot.lane.b32.xlu0 %v5429, 116
    %v5432 = vpop.permute.xlu0 %5431
    %5434 = vst.msk [vmem:[%s87 + $0x8] sm:$0x3] %vm3297, %v5432
    %v5435 = vsel %vm248, %v5432, 0
    %5437 = vmatprep.subr.mxu0 0.0
    %5438 = vmatpush1.msra.mxu0 0.0
    %5439 = vmatprep.subr.mxu0 0.0
    %5440 = vmatpush1.msra.mxu0 0.0
    %5441 = vmatprep.subr.mxu0 0.0
    %5442 = vmatpush1.msra.mxu0 0.0
    %5443 = vmatprep.subr.mxu0 0.0
    %5444 = vmatpush1.msra.mxu0 0.0
    %5445 = vmatprep.subr.mxu0 0.0
    %5446 = vmatpush1.msra.mxu0 0.0
    %5447 = vmatprep.subr.mxu0 0.0
    %5448 = vmatpush1.msra.mxu0 0.0
    %5449 = vmatprep.subr.mxu0 0.0
    %5450 = vmatpush1.msra.mxu0 0.0
    %5451 = vmatprep.subr.mxu0 0.0
    %5452 = vmatpush1.msra.mxu0 0.0
    %5453 = vmatprep.subr.mxu0 0.0
    %5454 = vmatpush1.msra.mxu0 0.0
    %5455 = vmatprep.subr.mxu0 0.0
    %5456 = vmatpush1.msra.mxu0 0.0
    %5457 = vmatprep.subr.mxu0 0.0
    %5458 = vmatpush1.msra.mxu0 0.0
    %5459 = vmatprep.subr.mxu0 0.0
    %5460 = vmatpush1.msra.mxu0 0.0
    %5461 = vmatprep.subr.mxu0 0.0
    %5462 = vmatpush1.msra.mxu0 0.0
    %5463 = vmatprep.subr.mxu0 0.0
    %5464 = vmatpush1.msra.mxu0 0.0
    %5465 = vmatprep.subr.mxu0 0.0
    %5466 = vmatpush1.msra.mxu0 0.0
    %5467 = vmatprep.subr.mxu0 0.0
    %5468 = vmatpush1.msra.mxu0 %v4995
    %5469 = vmatprep.subr.mxu0 0.0
    %5470 = vmatpush2.msra.mxu0 0.0
    %5471 = vmatprep.subr.mxu0 0.0
    %5472 = vmatpush2.msra.mxu0 0.0
    %5473 = vmatprep.subr.mxu0 0.0
    %5474 = vmatpush2.msra.mxu0 0.0
    %5475 = vmatprep.subr.mxu0 0.0
    %5476 = vmatpush2.msra.mxu0 0.0
    %5477 = vmatprep.subr.mxu0 0.0
    %5478 = vmatpush2.msra.mxu0 0.0
    %5479 = vmatprep.subr.mxu0 0.0
    %5480 = vmatpush2.msra.mxu0 0.0
    %5481 = vmatprep.subr.mxu0 0.0
    %5482 = vmatpush2.msra.mxu0 0.0
    %5483 = vmatprep.subr.mxu0 0.0
    %5484 = vmatpush2.msra.mxu0 0.0
    %5485 = vmatprep.subr.mxu0 0.0
    %5486 = vmatpush2.msra.mxu0 0.0
    %5487 = vmatprep.subr.mxu0 0.0
    %5488 = vmatpush2.msra.mxu0 0.0
    %5489 = vmatprep.subr.mxu0 0.0
    %5490 = vmatpush2.msra.mxu0 0.0
    %5491 = vmatprep.subr.mxu0 0.0
    %5492 = vmatpush2.msra.mxu0 0.0
    %5493 = vmatprep.subr.mxu0 0.0
    %5494 = vmatpush2.msra.mxu0 0.0
    %5495 = vmatprep.subr.mxu0 0.0
    %5496 = vmatpush2.msra.mxu0 0.0
    %5497 = vmatprep.subr.mxu0 0.0
    %5498 = vmatpush2.msra.mxu0 0.0
    %5499 = vmatprep.subr.mxu0 0.0
    %5500 = vmatpush2.msra.mxu0 0.0
    %5501 = vmatprep.mubr.f32.mxu0 0.0
    %5502 = vmatmul.mubr.f32.gmra.mxu0 %v5435
    %v5503 = vpop.f32.mrf.mxu0
    %v5504 = vadd.f32 0.0, %v5503
    %v5505 = vpop.f32.mrf.mxu0
    %5506 = vdwg.mxu0
    %v5508 = vrot.slane %v5504, 6
    %v5510 = vadd.f32 %v4966, %v5508
    %v5511 = vxor.u32 %v5510, 2147483648
    %v5512 = vmul.f32 %v5511, 1.442695
    %v5513 = vpow.pop %v5512
    %v5514 = vadd.f32 %v5513, 1.0
    %v5515 = vrcp.pop %v5514
    %v5516 = vmul.f32 1.0, %v5515
    %v5517 = vtanh.pop %v5510
    %5519 = vrot.lane.b32.xlu0 %v5517, 120
    %v5520 = vpop.permute.xlu0 %5519
    %v5522 = vmul.f32 %v5516, %v5520
    %v5524 = vrot.slane %v5423, 6
    %v5526 = vmul.f32 %v5516, %v5524
    %5528 = vrot.lane.b32.xlu0 %v5522, 4
    %v5529 = vpop.permute.xlu0 %5528
    %v5531 = vadd.f32 %v5526, %v5529
    %v5532 = vtanh.pop %v5531
    %5534 = vrot.lane.b32.xlu0 %v5532, 8
    %v5535 = vpop.permute.xlu0 %5534
    %v5537 = vmul.f32 %v5516, %v5535
    %5539 = vrot.lane.b32.xlu0 %v5537, 116
    %v5540 = vpop.permute.xlu0 %5539
    %5542 = vst.msk [vmem:[%s87 + $0x8] sm:$0xc] %vm3411, %v5540
    %v5543 = vrot.slane %v5537, 2
    %5544 = vrot.lane.b32.xlu0 %v5543, 116
    %v5545 = vpop.permute.xlu0 %5544
    %v5546 = vsel %vm248, %v5545, 0
    %5548 = vmatprep.subr.mxu0 0.0
    %5549 = vmatpush1.msra.mxu0 0.0
    %5550 = vmatprep.subr.mxu0 0.0
    %5551 = vmatpush1.msra.mxu0 0.0
    %5552 = vmatprep.subr.mxu0 0.0
    %5553 = vmatpush1.msra.mxu0 0.0
    %5554 = vmatprep.subr.mxu0 0.0
    %5555 = vmatpush1.msra.mxu0 0.0
    %5556 = vmatprep.subr.mxu0 0.0
    %5557 = vmatpush1.msra.mxu0 0.0
    %5558 = vmatprep.subr.mxu0 0.0
    %5559 = vmatpush1.msra.mxu0 0.0
    %5560 = vmatprep.subr.mxu0 0.0
    %5561 = vmatpush1.msra.mxu0 0.0
    %5562 = vmatprep.subr.mxu0 0.0
    %5563 = vmatpush1.msra.mxu0 0.0
    %5564 = vmatprep.subr.mxu0 0.0
    %5565 = vmatpush1.msra.mxu0 0.0
    %5566 = vmatprep.subr.mxu0 0.0
    %5567 = vmatpush1.msra.mxu0 0.0
    %5568 = vmatprep.subr.mxu0 0.0
    %5569 = vmatpush1.msra.mxu0 0.0
    %5570 = vmatprep.subr.mxu0 0.0
    %5571 = vmatpush1.msra.mxu0 0.0
    %5572 = vmatprep.subr.mxu0 0.0
    %5573 = vmatpush1.msra.mxu0 0.0
    %5574 = vmatprep.subr.mxu0 0.0
    %5575 = vmatpush1.msra.mxu0 0.0
    %5576 = vmatprep.subr.mxu0 0.0
    %5577 = vmatpush1.msra.mxu0 0.0
    %5578 = vmatprep.subr.mxu0 0.0
    %5579 = vmatpush1.msra.mxu0 %v4995
    %5580 = vmatprep.subr.mxu0 0.0
    %5581 = vmatpush2.msra.mxu0 0.0
    %5582 = vmatprep.subr.mxu0 0.0
    %5583 = vmatpush2.msra.mxu0 0.0
    %5584 = vmatprep.subr.mxu0 0.0
    %5585 = vmatpush2.msra.mxu0 0.0
    %5586 = vmatprep.subr.mxu0 0.0
    %5587 = vmatpush2.msra.mxu0 0.0
    %5588 = vmatprep.subr.mxu0 0.0
    %5589 = vmatpush2.msra.mxu0 0.0
    %5590 = vmatprep.subr.mxu0 0.0
    %5591 = vmatpush2.msra.mxu0 0.0
    %5592 = vmatprep.subr.mxu0 0.0
    %5593 = vmatpush2.msra.mxu0 0.0
    %5594 = vmatprep.subr.mxu0 0.0
    %5595 = vmatpush2.msra.mxu0 0.0
    %5596 = vmatprep.subr.mxu0 0.0
    %5597 = vmatpush2.msra.mxu0 0.0
    %5598 = vmatprep.subr.mxu0 0.0
    %5599 = vmatpush2.msra.mxu0 0.0
    %5600 = vmatprep.subr.mxu0 0.0
    %5601 = vmatpush2.msra.mxu0 0.0
    %5602 = vmatprep.subr.mxu0 0.0
    %5603 = vmatpush2.msra.mxu0 0.0
    %5604 = vmatprep.subr.mxu0 0.0
    %5605 = vmatpush2.msra.mxu0 0.0
    %5606 = vmatprep.subr.mxu0 0.0
    %5607 = vmatpush2.msra.mxu0 0.0
    %5608 = vmatprep.subr.mxu0 0.0
    %5609 = vmatpush2.msra.mxu0 0.0
    %5610 = vmatprep.subr.mxu0 0.0
    %5611 = vmatpush2.msra.mxu0 0.0
    %5612 = vmatprep.mubr.f32.mxu0 0.0
    %5613 = vmatmul.mubr.f32.gmra.mxu0 %v5546
    %v5614 = vpop.f32.mrf.mxu0
    %v5615 = vadd.f32 0.0, %v5614
    %v5616 = vpop.f32.mrf.mxu0
    %5617 = vdwg.mxu0
    %v5619 = vrot.slane %v5615, 4
    %v5621 = vadd.f32 %v4966, %v5619
    %v5622 = vxor.u32 %v5621, 2147483648
    %v5623 = vmul.f32 %v5622, 1.442695
    %v5624 = vpow.pop %v5623
    %v5625 = vadd.f32 %v5624, 1.0
    %v5626 = vrcp.pop %v5625
    %v5627 = vmul.f32 1.0, %v5626
    %v5628 = vtanh.pop %v5621
    %5630 = vrot.lane.b32.xlu0 %v5628, 120
    %v5631 = vpop.permute.xlu0 %5630
    %v5633 = vmul.f32 %v5627, %v5631
    %v5635 = vrot.slane %v5531, 6
    %v5637 = vmul.f32 %v5627, %v5635
    %5639 = vrot.lane.b32.xlu0 %v5633, 4
    %v5640 = vpop.permute.xlu0 %5639
    %v5642 = vadd.f32 %v5637, %v5640
    %v5643 = vtanh.pop %v5642
    %5645 = vrot.lane.b32.xlu0 %v5643, 8
    %v5646 = vpop.permute.xlu0 %5645
    %v5648 = vmul.f32 %v5627, %v5646
    %5650 = vrot.lane.b32.xlu0 %v5648, 116
    %v5651 = vpop.permute.xlu0 %5650
    %5653 = vst.msk [vmem:[%s87 + $0x8] sm:$0x30] %vm3523, %v5651
    %v5654 = vrot.slane %v5648, 4
    %5655 = vrot.lane.b32.xlu0 %v5654, 116
    %v5656 = vpop.permute.xlu0 %5655
    %v5657 = vsel %vm248, %v5656, 0
    %5659 = vmatprep.subr.mxu0 0.0
    %5660 = vmatpush1.msra.mxu0 0.0
    %5661 = vmatprep.subr.mxu0 0.0
    %5662 = vmatpush1.msra.mxu0 0.0
    %5663 = vmatprep.subr.mxu0 0.0
    %5664 = vmatpush1.msra.mxu0 0.0
    %5665 = vmatprep.subr.mxu0 0.0
    %5666 = vmatpush1.msra.mxu0 0.0
    %5667 = vmatprep.subr.mxu0 0.0
    %5668 = vmatpush1.msra.mxu0 0.0
    %5669 = vmatprep.subr.mxu0 0.0
    %5670 = vmatpush1.msra.mxu0 0.0
    %5671 = vmatprep.subr.mxu0 0.0
    %5672 = vmatpush1.msra.mxu0 0.0
    %5673 = vmatprep.subr.mxu0 0.0
    %5674 = vmatpush1.msra.mxu0 0.0
    %5675 = vmatprep.subr.mxu0 0.0
    %5676 = vmatpush1.msra.mxu0 0.0
    %5677 = vmatprep.subr.mxu0 0.0
    %5678 = vmatpush1.msra.mxu0 0.0
    %5679 = vmatprep.subr.mxu0 0.0
    %5680 = vmatpush1.msra.mxu0 0.0
    %5681 = vmatprep.subr.mxu0 0.0
    %5682 = vmatpush1.msra.mxu0 0.0
    %5683 = vmatprep.subr.mxu0 0.0
    %5684 = vmatpush1.msra.mxu0 0.0
    %5685 = vmatprep.subr.mxu0 0.0
    %5686 = vmatpush1.msra.mxu0 0.0
    %5687 = vmatprep.subr.mxu0 0.0
    %5688 = vmatpush1.msra.mxu0 0.0
    %5689 = vmatprep.subr.mxu0 0.0
    %5690 = vmatpush1.msra.mxu0 %v4995
    %5691 = vmatprep.subr.mxu0 0.0
    %5692 = vmatpush2.msra.mxu0 0.0
    %5693 = vmatprep.subr.mxu0 0.0
    %5694 = vmatpush2.msra.mxu0 0.0
    %5695 = vmatprep.subr.mxu0 0.0
    %5696 = vmatpush2.msra.mxu0 0.0
    %5697 = vmatprep.subr.mxu0 0.0
    %5698 = vmatpush2.msra.mxu0 0.0
    %5699 = vmatprep.subr.mxu0 0.0
    %5700 = vmatpush2.msra.mxu0 0.0
    %5701 = vmatprep.subr.mxu0 0.0
    %5702 = vmatpush2.msra.mxu0 0.0
    %5703 = vmatprep.subr.mxu0 0.0
    %5704 = vmatpush2.msra.mxu0 0.0
    %5705 = vmatprep.subr.mxu0 0.0
    %5706 = vmatpush2.msra.mxu0 0.0
    %5707 = vmatprep.subr.mxu0 0.0
    %5708 = vmatpush2.msra.mxu0 0.0
    %5709 = vmatprep.subr.mxu0 0.0
    %5710 = vmatpush2.msra.mxu0 0.0
    %5711 = vmatprep.subr.mxu0 0.0
    %5712 = vmatpush2.msra.mxu0 0.0
    %5713 = vmatprep.subr.mxu0 0.0
    %5714 = vmatpush2.msra.mxu0 0.0
    %5715 = vmatprep.subr.mxu0 0.0
    %5716 = vmatpush2.msra.mxu0 0.0
    %5717 = vmatprep.subr.mxu0 0.0
    %5718 = vmatpush2.msra.mxu0 0.0
    %5719 = vmatprep.subr.mxu0 0.0
    %5720 = vmatpush2.msra.mxu0 0.0
    %5721 = vmatprep.subr.mxu0 0.0
    %5722 = vmatpush2.msra.mxu0 0.0
    %5723 = vmatprep.mubr.f32.mxu0 0.0
    %5724 = vmatmul.mubr.f32.gmra.mxu0 %v5657
    %v5725 = vpop.f32.mrf.mxu0
    %v5726 = vadd.f32 0.0, %v5725
    %v5727 = vpop.f32.mrf.mxu0
    %5728 = vdwg.mxu0
    %v5730 = vrot.slane %v5726, 2
    %v5732 = vadd.f32 %v4966, %v5730
    %v5733 = vxor.u32 %v5732, 2147483648
    %v5734 = vmul.f32 %v5733, 1.442695
    %v5735 = vpow.pop %v5734
    %v5736 = vadd.f32 %v5735, 1.0
    %v5737 = vrcp.pop %v5736
    %v5738 = vmul.f32 1.0, %v5737
    %v5739 = vtanh.pop %v5732
    %5741 = vrot.lane.b32.xlu0 %v5739, 120
    %v5742 = vpop.permute.xlu0 %5741
    %v5744 = vmul.f32 %v5738, %v5742
    %v5746 = vrot.slane %v5642, 6
    %v5748 = vmul.f32 %v5738, %v5746
    %5750 = vrot.lane.b32.xlu0 %v5744, 4
    %v5751 = vpop.permute.xlu0 %5750
    %v5753 = vadd.f32 %v5748, %v5751
    %v5754 = vtanh.pop %v5753
    %5756 = vrot.lane.b32.xlu0 %v5754, 8
    %v5757 = vpop.permute.xlu0 %5756
    %v5759 = vmul.f32 %v5738, %v5757
    %5761 = vrot.lane.b32.xlu0 %v5759, 116
    %v5762 = vpop.permute.xlu0 %5761
    %5764 = vst.msk [vmem:[%s87 + $0x8] sm:$0xc0] %vm3635, %v5762
    %v5765 = vld [vmem:[%s49] sm:$0xff]
    %v5766 = vld [vmem:[%s49 + $0x8] sm:$0xff]
    %v5767 = vld [vmem:[%s55] sm:$0xff]
    %v5768 = vld [vmem:[%s55 + $0x8] sm:$0xff]
    %v5770 = vsel %vm3112, %v228, 0
    %v5773 = vsel %vm3112, %v229, 0
    %5775 = vmatprep.subr.mxu0 0.0
    %5776 = vmatpush1.msra.mxu0 0.0
    %5777 = vmatprep.subr.mxu0 0.0
    %5778 = vmatpush1.msra.mxu0 0.0
    %5779 = vmatprep.subr.mxu0 0.0
    %5780 = vmatpush1.msra.mxu0 0.0
    %5781 = vmatprep.subr.mxu0 0.0
    %5782 = vmatpush1.msra.mxu0 0.0
    %5783 = vmatprep.subr.mxu0 0.0
    %5784 = vmatpush1.msra.mxu0 0.0
    %5785 = vmatprep.subr.mxu0 0.0
    %5786 = vmatpush1.msra.mxu0 0.0
    %5787 = vmatprep.subr.mxu0 0.0
    %5788 = vmatpush1.msra.mxu0 0.0
    %5789 = vmatprep.subr.mxu0 0.0
    %5790 = vmatpush1.msra.mxu0 0.0
    %5791 = vmatprep.subr.mxu0 0.0
    %5792 = vmatpush1.msra.mxu0 0.0
    %5793 = vmatprep.subr.mxu0 0.0
    %5794 = vmatpush1.msra.mxu0 0.0
    %5795 = vmatprep.subr.mxu0 0.0
    %5796 = vmatpush1.msra.mxu0 0.0
    %5797 = vmatprep.subr.mxu0 0.0
    %5798 = vmatpush1.msra.mxu0 0.0
    %5799 = vmatprep.subr.mxu0 0.0
    %5800 = vmatpush1.msra.mxu0 0.0
    %5801 = vmatprep.subr.mxu0 0.0
    %5802 = vmatpush1.msra.mxu0 0.0
    %5803 = vmatprep.subr.mxu0 0.0
    %5804 = vmatpush1.msra.mxu0 0.0
    %5805 = vmatprep.subr.mxu0 0.0
    %5806 = vmatpush1.msra.mxu0 %v5766
    %5807 = vmatprep.subr.mxu0 0.0
    %5808 = vmatpush2.msra.mxu0 0.0
    %5809 = vmatprep.subr.mxu0 0.0
    %5810 = vmatpush2.msra.mxu0 0.0
    %5811 = vmatprep.subr.mxu0 0.0
    %5812 = vmatpush2.msra.mxu0 0.0
    %5813 = vmatprep.subr.mxu0 0.0
    %5814 = vmatpush2.msra.mxu0 0.0
    %5815 = vmatprep.subr.mxu0 0.0
    %5816 = vmatpush2.msra.mxu0 0.0
    %5817 = vmatprep.subr.mxu0 0.0
    %5818 = vmatpush2.msra.mxu0 0.0
    %5819 = vmatprep.subr.mxu0 0.0
    %5820 = vmatpush2.msra.mxu0 0.0
    %5821 = vmatprep.subr.mxu0 0.0
    %5822 = vmatpush2.msra.mxu0 0.0
    %5823 = vmatprep.subr.mxu0 0.0
    %5824 = vmatpush2.msra.mxu0 0.0
    %5825 = vmatprep.subr.mxu0 0.0
    %5826 = vmatpush2.msra.mxu0 0.0
    %5827 = vmatprep.subr.mxu0 0.0
    %5828 = vmatpush2.msra.mxu0 0.0
    %5829 = vmatprep.subr.mxu0 0.0
    %5830 = vmatpush2.msra.mxu0 0.0
    %5831 = vmatprep.subr.mxu0 0.0
    %5832 = vmatpush2.msra.mxu0 0.0
    %5833 = vmatprep.subr.mxu0 0.0
    %5834 = vmatpush2.msra.mxu0 0.0
    %5835 = vmatprep.subr.mxu0 0.0
    %5836 = vmatpush2.msra.mxu0 0.0
    %5837 = vmatprep.subr.mxu0 0.0
    %5838 = vmatpush2.msra.mxu0 0.0
    %5839 = vmatprep.mubr.f32.mxu0 0.0
    %5840 = vmatmul.mubr.f32.gmra.mxu0 %v5770
    %v5841 = vpop.f32.mrf.mxu0
    %v5842 = vadd.f32 0.0, %v5841
    %v5843 = vpop.f32.mrf.mxu0
    %5844 = vmatprep.mubr.f32.mxu0 0.0
    %5845 = vmatmul.mubr.f32.gmra.mxu0 %v5773
    %v5846 = vpop.f32.mrf.mxu0
    %v5847 = vadd.f32 0.0, %v5846
    %v5848 = vpop.f32.mrf.mxu0
    %5849 = vdwg.mxu0
    %5850 = vmatprep.subr.mxu0 0.0
    %5851 = vmatpush1.msra.mxu0 0.0
    %5852 = vmatprep.subr.mxu0 0.0
    %5853 = vmatpush1.msra.mxu0 0.0
    %5854 = vmatprep.subr.mxu0 0.0
    %5855 = vmatpush1.msra.mxu0 0.0
    %5856 = vmatprep.subr.mxu0 0.0
    %5857 = vmatpush1.msra.mxu0 0.0
    %5858 = vmatprep.subr.mxu0 0.0
    %5859 = vmatpush1.msra.mxu0 0.0
    %5860 = vmatprep.subr.mxu0 0.0
    %5861 = vmatpush1.msra.mxu0 0.0
    %5862 = vmatprep.subr.mxu0 0.0
    %5863 = vmatpush1.msra.mxu0 0.0
    %5864 = vmatprep.subr.mxu0 0.0
    %5865 = vmatpush1.msra.mxu0 0.0
    %5866 = vmatprep.subr.mxu0 0.0
    %5867 = vmatpush1.msra.mxu0 0.0
    %5868 = vmatprep.subr.mxu0 0.0
    %5869 = vmatpush1.msra.mxu0 0.0
    %5870 = vmatprep.subr.mxu0 0.0
    %5871 = vmatpush1.msra.mxu0 0.0
    %5872 = vmatprep.subr.mxu0 0.0
    %5873 = vmatpush1.msra.mxu0 0.0
    %5874 = vmatprep.subr.mxu0 0.0
    %5875 = vmatpush1.msra.mxu0 0.0
    %5876 = vmatprep.subr.mxu0 0.0
    %5877 = vmatpush1.msra.mxu0 0.0
    %5878 = vmatprep.subr.mxu0 0.0
    %5879 = vmatpush1.msra.mxu0 0.0
    %5880 = vmatprep.subr.mxu0 0.0
    %5881 = vmatpush1.msra.mxu0 %v5765
    %5882 = vmatprep.subr.mxu0 0.0
    %5883 = vmatpush2.msra.mxu0 0.0
    %5884 = vmatprep.subr.mxu0 0.0
    %5885 = vmatpush2.msra.mxu0 0.0
    %5886 = vmatprep.subr.mxu0 0.0
    %5887 = vmatpush2.msra.mxu0 0.0
    %5888 = vmatprep.subr.mxu0 0.0
    %5889 = vmatpush2.msra.mxu0 0.0
    %5890 = vmatprep.subr.mxu0 0.0
    %5891 = vmatpush2.msra.mxu0 0.0
    %5892 = vmatprep.subr.mxu0 0.0
    %5893 = vmatpush2.msra.mxu0 0.0
    %5894 = vmatprep.subr.mxu0 0.0
    %5895 = vmatpush2.msra.mxu0 0.0
    %5896 = vmatprep.subr.mxu0 0.0
    %5897 = vmatpush2.msra.mxu0 0.0
    %5898 = vmatprep.subr.mxu0 0.0
    %5899 = vmatpush2.msra.mxu0 0.0
    %5900 = vmatprep.subr.mxu0 0.0
    %5901 = vmatpush2.msra.mxu0 0.0
    %5902 = vmatprep.subr.mxu0 0.0
    %5903 = vmatpush2.msra.mxu0 0.0
    %5904 = vmatprep.subr.mxu0 0.0
    %5905 = vmatpush2.msra.mxu0 0.0
    %5906 = vmatprep.subr.mxu0 0.0
    %5907 = vmatpush2.msra.mxu0 0.0
    %5908 = vmatprep.subr.mxu0 0.0
    %5909 = vmatpush2.msra.mxu0 0.0
    %5910 = vmatprep.subr.mxu0 0.0
    %5911 = vmatpush2.msra.mxu0 0.0
    %5912 = vmatprep.subr.mxu0 0.0
    %5913 = vmatpush2.msra.mxu0 0.0
    %5914 = vmatprep.mubr.f32.mxu0 0.0
    %5915 = vmatmul.mubr.f32.gmra.mxu0 %v3114
    %v5916 = vpop.f32.mrf.mxu0
    %v5917 = vadd.f32 %v5842, %v5916
    %v5918 = vpop.f32.mrf.mxu0
    %5919 = vmatprep.mubr.f32.mxu0 0.0
    %5920 = vmatmul.mubr.f32.gmra.mxu0 %v3117
    %v5921 = vpop.f32.mrf.mxu0
    %v5922 = vadd.f32 %v5847, %v5921
    %v5923 = vpop.f32.mrf.mxu0
    %5924 = vdwg.mxu0
    %v5925 = vld [vmem:[%s53] sm:$0x1]
    %v5927 = vlaneseq
    %v5928 = vshrl.u32 %v5927, 7
    %v5929 = vsub.s32 0, %v5928
    %v5930 = vrot.slane %v5925, %v5929
    %v5932 = vadd.f32 %v5917, %v5930
    %v5933 = vadd.f32 %v5922, %v5930
    %5934 = vmatprep.subr.mxu0 0.0
    %5935 = vmatpush1.msra.mxu0 0.0
    %5936 = vmatprep.subr.mxu0 0.0
    %5937 = vmatpush1.msra.mxu0 0.0
    %5938 = vmatprep.subr.mxu0 0.0
    %5939 = vmatpush1.msra.mxu0 0.0
    %5940 = vmatprep.subr.mxu0 0.0
    %5941 = vmatpush1.msra.mxu0 0.0
    %5942 = vmatprep.subr.mxu0 0.0
    %5943 = vmatpush1.msra.mxu0 0.0
    %5944 = vmatprep.subr.mxu0 0.0
    %5945 = vmatpush1.msra.mxu0 0.0
    %5946 = vmatprep.subr.mxu0 0.0
    %5947 = vmatpush1.msra.mxu0 0.0
    %5948 = vmatprep.subr.mxu0 0.0
    %5949 = vmatpush1.msra.mxu0 0.0
    %5950 = vmatprep.subr.mxu0 0.0
    %5951 = vmatpush1.msra.mxu0 0.0
    %5952 = vmatprep.subr.mxu0 0.0
    %5953 = vmatpush1.msra.mxu0 0.0
    %5954 = vmatprep.subr.mxu0 0.0
    %5955 = vmatpush1.msra.mxu0 0.0
    %5956 = vmatprep.subr.mxu0 0.0
    %5957 = vmatpush1.msra.mxu0 0.0
    %5958 = vmatprep.subr.mxu0 0.0
    %5959 = vmatpush1.msra.mxu0 0.0
    %5960 = vmatprep.subr.mxu0 0.0
    %5961 = vmatpush1.msra.mxu0 0.0
    %5962 = vmatprep.subr.mxu0 0.0
    %5963 = vmatpush1.msra.mxu0 0.0
    %5964 = vmatprep.subr.mxu0 0.0
    %5965 = vmatpush1.msra.mxu0 %v5768
    %5966 = vmatprep.subr.mxu0 0.0
    %5967 = vmatpush2.msra.mxu0 0.0
    %5968 = vmatprep.subr.mxu0 0.0
    %5969 = vmatpush2.msra.mxu0 0.0
    %5970 = vmatprep.subr.mxu0 0.0
    %5971 = vmatpush2.msra.mxu0 0.0
    %5972 = vmatprep.subr.mxu0 0.0
    %5973 = vmatpush2.msra.mxu0 0.0
    %5974 = vmatprep.subr.mxu0 0.0
    %5975 = vmatpush2.msra.mxu0 0.0
    %5976 = vmatprep.subr.mxu0 0.0
    %5977 = vmatpush2.msra.mxu0 0.0
    %5978 = vmatprep.subr.mxu0 0.0
    %5979 = vmatpush2.msra.mxu0 0.0
    %5980 = vmatprep.subr.mxu0 0.0
    %5981 = vmatpush2.msra.mxu0 0.0
    %5982 = vmatprep.subr.mxu0 0.0
    %5983 = vmatpush2.msra.mxu0 0.0
    %5984 = vmatprep.subr.mxu0 0.0
    %5985 = vmatpush2.msra.mxu0 0.0
    %5986 = vmatprep.subr.mxu0 0.0
    %5987 = vmatpush2.msra.mxu0 0.0
    %5988 = vmatprep.subr.mxu0 0.0
    %5989 = vmatpush2.msra.mxu0 0.0
    %5990 = vmatprep.subr.mxu0 0.0
    %5991 = vmatpush2.msra.mxu0 0.0
    %5992 = vmatprep.subr.mxu0 0.0
    %5993 = vmatpush2.msra.mxu0 0.0
    %5994 = vmatprep.subr.mxu0 0.0
    %5995 = vmatpush2.msra.mxu0 0.0
    %5996 = vmatprep.subr.mxu0 0.0
    %5997 = vmatpush2.msra.mxu0 0.0
    %5998 = vmatprep.mubr.f32.mxu0 0.0
    %5999 = vmatmul.mubr.f32.gmra.mxu0 %v5770
    %v6000 = vpop.f32.mrf.mxu0
    %v6001 = vadd.f32 0.0, %v6000
    %v6002 = vpop.f32.mrf.mxu0
    %6003 = vmatprep.mubr.f32.mxu0 0.0
    %6004 = vmatmul.mubr.f32.gmra.mxu0 %v5773
    %v6005 = vpop.f32.mrf.mxu0
    %v6006 = vadd.f32 0.0, %v6005
    %v6007 = vpop.f32.mrf.mxu0
    %6008 = vdwg.mxu0
    %6009 = vmatprep.subr.mxu0 0.0
    %6010 = vmatpush1.msra.mxu0 0.0
    %6011 = vmatprep.subr.mxu0 0.0
    %6012 = vmatpush1.msra.mxu0 0.0
    %6013 = vmatprep.subr.mxu0 0.0
    %6014 = vmatpush1.msra.mxu0 0.0
    %6015 = vmatprep.subr.mxu0 0.0
    %6016 = vmatpush1.msra.mxu0 0.0
    %6017 = vmatprep.subr.mxu0 0.0
    %6018 = vmatpush1.msra.mxu0 0.0
    %6019 = vmatprep.subr.mxu0 0.0
    %6020 = vmatpush1.msra.mxu0 0.0
    %6021 = vmatprep.subr.mxu0 0.0
    %6022 = vmatpush1.msra.mxu0 0.0
    %6023 = vmatprep.subr.mxu0 0.0
    %6024 = vmatpush1.msra.mxu0 0.0
    %6025 = vmatprep.subr.mxu0 0.0
    %6026 = vmatpush1.msra.mxu0 0.0
    %6027 = vmatprep.subr.mxu0 0.0
    %6028 = vmatpush1.msra.mxu0 0.0
    %6029 = vmatprep.subr.mxu0 0.0
    %6030 = vmatpush1.msra.mxu0 0.0
    %6031 = vmatprep.subr.mxu0 0.0
    %6032 = vmatpush1.msra.mxu0 0.0
    %6033 = vmatprep.subr.mxu0 0.0
    %6034 = vmatpush1.msra.mxu0 0.0
    %6035 = vmatprep.subr.mxu0 0.0
    %6036 = vmatpush1.msra.mxu0 0.0
    %6037 = vmatprep.subr.mxu0 0.0
    %6038 = vmatpush1.msra.mxu0 0.0
    %6039 = vmatprep.subr.mxu0 0.0
    %6040 = vmatpush1.msra.mxu0 %v5767
    %6041 = vmatprep.subr.mxu0 0.0
    %6042 = vmatpush2.msra.mxu0 0.0
    %6043 = vmatprep.subr.mxu0 0.0
    %6044 = vmatpush2.msra.mxu0 0.0
    %6045 = vmatprep.subr.mxu0 0.0
    %6046 = vmatpush2.msra.mxu0 0.0
    %6047 = vmatprep.subr.mxu0 0.0
    %6048 = vmatpush2.msra.mxu0 0.0
    %6049 = vmatprep.subr.mxu0 0.0
    %6050 = vmatpush2.msra.mxu0 0.0
    %6051 = vmatprep.subr.mxu0 0.0
    %6052 = vmatpush2.msra.mxu0 0.0
    %6053 = vmatprep.subr.mxu0 0.0
    %6054 = vmatpush2.msra.mxu0 0.0
    %6055 = vmatprep.subr.mxu0 0.0
    %6056 = vmatpush2.msra.mxu0 0.0
    %6057 = vmatprep.subr.mxu0 0.0
    %6058 = vmatpush2.msra.mxu0 0.0
    %6059 = vmatprep.subr.mxu0 0.0
    %6060 = vmatpush2.msra.mxu0 0.0
    %6061 = vmatprep.subr.mxu0 0.0
    %6062 = vmatpush2.msra.mxu0 0.0
    %6063 = vmatprep.subr.mxu0 0.0
    %6064 = vmatpush2.msra.mxu0 0.0
    %6065 = vmatprep.subr.mxu0 0.0
    %6066 = vmatpush2.msra.mxu0 0.0
    %6067 = vmatprep.subr.mxu0 0.0
    %6068 = vmatpush2.msra.mxu0 0.0
    %6069 = vmatprep.subr.mxu0 0.0
    %6070 = vmatpush2.msra.mxu0 0.0
    %6071 = vmatprep.subr.mxu0 0.0
    %6072 = vmatpush2.msra.mxu0 0.0
    %6073 = vmatprep.mubr.f32.mxu0 0.0
    %6074 = vmatmul.mubr.f32.gmra.mxu0 %v3114
    %v6075 = vpop.f32.mrf.mxu0
    %v6076 = vadd.f32 %v6001, %v6075
    %v6077 = vpop.f32.mrf.mxu0
    %6078 = vmatprep.mubr.f32.mxu0 0.0
    %6079 = vmatmul.mubr.f32.gmra.mxu0 %v3117
    %v6080 = vpop.f32.mrf.mxu0
    %v6081 = vadd.f32 %v6006, %v6080
    %v6082 = vpop.f32.mrf.mxu0
    %6083 = vdwg.mxu0
    %v6084 = vld [vmem:[%s59] sm:$0x1]
    %v6086 = vlaneseq
    %v6087 = vshrl.u32 %v6086, 7
    %v6088 = vsub.s32 0, %v6087
    %v6089 = vrot.slane %v6084, %v6088
    %v6091 = vadd.f32 %v6076, %v6089
    %v6092 = vadd.f32 %v6081, %v6089
    %v6093 = vld [vmem:[%s51] sm:$0xff]
    %v6094 = vld [vmem:[%s51 + $0x8] sm:$0xff]
    %v6095 = vld [vmem:[%s51 + $0x10] sm:$0xff]
    %v6096 = vld [vmem:[%s51 + $0x18] sm:$0xff]
    %v6097 = vxor.u32 %v5932, 2147483648
    %v6098 = vmul.f32 %v6097, 1.442695
    %v6099 = vpow.pop %v6098
    %v6100 = vadd.f32 %v6099, 1.0
    %v6101 = vrcp.pop %v6100
    %v6102 = vmul.f32 1.0, %v6101
    %v6103 = vtanh.pop %v5932
    %6105 = vrot.lane.b32.xlu0 %v6103, 64
    %v6106 = vpop.permute.xlu0 %6105
    %v6108 = vmul.f32 %v6102, %v6106
    %v6109 = vtanh.pop %v6108
    %6111 = vrot.lane.b32.xlu0 %v6109, 96
    %v6112 = vpop.permute.xlu0 %6111
    %v6114 = vmul.f32 %v6102, %v6112
    %6116 = vrot.lane.b32.xlu0 %v6114, 32
    %v6117 = vpop.permute.xlu0 %6116
    %6119 = vst.msk [vmem:[#allocation5] sm:$0x3] %vm440, %v6117
    %v6120 = vsel %vm442, %v6117, 0
    %6122 = vmatprep.subr.mxu0 0.0
    %6123 = vmatpush1.msra.mxu0 0.0
    %6124 = vmatprep.subr.mxu0 0.0
    %6125 = vmatpush1.msra.mxu0 0.0
    %6126 = vmatprep.subr.mxu0 0.0
    %6127 = vmatpush1.msra.mxu0 0.0
    %6128 = vmatprep.subr.mxu0 0.0
    %6129 = vmatpush1.msra.mxu0 0.0
    %6130 = vmatprep.subr.mxu0 0.0
    %6131 = vmatpush1.msra.mxu0 0.0
    %6132 = vmatprep.subr.mxu0 0.0
    %6133 = vmatpush1.msra.mxu0 0.0
    %6134 = vmatprep.subr.mxu0 0.0
    %6135 = vmatpush1.msra.mxu0 0.0
    %6136 = vmatprep.subr.mxu0 0.0
    %6137 = vmatpush1.msra.mxu0 0.0
    %6138 = vmatprep.subr.mxu0 0.0
    %6139 = vmatpush1.msra.mxu0 0.0
    %6140 = vmatprep.subr.mxu0 0.0
    %6141 = vmatpush1.msra.mxu0 0.0
    %6142 = vmatprep.subr.mxu0 0.0
    %6143 = vmatpush1.msra.mxu0 0.0
    %6144 = vmatprep.subr.mxu0 0.0
    %6145 = vmatpush1.msra.mxu0 0.0
    %6146 = vmatprep.subr.mxu0 0.0
    %6147 = vmatpush1.msra.mxu0 %v6096
    %6148 = vmatprep.subr.mxu0 0.0
    %6149 = vmatpush1.msra.mxu0 %v6095
    %6150 = vmatprep.subr.mxu0 0.0
    %6151 = vmatpush1.msra.mxu0 %v6094
    %6152 = vmatprep.subr.mxu0 0.0
    %6153 = vmatpush1.msra.mxu0 %v6093
    %6154 = vmatprep.subr.mxu0 0.0
    %6155 = vmatpush2.msra.mxu0 0.0
    %6156 = vmatprep.subr.mxu0 0.0
    %6157 = vmatpush2.msra.mxu0 0.0
    %6158 = vmatprep.subr.mxu0 0.0
    %6159 = vmatpush2.msra.mxu0 0.0
    %6160 = vmatprep.subr.mxu0 0.0
    %6161 = vmatpush2.msra.mxu0 0.0
    %6162 = vmatprep.subr.mxu0 0.0
    %6163 = vmatpush2.msra.mxu0 0.0
    %6164 = vmatprep.subr.mxu0 0.0
    %6165 = vmatpush2.msra.mxu0 0.0
    %6166 = vmatprep.subr.mxu0 0.0
    %6167 = vmatpush2.msra.mxu0 0.0
    %6168 = vmatprep.subr.mxu0 0.0
    %6169 = vmatpush2.msra.mxu0 0.0
    %6170 = vmatprep.subr.mxu0 0.0
    %6171 = vmatpush2.msra.mxu0 0.0
    %6172 = vmatprep.subr.mxu0 0.0
    %6173 = vmatpush2.msra.mxu0 0.0
    %6174 = vmatprep.subr.mxu0 0.0
    %6175 = vmatpush2.msra.mxu0 0.0
    %6176 = vmatprep.subr.mxu0 0.0
    %6177 = vmatpush2.msra.mxu0 0.0
    %6178 = vmatprep.subr.mxu0 0.0
    %6179 = vmatpush2.msra.mxu0 0.0
    %6180 = vmatprep.subr.mxu0 0.0
    %6181 = vmatpush2.msra.mxu0 0.0
    %6182 = vmatprep.subr.mxu0 0.0
    %6183 = vmatpush2.msra.mxu0 0.0
    %6184 = vmatprep.subr.mxu0 0.0
    %6185 = vmatpush2.msra.mxu0 0.0
    %6186 = vmatprep.mubr.f32.mxu0 0.0
    %6187 = vmatmul.mubr.f32.gmra.mxu0 %v6120
    %v6188 = vpop.f32.mrf.mxu0
    %v6189 = vadd.f32 0.0, %v6188
    %v6190 = vpop.f32.mrf.mxu0
    %6191 = vdwg.mxu0
    %v6193 = vrot.slane %v6189, 6
    %v6195 = vadd.f32 %v5932, %v6193
    %v6196 = vxor.u32 %v6195, 2147483648
    %v6197 = vmul.f32 %v6196, 1.442695
    %v6198 = vpow.pop %v6197
    %v6199 = vadd.f32 %v6198, 1.0
    %v6200 = vrcp.pop %v6199
    %v6201 = vmul.f32 1.0, %v6200
    %v6202 = vtanh.pop %v6195
    %6204 = vrot.lane.b32.xlu0 %v6202, 64
    %v6205 = vpop.permute.xlu0 %6204
    %v6207 = vmul.f32 %v6201, %v6205
    %v6209 = vrot.slane %v6108, 6
    %6210 = vrot.lane.b32.xlu0 %v6209, 32
    %v6211 = vpop.permute.xlu0 %6210
    %v6213 = vmul.f32 %v6201, %v6211
    %6215 = vrot.lane.b32.xlu0 %v6207, 32
    %v6216 = vpop.permute.xlu0 %6215
    %v6218 = vadd.f32 %v6213, %v6216
    %v6219 = vtanh.pop %v6218
    %6221 = vrot.lane.b32.xlu0 %v6219, 64
    %v6222 = vpop.permute.xlu0 %6221
    %v6224 = vmul.f32 %v6201, %v6222
    %6226 = vrot.lane.b32.xlu0 %v6224, 32
    %v6227 = vpop.permute.xlu0 %6226
    %6229 = vst.msk [vmem:[#allocation5] sm:$0xc] %vm552, %v6227
    %v6230 = vrot.slane %v6224, 2
    %6231 = vrot.lane.b32.xlu0 %v6230, 32
    %v6232 = vpop.permute.xlu0 %6231
    %v6233 = vsel %vm442, %v6232, 0
    %6235 = vmatprep.subr.mxu0 0.0
    %6236 = vmatpush1.msra.mxu0 0.0
    %6237 = vmatprep.subr.mxu0 0.0
    %6238 = vmatpush1.msra.mxu0 0.0
    %6239 = vmatprep.subr.mxu0 0.0
    %6240 = vmatpush1.msra.mxu0 0.0
    %6241 = vmatprep.subr.mxu0 0.0
    %6242 = vmatpush1.msra.mxu0 0.0
    %6243 = vmatprep.subr.mxu0 0.0
    %6244 = vmatpush1.msra.mxu0 0.0
    %6245 = vmatprep.subr.mxu0 0.0
    %6246 = vmatpush1.msra.mxu0 0.0
    %6247 = vmatprep.subr.mxu0 0.0
    %6248 = vmatpush1.msra.mxu0 0.0
    %6249 = vmatprep.subr.mxu0 0.0
    %6250 = vmatpush1.msra.mxu0 0.0
    %6251 = vmatprep.subr.mxu0 0.0
    %6252 = vmatpush1.msra.mxu0 0.0
    %6253 = vmatprep.subr.mxu0 0.0
    %6254 = vmatpush1.msra.mxu0 0.0
    %6255 = vmatprep.subr.mxu0 0.0
    %6256 = vmatpush1.msra.mxu0 0.0
    %6257 = vmatprep.subr.mxu0 0.0
    %6258 = vmatpush1.msra.mxu0 0.0
    %6259 = vmatprep.subr.mxu0 0.0
    %6260 = vmatpush1.msra.mxu0 %v6096
    %6261 = vmatprep.subr.mxu0 0.0
    %6262 = vmatpush1.msra.mxu0 %v6095
    %6263 = vmatprep.subr.mxu0 0.0
    %6264 = vmatpush1.msra.mxu0 %v6094
    %6265 = vmatprep.subr.mxu0 0.0
    %6266 = vmatpush1.msra.mxu0 %v6093
    %6267 = vmatprep.subr.mxu0 0.0
    %6268 = vmatpush2.msra.mxu0 0.0
    %6269 = vmatprep.subr.mxu0 0.0
    %6270 = vmatpush2.msra.mxu0 0.0
    %6271 = vmatprep.subr.mxu0 0.0
    %6272 = vmatpush2.msra.mxu0 0.0
    %6273 = vmatprep.subr.mxu0 0.0
    %6274 = vmatpush2.msra.mxu0 0.0
    %6275 = vmatprep.subr.mxu0 0.0
    %6276 = vmatpush2.msra.mxu0 0.0
    %6277 = vmatprep.subr.mxu0 0.0
    %6278 = vmatpush2.msra.mxu0 0.0
    %6279 = vmatprep.subr.mxu0 0.0
    %6280 = vmatpush2.msra.mxu0 0.0
    %6281 = vmatprep.subr.mxu0 0.0
    %6282 = vmatpush2.msra.mxu0 0.0
    %6283 = vmatprep.subr.mxu0 0.0
    %6284 = vmatpush2.msra.mxu0 0.0
    %6285 = vmatprep.subr.mxu0 0.0
    %6286 = vmatpush2.msra.mxu0 0.0
    %6287 = vmatprep.subr.mxu0 0.0
    %6288 = vmatpush2.msra.mxu0 0.0
    %6289 = vmatprep.subr.mxu0 0.0
    %6290 = vmatpush2.msra.mxu0 0.0
    %6291 = vmatprep.subr.mxu0 0.0
    %6292 = vmatpush2.msra.mxu0 0.0
    %6293 = vmatprep.subr.mxu0 0.0
    %6294 = vmatpush2.msra.mxu0 0.0
    %6295 = vmatprep.subr.mxu0 0.0
    %6296 = vmatpush2.msra.mxu0 0.0
    %6297 = vmatprep.subr.mxu0 0.0
    %6298 = vmatpush2.msra.mxu0 0.0
    %6299 = vmatprep.mubr.f32.mxu0 0.0
    %6300 = vmatmul.mubr.f32.gmra.mxu0 %v6233
    %v6301 = vpop.f32.mrf.mxu0
    %v6302 = vadd.f32 0.0, %v6301
    %v6303 = vpop.f32.mrf.mxu0
    %6304 = vdwg.mxu0
    %v6306 = vrot.slane %v6302, 4
    %v6308 = vadd.f32 %v5932, %v6306
    %v6309 = vxor.u32 %v6308, 2147483648
    %v6310 = vmul.f32 %v6309, 1.442695
    %v6311 = vpow.pop %v6310
    %v6312 = vadd.f32 %v6311, 1.0
    %v6313 = vrcp.pop %v6312
    %v6314 = vmul.f32 1.0, %v6313
    %v6315 = vtanh.pop %v6308
    %6317 = vrot.lane.b32.xlu0 %v6315, 64
    %v6318 = vpop.permute.xlu0 %6317
    %v6320 = vmul.f32 %v6314, %v6318
    %v6322 = vrot.slane %v6218, 6
    %v6324 = vmul.f32 %v6314, %v6322
    %6326 = vrot.lane.b32.xlu0 %v6320, 32
    %v6327 = vpop.permute.xlu0 %6326
    %v6329 = vadd.f32 %v6324, %v6327
    %v6330 = vtanh.pop %v6329
    %6332 = vrot.lane.b32.xlu0 %v6330, 64
    %v6333 = vpop.permute.xlu0 %6332
    %v6335 = vmul.f32 %v6314, %v6333
    %6337 = vrot.lane.b32.xlu0 %v6335, 32
    %v6338 = vpop.permute.xlu0 %6337
    %6340 = vst.msk [vmem:[#allocation5] sm:$0x30] %vm664, %v6338
    %v6341 = vrot.slane %v6335, 4
    %6342 = vrot.lane.b32.xlu0 %v6341, 32
    %v6343 = vpop.permute.xlu0 %6342
    %v6344 = vsel %vm442, %v6343, 0
    %6346 = vmatprep.subr.mxu0 0.0
    %6347 = vmatpush1.msra.mxu0 0.0
    %6348 = vmatprep.subr.mxu0 0.0
    %6349 = vmatpush1.msra.mxu0 0.0
    %6350 = vmatprep.subr.mxu0 0.0
    %6351 = vmatpush1.msra.mxu0 0.0
    %6352 = vmatprep.subr.mxu0 0.0
    %6353 = vmatpush1.msra.mxu0 0.0
    %6354 = vmatprep.subr.mxu0 0.0
    %6355 = vmatpush1.msra.mxu0 0.0
    %6356 = vmatprep.subr.mxu0 0.0
    %6357 = vmatpush1.msra.mxu0 0.0
    %6358 = vmatprep.subr.mxu0 0.0
    %6359 = vmatpush1.msra.mxu0 0.0
    %6360 = vmatprep.subr.mxu0 0.0
    %6361 = vmatpush1.msra.mxu0 0.0
    %6362 = vmatprep.subr.mxu0 0.0
    %6363 = vmatpush1.msra.mxu0 0.0
    %6364 = vmatprep.subr.mxu0 0.0
    %6365 = vmatpush1.msra.mxu0 0.0
    %6366 = vmatprep.subr.mxu0 0.0
    %6367 = vmatpush1.msra.mxu0 0.0
    %6368 = vmatprep.subr.mxu0 0.0
    %6369 = vmatpush1.msra.mxu0 0.0
    %6370 = vmatprep.subr.mxu0 0.0
    %6371 = vmatpush1.msra.mxu0 %v6096
    %6372 = vmatprep.subr.mxu0 0.0
    %6373 = vmatpush1.msra.mxu0 %v6095
    %6374 = vmatprep.subr.mxu0 0.0
    %6375 = vmatpush1.msra.mxu0 %v6094
    %6376 = vmatprep.subr.mxu0 0.0
    %6377 = vmatpush1.msra.mxu0 %v6093
    %6378 = vmatprep.subr.mxu0 0.0
    %6379 = vmatpush2.msra.mxu0 0.0
    %6380 = vmatprep.subr.mxu0 0.0
    %6381 = vmatpush2.msra.mxu0 0.0
    %6382 = vmatprep.subr.mxu0 0.0
    %6383 = vmatpush2.msra.mxu0 0.0
    %6384 = vmatprep.subr.mxu0 0.0
    %6385 = vmatpush2.msra.mxu0 0.0
    %6386 = vmatprep.subr.mxu0 0.0
    %6387 = vmatpush2.msra.mxu0 0.0
    %6388 = vmatprep.subr.mxu0 0.0
    %6389 = vmatpush2.msra.mxu0 0.0
    %6390 = vmatprep.subr.mxu0 0.0
    %6391 = vmatpush2.msra.mxu0 0.0
    %6392 = vmatprep.subr.mxu0 0.0
    %6393 = vmatpush2.msra.mxu0 0.0
    %6394 = vmatprep.subr.mxu0 0.0
    %6395 = vmatpush2.msra.mxu0 0.0
    %6396 = vmatprep.subr.mxu0 0.0
    %6397 = vmatpush2.msra.mxu0 0.0
    %6398 = vmatprep.subr.mxu0 0.0
    %6399 = vmatpush2.msra.mxu0 0.0
    %6400 = vmatprep.subr.mxu0 0.0
    %6401 = vmatpush2.msra.mxu0 0.0
    %6402 = vmatprep.subr.mxu0 0.0
    %6403 = vmatpush2.msra.mxu0 0.0
    %6404 = vmatprep.subr.mxu0 0.0
    %6405 = vmatpush2.msra.mxu0 0.0
    %6406 = vmatprep.subr.mxu0 0.0
    %6407 = vmatpush2.msra.mxu0 0.0
    %6408 = vmatprep.subr.mxu0 0.0
    %6409 = vmatpush2.msra.mxu0 0.0
    %6410 = vmatprep.mubr.f32.mxu0 0.0
    %6411 = vmatmul.mubr.f32.gmra.mxu0 %v6344
    %v6412 = vpop.f32.mrf.mxu0
    %v6413 = vadd.f32 0.0, %v6412
    %v6414 = vpop.f32.mrf.mxu0
    %6415 = vdwg.mxu0
    %v6417 = vrot.slane %v6413, 2
    %v6419 = vadd.f32 %v5932, %v6417
    %v6420 = vxor.u32 %v6419, 2147483648
    %v6421 = vmul.f32 %v6420, 1.442695
    %v6422 = vpow.pop %v6421
    %v6423 = vadd.f32 %v6422, 1.0
    %v6424 = vrcp.pop %v6423
    %v6425 = vmul.f32 1.0, %v6424
    %v6426 = vtanh.pop %v6419
    %6428 = vrot.lane.b32.xlu0 %v6426, 64
    %v6429 = vpop.permute.xlu0 %6428
    %v6431 = vmul.f32 %v6425, %v6429
    %v6433 = vrot.slane %v6329, 6
    %v6435 = vmul.f32 %v6425, %v6433
    %6437 = vrot.lane.b32.xlu0 %v6431, 32
    %v6438 = vpop.permute.xlu0 %6437
    %v6440 = vadd.f32 %v6435, %v6438
    %v6441 = vtanh.pop %v6440
    %6443 = vrot.lane.b32.xlu0 %v6441, 64
    %v6444 = vpop.permute.xlu0 %6443
    %v6446 = vmul.f32 %v6425, %v6444
    %6448 = vrot.lane.b32.xlu0 %v6446, 32
    %v6449 = vpop.permute.xlu0 %6448
    %6451 = vst.msk [vmem:[#allocation5] sm:$0xc0] %vm776, %v6449
    %v6452 = vrot.slane %v6446, 6
    %6453 = vrot.lane.b32.xlu0 %v6452, 32
    %v6454 = vpop.permute.xlu0 %6453
    %v6455 = vsel %vm442, %v6454, 0
    %6457 = vmatprep.subr.mxu0 0.0
    %6458 = vmatpush1.msra.mxu0 0.0
    %6459 = vmatprep.subr.mxu0 0.0
    %6460 = vmatpush1.msra.mxu0 0.0
    %6461 = vmatprep.subr.mxu0 0.0
    %6462 = vmatpush1.msra.mxu0 0.0
    %6463 = vmatprep.subr.mxu0 0.0
    %6464 = vmatpush1.msra.mxu0 0.0
    %6465 = vmatprep.subr.mxu0 0.0
    %6466 = vmatpush1.msra.mxu0 0.0
    %6467 = vmatprep.subr.mxu0 0.0
    %6468 = vmatpush1.msra.mxu0 0.0
    %6469 = vmatprep.subr.mxu0 0.0
    %6470 = vmatpush1.msra.mxu0 0.0
    %6471 = vmatprep.subr.mxu0 0.0
    %6472 = vmatpush1.msra.mxu0 0.0
    %6473 = vmatprep.subr.mxu0 0.0
    %6474 = vmatpush1.msra.mxu0 0.0
    %6475 = vmatprep.subr.mxu0 0.0
    %6476 = vmatpush1.msra.mxu0 0.0
    %6477 = vmatprep.subr.mxu0 0.0
    %6478 = vmatpush1.msra.mxu0 0.0
    %6479 = vmatprep.subr.mxu0 0.0
    %6480 = vmatpush1.msra.mxu0 0.0
    %6481 = vmatprep.subr.mxu0 0.0
    %6482 = vmatpush1.msra.mxu0 %v6096
    %6483 = vmatprep.subr.mxu0 0.0
    %6484 = vmatpush1.msra.mxu0 %v6095
    %6485 = vmatprep.subr.mxu0 0.0
    %6486 = vmatpush1.msra.mxu0 %v6094
    %6487 = vmatprep.subr.mxu0 0.0
    %6488 = vmatpush1.msra.mxu0 %v6093
    %6489 = vmatprep.subr.mxu0 0.0
    %6490 = vmatpush2.msra.mxu0 0.0
    %6491 = vmatprep.subr.mxu0 0.0
    %6492 = vmatpush2.msra.mxu0 0.0
    %6493 = vmatprep.subr.mxu0 0.0
    %6494 = vmatpush2.msra.mxu0 0.0
    %6495 = vmatprep.subr.mxu0 0.0
    %6496 = vmatpush2.msra.mxu0 0.0
    %6497 = vmatprep.subr.mxu0 0.0
    %6498 = vmatpush2.msra.mxu0 0.0
    %6499 = vmatprep.subr.mxu0 0.0
    %6500 = vmatpush2.msra.mxu0 0.0
    %6501 = vmatprep.subr.mxu0 0.0
    %6502 = vmatpush2.msra.mxu0 0.0
    %6503 = vmatprep.subr.mxu0 0.0
    %6504 = vmatpush2.msra.mxu0 0.0
    %6505 = vmatprep.subr.mxu0 0.0
    %6506 = vmatpush2.msra.mxu0 0.0
    %6507 = vmatprep.subr.mxu0 0.0
    %6508 = vmatpush2.msra.mxu0 0.0
    %6509 = vmatprep.subr.mxu0 0.0
    %6510 = vmatpush2.msra.mxu0 0.0
    %6511 = vmatprep.subr.mxu0 0.0
    %6512 = vmatpush2.msra.mxu0 0.0
    %6513 = vmatprep.subr.mxu0 0.0
    %6514 = vmatpush2.msra.mxu0 0.0
    %6515 = vmatprep.subr.mxu0 0.0
    %6516 = vmatpush2.msra.mxu0 0.0
    %6517 = vmatprep.subr.mxu0 0.0
    %6518 = vmatpush2.msra.mxu0 0.0
    %6519 = vmatprep.subr.mxu0 0.0
    %6520 = vmatpush2.msra.mxu0 0.0
    %6521 = vmatprep.mubr.f32.mxu0 0.0
    %6522 = vmatmul.mubr.f32.gmra.mxu0 %v6455
    %v6523 = vpop.f32.mrf.mxu0
    %v6524 = vadd.f32 0.0, %v6523
    %v6525 = vpop.f32.mrf.mxu0
    %6526 = vdwg.mxu0
    %v6527 = vadd.f32 %v5933, %v6524
    %v6528 = vxor.u32 %v6527, 2147483648
    %v6529 = vmul.f32 %v6528, 1.442695
    %v6530 = vpow.pop %v6529
    %v6531 = vadd.f32 %v6530, 1.0
    %v6532 = vrcp.pop %v6531
    %v6533 = vmul.f32 1.0, %v6532
    %v6534 = vtanh.pop %v6527
    %6536 = vrot.lane.b32.xlu0 %v6534, 64
    %v6537 = vpop.permute.xlu0 %6536
    %v6539 = vmul.f32 %v6533, %v6537
    %v6541 = vrot.slane %v6440, 6
    %v6543 = vmul.f32 %v6533, %v6541
    %6545 = vrot.lane.b32.xlu0 %v6539, 32
    %v6546 = vpop.permute.xlu0 %6545
    %v6548 = vadd.f32 %v6543, %v6546
    %v6549 = vtanh.pop %v6548
    %6551 = vrot.lane.b32.xlu0 %v6549, 64
    %v6552 = vpop.permute.xlu0 %6551
    %v6554 = vmul.f32 %v6533, %v6552
    %6556 = vrot.lane.b32.xlu0 %v6554, 32
    %v6557 = vpop.permute.xlu0 %6556
    %6559 = vst.msk [vmem:[#allocation5 + $0x8] sm:$0x3] %vm440, %v6557
    %v6560 = vsel %vm442, %v6557, 0
    %6562 = vmatprep.subr.mxu0 0.0
    %6563 = vmatpush1.msra.mxu0 0.0
    %6564 = vmatprep.subr.mxu0 0.0
    %6565 = vmatpush1.msra.mxu0 0.0
    %6566 = vmatprep.subr.mxu0 0.0
    %6567 = vmatpush1.msra.mxu0 0.0
    %6568 = vmatprep.subr.mxu0 0.0
    %6569 = vmatpush1.msra.mxu0 0.0
    %6570 = vmatprep.subr.mxu0 0.0
    %6571 = vmatpush1.msra.mxu0 0.0
    %6572 = vmatprep.subr.mxu0 0.0
    %6573 = vmatpush1.msra.mxu0 0.0
    %6574 = vmatprep.subr.mxu0 0.0
    %6575 = vmatpush1.msra.mxu0 0.0
    %6576 = vmatprep.subr.mxu0 0.0
    %6577 = vmatpush1.msra.mxu0 0.0
    %6578 = vmatprep.subr.mxu0 0.0
    %6579 = vmatpush1.msra.mxu0 0.0
    %6580 = vmatprep.subr.mxu0 0.0
    %6581 = vmatpush1.msra.mxu0 0.0
    %6582 = vmatprep.subr.mxu0 0.0
    %6583 = vmatpush1.msra.mxu0 0.0
    %6584 = vmatprep.subr.mxu0 0.0
    %6585 = vmatpush1.msra.mxu0 0.0
    %6586 = vmatprep.subr.mxu0 0.0
    %6587 = vmatpush1.msra.mxu0 %v6096
    %6588 = vmatprep.subr.mxu0 0.0
    %6589 = vmatpush1.msra.mxu0 %v6095
    %6590 = vmatprep.subr.mxu0 0.0
    %6591 = vmatpush1.msra.mxu0 %v6094
    %6592 = vmatprep.subr.mxu0 0.0
    %6593 = vmatpush1.msra.mxu0 %v6093
    %6594 = vmatprep.subr.mxu0 0.0
    %6595 = vmatpush2.msra.mxu0 0.0
    %6596 = vmatprep.subr.mxu0 0.0
    %6597 = vmatpush2.msra.mxu0 0.0
    %6598 = vmatprep.subr.mxu0 0.0
    %6599 = vmatpush2.msra.mxu0 0.0
    %6600 = vmatprep.subr.mxu0 0.0
    %6601 = vmatpush2.msra.mxu0 0.0
    %6602 = vmatprep.subr.mxu0 0.0
    %6603 = vmatpush2.msra.mxu0 0.0
    %6604 = vmatprep.subr.mxu0 0.0
    %6605 = vmatpush2.msra.mxu0 0.0
    %6606 = vmatprep.subr.mxu0 0.0
    %6607 = vmatpush2.msra.mxu0 0.0
    %6608 = vmatprep.subr.mxu0 0.0
    %6609 = vmatpush2.msra.mxu0 0.0
    %6610 = vmatprep.subr.mxu0 0.0
    %6611 = vmatpush2.msra.mxu0 0.0
    %6612 = vmatprep.subr.mxu0 0.0
    %6613 = vmatpush2.msra.mxu0 0.0
    %6614 = vmatprep.subr.mxu0 0.0
    %6615 = vmatpush2.msra.mxu0 0.0
    %6616 = vmatprep.subr.mxu0 0.0
    %6617 = vmatpush2.msra.mxu0 0.0
    %6618 = vmatprep.subr.mxu0 0.0
    %6619 = vmatpush2.msra.mxu0 0.0
    %6620 = vmatprep.subr.mxu0 0.0
    %6621 = vmatpush2.msra.mxu0 0.0
    %6622 = vmatprep.subr.mxu0 0.0
    %6623 = vmatpush2.msra.mxu0 0.0
    %6624 = vmatprep.subr.mxu0 0.0
    %6625 = vmatpush2.msra.mxu0 0.0
    %6626 = vmatprep.mubr.f32.mxu0 0.0
    %6627 = vmatmul.mubr.f32.gmra.mxu0 %v6560
    %v6628 = vpop.f32.mrf.mxu0
    %v6629 = vadd.f32 0.0, %v6628
    %v6630 = vpop.f32.mrf.mxu0
    %6631 = vdwg.mxu0
    %v6633 = vrot.slane %v6629, 6
    %v6635 = vadd.f32 %v5933, %v6633
    %v6636 = vxor.u32 %v6635, 2147483648
    %v6637 = vmul.f32 %v6636, 1.442695
    %v6638 = vpow.pop %v6637
    %v6639 = vadd.f32 %v6638, 1.0
    %v6640 = vrcp.pop %v6639
    %v6641 = vmul.f32 1.0, %v6640
    %v6642 = vtanh.pop %v6635
    %6644 = vrot.lane.b32.xlu0 %v6642, 64
    %v6645 = vpop.permute.xlu0 %6644
    %v6647 = vmul.f32 %v6641, %v6645
    %v6649 = vrot.slane %v6548, 6
    %v6651 = vmul.f32 %v6641, %v6649
    %6653 = vrot.lane.b32.xlu0 %v6647, 32
    %v6654 = vpop.permute.xlu0 %6653
    %v6656 = vadd.f32 %v6651, %v6654
    %v6657 = vtanh.pop %v6656
    %6659 = vrot.lane.b32.xlu0 %v6657, 64
    %v6660 = vpop.permute.xlu0 %6659
    %v6662 = vmul.f32 %v6641, %v6660
    %6664 = vrot.lane.b32.xlu0 %v6662, 32
    %v6665 = vpop.permute.xlu0 %6664
    %6667 = vst.msk [vmem:[#allocation5 + $0x8] sm:$0xc] %vm552, %v6665
    %v6668 = vrot.slane %v6662, 2
    %6669 = vrot.lane.b32.xlu0 %v6668, 32
    %v6670 = vpop.permute.xlu0 %6669
    %v6671 = vsel %vm442, %v6670, 0
    %6673 = vmatprep.subr.mxu0 0.0
    %6674 = vmatpush1.msra.mxu0 0.0
    %6675 = vmatprep.subr.mxu0 0.0
    %6676 = vmatpush1.msra.mxu0 0.0
    %6677 = vmatprep.subr.mxu0 0.0
    %6678 = vmatpush1.msra.mxu0 0.0
    %6679 = vmatprep.subr.mxu0 0.0
    %6680 = vmatpush1.msra.mxu0 0.0
    %6681 = vmatprep.subr.mxu0 0.0
    %6682 = vmatpush1.msra.mxu0 0.0
    %6683 = vmatprep.subr.mxu0 0.0
    %6684 = vmatpush1.msra.mxu0 0.0
    %6685 = vmatprep.subr.mxu0 0.0
    %6686 = vmatpush1.msra.mxu0 0.0
    %6687 = vmatprep.subr.mxu0 0.0
    %6688 = vmatpush1.msra.mxu0 0.0
    %6689 = vmatprep.subr.mxu0 0.0
    %6690 = vmatpush1.msra.mxu0 0.0
    %6691 = vmatprep.subr.mxu0 0.0
    %6692 = vmatpush1.msra.mxu0 0.0
    %6693 = vmatprep.subr.mxu0 0.0
    %6694 = vmatpush1.msra.mxu0 0.0
    %6695 = vmatprep.subr.mxu0 0.0
    %6696 = vmatpush1.msra.mxu0 0.0
    %6697 = vmatprep.subr.mxu0 0.0
    %6698 = vmatpush1.msra.mxu0 %v6096
    %6699 = vmatprep.subr.mxu0 0.0
    %6700 = vmatpush1.msra.mxu0 %v6095
    %6701 = vmatprep.subr.mxu0 0.0
    %6702 = vmatpush1.msra.mxu0 %v6094
    %6703 = vmatprep.subr.mxu0 0.0
    %6704 = vmatpush1.msra.mxu0 %v6093
    %6705 = vmatprep.subr.mxu0 0.0
    %6706 = vmatpush2.msra.mxu0 0.0
    %6707 = vmatprep.subr.mxu0 0.0
    %6708 = vmatpush2.msra.mxu0 0.0
    %6709 = vmatprep.subr.mxu0 0.0
    %6710 = vmatpush2.msra.mxu0 0.0
    %6711 = vmatprep.subr.mxu0 0.0
    %6712 = vmatpush2.msra.mxu0 0.0
    %6713 = vmatprep.subr.mxu0 0.0
    %6714 = vmatpush2.msra.mxu0 0.0
    %6715 = vmatprep.subr.mxu0 0.0
    %6716 = vmatpush2.msra.mxu0 0.0
    %6717 = vmatprep.subr.mxu0 0.0
    %6718 = vmatpush2.msra.mxu0 0.0
    %6719 = vmatprep.subr.mxu0 0.0
    %6720 = vmatpush2.msra.mxu0 0.0
    %6721 = vmatprep.subr.mxu0 0.0
    %6722 = vmatpush2.msra.mxu0 0.0
    %6723 = vmatprep.subr.mxu0 0.0
    %6724 = vmatpush2.msra.mxu0 0.0
    %6725 = vmatprep.subr.mxu0 0.0
    %6726 = vmatpush2.msra.mxu0 0.0
    %6727 = vmatprep.subr.mxu0 0.0
    %6728 = vmatpush2.msra.mxu0 0.0
    %6729 = vmatprep.subr.mxu0 0.0
    %6730 = vmatpush2.msra.mxu0 0.0
    %6731 = vmatprep.subr.mxu0 0.0
    %6732 = vmatpush2.msra.mxu0 0.0
    %6733 = vmatprep.subr.mxu0 0.0
    %6734 = vmatpush2.msra.mxu0 0.0
    %6735 = vmatprep.subr.mxu0 0.0
    %6736 = vmatpush2.msra.mxu0 0.0
    %6737 = vmatprep.mubr.f32.mxu0 0.0
    %6738 = vmatmul.mubr.f32.gmra.mxu0 %v6671
    %v6739 = vpop.f32.mrf.mxu0
    %v6740 = vadd.f32 0.0, %v6739
    %v6741 = vpop.f32.mrf.mxu0
    %6742 = vdwg.mxu0
    %v6744 = vrot.slane %v6740, 4
    %v6746 = vadd.f32 %v5933, %v6744
    %v6747 = vxor.u32 %v6746, 2147483648
    %v6748 = vmul.f32 %v6747, 1.442695
    %v6749 = vpow.pop %v6748
    %v6750 = vadd.f32 %v6749, 1.0
    %v6751 = vrcp.pop %v6750
    %v6752 = vmul.f32 1.0, %v6751
    %v6753 = vtanh.pop %v6746
    %6755 = vrot.lane.b32.xlu0 %v6753, 64
    %v6756 = vpop.permute.xlu0 %6755
    %v6758 = vmul.f32 %v6752, %v6756
    %v6760 = vrot.slane %v6656, 6
    %v6762 = vmul.f32 %v6752, %v6760
    %6764 = vrot.lane.b32.xlu0 %v6758, 32
    %v6765 = vpop.permute.xlu0 %6764
    %v6767 = vadd.f32 %v6762, %v6765
    %v6768 = vtanh.pop %v6767
    %6770 = vrot.lane.b32.xlu0 %v6768, 64
    %v6771 = vpop.permute.xlu0 %6770
    %v6773 = vmul.f32 %v6752, %v6771
    %6775 = vrot.lane.b32.xlu0 %v6773, 32
    %v6776 = vpop.permute.xlu0 %6775
    %6778 = vst.msk [vmem:[#allocation5 + $0x8] sm:$0x30] %vm664, %v6776
    %v6779 = vrot.slane %v6773, 4
    %6780 = vrot.lane.b32.xlu0 %v6779, 32
    %v6781 = vpop.permute.xlu0 %6780
    %v6782 = vsel %vm442, %v6781, 0
    %6784 = vmatprep.subr.mxu0 0.0
    %6785 = vmatpush1.msra.mxu0 0.0
    %6786 = vmatprep.subr.mxu0 0.0
    %6787 = vmatpush1.msra.mxu0 0.0
    %6788 = vmatprep.subr.mxu0 0.0
    %6789 = vmatpush1.msra.mxu0 0.0
    %6790 = vmatprep.subr.mxu0 0.0
    %6791 = vmatpush1.msra.mxu0 0.0
    %6792 = vmatprep.subr.mxu0 0.0
    %6793 = vmatpush1.msra.mxu0 0.0
    %6794 = vmatprep.subr.mxu0 0.0
    %6795 = vmatpush1.msra.mxu0 0.0
    %6796 = vmatprep.subr.mxu0 0.0
    %6797 = vmatpush1.msra.mxu0 0.0
    %6798 = vmatprep.subr.mxu0 0.0
    %6799 = vmatpush1.msra.mxu0 0.0
    %6800 = vmatprep.subr.mxu0 0.0
    %6801 = vmatpush1.msra.mxu0 0.0
    %6802 = vmatprep.subr.mxu0 0.0
    %6803 = vmatpush1.msra.mxu0 0.0
    %6804 = vmatprep.subr.mxu0 0.0
    %6805 = vmatpush1.msra.mxu0 0.0
    %6806 = vmatprep.subr.mxu0 0.0
    %6807 = vmatpush1.msra.mxu0 0.0
    %6808 = vmatprep.subr.mxu0 0.0
    %6809 = vmatpush1.msra.mxu0 %v6096
    %6810 = vmatprep.subr.mxu0 0.0
    %6811 = vmatpush1.msra.mxu0 %v6095
    %6812 = vmatprep.subr.mxu0 0.0
    %6813 = vmatpush1.msra.mxu0 %v6094
    %6814 = vmatprep.subr.mxu0 0.0
    %6815 = vmatpush1.msra.mxu0 %v6093
    %6816 = vmatprep.subr.mxu0 0.0
    %6817 = vmatpush2.msra.mxu0 0.0
    %6818 = vmatprep.subr.mxu0 0.0
    %6819 = vmatpush2.msra.mxu0 0.0
    %6820 = vmatprep.subr.mxu0 0.0
    %6821 = vmatpush2.msra.mxu0 0.0
    %6822 = vmatprep.subr.mxu0 0.0
    %6823 = vmatpush2.msra.mxu0 0.0
    %6824 = vmatprep.subr.mxu0 0.0
    %6825 = vmatpush2.msra.mxu0 0.0
    %6826 = vmatprep.subr.mxu0 0.0
    %6827 = vmatpush2.msra.mxu0 0.0
    %6828 = vmatprep.subr.mxu0 0.0
    %6829 = vmatpush2.msra.mxu0 0.0
    %6830 = vmatprep.subr.mxu0 0.0
    %6831 = vmatpush2.msra.mxu0 0.0
    %6832 = vmatprep.subr.mxu0 0.0
    %6833 = vmatpush2.msra.mxu0 0.0
    %6834 = vmatprep.subr.mxu0 0.0
    %6835 = vmatpush2.msra.mxu0 0.0
    %6836 = vmatprep.subr.mxu0 0.0
    %6837 = vmatpush2.msra.mxu0 0.0
    %6838 = vmatprep.subr.mxu0 0.0
    %6839 = vmatpush2.msra.mxu0 0.0
    %6840 = vmatprep.subr.mxu0 0.0
    %6841 = vmatpush2.msra.mxu0 0.0
    %6842 = vmatprep.subr.mxu0 0.0
    %6843 = vmatpush2.msra.mxu0 0.0
    %6844 = vmatprep.subr.mxu0 0.0
    %6845 = vmatpush2.msra.mxu0 0.0
    %6846 = vmatprep.subr.mxu0 0.0
    %6847 = vmatpush2.msra.mxu0 0.0
    %6848 = vmatprep.mubr.f32.mxu0 0.0
    %6849 = vmatmul.mubr.f32.gmra.mxu0 %v6782
    %v6850 = vpop.f32.mrf.mxu0
    %v6851 = vadd.f32 0.0, %v6850
    %v6852 = vpop.f32.mrf.mxu0
    %6853 = vdwg.mxu0
    %v6855 = vrot.slane %v6851, 2
    %v6857 = vadd.f32 %v5933, %v6855
    %v6858 = vxor.u32 %v6857, 2147483648
    %v6859 = vmul.f32 %v6858, 1.442695
    %v6860 = vpow.pop %v6859
    %v6861 = vadd.f32 %v6860, 1.0
    %v6862 = vrcp.pop %v6861
    %v6863 = vmul.f32 1.0, %v6862
    %v6864 = vtanh.pop %v6857
    %6866 = vrot.lane.b32.xlu0 %v6864, 64
    %v6867 = vpop.permute.xlu0 %6866
    %v6869 = vmul.f32 %v6863, %v6867
    %v6871 = vrot.slane %v6767, 6
    %v6873 = vmul.f32 %v6863, %v6871
    %6875 = vrot.lane.b32.xlu0 %v6869, 32
    %v6876 = vpop.permute.xlu0 %6875
    %v6878 = vadd.f32 %v6873, %v6876
    %v6879 = vtanh.pop %v6878
    %6881 = vrot.lane.b32.xlu0 %v6879, 64
    %v6882 = vpop.permute.xlu0 %6881
    %v6884 = vmul.f32 %v6863, %v6882
    %6886 = vrot.lane.b32.xlu0 %v6884, 32
    %v6887 = vpop.permute.xlu0 %6886
    %6889 = vst.msk [vmem:[#allocation5 + $0x8] sm:$0xc0] %vm776, %v6887
    %v6890 = vld [vmem:[%s57] sm:$0xff]
    %v6891 = vld [vmem:[%s57 + $0x8] sm:$0xff]
    %v6892 = vld [vmem:[%s57 + $0x10] sm:$0xff]
    %v6893 = vld [vmem:[%s57 + $0x18] sm:$0xff]
    %v6894 = vxor.u32 %v6092, 2147483648
    %v6895 = vmul.f32 %v6894, 1.442695
    %v6896 = vpow.pop %v6895
    %v6897 = vadd.f32 %v6896, 1.0
    %v6898 = vrcp.pop %v6897
    %v6899 = vmul.f32 1.0, %v6898
    %v6900 = vtanh.pop %v6092
    %6902 = vrot.lane.b32.xlu0 %v6900, 64
    %v6903 = vpop.permute.xlu0 %6902
    %v6905 = vmul.f32 %v6899, %v6903
    %v6906 = vtanh.pop %v6905
    %6908 = vrot.lane.b32.xlu0 %v6906, 96
    %v6909 = vpop.permute.xlu0 %6908
    %v6911 = vmul.f32 %v6899, %v6909
    %6913 = vrot.lane.b32.xlu0 %v6911, 64
    %v6914 = vpop.permute.xlu0 %6913
    %6916 = vst.msk [vmem:[#allocation5 + $0x8] sm:$0xc0] %vm1238, %v6914
    %v6917 = vrot.slane %v6911, 6
    %6918 = vrot.lane.b32.xlu0 %v6917, 32
    %v6919 = vpop.permute.xlu0 %6918
    %v6920 = vsel %vm442, %v6919, 0
    %6922 = vmatprep.subr.mxu0 0.0
    %6923 = vmatpush1.msra.mxu0 0.0
    %6924 = vmatprep.subr.mxu0 0.0
    %6925 = vmatpush1.msra.mxu0 0.0
    %6926 = vmatprep.subr.mxu0 0.0
    %6927 = vmatpush1.msra.mxu0 0.0
    %6928 = vmatprep.subr.mxu0 0.0
    %6929 = vmatpush1.msra.mxu0 0.0
    %6930 = vmatprep.subr.mxu0 0.0
    %6931 = vmatpush1.msra.mxu0 0.0
    %6932 = vmatprep.subr.mxu0 0.0
    %6933 = vmatpush1.msra.mxu0 0.0
    %6934 = vmatprep.subr.mxu0 0.0
    %6935 = vmatpush1.msra.mxu0 0.0
    %6936 = vmatprep.subr.mxu0 0.0
    %6937 = vmatpush1.msra.mxu0 0.0
    %6938 = vmatprep.subr.mxu0 0.0
    %6939 = vmatpush1.msra.mxu0 0.0
    %6940 = vmatprep.subr.mxu0 0.0
    %6941 = vmatpush1.msra.mxu0 0.0
    %6942 = vmatprep.subr.mxu0 0.0
    %6943 = vmatpush1.msra.mxu0 0.0
    %6944 = vmatprep.subr.mxu0 0.0
    %6945 = vmatpush1.msra.mxu0 0.0
    %6946 = vmatprep.subr.mxu0 0.0
    %6947 = vmatpush1.msra.mxu0 %v6893
    %6948 = vmatprep.subr.mxu0 0.0
    %6949 = vmatpush1.msra.mxu0 %v6892
    %6950 = vmatprep.subr.mxu0 0.0
    %6951 = vmatpush1.msra.mxu0 %v6891
    %6952 = vmatprep.subr.mxu0 0.0
    %6953 = vmatpush1.msra.mxu0 %v6890
    %6954 = vmatprep.subr.mxu0 0.0
    %6955 = vmatpush2.msra.mxu0 0.0
    %6956 = vmatprep.subr.mxu0 0.0
    %6957 = vmatpush2.msra.mxu0 0.0
    %6958 = vmatprep.subr.mxu0 0.0
    %6959 = vmatpush2.msra.mxu0 0.0
    %6960 = vmatprep.subr.mxu0 0.0
    %6961 = vmatpush2.msra.mxu0 0.0
    %6962 = vmatprep.subr.mxu0 0.0
    %6963 = vmatpush2.msra.mxu0 0.0
    %6964 = vmatprep.subr.mxu0 0.0
    %6965 = vmatpush2.msra.mxu0 0.0
    %6966 = vmatprep.subr.mxu0 0.0
    %6967 = vmatpush2.msra.mxu0 0.0
    %6968 = vmatprep.subr.mxu0 0.0
    %6969 = vmatpush2.msra.mxu0 0.0
    %6970 = vmatprep.subr.mxu0 0.0
    %6971 = vmatpush2.msra.mxu0 0.0
    %6972 = vmatprep.subr.mxu0 0.0
    %6973 = vmatpush2.msra.mxu0 0.0
    %6974 = vmatprep.subr.mxu0 0.0
    %6975 = vmatpush2.msra.mxu0 0.0
    %6976 = vmatprep.subr.mxu0 0.0
    %6977 = vmatpush2.msra.mxu0 0.0
    %6978 = vmatprep.subr.mxu0 0.0
    %6979 = vmatpush2.msra.mxu0 0.0
    %6980 = vmatprep.subr.mxu0 0.0
    %6981 = vmatpush2.msra.mxu0 0.0
    %6982 = vmatprep.subr.mxu0 0.0
    %6983 = vmatpush2.msra.mxu0 0.0
    %6984 = vmatprep.subr.mxu0 0.0
    %6985 = vmatpush2.msra.mxu0 0.0
    %6986 = vmatprep.mubr.f32.mxu0 0.0
    %6987 = vmatmul.mubr.f32.gmra.mxu0 %v6920
    %v6988 = vpop.f32.mrf.mxu0
    %v6989 = vadd.f32 0.0, %v6988
    %v6990 = vpop.f32.mrf.mxu0
    %6991 = vdwg.mxu0
    %v6993 = vrot.slane %v6989, 4
    %v6995 = vadd.f32 %v6092, %v6993
    %v6996 = vxor.u32 %v6995, 2147483648
    %v6997 = vmul.f32 %v6996, 1.442695
    %v6998 = vpow.pop %v6997
    %v6999 = vadd.f32 %v6998, 1.0
    %v7000 = vrcp.pop %v6999
    %v7001 = vmul.f32 1.0, %v7000
    %v7002 = vtanh.pop %v6995
    %7004 = vrot.lane.b32.xlu0 %v7002, 64
    %v7005 = vpop.permute.xlu0 %7004
    %v7007 = vmul.f32 %v7001, %v7005
    %v7009 = vrot.slane %v6905, 2
    %7010 = vrot.lane.b32.xlu0 %v7009, 32
    %v7011 = vpop.permute.xlu0 %7010
    %v7013 = vmul.f32 %v7001, %v7011
    %7015 = vrot.lane.b32.xlu0 %v7007, 32
    %v7016 = vpop.permute.xlu0 %7015
    %v7018 = vadd.f32 %v7013, %v7016
    %v7019 = vtanh.pop %v7018
    %7021 = vrot.lane.b32.xlu0 %v7019, 64
    %v7022 = vpop.permute.xlu0 %7021
    %v7024 = vmul.f32 %v7001, %v7022
    %7026 = vrot.lane.b32.xlu0 %v7024, 64
    %v7027 = vpop.permute.xlu0 %7026
    %7029 = vst.msk [vmem:[#allocation5 + $0x8] sm:$0x30] %vm1352, %v7027
    %v7030 = vrot.slane %v7024, 4
    %7031 = vrot.lane.b32.xlu0 %v7030, 32
    %v7032 = vpop.permute.xlu0 %7031
    %v7033 = vsel %vm442, %v7032, 0
    %7035 = vmatprep.subr.mxu0 0.0
    %7036 = vmatpush1.msra.mxu0 0.0
    %7037 = vmatprep.subr.mxu0 0.0
    %7038 = vmatpush1.msra.mxu0 0.0
    %7039 = vmatprep.subr.mxu0 0.0
    %7040 = vmatpush1.msra.mxu0 0.0
    %7041 = vmatprep.subr.mxu0 0.0
    %7042 = vmatpush1.msra.mxu0 0.0
    %7043 = vmatprep.subr.mxu0 0.0
    %7044 = vmatpush1.msra.mxu0 0.0
    %7045 = vmatprep.subr.mxu0 0.0
    %7046 = vmatpush1.msra.mxu0 0.0
    %7047 = vmatprep.subr.mxu0 0.0
    %7048 = vmatpush1.msra.mxu0 0.0
    %7049 = vmatprep.subr.mxu0 0.0
    %7050 = vmatpush1.msra.mxu0 0.0
    %7051 = vmatprep.subr.mxu0 0.0
    %7052 = vmatpush1.msra.mxu0 0.0
    %7053 = vmatprep.subr.mxu0 0.0
    %7054 = vmatpush1.msra.mxu0 0.0
    %7055 = vmatprep.subr.mxu0 0.0
    %7056 = vmatpush1.msra.mxu0 0.0
    %7057 = vmatprep.subr.mxu0 0.0
    %7058 = vmatpush1.msra.mxu0 0.0
    %7059 = vmatprep.subr.mxu0 0.0
    %7060 = vmatpush1.msra.mxu0 %v6893
    %7061 = vmatprep.subr.mxu0 0.0
    %7062 = vmatpush1.msra.mxu0 %v6892
    %7063 = vmatprep.subr.mxu0 0.0
    %7064 = vmatpush1.msra.mxu0 %v6891
    %7065 = vmatprep.subr.mxu0 0.0
    %7066 = vmatpush1.msra.mxu0 %v6890
    %7067 = vmatprep.subr.mxu0 0.0
    %7068 = vmatpush2.msra.mxu0 0.0
    %7069 = vmatprep.subr.mxu0 0.0
    %7070 = vmatpush2.msra.mxu0 0.0
    %7071 = vmatprep.subr.mxu0 0.0
    %7072 = vmatpush2.msra.mxu0 0.0
    %7073 = vmatprep.subr.mxu0 0.0
    %7074 = vmatpush2.msra.mxu0 0.0
    %7075 = vmatprep.subr.mxu0 0.0
    %7076 = vmatpush2.msra.mxu0 0.0
    %7077 = vmatprep.subr.mxu0 0.0
    %7078 = vmatpush2.msra.mxu0 0.0
    %7079 = vmatprep.subr.mxu0 0.0
    %7080 = vmatpush2.msra.mxu0 0.0
    %7081 = vmatprep.subr.mxu0 0.0
    %7082 = vmatpush2.msra.mxu0 0.0
    %7083 = vmatprep.subr.mxu0 0.0
    %7084 = vmatpush2.msra.mxu0 0.0
    %7085 = vmatprep.subr.mxu0 0.0
    %7086 = vmatpush2.msra.mxu0 0.0
    %7087 = vmatprep.subr.mxu0 0.0
    %7088 = vmatpush2.msra.mxu0 0.0
    %7089 = vmatprep.subr.mxu0 0.0
    %7090 = vmatpush2.msra.mxu0 0.0
    %7091 = vmatprep.subr.mxu0 0.0
    %7092 = vmatpush2.msra.mxu0 0.0
    %7093 = vmatprep.subr.mxu0 0.0
    %7094 = vmatpush2.msra.mxu0 0.0
    %7095 = vmatprep.subr.mxu0 0.0
    %7096 = vmatpush2.msra.mxu0 0.0
    %7097 = vmatprep.subr.mxu0 0.0
    %7098 = vmatpush2.msra.mxu0 0.0
    %7099 = vmatprep.mubr.f32.mxu0 0.0
    %7100 = vmatmul.mubr.f32.gmra.mxu0 %v7033
    %v7101 = vpop.f32.mrf.mxu0
    %v7102 = vadd.f32 0.0, %v7101
    %v7103 = vpop.f32.mrf.mxu0
    %7104 = vdwg.mxu0
    %v7106 = vrot.slane %v7102, 6
    %v7108 = vadd.f32 %v6092, %v7106
    %v7109 = vxor.u32 %v7108, 2147483648
    %v7110 = vmul.f32 %v7109, 1.442695
    %v7111 = vpow.pop %v7110
    %v7112 = vadd.f32 %v7111, 1.0
    %v7113 = vrcp.pop %v7112
    %v7114 = vmul.f32 1.0, %v7113
    %v7115 = vtanh.pop %v7108
    %7117 = vrot.lane.b32.xlu0 %v7115, 64
    %v7118 = vpop.permute.xlu0 %7117
    %v7120 = vmul.f32 %v7114, %v7118
    %v7122 = vrot.slane %v7018, 2
    %v7124 = vmul.f32 %v7114, %v7122
    %7126 = vrot.lane.b32.xlu0 %v7120, 32
    %v7127 = vpop.permute.xlu0 %7126
    %v7129 = vadd.f32 %v7124, %v7127
    %v7130 = vtanh.pop %v7129
    %7132 = vrot.lane.b32.xlu0 %v7130, 64
    %v7133 = vpop.permute.xlu0 %7132
    %v7135 = vmul.f32 %v7114, %v7133
    %7137 = vrot.lane.b32.xlu0 %v7135, 64
    %v7138 = vpop.permute.xlu0 %7137
    %7140 = vst.msk [vmem:[#allocation5 + $0x8] sm:$0xc] %vm1464, %v7138
    %v7141 = vrot.slane %v7135, 2
    %7142 = vrot.lane.b32.xlu0 %v7141, 32
    %v7143 = vpop.permute.xlu0 %7142
    %v7144 = vsel %vm442, %v7143, 0
    %7146 = vmatprep.subr.mxu0 0.0
    %7147 = vmatpush1.msra.mxu0 0.0
    %7148 = vmatprep.subr.mxu0 0.0
    %7149 = vmatpush1.msra.mxu0 0.0
    %7150 = vmatprep.subr.mxu0 0.0
    %7151 = vmatpush1.msra.mxu0 0.0
    %7152 = vmatprep.subr.mxu0 0.0
    %7153 = vmatpush1.msra.mxu0 0.0
    %7154 = vmatprep.subr.mxu0 0.0
    %7155 = vmatpush1.msra.mxu0 0.0
    %7156 = vmatprep.subr.mxu0 0.0
    %7157 = vmatpush1.msra.mxu0 0.0
    %7158 = vmatprep.subr.mxu0 0.0
    %7159 = vmatpush1.msra.mxu0 0.0
    %7160 = vmatprep.subr.mxu0 0.0
    %7161 = vmatpush1.msra.mxu0 0.0
    %7162 = vmatprep.subr.mxu0 0.0
    %7163 = vmatpush1.msra.mxu0 0.0
    %7164 = vmatprep.subr.mxu0 0.0
    %7165 = vmatpush1.msra.mxu0 0.0
    %7166 = vmatprep.subr.mxu0 0.0
    %7167 = vmatpush1.msra.mxu0 0.0
    %7168 = vmatprep.subr.mxu0 0.0
    %7169 = vmatpush1.msra.mxu0 0.0
    %7170 = vmatprep.subr.mxu0 0.0
    %7171 = vmatpush1.msra.mxu0 %v6893
    %7172 = vmatprep.subr.mxu0 0.0
    %7173 = vmatpush1.msra.mxu0 %v6892
    %7174 = vmatprep.subr.mxu0 0.0
    %7175 = vmatpush1.msra.mxu0 %v6891
    %7176 = vmatprep.subr.mxu0 0.0
    %7177 = vmatpush1.msra.mxu0 %v6890
    %7178 = vmatprep.subr.mxu0 0.0
    %7179 = vmatpush2.msra.mxu0 0.0
    %7180 = vmatprep.subr.mxu0 0.0
    %7181 = vmatpush2.msra.mxu0 0.0
    %7182 = vmatprep.subr.mxu0 0.0
    %7183 = vmatpush2.msra.mxu0 0.0
    %7184 = vmatprep.subr.mxu0 0.0
    %7185 = vmatpush2.msra.mxu0 0.0
    %7186 = vmatprep.subr.mxu0 0.0
    %7187 = vmatpush2.msra.mxu0 0.0
    %7188 = vmatprep.subr.mxu0 0.0
    %7189 = vmatpush2.msra.mxu0 0.0
    %7190 = vmatprep.subr.mxu0 0.0
    %7191 = vmatpush2.msra.mxu0 0.0
    %7192 = vmatprep.subr.mxu0 0.0
    %7193 = vmatpush2.msra.mxu0 0.0
    %7194 = vmatprep.subr.mxu0 0.0
    %7195 = vmatpush2.msra.mxu0 0.0
    %7196 = vmatprep.subr.mxu0 0.0
    %7197 = vmatpush2.msra.mxu0 0.0
    %7198 = vmatprep.subr.mxu0 0.0
    %7199 = vmatpush2.msra.mxu0 0.0
    %7200 = vmatprep.subr.mxu0 0.0
    %7201 = vmatpush2.msra.mxu0 0.0
    %7202 = vmatprep.subr.mxu0 0.0
    %7203 = vmatpush2.msra.mxu0 0.0
    %7204 = vmatprep.subr.mxu0 0.0
    %7205 = vmatpush2.msra.mxu0 0.0
    %7206 = vmatprep.subr.mxu0 0.0
    %7207 = vmatpush2.msra.mxu0 0.0
    %7208 = vmatprep.subr.mxu0 0.0
    %7209 = vmatpush2.msra.mxu0 0.0
    %7210 = vmatprep.mubr.f32.mxu0 0.0
    %7211 = vmatmul.mubr.f32.gmra.mxu0 %v7144
    %v7212 = vpop.f32.mrf.mxu0
    %v7213 = vadd.f32 0.0, %v7212
    %v7214 = vpop.f32.mrf.mxu0
    %7215 = vdwg.mxu0
    %v7216 = vadd.f32 %v6092, %v7213
    %v7217 = vxor.u32 %v7216, 2147483648
    %v7218 = vmul.f32 %v7217, 1.442695
    %v7219 = vpow.pop %v7218
    %v7220 = vadd.f32 %v7219, 1.0
    %v7221 = vrcp.pop %v7220
    %v7222 = vmul.f32 1.0, %v7221
    %v7223 = vtanh.pop %v7216
    %7225 = vrot.lane.b32.xlu0 %v7223, 64
    %v7226 = vpop.permute.xlu0 %7225
    %v7228 = vmul.f32 %v7222, %v7226
    %v7230 = vrot.slane %v7129, 2
    %v7232 = vmul.f32 %v7222, %v7230
    %7234 = vrot.lane.b32.xlu0 %v7228, 32
    %v7235 = vpop.permute.xlu0 %7234
    %v7237 = vadd.f32 %v7232, %v7235
    %v7238 = vtanh.pop %v7237
    %7240 = vrot.lane.b32.xlu0 %v7238, 64
    %v7241 = vpop.permute.xlu0 %7240
    %v7243 = vmul.f32 %v7222, %v7241
    %7245 = vrot.lane.b32.xlu0 %v7243, 64
    %v7246 = vpop.permute.xlu0 %7245
    %7248 = vst.msk [vmem:[#allocation5 + $0x8] sm:$0x3] %vm1573, %v7246
    %7249 = vrot.lane.b32.xlu0 %v7243, 32
    %v7250 = vpop.permute.xlu0 %7249
    %v7251 = vsel %vm442, %v7250, 0
    %7253 = vmatprep.subr.mxu0 0.0
    %7254 = vmatpush1.msra.mxu0 0.0
    %7255 = vmatprep.subr.mxu0 0.0
    %7256 = vmatpush1.msra.mxu0 0.0
    %7257 = vmatprep.subr.mxu0 0.0
    %7258 = vmatpush1.msra.mxu0 0.0
    %7259 = vmatprep.subr.mxu0 0.0
    %7260 = vmatpush1.msra.mxu0 0.0
    %7261 = vmatprep.subr.mxu0 0.0
    %7262 = vmatpush1.msra.mxu0 0.0
    %7263 = vmatprep.subr.mxu0 0.0
    %7264 = vmatpush1.msra.mxu0 0.0
    %7265 = vmatprep.subr.mxu0 0.0
    %7266 = vmatpush1.msra.mxu0 0.0
    %7267 = vmatprep.subr.mxu0 0.0
    %7268 = vmatpush1.msra.mxu0 0.0
    %7269 = vmatprep.subr.mxu0 0.0
    %7270 = vmatpush1.msra.mxu0 0.0
    %7271 = vmatprep.subr.mxu0 0.0
    %7272 = vmatpush1.msra.mxu0 0.0
    %7273 = vmatprep.subr.mxu0 0.0
    %7274 = vmatpush1.msra.mxu0 0.0
    %7275 = vmatprep.subr.mxu0 0.0
    %7276 = vmatpush1.msra.mxu0 0.0
    %7277 = vmatprep.subr.mxu0 0.0
    %7278 = vmatpush1.msra.mxu0 %v6893
    %7279 = vmatprep.subr.mxu0 0.0
    %7280 = vmatpush1.msra.mxu0 %v6892
    %7281 = vmatprep.subr.mxu0 0.0
    %7282 = vmatpush1.msra.mxu0 %v6891
    %7283 = vmatprep.subr.mxu0 0.0
    %7284 = vmatpush1.msra.mxu0 %v6890
    %7285 = vmatprep.subr.mxu0 0.0
    %7286 = vmatpush2.msra.mxu0 0.0
    %7287 = vmatprep.subr.mxu0 0.0
    %7288 = vmatpush2.msra.mxu0 0.0
    %7289 = vmatprep.subr.mxu0 0.0
    %7290 = vmatpush2.msra.mxu0 0.0
    %7291 = vmatprep.subr.mxu0 0.0
    %7292 = vmatpush2.msra.mxu0 0.0
    %7293 = vmatprep.subr.mxu0 0.0
    %7294 = vmatpush2.msra.mxu0 0.0
    %7295 = vmatprep.subr.mxu0 0.0
    %7296 = vmatpush2.msra.mxu0 0.0
    %7297 = vmatprep.subr.mxu0 0.0
    %7298 = vmatpush2.msra.mxu0 0.0
    %7299 = vmatprep.subr.mxu0 0.0
    %7300 = vmatpush2.msra.mxu0 0.0
    %7301 = vmatprep.subr.mxu0 0.0
    %7302 = vmatpush2.msra.mxu0 0.0
    %7303 = vmatprep.subr.mxu0 0.0
    %7304 = vmatpush2.msra.mxu0 0.0
    %7305 = vmatprep.subr.mxu0 0.0
    %7306 = vmatpush2.msra.mxu0 0.0
    %7307 = vmatprep.subr.mxu0 0.0
    %7308 = vmatpush2.msra.mxu0 0.0
    %7309 = vmatprep.subr.mxu0 0.0
    %7310 = vmatpush2.msra.mxu0 0.0
    %7311 = vmatprep.subr.mxu0 0.0
    %7312 = vmatpush2.msra.mxu0 0.0
    %7313 = vmatprep.subr.mxu0 0.0
    %7314 = vmatpush2.msra.mxu0 0.0
    %7315 = vmatprep.subr.mxu0 0.0
    %7316 = vmatpush2.msra.mxu0 0.0
    %7317 = vmatprep.mubr.f32.mxu0 0.0
    %7318 = vmatmul.mubr.f32.gmra.mxu0 %v7251
    %v7319 = vpop.f32.mrf.mxu0
    %v7320 = vadd.f32 0.0, %v7319
    %v7321 = vpop.f32.mrf.mxu0
    %7322 = vdwg.mxu0
    %v7324 = vrot.slane %v7320, 2
    %v7326 = vadd.f32 %v6091, %v7324
    %v7327 = vxor.u32 %v7326, 2147483648
    %v7328 = vmul.f32 %v7327, 1.442695
    %v7329 = vpow.pop %v7328
    %v7330 = vadd.f32 %v7329, 1.0
    %v7331 = vrcp.pop %v7330
    %v7332 = vmul.f32 1.0, %v7331
    %v7333 = vtanh.pop %v7326
    %7335 = vrot.lane.b32.xlu0 %v7333, 64
    %v7336 = vpop.permute.xlu0 %7335
    %v7338 = vmul.f32 %v7332, %v7336
    %v7340 = vrot.slane %v7237, 2
    %v7342 = vmul.f32 %v7332, %v7340
    %7344 = vrot.lane.b32.xlu0 %v7338, 32
    %v7345 = vpop.permute.xlu0 %7344
    %v7347 = vadd.f32 %v7342, %v7345
    %v7348 = vtanh.pop %v7347
    %7350 = vrot.lane.b32.xlu0 %v7348, 64
    %v7351 = vpop.permute.xlu0 %7350
    %v7353 = vmul.f32 %v7332, %v7351
    %7355 = vrot.lane.b32.xlu0 %v7353, 64
    %v7356 = vpop.permute.xlu0 %7355
    %7358 = vst.msk [vmem:[#allocation5] sm:$0xc0] %vm1238, %v7356
    %v7359 = vrot.slane %v7353, 6
    %7360 = vrot.lane.b32.xlu0 %v7359, 32
    %v7361 = vpop.permute.xlu0 %7360
    %v7362 = vsel %vm442, %v7361, 0
    %7364 = vmatprep.subr.mxu0 0.0
    %7365 = vmatpush1.msra.mxu0 0.0
    %7366 = vmatprep.subr.mxu0 0.0
    %7367 = vmatpush1.msra.mxu0 0.0
    %7368 = vmatprep.subr.mxu0 0.0
    %7369 = vmatpush1.msra.mxu0 0.0
    %7370 = vmatprep.subr.mxu0 0.0
    %7371 = vmatpush1.msra.mxu0 0.0
    %7372 = vmatprep.subr.mxu0 0.0
    %7373 = vmatpush1.msra.mxu0 0.0
    %7374 = vmatprep.subr.mxu0 0.0
    %7375 = vmatpush1.msra.mxu0 0.0
    %7376 = vmatprep.subr.mxu0 0.0
    %7377 = vmatpush1.msra.mxu0 0.0
    %7378 = vmatprep.subr.mxu0 0.0
    %7379 = vmatpush1.msra.mxu0 0.0
    %7380 = vmatprep.subr.mxu0 0.0
    %7381 = vmatpush1.msra.mxu0 0.0
    %7382 = vmatprep.subr.mxu0 0.0
    %7383 = vmatpush1.msra.mxu0 0.0
    %7384 = vmatprep.subr.mxu0 0.0
    %7385 = vmatpush1.msra.mxu0 0.0
    %7386 = vmatprep.subr.mxu0 0.0
    %7387 = vmatpush1.msra.mxu0 0.0
    %7388 = vmatprep.subr.mxu0 0.0
    %7389 = vmatpush1.msra.mxu0 %v6893
    %7390 = vmatprep.subr.mxu0 0.0
    %7391 = vmatpush1.msra.mxu0 %v6892
    %7392 = vmatprep.subr.mxu0 0.0
    %7393 = vmatpush1.msra.mxu0 %v6891
    %7394 = vmatprep.subr.mxu0 0.0
    %7395 = vmatpush1.msra.mxu0 %v6890
    %7396 = vmatprep.subr.mxu0 0.0
    %7397 = vmatpush2.msra.mxu0 0.0
    %7398 = vmatprep.subr.mxu0 0.0
    %7399 = vmatpush2.msra.mxu0 0.0
    %7400 = vmatprep.subr.mxu0 0.0
    %7401 = vmatpush2.msra.mxu0 0.0
    %7402 = vmatprep.subr.mxu0 0.0
    %7403 = vmatpush2.msra.mxu0 0.0
    %7404 = vmatprep.subr.mxu0 0.0
    %7405 = vmatpush2.msra.mxu0 0.0
    %7406 = vmatprep.subr.mxu0 0.0
    %7407 = vmatpush2.msra.mxu0 0.0
    %7408 = vmatprep.subr.mxu0 0.0
    %7409 = vmatpush2.msra.mxu0 0.0
    %7410 = vmatprep.subr.mxu0 0.0
    %7411 = vmatpush2.msra.mxu0 0.0
    %7412 = vmatprep.subr.mxu0 0.0
    %7413 = vmatpush2.msra.mxu0 0.0
    %7414 = vmatprep.subr.mxu0 0.0
    %7415 = vmatpush2.msra.mxu0 0.0
    %7416 = vmatprep.subr.mxu0 0.0
    %7417 = vmatpush2.msra.mxu0 0.0
    %7418 = vmatprep.subr.mxu0 0.0
    %7419 = vmatpush2.msra.mxu0 0.0
    %7420 = vmatprep.subr.mxu0 0.0
    %7421 = vmatpush2.msra.mxu0 0.0
    %7422 = vmatprep.subr.mxu0 0.0
    %7423 = vmatpush2.msra.mxu0 0.0
    %7424 = vmatprep.subr.mxu0 0.0
    %7425 = vmatpush2.msra.mxu0 0.0
    %7426 = vmatprep.subr.mxu0 0.0
    %7427 = vmatpush2.msra.mxu0 0.0
    %7428 = vmatprep.mubr.f32.mxu0 0.0
    %7429 = vmatmul.mubr.f32.gmra.mxu0 %v7362
    %v7430 = vpop.f32.mrf.mxu0
    %v7431 = vadd.f32 0.0, %v7430
    %v7432 = vpop.f32.mrf.mxu0
    %7433 = vdwg.mxu0
    %v7435 = vrot.slane %v7431, 4
    %v7437 = vadd.f32 %v6091, %v7435
    %v7438 = vxor.u32 %v7437, 2147483648
    %v7439 = vmul.f32 %v7438, 1.442695
    %v7440 = vpow.pop %v7439
    %v7441 = vadd.f32 %v7440, 1.0
    %v7442 = vrcp.pop %v7441
    %v7443 = vmul.f32 1.0, %v7442
    %v7444 = vtanh.pop %v7437
    %7446 = vrot.lane.b32.xlu0 %v7444, 64
    %v7447 = vpop.permute.xlu0 %7446
    %v7449 = vmul.f32 %v7443, %v7447
    %v7451 = vrot.slane %v7347, 2
    %v7453 = vmul.f32 %v7443, %v7451
    %7455 = vrot.lane.b32.xlu0 %v7449, 32
    %v7456 = vpop.permute.xlu0 %7455
    %v7458 = vadd.f32 %v7453, %v7456
    %v7459 = vtanh.pop %v7458
    %7461 = vrot.lane.b32.xlu0 %v7459, 64
    %v7462 = vpop.permute.xlu0 %7461
    %v7464 = vmul.f32 %v7443, %v7462
    %7466 = vrot.lane.b32.xlu0 %v7464, 64
    %v7467 = vpop.permute.xlu0 %7466
    %7469 = vst.msk [vmem:[#allocation5] sm:$0x30] %vm1352, %v7467
    %v7470 = vrot.slane %v7464, 4
    %7471 = vrot.lane.b32.xlu0 %v7470, 32
    %v7472 = vpop.permute.xlu0 %7471
    %v7473 = vsel %vm442, %v7472, 0
    %7475 = vmatprep.subr.mxu0 0.0
    %7476 = vmatpush1.msra.mxu0 0.0
    %7477 = vmatprep.subr.mxu0 0.0
    %7478 = vmatpush1.msra.mxu0 0.0
    %7479 = vmatprep.subr.mxu0 0.0
    %7480 = vmatpush1.msra.mxu0 0.0
    %7481 = vmatprep.subr.mxu0 0.0
    %7482 = vmatpush1.msra.mxu0 0.0
    %7483 = vmatprep.subr.mxu0 0.0
    %7484 = vmatpush1.msra.mxu0 0.0
    %7485 = vmatprep.subr.mxu0 0.0
    %7486 = vmatpush1.msra.mxu0 0.0
    %7487 = vmatprep.subr.mxu0 0.0
    %7488 = vmatpush1.msra.mxu0 0.0
    %7489 = vmatprep.subr.mxu0 0.0
    %7490 = vmatpush1.msra.mxu0 0.0
    %7491 = vmatprep.subr.mxu0 0.0
    %7492 = vmatpush1.msra.mxu0 0.0
    %7493 = vmatprep.subr.mxu0 0.0
    %7494 = vmatpush1.msra.mxu0 0.0
    %7495 = vmatprep.subr.mxu0 0.0
    %7496 = vmatpush1.msra.mxu0 0.0
    %7497 = vmatprep.subr.mxu0 0.0
    %7498 = vmatpush1.msra.mxu0 0.0
    %7499 = vmatprep.subr.mxu0 0.0
    %7500 = vmatpush1.msra.mxu0 %v6893
    %7501 = vmatprep.subr.mxu0 0.0
    %7502 = vmatpush1.msra.mxu0 %v6892
    %7503 = vmatprep.subr.mxu0 0.0
    %7504 = vmatpush1.msra.mxu0 %v6891
    %7505 = vmatprep.subr.mxu0 0.0
    %7506 = vmatpush1.msra.mxu0 %v6890
    %7507 = vmatprep.subr.mxu0 0.0
    %7508 = vmatpush2.msra.mxu0 0.0
    %7509 = vmatprep.subr.mxu0 0.0
    %7510 = vmatpush2.msra.mxu0 0.0
    %7511 = vmatprep.subr.mxu0 0.0
    %7512 = vmatpush2.msra.mxu0 0.0
    %7513 = vmatprep.subr.mxu0 0.0
    %7514 = vmatpush2.msra.mxu0 0.0
    %7515 = vmatprep.subr.mxu0 0.0
    %7516 = vmatpush2.msra.mxu0 0.0
    %7517 = vmatprep.subr.mxu0 0.0
    %7518 = vmatpush2.msra.mxu0 0.0
    %7519 = vmatprep.subr.mxu0 0.0
    %7520 = vmatpush2.msra.mxu0 0.0
    %7521 = vmatprep.subr.mxu0 0.0
    %7522 = vmatpush2.msra.mxu0 0.0
    %7523 = vmatprep.subr.mxu0 0.0
    %7524 = vmatpush2.msra.mxu0 0.0
    %7525 = vmatprep.subr.mxu0 0.0
    %7526 = vmatpush2.msra.mxu0 0.0
    %7527 = vmatprep.subr.mxu0 0.0
    %7528 = vmatpush2.msra.mxu0 0.0
    %7529 = vmatprep.subr.mxu0 0.0
    %7530 = vmatpush2.msra.mxu0 0.0
    %7531 = vmatprep.subr.mxu0 0.0
    %7532 = vmatpush2.msra.mxu0 0.0
    %7533 = vmatprep.subr.mxu0 0.0
    %7534 = vmatpush2.msra.mxu0 0.0
    %7535 = vmatprep.subr.mxu0 0.0
    %7536 = vmatpush2.msra.mxu0 0.0
    %7537 = vmatprep.subr.mxu0 0.0
    %7538 = vmatpush2.msra.mxu0 0.0
    %7539 = vmatprep.mubr.f32.mxu0 0.0
    %7540 = vmatmul.mubr.f32.gmra.mxu0 %v7473
    %v7541 = vpop.f32.mrf.mxu0
    %v7542 = vadd.f32 0.0, %v7541
    %v7543 = vpop.f32.mrf.mxu0
    %7544 = vdwg.mxu0
    %v7546 = vrot.slane %v7542, 6
    %v7548 = vadd.f32 %v6091, %v7546
    %v7549 = vxor.u32 %v7548, 2147483648
    %v7550 = vmul.f32 %v7549, 1.442695
    %v7551 = vpow.pop %v7550
    %v7552 = vadd.f32 %v7551, 1.0
    %v7553 = vrcp.pop %v7552
    %v7554 = vmul.f32 1.0, %v7553
    %v7555 = vtanh.pop %v7548
    %7557 = vrot.lane.b32.xlu0 %v7555, 64
    %v7558 = vpop.permute.xlu0 %7557
    %v7560 = vmul.f32 %v7554, %v7558
    %v7562 = vrot.slane %v7458, 2
    %v7564 = vmul.f32 %v7554, %v7562
    %7566 = vrot.lane.b32.xlu0 %v7560, 32
    %v7567 = vpop.permute.xlu0 %7566
    %v7569 = vadd.f32 %v7564, %v7567
    %v7570 = vtanh.pop %v7569
    %7572 = vrot.lane.b32.xlu0 %v7570, 64
    %v7573 = vpop.permute.xlu0 %7572
    %v7575 = vmul.f32 %v7554, %v7573
    %7577 = vrot.lane.b32.xlu0 %v7575, 64
    %v7578 = vpop.permute.xlu0 %7577
    %7580 = vst.msk [vmem:[#allocation5] sm:$0xc] %vm1464, %v7578
    %v7581 = vrot.slane %v7575, 2
    %7582 = vrot.lane.b32.xlu0 %v7581, 32
    %v7583 = vpop.permute.xlu0 %7582
    %v7584 = vsel %vm442, %v7583, 0
    %7586 = vmatprep.subr.mxu0 0.0
    %7587 = vmatpush1.msra.mxu0 0.0
    %7588 = vmatprep.subr.mxu0 0.0
    %7589 = vmatpush1.msra.mxu0 0.0
    %7590 = vmatprep.subr.mxu0 0.0
    %7591 = vmatpush1.msra.mxu0 0.0
    %7592 = vmatprep.subr.mxu0 0.0
    %7593 = vmatpush1.msra.mxu0 0.0
    %7594 = vmatprep.subr.mxu0 0.0
    %7595 = vmatpush1.msra.mxu0 0.0
    %7596 = vmatprep.subr.mxu0 0.0
    %7597 = vmatpush1.msra.mxu0 0.0
    %7598 = vmatprep.subr.mxu0 0.0
    %7599 = vmatpush1.msra.mxu0 0.0
    %7600 = vmatprep.subr.mxu0 0.0
    %7601 = vmatpush1.msra.mxu0 0.0
    %7602 = vmatprep.subr.mxu0 0.0
    %7603 = vmatpush1.msra.mxu0 0.0
    %7604 = vmatprep.subr.mxu0 0.0
    %7605 = vmatpush1.msra.mxu0 0.0
    %7606 = vmatprep.subr.mxu0 0.0
    %7607 = vmatpush1.msra.mxu0 0.0
    %7608 = vmatprep.subr.mxu0 0.0
    %7609 = vmatpush1.msra.mxu0 0.0
    %7610 = vmatprep.subr.mxu0 0.0
    %7611 = vmatpush1.msra.mxu0 %v6893
    %7612 = vmatprep.subr.mxu0 0.0
    %7613 = vmatpush1.msra.mxu0 %v6892
    %7614 = vmatprep.subr.mxu0 0.0
    %7615 = vmatpush1.msra.mxu0 %v6891
    %7616 = vmatprep.subr.mxu0 0.0
    %7617 = vmatpush1.msra.mxu0 %v6890
    %7618 = vmatprep.subr.mxu0 0.0
    %7619 = vmatpush2.msra.mxu0 0.0
    %7620 = vmatprep.subr.mxu0 0.0
    %7621 = vmatpush2.msra.mxu0 0.0
    %7622 = vmatprep.subr.mxu0 0.0
    %7623 = vmatpush2.msra.mxu0 0.0
    %7624 = vmatprep.subr.mxu0 0.0
    %7625 = vmatpush2.msra.mxu0 0.0
    %7626 = vmatprep.subr.mxu0 0.0
    %7627 = vmatpush2.msra.mxu0 0.0
    %7628 = vmatprep.subr.mxu0 0.0
    %7629 = vmatpush2.msra.mxu0 0.0
    %7630 = vmatprep.subr.mxu0 0.0
    %7631 = vmatpush2.msra.mxu0 0.0
    %7632 = vmatprep.subr.mxu0 0.0
    %7633 = vmatpush2.msra.mxu0 0.0
    %7634 = vmatprep.subr.mxu0 0.0
    %7635 = vmatpush2.msra.mxu0 0.0
    %7636 = vmatprep.subr.mxu0 0.0
    %7637 = vmatpush2.msra.mxu0 0.0
    %7638 = vmatprep.subr.mxu0 0.0
    %7639 = vmatpush2.msra.mxu0 0.0
    %7640 = vmatprep.subr.mxu0 0.0
    %7641 = vmatpush2.msra.mxu0 0.0
    %7642 = vmatprep.subr.mxu0 0.0
    %7643 = vmatpush2.msra.mxu0 0.0
    %7644 = vmatprep.subr.mxu0 0.0
    %7645 = vmatpush2.msra.mxu0 0.0
    %7646 = vmatprep.subr.mxu0 0.0
    %7647 = vmatpush2.msra.mxu0 0.0
    %7648 = vmatprep.subr.mxu0 0.0
    %7649 = vmatpush2.msra.mxu0 0.0
    %7650 = vmatprep.mubr.f32.mxu0 0.0
    %7651 = vmatmul.mubr.f32.gmra.mxu0 %v7584
    %v7652 = vpop.f32.mrf.mxu0
    %v7653 = vadd.f32 0.0, %v7652
    %v7654 = vpop.f32.mrf.mxu0
    %7655 = vdwg.mxu0
    %v7656 = vadd.f32 %v6091, %v7653
    %v7657 = vxor.u32 %v7656, 2147483648
    %v7658 = vmul.f32 %v7657, 1.442695
    %v7659 = vpow.pop %v7658
    %v7660 = vadd.f32 %v7659, 1.0
    %v7661 = vrcp.pop %v7660
    %v7662 = vmul.f32 1.0, %v7661
    %v7663 = vtanh.pop %v7656
    %7665 = vrot.lane.b32.xlu0 %v7663, 64
    %v7666 = vpop.permute.xlu0 %7665
    %v7668 = vmul.f32 %v7662, %v7666
    %v7670 = vrot.slane %v7569, 2
    %v7672 = vmul.f32 %v7662, %v7670
    %7674 = vrot.lane.b32.xlu0 %v7668, 32
    %v7675 = vpop.permute.xlu0 %7674
    %v7677 = vadd.f32 %v7672, %v7675
    %v7678 = vtanh.pop %v7677
    %7680 = vrot.lane.b32.xlu0 %v7678, 64
    %v7681 = vpop.permute.xlu0 %7680
    %v7683 = vmul.f32 %v7662, %v7681
    %7685 = vrot.lane.b32.xlu0 %v7683, 64
    %v7686 = vpop.permute.xlu0 %7685
    %7688 = vst.msk [vmem:[#allocation5] sm:$0x3] %vm1573, %v7686
    %v7689 = vld [vmem:[#allocation5] sm:$0xff]
    %v7690 = vld [vmem:[#allocation5 + $0x8] sm:$0xff]
    %v7691 = vld [vmem:[%s61] sm:$0xff]
    %v7692 = vld [vmem:[%s61 + $0x8] sm:$0xff]
    %v7693 = vld [vmem:[%s61 + $0x10] sm:$0xff]
    %v7694 = vld [vmem:[%s61 + $0x18] sm:$0xff]
    %v7695 = vld [vmem:[%s61 + $0x20] sm:$0xff]
    %v7696 = vld [vmem:[%s61 + $0x28] sm:$0xff]
    %v7697 = vld [vmem:[%s61 + $0x30] sm:$0xff]
    %v7698 = vld [vmem:[%s61 + $0x38] sm:$0xff]
    %v7699 = vld [vmem:[#allocation7] sm:$0x1]
    %v7701 = vlaneseq
    %v7702 = vshrl.u32 %v7701, 7
    %v7703 = vsub.s32 0, %v7702
    %v7704 = vrot.slane %v7699, %v7703
    %v7707 = vsel %vm2036, %v7689, 0
    %v7710 = vsel %vm2036, %v7690, 0
    %7712 = vmatprep.subr.mxu0 0.0
    %7713 = vmatpush1.msra.mxu0 0.0
    %7714 = vmatprep.subr.mxu0 0.0
    %7715 = vmatpush1.msra.mxu0 0.0
    %7716 = vmatprep.subr.mxu0 0.0
    %7717 = vmatpush1.msra.mxu0 0.0
    %7718 = vmatprep.subr.mxu0 0.0
    %7719 = vmatpush1.msra.mxu0 0.0
    %7720 = vmatprep.subr.mxu0 0.0
    %7721 = vmatpush1.msra.mxu0 0.0
    %7722 = vmatprep.subr.mxu0 0.0
    %7723 = vmatpush1.msra.mxu0 0.0
    %7724 = vmatprep.subr.mxu0 0.0
    %7725 = vmatpush1.msra.mxu0 0.0
    %7726 = vmatprep.subr.mxu0 0.0
    %7727 = vmatpush1.msra.mxu0 0.0
    %7728 = vmatprep.subr.mxu0 0.0
    %7729 = vmatpush1.msra.mxu0 %v7698
    %7730 = vmatprep.subr.mxu0 0.0
    %7731 = vmatpush1.msra.mxu0 %v7697
    %7732 = vmatprep.subr.mxu0 0.0
    %7733 = vmatpush1.msra.mxu0 %v7696
    %7734 = vmatprep.subr.mxu0 0.0
    %7735 = vmatpush1.msra.mxu0 %v7695
    %7736 = vmatprep.subr.mxu0 0.0
    %7737 = vmatpush1.msra.mxu0 %v7694
    %7738 = vmatprep.subr.mxu0 0.0
    %7739 = vmatpush1.msra.mxu0 %v7693
    %7740 = vmatprep.subr.mxu0 0.0
    %7741 = vmatpush1.msra.mxu0 %v7692
    %7742 = vmatprep.subr.mxu0 0.0
    %7743 = vmatpush1.msra.mxu0 %v7691
    %7744 = vmatprep.subr.mxu0 0.0
    %7745 = vmatpush2.msra.mxu0 0.0
    %7746 = vmatprep.subr.mxu0 0.0
    %7747 = vmatpush2.msra.mxu0 0.0
    %7748 = vmatprep.subr.mxu0 0.0
    %7749 = vmatpush2.msra.mxu0 0.0
    %7750 = vmatprep.subr.mxu0 0.0
    %7751 = vmatpush2.msra.mxu0 0.0
    %7752 = vmatprep.subr.mxu0 0.0
    %7753 = vmatpush2.msra.mxu0 0.0
    %7754 = vmatprep.subr.mxu0 0.0
    %7755 = vmatpush2.msra.mxu0 0.0
    %7756 = vmatprep.subr.mxu0 0.0
    %7757 = vmatpush2.msra.mxu0 0.0
    %7758 = vmatprep.subr.mxu0 0.0
    %7759 = vmatpush2.msra.mxu0 0.0
    %7760 = vmatprep.subr.mxu0 0.0
    %7761 = vmatpush2.msra.mxu0 0.0
    %7762 = vmatprep.subr.mxu0 0.0
    %7763 = vmatpush2.msra.mxu0 0.0
    %7764 = vmatprep.subr.mxu0 0.0
    %7765 = vmatpush2.msra.mxu0 0.0
    %7766 = vmatprep.subr.mxu0 0.0
    %7767 = vmatpush2.msra.mxu0 0.0
    %7768 = vmatprep.subr.mxu0 0.0
    %7769 = vmatpush2.msra.mxu0 0.0
    %7770 = vmatprep.subr.mxu0 0.0
    %7771 = vmatpush2.msra.mxu0 0.0
    %7772 = vmatprep.subr.mxu0 0.0
    %7773 = vmatpush2.msra.mxu0 0.0
    %7774 = vmatprep.subr.mxu0 0.0
    %7775 = vmatpush2.msra.mxu0 0.0
    %7776 = vmatprep.mubr.f32.mxu0 0.0
    %7777 = vmatmul.mubr.f32.gmra.mxu0 %v7707
    %v7778 = vpop.f32.mrf.mxu0
    %v7779 = vadd.f32 %v7704, %v7778
    %v7780 = vpop.f32.mrf.mxu0
    %7781 = vmatprep.mubr.f32.mxu0 0.0
    %7782 = vmatmul.mubr.f32.gmra.mxu0 %v7710
    %v7783 = vpop.f32.mrf.mxu0
    %v7784 = vadd.f32 %v7704, %v7783
    %v7785 = vpop.f32.mrf.mxu0
    %7786 = vdwg.mxu0
    %v7787 = vld [vmem:[%s63] sm:$0xff]
    %v7788 = vld [vmem:[%s63 + $0x8] sm:$0xff]
    %v7789 = vld [vmem:[%s63 + $0x10] sm:$0xff]
    %v7790 = vld [vmem:[%s63 + $0x18] sm:$0xff]
    %v7791 = vxor.u32 %v7779, 2147483648
    %v7792 = vmul.f32 %v7791, 1.442695
    %v7793 = vpow.pop %v7792
    %v7794 = vadd.f32 %v7793, 1.0
    %v7795 = vrcp.pop %v7794
    %v7796 = vmul.f32 1.0, %v7795
    %v7797 = vtanh.pop %v7779
    %7799 = vrot.lane.b32.xlu0 %v7797, 64
    %v7800 = vpop.permute.xlu0 %7799
    %v7802 = vmul.f32 %v7796, %v7800
    %v7803 = vtanh.pop %v7802
    %7805 = vrot.lane.b32.xlu0 %v7803, 96
    %v7806 = vpop.permute.xlu0 %7805
    %v7808 = vmul.f32 %v7796, %v7806
    %7810 = vrot.lane.b32.xlu0 %v7808, 32
    %v7811 = vpop.permute.xlu0 %7810
    %v7812 = vsel %vm442, %v7811, 0
    %7814 = vmatprep.subr.mxu0 0.0
    %7815 = vmatpush1.msra.mxu0 0.0
    %7816 = vmatprep.subr.mxu0 0.0
    %7817 = vmatpush1.msra.mxu0 0.0
    %7818 = vmatprep.subr.mxu0 0.0
    %7819 = vmatpush1.msra.mxu0 0.0
    %7820 = vmatprep.subr.mxu0 0.0
    %7821 = vmatpush1.msra.mxu0 0.0
    %7822 = vmatprep.subr.mxu0 0.0
    %7823 = vmatpush1.msra.mxu0 0.0
    %7824 = vmatprep.subr.mxu0 0.0
    %7825 = vmatpush1.msra.mxu0 0.0
    %7826 = vmatprep.subr.mxu0 0.0
    %7827 = vmatpush1.msra.mxu0 0.0
    %7828 = vmatprep.subr.mxu0 0.0
    %7829 = vmatpush1.msra.mxu0 0.0
    %7830 = vmatprep.subr.mxu0 0.0
    %7831 = vmatpush1.msra.mxu0 0.0
    %7832 = vmatprep.subr.mxu0 0.0
    %7833 = vmatpush1.msra.mxu0 0.0
    %7834 = vmatprep.subr.mxu0 0.0
    %7835 = vmatpush1.msra.mxu0 0.0
    %7836 = vmatprep.subr.mxu0 0.0
    %7837 = vmatpush1.msra.mxu0 0.0
    %7838 = vmatprep.subr.mxu0 0.0
    %7839 = vmatpush1.msra.mxu0 %v7790
    %7840 = vmatprep.subr.mxu0 0.0
    %7841 = vmatpush1.msra.mxu0 %v7789
    %7842 = vmatprep.subr.mxu0 0.0
    %7843 = vmatpush1.msra.mxu0 %v7788
    %7844 = vmatprep.subr.mxu0 0.0
    %7845 = vmatpush1.msra.mxu0 %v7787
    %7846 = vmatprep.subr.mxu0 0.0
    %7847 = vmatpush2.msra.mxu0 0.0
    %7848 = vmatprep.subr.mxu0 0.0
    %7849 = vmatpush2.msra.mxu0 0.0
    %7850 = vmatprep.subr.mxu0 0.0
    %7851 = vmatpush2.msra.mxu0 0.0
    %7852 = vmatprep.subr.mxu0 0.0
    %7853 = vmatpush2.msra.mxu0 0.0
    %7854 = vmatprep.subr.mxu0 0.0
    %7855 = vmatpush2.msra.mxu0 0.0
    %7856 = vmatprep.subr.mxu0 0.0
    %7857 = vmatpush2.msra.mxu0 0.0
    %7858 = vmatprep.subr.mxu0 0.0
    %7859 = vmatpush2.msra.mxu0 0.0
    %7860 = vmatprep.subr.mxu0 0.0
    %7861 = vmatpush2.msra.mxu0 0.0
    %7862 = vmatprep.subr.mxu0 0.0
    %7863 = vmatpush2.msra.mxu0 0.0
    %7864 = vmatprep.subr.mxu0 0.0
    %7865 = vmatpush2.msra.mxu0 0.0
    %7866 = vmatprep.subr.mxu0 0.0
    %7867 = vmatpush2.msra.mxu0 0.0
    %7868 = vmatprep.subr.mxu0 0.0
    %7869 = vmatpush2.msra.mxu0 0.0
    %7870 = vmatprep.subr.mxu0 0.0
    %7871 = vmatpush2.msra.mxu0 0.0
    %7872 = vmatprep.subr.mxu0 0.0
    %7873 = vmatpush2.msra.mxu0 0.0
    %7874 = vmatprep.subr.mxu0 0.0
    %7875 = vmatpush2.msra.mxu0 0.0
    %7876 = vmatprep.subr.mxu0 0.0
    %7877 = vmatpush2.msra.mxu0 0.0
    %7878 = vmatprep.mubr.f32.mxu0 0.0
    %7879 = vmatmul.mubr.f32.gmra.mxu0 %v7812
    %v7880 = vpop.f32.mrf.mxu0
    %v7881 = vadd.f32 0.0, %v7880
    %v7882 = vpop.f32.mrf.mxu0
    %7883 = vdwg.mxu0
    %v7885 = vrot.slane %v7881, 6
    %v7887 = vadd.f32 %v7779, %v7885
    %v7888 = vxor.u32 %v7887, 2147483648
    %v7889 = vmul.f32 %v7888, 1.442695
    %v7890 = vpow.pop %v7889
    %v7891 = vadd.f32 %v7890, 1.0
    %v7892 = vrcp.pop %v7891
    %v7893 = vmul.f32 1.0, %v7892
    %v7894 = vtanh.pop %v7887
    %7896 = vrot.lane.b32.xlu0 %v7894, 64
    %v7897 = vpop.permute.xlu0 %7896
    %v7899 = vmul.f32 %v7893, %v7897
    %v7901 = vrot.slane %v7802, 6
    %7902 = vrot.lane.b32.xlu0 %v7901, 32
    %v7903 = vpop.permute.xlu0 %7902
    %v7905 = vmul.f32 %v7893, %v7903
    %7907 = vrot.lane.b32.xlu0 %v7899, 32
    %v7908 = vpop.permute.xlu0 %7907
    %v7910 = vadd.f32 %v7905, %v7908
    %v7911 = vtanh.pop %v7910
    %7913 = vrot.lane.b32.xlu0 %v7911, 64
    %v7914 = vpop.permute.xlu0 %7913
    %v7916 = vmul.f32 %v7893, %v7914
    %v7918 = vrot.slane %v7916, 2
    %7919 = vrot.lane.b32.xlu0 %v7918, 32
    %v7920 = vpop.permute.xlu0 %7919
    %v7921 = vsel %vm442, %v7920, 0
    %7923 = vmatprep.subr.mxu0 0.0
    %7924 = vmatpush1.msra.mxu0 0.0
    %7925 = vmatprep.subr.mxu0 0.0
    %7926 = vmatpush1.msra.mxu0 0.0
    %7927 = vmatprep.subr.mxu0 0.0
    %7928 = vmatpush1.msra.mxu0 0.0
    %7929 = vmatprep.subr.mxu0 0.0
    %7930 = vmatpush1.msra.mxu0 0.0
    %7931 = vmatprep.subr.mxu0 0.0
    %7932 = vmatpush1.msra.mxu0 0.0
    %7933 = vmatprep.subr.mxu0 0.0
    %7934 = vmatpush1.msra.mxu0 0.0
    %7935 = vmatprep.subr.mxu0 0.0
    %7936 = vmatpush1.msra.mxu0 0.0
    %7937 = vmatprep.subr.mxu0 0.0
    %7938 = vmatpush1.msra.mxu0 0.0
    %7939 = vmatprep.subr.mxu0 0.0
    %7940 = vmatpush1.msra.mxu0 0.0
    %7941 = vmatprep.subr.mxu0 0.0
    %7942 = vmatpush1.msra.mxu0 0.0
    %7943 = vmatprep.subr.mxu0 0.0
    %7944 = vmatpush1.msra.mxu0 0.0
    %7945 = vmatprep.subr.mxu0 0.0
    %7946 = vmatpush1.msra.mxu0 0.0
    %7947 = vmatprep.subr.mxu0 0.0
    %7948 = vmatpush1.msra.mxu0 %v7790
    %7949 = vmatprep.subr.mxu0 0.0
    %7950 = vmatpush1.msra.mxu0 %v7789
    %7951 = vmatprep.subr.mxu0 0.0
    %7952 = vmatpush1.msra.mxu0 %v7788
    %7953 = vmatprep.subr.mxu0 0.0
    %7954 = vmatpush1.msra.mxu0 %v7787
    %7955 = vmatprep.subr.mxu0 0.0
    %7956 = vmatpush2.msra.mxu0 0.0
    %7957 = vmatprep.subr.mxu0 0.0
    %7958 = vmatpush2.msra.mxu0 0.0
    %7959 = vmatprep.subr.mxu0 0.0
    %7960 = vmatpush2.msra.mxu0 0.0
    %7961 = vmatprep.subr.mxu0 0.0
    %7962 = vmatpush2.msra.mxu0 0.0
    %7963 = vmatprep.subr.mxu0 0.0
    %7964 = vmatpush2.msra.mxu0 0.0
    %7965 = vmatprep.subr.mxu0 0.0
    %7966 = vmatpush2.msra.mxu0 0.0
    %7967 = vmatprep.subr.mxu0 0.0
    %7968 = vmatpush2.msra.mxu0 0.0
    %7969 = vmatprep.subr.mxu0 0.0
    %7970 = vmatpush2.msra.mxu0 0.0
    %7971 = vmatprep.subr.mxu0 0.0
    %7972 = vmatpush2.msra.mxu0 0.0
    %7973 = vmatprep.subr.mxu0 0.0
    %7974 = vmatpush2.msra.mxu0 0.0
    %7975 = vmatprep.subr.mxu0 0.0
    %7976 = vmatpush2.msra.mxu0 0.0
    %7977 = vmatprep.subr.mxu0 0.0
    %7978 = vmatpush2.msra.mxu0 0.0
    %7979 = vmatprep.subr.mxu0 0.0
    %7980 = vmatpush2.msra.mxu0 0.0
    %7981 = vmatprep.subr.mxu0 0.0
    %7982 = vmatpush2.msra.mxu0 0.0
    %7983 = vmatprep.subr.mxu0 0.0
    %7984 = vmatpush2.msra.mxu0 0.0
    %7985 = vmatprep.subr.mxu0 0.0
    %7986 = vmatpush2.msra.mxu0 0.0
    %7987 = vmatprep.mubr.f32.mxu0 0.0
    %7988 = vmatmul.mubr.f32.gmra.mxu0 %v7921
    %v7989 = vpop.f32.mrf.mxu0
    %v7990 = vadd.f32 0.0, %v7989
    %v7991 = vpop.f32.mrf.mxu0
    %7992 = vdwg.mxu0
    %v7994 = vrot.slane %v7990, 4
    %v7996 = vadd.f32 %v7779, %v7994
    %v7997 = vxor.u32 %v7996, 2147483648
    %v7998 = vmul.f32 %v7997, 1.442695
    %v7999 = vpow.pop %v7998
    %v8000 = vadd.f32 %v7999, 1.0
    %v8001 = vrcp.pop %v8000
    %v8002 = vmul.f32 1.0, %v8001
    %v8003 = vtanh.pop %v7996
    %8005 = vrot.lane.b32.xlu0 %v8003, 64
    %v8006 = vpop.permute.xlu0 %8005
    %v8008 = vmul.f32 %v8002, %v8006
    %v8010 = vrot.slane %v7910, 6
    %v8012 = vmul.f32 %v8002, %v8010
    %8014 = vrot.lane.b32.xlu0 %v8008, 32
    %v8015 = vpop.permute.xlu0 %8014
    %v8017 = vadd.f32 %v8012, %v8015
    %v8018 = vtanh.pop %v8017
    %8020 = vrot.lane.b32.xlu0 %v8018, 64
    %v8021 = vpop.permute.xlu0 %8020
    %v8023 = vmul.f32 %v8002, %v8021
    %v8025 = vrot.slane %v8023, 4
    %8026 = vrot.lane.b32.xlu0 %v8025, 32
    %v8027 = vpop.permute.xlu0 %8026
    %v8028 = vsel %vm442, %v8027, 0
    %8030 = vmatprep.subr.mxu0 0.0
    %8031 = vmatpush1.msra.mxu0 0.0
    %8032 = vmatprep.subr.mxu0 0.0
    %8033 = vmatpush1.msra.mxu0 0.0
    %8034 = vmatprep.subr.mxu0 0.0
    %8035 = vmatpush1.msra.mxu0 0.0
    %8036 = vmatprep.subr.mxu0 0.0
    %8037 = vmatpush1.msra.mxu0 0.0
    %8038 = vmatprep.subr.mxu0 0.0
    %8039 = vmatpush1.msra.mxu0 0.0
    %8040 = vmatprep.subr.mxu0 0.0
    %8041 = vmatpush1.msra.mxu0 0.0
    %8042 = vmatprep.subr.mxu0 0.0
    %8043 = vmatpush1.msra.mxu0 0.0
    %8044 = vmatprep.subr.mxu0 0.0
    %8045 = vmatpush1.msra.mxu0 0.0
    %8046 = vmatprep.subr.mxu0 0.0
    %8047 = vmatpush1.msra.mxu0 0.0
    %8048 = vmatprep.subr.mxu0 0.0
    %8049 = vmatpush1.msra.mxu0 0.0
    %8050 = vmatprep.subr.mxu0 0.0
    %8051 = vmatpush1.msra.mxu0 0.0
    %8052 = vmatprep.subr.mxu0 0.0
    %8053 = vmatpush1.msra.mxu0 0.0
    %8054 = vmatprep.subr.mxu0 0.0
    %8055 = vmatpush1.msra.mxu0 %v7790
    %8056 = vmatprep.subr.mxu0 0.0
    %8057 = vmatpush1.msra.mxu0 %v7789
    %8058 = vmatprep.subr.mxu0 0.0
    %8059 = vmatpush1.msra.mxu0 %v7788
    %8060 = vmatprep.subr.mxu0 0.0
    %8061 = vmatpush1.msra.mxu0 %v7787
    %8062 = vmatprep.subr.mxu0 0.0
    %8063 = vmatpush2.msra.mxu0 0.0
    %8064 = vmatprep.subr.mxu0 0.0
    %8065 = vmatpush2.msra.mxu0 0.0
    %8066 = vmatprep.subr.mxu0 0.0
    %8067 = vmatpush2.msra.mxu0 0.0
    %8068 = vmatprep.subr.mxu0 0.0
    %8069 = vmatpush2.msra.mxu0 0.0
    %8070 = vmatprep.subr.mxu0 0.0
    %8071 = vmatpush2.msra.mxu0 0.0
    %8072 = vmatprep.subr.mxu0 0.0
    %8073 = vmatpush2.msra.mxu0 0.0
    %8074 = vmatprep.subr.mxu0 0.0
    %8075 = vmatpush2.msra.mxu0 0.0
    %8076 = vmatprep.subr.mxu0 0.0
    %8077 = vmatpush2.msra.mxu0 0.0
    %8078 = vmatprep.subr.mxu0 0.0
    %8079 = vmatpush2.msra.mxu0 0.0
    %8080 = vmatprep.subr.mxu0 0.0
    %8081 = vmatpush2.msra.mxu0 0.0
    %8082 = vmatprep.subr.mxu0 0.0
    %8083 = vmatpush2.msra.mxu0 0.0
    %8084 = vmatprep.subr.mxu0 0.0
    %8085 = vmatpush2.msra.mxu0 0.0
    %8086 = vmatprep.subr.mxu0 0.0
    %8087 = vmatpush2.msra.mxu0 0.0
    %8088 = vmatprep.subr.mxu0 0.0
    %8089 = vmatpush2.msra.mxu0 0.0
    %8090 = vmatprep.subr.mxu0 0.0
    %8091 = vmatpush2.msra.mxu0 0.0
    %8092 = vmatprep.subr.mxu0 0.0
    %8093 = vmatpush2.msra.mxu0 0.0
    %8094 = vmatprep.mubr.f32.mxu0 0.0
    %8095 = vmatmul.mubr.f32.gmra.mxu0 %v8028
    %v8096 = vpop.f32.mrf.mxu0
    %v8097 = vadd.f32 0.0, %v8096
    %v8098 = vpop.f32.mrf.mxu0
    %8099 = vdwg.mxu0
    %v8101 = vrot.slane %v8097, 2
    %v8103 = vadd.f32 %v7779, %v8101
    %v8104 = vxor.u32 %v8103, 2147483648
    %v8105 = vmul.f32 %v8104, 1.442695
    %v8106 = vpow.pop %v8105
    %v8107 = vadd.f32 %v8106, 1.0
    %v8108 = vrcp.pop %v8107
    %v8109 = vmul.f32 1.0, %v8108
    %v8110 = vtanh.pop %v8103
    %8112 = vrot.lane.b32.xlu0 %v8110, 64
    %v8113 = vpop.permute.xlu0 %8112
    %v8115 = vmul.f32 %v8109, %v8113
    %v8117 = vrot.slane %v8017, 6
    %v8119 = vmul.f32 %v8109, %v8117
    %8121 = vrot.lane.b32.xlu0 %v8115, 32
    %v8122 = vpop.permute.xlu0 %8121
    %v8124 = vadd.f32 %v8119, %v8122
    %v8125 = vtanh.pop %v8124
    %8127 = vrot.lane.b32.xlu0 %v8125, 64
    %v8128 = vpop.permute.xlu0 %8127
    %v8130 = vmul.f32 %v8109, %v8128
    %v8132 = vrot.slane %v8130, 6
    %8133 = vrot.lane.b32.xlu0 %v8132, 32
    %v8134 = vpop.permute.xlu0 %8133
    %v8135 = vsel %vm442, %v8134, 0
    %8137 = vmatprep.subr.mxu0 0.0
    %8138 = vmatpush1.msra.mxu0 0.0
    %8139 = vmatprep.subr.mxu0 0.0
    %8140 = vmatpush1.msra.mxu0 0.0
    %8141 = vmatprep.subr.mxu0 0.0
    %8142 = vmatpush1.msra.mxu0 0.0
    %8143 = vmatprep.subr.mxu0 0.0
    %8144 = vmatpush1.msra.mxu0 0.0
    %8145 = vmatprep.subr.mxu0 0.0
    %8146 = vmatpush1.msra.mxu0 0.0
    %8147 = vmatprep.subr.mxu0 0.0
    %8148 = vmatpush1.msra.mxu0 0.0
    %8149 = vmatprep.subr.mxu0 0.0
    %8150 = vmatpush1.msra.mxu0 0.0
    %8151 = vmatprep.subr.mxu0 0.0
    %8152 = vmatpush1.msra.mxu0 0.0
    %8153 = vmatprep.subr.mxu0 0.0
    %8154 = vmatpush1.msra.mxu0 0.0
    %8155 = vmatprep.subr.mxu0 0.0
    %8156 = vmatpush1.msra.mxu0 0.0
    %8157 = vmatprep.subr.mxu0 0.0
    %8158 = vmatpush1.msra.mxu0 0.0
    %8159 = vmatprep.subr.mxu0 0.0
    %8160 = vmatpush1.msra.mxu0 0.0
    %8161 = vmatprep.subr.mxu0 0.0
    %8162 = vmatpush1.msra.mxu0 %v7790
    %8163 = vmatprep.subr.mxu0 0.0
    %8164 = vmatpush1.msra.mxu0 %v7789
    %8165 = vmatprep.subr.mxu0 0.0
    %8166 = vmatpush1.msra.mxu0 %v7788
    %8167 = vmatprep.subr.mxu0 0.0
    %8168 = vmatpush1.msra.mxu0 %v7787
    %8169 = vmatprep.subr.mxu0 0.0
    %8170 = vmatpush2.msra.mxu0 0.0
    %8171 = vmatprep.subr.mxu0 0.0
    %8172 = vmatpush2.msra.mxu0 0.0
    %8173 = vmatprep.subr.mxu0 0.0
    %8174 = vmatpush2.msra.mxu0 0.0
    %8175 = vmatprep.subr.mxu0 0.0
    %8176 = vmatpush2.msra.mxu0 0.0
    %8177 = vmatprep.subr.mxu0 0.0
    %8178 = vmatpush2.msra.mxu0 0.0
    %8179 = vmatprep.subr.mxu0 0.0
    %8180 = vmatpush2.msra.mxu0 0.0
    %8181 = vmatprep.subr.mxu0 0.0
    %8182 = vmatpush2.msra.mxu0 0.0
    %8183 = vmatprep.subr.mxu0 0.0
    %8184 = vmatpush2.msra.mxu0 0.0
    %8185 = vmatprep.subr.mxu0 0.0
    %8186 = vmatpush2.msra.mxu0 0.0
    %8187 = vmatprep.subr.mxu0 0.0
    %8188 = vmatpush2.msra.mxu0 0.0
    %8189 = vmatprep.subr.mxu0 0.0
    %8190 = vmatpush2.msra.mxu0 0.0
    %8191 = vmatprep.subr.mxu0 0.0
    %8192 = vmatpush2.msra.mxu0 0.0
    %8193 = vmatprep.subr.mxu0 0.0
    %8194 = vmatpush2.msra.mxu0 0.0
    %8195 = vmatprep.subr.mxu0 0.0
    %8196 = vmatpush2.msra.mxu0 0.0
    %8197 = vmatprep.subr.mxu0 0.0
    %8198 = vmatpush2.msra.mxu0 0.0
    %8199 = vmatprep.subr.mxu0 0.0
    %8200 = vmatpush2.msra.mxu0 0.0
    %8201 = vmatprep.mubr.f32.mxu0 0.0
    %8202 = vmatmul.mubr.f32.gmra.mxu0 %v8135
    %v8203 = vpop.f32.mrf.mxu0
    %v8204 = vadd.f32 0.0, %v8203
    %v8205 = vpop.f32.mrf.mxu0
    %8206 = vdwg.mxu0
    %v8207 = vadd.f32 %v7784, %v8204
    %v8208 = vxor.u32 %v8207, 2147483648
    %v8209 = vmul.f32 %v8208, 1.442695
    %v8210 = vpow.pop %v8209
    %v8211 = vadd.f32 %v8210, 1.0
    %v8212 = vrcp.pop %v8211
    %v8213 = vmul.f32 1.0, %v8212
    %v8214 = vtanh.pop %v8207
    %8216 = vrot.lane.b32.xlu0 %v8214, 64
    %v8217 = vpop.permute.xlu0 %8216
    %v8219 = vmul.f32 %v8213, %v8217
    %v8221 = vrot.slane %v8124, 6
    %v8223 = vmul.f32 %v8213, %v8221
    %8225 = vrot.lane.b32.xlu0 %v8219, 32
    %v8226 = vpop.permute.xlu0 %8225
    %v8228 = vadd.f32 %v8223, %v8226
    %v8229 = vtanh.pop %v8228
    %8231 = vrot.lane.b32.xlu0 %v8229, 64
    %v8232 = vpop.permute.xlu0 %8231
    %v8234 = vmul.f32 %v8213, %v8232
    %8236 = vrot.lane.b32.xlu0 %v8234, 32
    %v8237 = vpop.permute.xlu0 %8236
    %v8238 = vsel %vm442, %v8237, 0
    %8240 = vmatprep.subr.mxu0 0.0
    %8241 = vmatpush1.msra.mxu0 0.0
    %8242 = vmatprep.subr.mxu0 0.0
    %8243 = vmatpush1.msra.mxu0 0.0
    %8244 = vmatprep.subr.mxu0 0.0
    %8245 = vmatpush1.msra.mxu0 0.0
    %8246 = vmatprep.subr.mxu0 0.0
    %8247 = vmatpush1.msra.mxu0 0.0
    %8248 = vmatprep.subr.mxu0 0.0
    %8249 = vmatpush1.msra.mxu0 0.0
    %8250 = vmatprep.subr.mxu0 0.0
    %8251 = vmatpush1.msra.mxu0 0.0
    %8252 = vmatprep.subr.mxu0 0.0
    %8253 = vmatpush1.msra.mxu0 0.0
    %8254 = vmatprep.subr.mxu0 0.0
    %8255 = vmatpush1.msra.mxu0 0.0
    %8256 = vmatprep.subr.mxu0 0.0
    %8257 = vmatpush1.msra.mxu0 0.0
    %8258 = vmatprep.subr.mxu0 0.0
    %8259 = vmatpush1.msra.mxu0 0.0
    %8260 = vmatprep.subr.mxu0 0.0
    %8261 = vmatpush1.msra.mxu0 0.0
    %8262 = vmatprep.subr.mxu0 0.0
    %8263 = vmatpush1.msra.mxu0 0.0
    %8264 = vmatprep.subr.mxu0 0.0
    %8265 = vmatpush1.msra.mxu0 %v7790
    %8266 = vmatprep.subr.mxu0 0.0
    %8267 = vmatpush1.msra.mxu0 %v7789
    %8268 = vmatprep.subr.mxu0 0.0
    %8269 = vmatpush1.msra.mxu0 %v7788
    %8270 = vmatprep.subr.mxu0 0.0
    %8271 = vmatpush1.msra.mxu0 %v7787
    %8272 = vmatprep.subr.mxu0 0.0
    %8273 = vmatpush2.msra.mxu0 0.0
    %8274 = vmatprep.subr.mxu0 0.0
    %8275 = vmatpush2.msra.mxu0 0.0
    %8276 = vmatprep.subr.mxu0 0.0
    %8277 = vmatpush2.msra.mxu0 0.0
    %8278 = vmatprep.subr.mxu0 0.0
    %8279 = vmatpush2.msra.mxu0 0.0
    %8280 = vmatprep.subr.mxu0 0.0
    %8281 = vmatpush2.msra.mxu0 0.0
    %8282 = vmatprep.subr.mxu0 0.0
    %8283 = vmatpush2.msra.mxu0 0.0
    %8284 = vmatprep.subr.mxu0 0.0
    %8285 = vmatpush2.msra.mxu0 0.0
    %8286 = vmatprep.subr.mxu0 0.0
    %8287 = vmatpush2.msra.mxu0 0.0
    %8288 = vmatprep.subr.mxu0 0.0
    %8289 = vmatpush2.msra.mxu0 0.0
    %8290 = vmatprep.subr.mxu0 0.0
    %8291 = vmatpush2.msra.mxu0 0.0
    %8292 = vmatprep.subr.mxu0 0.0
    %8293 = vmatpush2.msra.mxu0 0.0
    %8294 = vmatprep.subr.mxu0 0.0
    %8295 = vmatpush2.msra.mxu0 0.0
    %8296 = vmatprep.subr.mxu0 0.0
    %8297 = vmatpush2.msra.mxu0 0.0
    %8298 = vmatprep.subr.mxu0 0.0
    %8299 = vmatpush2.msra.mxu0 0.0
    %8300 = vmatprep.subr.mxu0 0.0
    %8301 = vmatpush2.msra.mxu0 0.0
    %8302 = vmatprep.subr.mxu0 0.0
    %8303 = vmatpush2.msra.mxu0 0.0
    %8304 = vmatprep.mubr.f32.mxu0 0.0
    %8305 = vmatmul.mubr.f32.gmra.mxu0 %v8238
    %v8306 = vpop.f32.mrf.mxu0
    %v8307 = vadd.f32 0.0, %v8306
    %v8308 = vpop.f32.mrf.mxu0
    %8309 = vdwg.mxu0
    %v8311 = vrot.slane %v8307, 6
    %v8313 = vadd.f32 %v7784, %v8311
    %v8314 = vxor.u32 %v8313, 2147483648
    %v8315 = vmul.f32 %v8314, 1.442695
    %v8316 = vpow.pop %v8315
    %v8317 = vadd.f32 %v8316, 1.0
    %v8318 = vrcp.pop %v8317
    %v8319 = vmul.f32 1.0, %v8318
    %v8320 = vtanh.pop %v8313
    %8322 = vrot.lane.b32.xlu0 %v8320, 64
    %v8323 = vpop.permute.xlu0 %8322
    %v8325 = vmul.f32 %v8319, %v8323
    %v8327 = vrot.slane %v8228, 6
    %v8329 = vmul.f32 %v8319, %v8327
    %8331 = vrot.lane.b32.xlu0 %v8325, 32
    %v8332 = vpop.permute.xlu0 %8331
    %v8334 = vadd.f32 %v8329, %v8332
    %v8335 = vtanh.pop %v8334
    %8337 = vrot.lane.b32.xlu0 %v8335, 64
    %v8338 = vpop.permute.xlu0 %8337
    %v8340 = vmul.f32 %v8319, %v8338
    %v8342 = vrot.slane %v8340, 2
    %8343 = vrot.lane.b32.xlu0 %v8342, 32
    %v8344 = vpop.permute.xlu0 %8343
    %v8345 = vsel %vm442, %v8344, 0
    %8347 = vmatprep.subr.mxu0 0.0
    %8348 = vmatpush1.msra.mxu0 0.0
    %8349 = vmatprep.subr.mxu0 0.0
    %8350 = vmatpush1.msra.mxu0 0.0
    %8351 = vmatprep.subr.mxu0 0.0
    %8352 = vmatpush1.msra.mxu0 0.0
    %8353 = vmatprep.subr.mxu0 0.0
    %8354 = vmatpush1.msra.mxu0 0.0
    %8355 = vmatprep.subr.mxu0 0.0
    %8356 = vmatpush1.msra.mxu0 0.0
    %8357 = vmatprep.subr.mxu0 0.0
    %8358 = vmatpush1.msra.mxu0 0.0
    %8359 = vmatprep.subr.mxu0 0.0
    %8360 = vmatpush1.msra.mxu0 0.0
    %8361 = vmatprep.subr.mxu0 0.0
    %8362 = vmatpush1.msra.mxu0 0.0
    %8363 = vmatprep.subr.mxu0 0.0
    %8364 = vmatpush1.msra.mxu0 0.0
    %8365 = vmatprep.subr.mxu0 0.0
    %8366 = vmatpush1.msra.mxu0 0.0
    %8367 = vmatprep.subr.mxu0 0.0
    %8368 = vmatpush1.msra.mxu0 0.0
    %8369 = vmatprep.subr.mxu0 0.0
    %8370 = vmatpush1.msra.mxu0 0.0
    %8371 = vmatprep.subr.mxu0 0.0
    %8372 = vmatpush1.msra.mxu0 %v7790
    %8373 = vmatprep.subr.mxu0 0.0
    %8374 = vmatpush1.msra.mxu0 %v7789
    %8375 = vmatprep.subr.mxu0 0.0
    %8376 = vmatpush1.msra.mxu0 %v7788
    %8377 = vmatprep.subr.mxu0 0.0
    %8378 = vmatpush1.msra.mxu0 %v7787
    %8379 = vmatprep.subr.mxu0 0.0
    %8380 = vmatpush2.msra.mxu0 0.0
    %8381 = vmatprep.subr.mxu0 0.0
    %8382 = vmatpush2.msra.mxu0 0.0
    %8383 = vmatprep.subr.mxu0 0.0
    %8384 = vmatpush2.msra.mxu0 0.0
    %8385 = vmatprep.subr.mxu0 0.0
    %8386 = vmatpush2.msra.mxu0 0.0
    %8387 = vmatprep.subr.mxu0 0.0
    %8388 = vmatpush2.msra.mxu0 0.0
    %8389 = vmatprep.subr.mxu0 0.0
    %8390 = vmatpush2.msra.mxu0 0.0
    %8391 = vmatprep.subr.mxu0 0.0
    %8392 = vmatpush2.msra.mxu0 0.0
    %8393 = vmatprep.subr.mxu0 0.0
    %8394 = vmatpush2.msra.mxu0 0.0
    %8395 = vmatprep.subr.mxu0 0.0
    %8396 = vmatpush2.msra.mxu0 0.0
    %8397 = vmatprep.subr.mxu0 0.0
    %8398 = vmatpush2.msra.mxu0 0.0
    %8399 = vmatprep.subr.mxu0 0.0
    %8400 = vmatpush2.msra.mxu0 0.0
    %8401 = vmatprep.subr.mxu0 0.0
    %8402 = vmatpush2.msra.mxu0 0.0
    %8403 = vmatprep.subr.mxu0 0.0
    %8404 = vmatpush2.msra.mxu0 0.0
    %8405 = vmatprep.subr.mxu0 0.0
    %8406 = vmatpush2.msra.mxu0 0.0
    %8407 = vmatprep.subr.mxu0 0.0
    %8408 = vmatpush2.msra.mxu0 0.0
    %8409 = vmatprep.subr.mxu0 0.0
    %8410 = vmatpush2.msra.mxu0 0.0
    %8411 = vmatprep.mubr.f32.mxu0 0.0
    %8412 = vmatmul.mubr.f32.gmra.mxu0 %v8345
    %v8413 = vpop.f32.mrf.mxu0
    %v8414 = vadd.f32 0.0, %v8413
    %v8415 = vpop.f32.mrf.mxu0
    %8416 = vdwg.mxu0
    %v8418 = vrot.slane %v8414, 4
    %v8420 = vadd.f32 %v7784, %v8418
    %v8421 = vxor.u32 %v8420, 2147483648
    %v8422 = vmul.f32 %v8421, 1.442695
    %v8423 = vpow.pop %v8422
    %v8424 = vadd.f32 %v8423, 1.0
    %v8425 = vrcp.pop %v8424
    %v8426 = vmul.f32 1.0, %v8425
    %v8427 = vtanh.pop %v8420
    %8429 = vrot.lane.b32.xlu0 %v8427, 64
    %v8430 = vpop.permute.xlu0 %8429
    %v8432 = vmul.f32 %v8426, %v8430
    %v8434 = vrot.slane %v8334, 6
    %v8436 = vmul.f32 %v8426, %v8434
    %8438 = vrot.lane.b32.xlu0 %v8432, 32
    %v8439 = vpop.permute.xlu0 %8438
    %v8441 = vadd.f32 %v8436, %v8439
    %v8442 = vtanh.pop %v8441
    %8444 = vrot.lane.b32.xlu0 %v8442, 64
    %v8445 = vpop.permute.xlu0 %8444
    %v8447 = vmul.f32 %v8426, %v8445
    %v8449 = vrot.slane %v8447, 4
    %8450 = vrot.lane.b32.xlu0 %v8449, 32
    %v8451 = vpop.permute.xlu0 %8450
    %v8452 = vsel %vm442, %v8451, 0
    %8454 = vmatprep.subr.mxu0 0.0
    %8455 = vmatpush1.msra.mxu0 0.0
    %8456 = vmatprep.subr.mxu0 0.0
    %8457 = vmatpush1.msra.mxu0 0.0
    %8458 = vmatprep.subr.mxu0 0.0
    %8459 = vmatpush1.msra.mxu0 0.0
    %8460 = vmatprep.subr.mxu0 0.0
    %8461 = vmatpush1.msra.mxu0 0.0
    %8462 = vmatprep.subr.mxu0 0.0
    %8463 = vmatpush1.msra.mxu0 0.0
    %8464 = vmatprep.subr.mxu0 0.0
    %8465 = vmatpush1.msra.mxu0 0.0
    %8466 = vmatprep.subr.mxu0 0.0
    %8467 = vmatpush1.msra.mxu0 0.0
    %8468 = vmatprep.subr.mxu0 0.0
    %8469 = vmatpush1.msra.mxu0 0.0
    %8470 = vmatprep.subr.mxu0 0.0
    %8471 = vmatpush1.msra.mxu0 0.0
    %8472 = vmatprep.subr.mxu0 0.0
    %8473 = vmatpush1.msra.mxu0 0.0
    %8474 = vmatprep.subr.mxu0 0.0
    %8475 = vmatpush1.msra.mxu0 0.0
    %8476 = vmatprep.subr.mxu0 0.0
    %8477 = vmatpush1.msra.mxu0 0.0
    %8478 = vmatprep.subr.mxu0 0.0
    %8479 = vmatpush1.msra.mxu0 %v7790
    %8480 = vmatprep.subr.mxu0 0.0
    %8481 = vmatpush1.msra.mxu0 %v7789
    %8482 = vmatprep.subr.mxu0 0.0
    %8483 = vmatpush1.msra.mxu0 %v7788
    %8484 = vmatprep.subr.mxu0 0.0
    %8485 = vmatpush1.msra.mxu0 %v7787
    %8486 = vmatprep.subr.mxu0 0.0
    %8487 = vmatpush2.msra.mxu0 0.0
    %8488 = vmatprep.subr.mxu0 0.0
    %8489 = vmatpush2.msra.mxu0 0.0
    %8490 = vmatprep.subr.mxu0 0.0
    %8491 = vmatpush2.msra.mxu0 0.0
    %8492 = vmatprep.subr.mxu0 0.0
    %8493 = vmatpush2.msra.mxu0 0.0
    %8494 = vmatprep.subr.mxu0 0.0
    %8495 = vmatpush2.msra.mxu0 0.0
    %8496 = vmatprep.subr.mxu0 0.0
    %8497 = vmatpush2.msra.mxu0 0.0
    %8498 = vmatprep.subr.mxu0 0.0
    %8499 = vmatpush2.msra.mxu0 0.0
    %8500 = vmatprep.subr.mxu0 0.0
    %8501 = vmatpush2.msra.mxu0 0.0
    %8502 = vmatprep.subr.mxu0 0.0
    %8503 = vmatpush2.msra.mxu0 0.0
    %8504 = vmatprep.subr.mxu0 0.0
    %8505 = vmatpush2.msra.mxu0 0.0
    %8506 = vmatprep.subr.mxu0 0.0
    %8507 = vmatpush2.msra.mxu0 0.0
    %8508 = vmatprep.subr.mxu0 0.0
    %8509 = vmatpush2.msra.mxu0 0.0
    %8510 = vmatprep.subr.mxu0 0.0
    %8511 = vmatpush2.msra.mxu0 0.0
    %8512 = vmatprep.subr.mxu0 0.0
    %8513 = vmatpush2.msra.mxu0 0.0
    %8514 = vmatprep.subr.mxu0 0.0
    %8515 = vmatpush2.msra.mxu0 0.0
    %8516 = vmatprep.subr.mxu0 0.0
    %8517 = vmatpush2.msra.mxu0 0.0
    %8518 = vmatprep.mubr.f32.mxu0 0.0
    %8519 = vmatmul.mubr.f32.gmra.mxu0 %v8452
    %v8520 = vpop.f32.mrf.mxu0
    %v8521 = vadd.f32 0.0, %v8520
    %v8522 = vpop.f32.mrf.mxu0
    %8523 = vdwg.mxu0
    %v8525 = vrot.slane %v8521, 2
    %v8527 = vadd.f32 %v7784, %v8525
    %v8528 = vxor.u32 %v8527, 2147483648
    %v8529 = vmul.f32 %v8528, 1.442695
    %v8530 = vpow.pop %v8529
    %v8531 = vadd.f32 %v8530, 1.0
    %v8532 = vrcp.pop %v8531
    %v8533 = vmul.f32 1.0, %v8532
    %v8534 = vtanh.pop %v8527
    %8536 = vrot.lane.b32.xlu0 %v8534, 64
    %v8537 = vpop.permute.xlu0 %8536
    %v8539 = vmul.f32 %v8533, %v8537
    %v8541 = vrot.slane %v8441, 6
    %v8543 = vmul.f32 %v8533, %v8541
    %8545 = vrot.lane.b32.xlu0 %v8539, 32
    %v8546 = vpop.permute.xlu0 %8545
    %v8548 = vadd.f32 %v8543, %v8546
    %v8549 = vtanh.pop %v8548
    %8551 = vrot.lane.b32.xlu0 %v8549, 64
    %v8552 = vpop.permute.xlu0 %8551
    %v8554 = vmul.f32 %v8533, %v8552
    %v8555 = vld [vmem:[%s67] sm:$0xff]
    %v8556 = vld [vmem:[%s67 + $0x8] sm:$0xff]
    %v8557 = vld [vmem:[%s67 + $0x10] sm:$0xff]
    %v8558 = vld [vmem:[%s67 + $0x18] sm:$0xff]
    %v8559 = vld [vmem:[%s67 + $0x20] sm:$0xff]
    %v8560 = vld [vmem:[%s67 + $0x28] sm:$0xff]
    %v8561 = vld [vmem:[%s67 + $0x30] sm:$0xff]
    %v8562 = vld [vmem:[%s67 + $0x38] sm:$0xff]
    %v8563 = vld [vmem:[#allocation9] sm:$0x1]
    %v8565 = vlaneseq
    %v8566 = vshrl.u32 %v8565, 7
    %v8567 = vsub.s32 0, %v8566
    %v8568 = vrot.slane %v8563, %v8567
    %v8570 = vrot.slane %v7690, 6
    %v8571 = vsel %vm2036, %v8570, 0
    %8573 = vmatprep.subr.mxu0 0.0
    %8574 = vmatpush1.msra.mxu0 0.0
    %8575 = vmatprep.subr.mxu0 0.0
    %8576 = vmatpush1.msra.mxu0 0.0
    %8577 = vmatprep.subr.mxu0 0.0
    %8578 = vmatpush1.msra.mxu0 0.0
    %8579 = vmatprep.subr.mxu0 0.0
    %8580 = vmatpush1.msra.mxu0 0.0
    %8581 = vmatprep.subr.mxu0 0.0
    %8582 = vmatpush1.msra.mxu0 0.0
    %8583 = vmatprep.subr.mxu0 0.0
    %8584 = vmatpush1.msra.mxu0 0.0
    %8585 = vmatprep.subr.mxu0 0.0
    %8586 = vmatpush1.msra.mxu0 0.0
    %8587 = vmatprep.subr.mxu0 0.0
    %8588 = vmatpush1.msra.mxu0 0.0
    %8589 = vmatprep.subr.mxu0 0.0
    %8590 = vmatpush1.msra.mxu0 %v8562
    %8591 = vmatprep.subr.mxu0 0.0
    %8592 = vmatpush1.msra.mxu0 %v8561
    %8593 = vmatprep.subr.mxu0 0.0
    %8594 = vmatpush1.msra.mxu0 %v8560
    %8595 = vmatprep.subr.mxu0 0.0
    %8596 = vmatpush1.msra.mxu0 %v8559
    %8597 = vmatprep.subr.mxu0 0.0
    %8598 = vmatpush1.msra.mxu0 %v8558
    %8599 = vmatprep.subr.mxu0 0.0
    %8600 = vmatpush1.msra.mxu0 %v8557
    %8601 = vmatprep.subr.mxu0 0.0
    %8602 = vmatpush1.msra.mxu0 %v8556
    %8603 = vmatprep.subr.mxu0 0.0
    %8604 = vmatpush1.msra.mxu0 %v8555
    %8605 = vmatprep.subr.mxu0 0.0
    %8606 = vmatpush2.msra.mxu0 0.0
    %8607 = vmatprep.subr.mxu0 0.0
    %8608 = vmatpush2.msra.mxu0 0.0
    %8609 = vmatprep.subr.mxu0 0.0
    %8610 = vmatpush2.msra.mxu0 0.0
    %8611 = vmatprep.subr.mxu0 0.0
    %8612 = vmatpush2.msra.mxu0 0.0
    %8613 = vmatprep.subr.mxu0 0.0
    %8614 = vmatpush2.msra.mxu0 0.0
    %8615 = vmatprep.subr.mxu0 0.0
    %8616 = vmatpush2.msra.mxu0 0.0
    %8617 = vmatprep.subr.mxu0 0.0
    %8618 = vmatpush2.msra.mxu0 0.0
    %8619 = vmatprep.subr.mxu0 0.0
    %8620 = vmatpush2.msra.mxu0 0.0
    %8621 = vmatprep.subr.mxu0 0.0
    %8622 = vmatpush2.msra.mxu0 0.0
    %8623 = vmatprep.subr.mxu0 0.0
    %8624 = vmatpush2.msra.mxu0 0.0
    %8625 = vmatprep.subr.mxu0 0.0
    %8626 = vmatpush2.msra.mxu0 0.0
    %8627 = vmatprep.subr.mxu0 0.0
    %8628 = vmatpush2.msra.mxu0 0.0
    %8629 = vmatprep.subr.mxu0 0.0
    %8630 = vmatpush2.msra.mxu0 0.0
    %8631 = vmatprep.subr.mxu0 0.0
    %8632 = vmatpush2.msra.mxu0 0.0
    %8633 = vmatprep.subr.mxu0 0.0
    %8634 = vmatpush2.msra.mxu0 0.0
    %8635 = vmatprep.subr.mxu0 0.0
    %8636 = vmatpush2.msra.mxu0 0.0
    %8637 = vmatprep.mubr.f32.mxu0 0.0
    %8638 = vmatmul.mubr.f32.gmra.mxu0 %v8571
    %v8639 = vpop.f32.mrf.mxu0
    %v8640 = vadd.f32 %v8568, %v8639
    %v8641 = vpop.f32.mrf.mxu0
    %8642 = vdwg.mxu0
    %v8643 = vxor.u32 %v8640, 2147483648
    %v8644 = vmul.f32 %v8643, 1.442695
    %v8645 = vpow.pop %v8644
    %v8646 = vadd.f32 %v8645, 1.0
    %v8647 = vrcp.pop %v8646
    %v8648 = vmul.f32 1.0, %v8647
    %v8649 = vtanh.pop %v8640
    %8651 = vrot.lane.b32.xlu0 %v8649, 64
    %v8652 = vpop.permute.xlu0 %8651
    %v8654 = vmul.f32 %v8648, %v8652
    %v8655 = vtanh.pop %v8654
    %8657 = vrot.lane.b32.xlu0 %v8655, 96
    %v8658 = vpop.permute.xlu0 %8657
    %v8660 = vmul.f32 %v8648, %v8658
    %v8661 = vld [vmem:[%s73] sm:$0xff]
    %v8662 = vld [vmem:[%s73 + $0x8] sm:$0xff]
    %v8663 = vld [vmem:[%s73 + $0x10] sm:$0xff]
    %v8664 = vld [vmem:[%s73 + $0x18] sm:$0xff]
    %v8665 = vld [vmem:[%s73 + $0x20] sm:$0xff]
    %v8666 = vld [vmem:[%s73 + $0x28] sm:$0xff]
    %v8667 = vld [vmem:[%s73 + $0x30] sm:$0xff]
    %v8668 = vld [vmem:[%s73 + $0x38] sm:$0xff]
    %8670 = vrot.lane.b32.xlu0 %v8660, 32
    %v8671 = vpop.permute.xlu0 %8670
    %v8672 = vsel %vm442, %v8671, 0
    %8674 = vmatprep.subr.mxu0 0.0
    %8675 = vmatpush1.msra.mxu0 0.0
    %8676 = vmatprep.subr.mxu0 0.0
    %8677 = vmatpush1.msra.mxu0 0.0
    %8678 = vmatprep.subr.mxu0 0.0
    %8679 = vmatpush1.msra.mxu0 0.0
    %8680 = vmatprep.subr.mxu0 0.0
    %8681 = vmatpush1.msra.mxu0 0.0
    %8682 = vmatprep.subr.mxu0 0.0
    %8683 = vmatpush1.msra.mxu0 0.0
    %8684 = vmatprep.subr.mxu0 0.0
    %8685 = vmatpush1.msra.mxu0 0.0
    %8686 = vmatprep.subr.mxu0 0.0
    %8687 = vmatpush1.msra.mxu0 0.0
    %8688 = vmatprep.subr.mxu0 0.0
    %8689 = vmatpush1.msra.mxu0 0.0
    %8690 = vmatprep.subr.mxu0 0.0
    %8691 = vmatpush1.msra.mxu0 0.0
    %8692 = vmatprep.subr.mxu0 0.0
    %8693 = vmatpush1.msra.mxu0 0.0
    %8694 = vmatprep.subr.mxu0 0.0
    %8695 = vmatpush1.msra.mxu0 0.0
    %8696 = vmatprep.subr.mxu0 0.0
    %8697 = vmatpush1.msra.mxu0 0.0
    %8698 = vmatprep.subr.mxu0 0.0
    %8699 = vmatpush1.msra.mxu0 %v8668
    %8700 = vmatprep.subr.mxu0 0.0
    %8701 = vmatpush1.msra.mxu0 %v8667
    %8702 = vmatprep.subr.mxu0 0.0
    %8703 = vmatpush1.msra.mxu0 %v8666
    %8704 = vmatprep.subr.mxu0 0.0
    %8705 = vmatpush1.msra.mxu0 %v8665
    %8706 = vmatprep.subr.mxu0 0.0
    %8707 = vmatpush2.msra.mxu0 0.0
    %8708 = vmatprep.subr.mxu0 0.0
    %8709 = vmatpush2.msra.mxu0 0.0
    %8710 = vmatprep.subr.mxu0 0.0
    %8711 = vmatpush2.msra.mxu0 0.0
    %8712 = vmatprep.subr.mxu0 0.0
    %8713 = vmatpush2.msra.mxu0 0.0
    %8714 = vmatprep.subr.mxu0 0.0
    %8715 = vmatpush2.msra.mxu0 0.0
    %8716 = vmatprep.subr.mxu0 0.0
    %8717 = vmatpush2.msra.mxu0 0.0
    %8718 = vmatprep.subr.mxu0 0.0
    %8719 = vmatpush2.msra.mxu0 0.0
    %8720 = vmatprep.subr.mxu0 0.0
    %8721 = vmatpush2.msra.mxu0 0.0
    %8722 = vmatprep.subr.mxu0 0.0
    %8723 = vmatpush2.msra.mxu0 0.0
    %8724 = vmatprep.subr.mxu0 0.0
    %8725 = vmatpush2.msra.mxu0 0.0
    %8726 = vmatprep.subr.mxu0 0.0
    %8727 = vmatpush2.msra.mxu0 0.0
    %8728 = vmatprep.subr.mxu0 0.0
    %8729 = vmatpush2.msra.mxu0 0.0
    %8730 = vmatprep.subr.mxu0 0.0
    %8731 = vmatpush2.msra.mxu0 0.0
    %8732 = vmatprep.subr.mxu0 0.0
    %8733 = vmatpush2.msra.mxu0 0.0
    %8734 = vmatprep.subr.mxu0 0.0
    %8735 = vmatpush2.msra.mxu0 0.0
    %8736 = vmatprep.subr.mxu0 0.0
    %8737 = vmatpush2.msra.mxu0 0.0
    %8738 = vmatprep.mubr.f32.mxu0 0.0
    %8739 = vmatmul.mubr.f32.gmra.mxu0 %v8672
    %v8740 = vpop.f32.mrf.mxu0
    %v8741 = vadd.f32 0.0, %v8740
    %v8742 = vpop.f32.mrf.mxu0
    %8743 = vdwg.mxu0
    %v8745 = vrot.slane %v8554, 6
    %8746 = vrot.lane.b32.xlu0 %v8745, 32
    %v8747 = vpop.permute.xlu0 %8746
    %v8748 = vsel %vm442, %v8747, 0
    %8750 = vmatprep.subr.mxu0 0.0
    %8751 = vmatpush1.msra.mxu0 0.0
    %8752 = vmatprep.subr.mxu0 0.0
    %8753 = vmatpush1.msra.mxu0 0.0
    %8754 = vmatprep.subr.mxu0 0.0
    %8755 = vmatpush1.msra.mxu0 0.0
    %8756 = vmatprep.subr.mxu0 0.0
    %8757 = vmatpush1.msra.mxu0 0.0
    %8758 = vmatprep.subr.mxu0 0.0
    %8759 = vmatpush1.msra.mxu0 0.0
    %8760 = vmatprep.subr.mxu0 0.0
    %8761 = vmatpush1.msra.mxu0 0.0
    %8762 = vmatprep.subr.mxu0 0.0
    %8763 = vmatpush1.msra.mxu0 0.0
    %8764 = vmatprep.subr.mxu0 0.0
    %8765 = vmatpush1.msra.mxu0 0.0
    %8766 = vmatprep.subr.mxu0 0.0
    %8767 = vmatpush1.msra.mxu0 0.0
    %8768 = vmatprep.subr.mxu0 0.0
    %8769 = vmatpush1.msra.mxu0 0.0
    %8770 = vmatprep.subr.mxu0 0.0
    %8771 = vmatpush1.msra.mxu0 0.0
    %8772 = vmatprep.subr.mxu0 0.0
    %8773 = vmatpush1.msra.mxu0 0.0
    %8774 = vmatprep.subr.mxu0 0.0
    %8775 = vmatpush1.msra.mxu0 %v8664
    %8776 = vmatprep.subr.mxu0 0.0
    %8777 = vmatpush1.msra.mxu0 %v8663
    %8778 = vmatprep.subr.mxu0 0.0
    %8779 = vmatpush1.msra.mxu0 %v8662
    %8780 = vmatprep.subr.mxu0 0.0
    %8781 = vmatpush1.msra.mxu0 %v8661
    %8782 = vmatprep.subr.mxu0 0.0
    %8783 = vmatpush2.msra.mxu0 0.0
    %8784 = vmatprep.subr.mxu0 0.0
    %8785 = vmatpush2.msra.mxu0 0.0
    %8786 = vmatprep.subr.mxu0 0.0
    %8787 = vmatpush2.msra.mxu0 0.0
    %8788 = vmatprep.subr.mxu0 0.0
    %8789 = vmatpush2.msra.mxu0 0.0
    %8790 = vmatprep.subr.mxu0 0.0
    %8791 = vmatpush2.msra.mxu0 0.0
    %8792 = vmatprep.subr.mxu0 0.0
    %8793 = vmatpush2.msra.mxu0 0.0
    %8794 = vmatprep.subr.mxu0 0.0
    %8795 = vmatpush2.msra.mxu0 0.0
    %8796 = vmatprep.subr.mxu0 0.0
    %8797 = vmatpush2.msra.mxu0 0.0
    %8798 = vmatprep.subr.mxu0 0.0
    %8799 = vmatpush2.msra.mxu0 0.0
    %8800 = vmatprep.subr.mxu0 0.0
    %8801 = vmatpush2.msra.mxu0 0.0
    %8802 = vmatprep.subr.mxu0 0.0
    %8803 = vmatpush2.msra.mxu0 0.0
    %8804 = vmatprep.subr.mxu0 0.0
    %8805 = vmatpush2.msra.mxu0 0.0
    %8806 = vmatprep.subr.mxu0 0.0
    %8807 = vmatpush2.msra.mxu0 0.0
    %8808 = vmatprep.subr.mxu0 0.0
    %8809 = vmatpush2.msra.mxu0 0.0
    %8810 = vmatprep.subr.mxu0 0.0
    %8811 = vmatpush2.msra.mxu0 0.0
    %8812 = vmatprep.subr.mxu0 0.0
    %8813 = vmatpush2.msra.mxu0 0.0
    %8814 = vmatprep.mubr.f32.mxu0 0.0
    %8815 = vmatmul.mubr.f32.gmra.mxu0 %v8748
    %v8816 = vpop.f32.mrf.mxu0
    %v8817 = vadd.f32 %v8741, %v8816
    %v8818 = vpop.f32.mrf.mxu0
    %8819 = vdwg.mxu0
    %v8820 = vld [vmem:[#allocation11] sm:$0x1]
    %v8822 = vlaneseq
    %v8823 = vshrl.u32 %v8822, 7
    %v8824 = vsub.s32 0, %v8823
    %v8825 = vrot.slane %v8820, %v8824
    %v8827 = vadd.f32 %v8817, %v8825
    %v8828 = vmax.f32 %v8827, 0.0
    %v8829 = vld [vmem:[%s77] sm:$0xff]
    %v8830 = vld [vmem:[%s77 + $0x8] sm:$0xff]
    %v8831 = vld [vmem:[%s77 + $0x10] sm:$0xff]
    %v8832 = vld [vmem:[%s77 + $0x18] sm:$0xff]
    %v8833 = vld [vmem:[%s77 + $0x20] sm:$0xff]
    %v8834 = vld [vmem:[%s77 + $0x28] sm:$0xff]
    %v8835 = vld [vmem:[%s77 + $0x30] sm:$0xff]
    %v8836 = vld [vmem:[%s77 + $0x38] sm:$0xff]
    %v8837 = vld [vmem:[#allocation12] sm:$0x1]
    %v8839 = vlaneseq
    %v8840 = vshrl.u32 %v8839, 7
    %v8841 = vsub.s32 0, %v8840
    %v8842 = vrot.slane %v8837, %v8841
    %v8845 = vsel %vm2036, %v8828, 0
    %8847 = vmatprep.subr.mxu0 0.0
    %8848 = vmatpush1.msra.mxu0 0.0
    %8849 = vmatprep.subr.mxu0 0.0
    %8850 = vmatpush1.msra.mxu0 0.0
    %8851 = vmatprep.subr.mxu0 0.0
    %8852 = vmatpush1.msra.mxu0 0.0
    %8853 = vmatprep.subr.mxu0 0.0
    %8854 = vmatpush1.msra.mxu0 0.0
    %8855 = vmatprep.subr.mxu0 0.0
    %8856 = vmatpush1.msra.mxu0 0.0
    %8857 = vmatprep.subr.mxu0 0.0
    %8858 = vmatpush1.msra.mxu0 0.0
    %8859 = vmatprep.subr.mxu0 0.0
    %8860 = vmatpush1.msra.mxu0 0.0
    %8861 = vmatprep.subr.mxu0 0.0
    %8862 = vmatpush1.msra.mxu0 0.0
    %8863 = vmatprep.subr.mxu0 0.0
    %8864 = vmatpush1.msra.mxu0 %v8836
    %8865 = vmatprep.subr.mxu0 0.0
    %8866 = vmatpush1.msra.mxu0 %v8835
    %8867 = vmatprep.subr.mxu0 0.0
    %8868 = vmatpush1.msra.mxu0 %v8834
    %8869 = vmatprep.subr.mxu0 0.0
    %8870 = vmatpush1.msra.mxu0 %v8833
    %8871 = vmatprep.subr.mxu0 0.0
    %8872 = vmatpush1.msra.mxu0 %v8832
    %8873 = vmatprep.subr.mxu0 0.0
    %8874 = vmatpush1.msra.mxu0 %v8831
    %8875 = vmatprep.subr.mxu0 0.0
    %8876 = vmatpush1.msra.mxu0 %v8830
    %8877 = vmatprep.subr.mxu0 0.0
    %8878 = vmatpush1.msra.mxu0 %v8829
    %8879 = vmatprep.subr.mxu0 0.0
    %8880 = vmatpush2.msra.mxu0 0.0
    %8881 = vmatprep.subr.mxu0 0.0
    %8882 = vmatpush2.msra.mxu0 0.0
    %8883 = vmatprep.subr.mxu0 0.0
    %8884 = vmatpush2.msra.mxu0 0.0
    %8885 = vmatprep.subr.mxu0 0.0
    %8886 = vmatpush2.msra.mxu0 0.0
    %8887 = vmatprep.subr.mxu0 0.0
    %8888 = vmatpush2.msra.mxu0 0.0
    %8889 = vmatprep.subr.mxu0 0.0
    %8890 = vmatpush2.msra.mxu0 0.0
    %8891 = vmatprep.subr.mxu0 0.0
    %8892 = vmatpush2.msra.mxu0 0.0
    %8893 = vmatprep.subr.mxu0 0.0
    %8894 = vmatpush2.msra.mxu0 0.0
    %8895 = vmatprep.subr.mxu0 0.0
    %8896 = vmatpush2.msra.mxu0 0.0
    %8897 = vmatprep.subr.mxu0 0.0
    %8898 = vmatpush2.msra.mxu0 0.0
    %8899 = vmatprep.subr.mxu0 0.0
    %8900 = vmatpush2.msra.mxu0 0.0
    %8901 = vmatprep.subr.mxu0 0.0
    %8902 = vmatpush2.msra.mxu0 0.0
    %8903 = vmatprep.subr.mxu0 0.0
    %8904 = vmatpush2.msra.mxu0 0.0
    %8905 = vmatprep.subr.mxu0 0.0
    %8906 = vmatpush2.msra.mxu0 0.0
    %8907 = vmatprep.subr.mxu0 0.0
    %8908 = vmatpush2.msra.mxu0 0.0
    %8909 = vmatprep.subr.mxu0 0.0
    %8910 = vmatpush2.msra.mxu0 0.0
    %8911 = vmatprep.mubr.f32.mxu0 0.0
    %8912 = vmatmul.mubr.f32.gmra.mxu0 %v8845
    %v8913 = vpop.f32.mrf.mxu0
    %v8914 = vadd.f32 %v8842, %v8913
    %v8915 = vpop.f32.mrf.mxu0
    %8916 = vdwg.mxu0
    %v8917 = vmax.f32 %v8914, 0.0
    %v8918 = vld [vmem:[%s81] sm:$0xff]
    %v8919 = vld [vmem:[%s81 + $0x8] sm:$0xff]
    %v8920 = vld [vmem:[%s81 + $0x10] sm:$0xff]
    %v8921 = vld [vmem:[%s81 + $0x18] sm:$0xff]
    %v8922 = vld [vmem:[#allocation6] sm:$0x1]
    %v8924 = vlaneseq
    %v8925 = vshrl.u32 %v8924, 7
    %v8926 = vsub.s32 0, %v8925
    %v8927 = vrot.slane %v8922, %v8926
    %v8930 = vsel %vm442, %v8917, 0
    %8932 = vmatprep.subr.mxu0 0.0
    %8933 = vmatpush1.msra.mxu0 0.0
    %8934 = vmatprep.subr.mxu0 0.0
    %8935 = vmatpush1.msra.mxu0 0.0
    %8936 = vmatprep.subr.mxu0 0.0
    %8937 = vmatpush1.msra.mxu0 0.0
    %8938 = vmatprep.subr.mxu0 0.0
    %8939 = vmatpush1.msra.mxu0 0.0
    %8940 = vmatprep.subr.mxu0 0.0
    %8941 = vmatpush1.msra.mxu0 0.0
    %8942 = vmatprep.subr.mxu0 0.0
    %8943 = vmatpush1.msra.mxu0 0.0
    %8944 = vmatprep.subr.mxu0 0.0
    %8945 = vmatpush1.msra.mxu0 0.0
    %8946 = vmatprep.subr.mxu0 0.0
    %8947 = vmatpush1.msra.mxu0 0.0
    %8948 = vmatprep.subr.mxu0 0.0
    %8949 = vmatpush1.msra.mxu0 0.0
    %8950 = vmatprep.subr.mxu0 0.0
    %8951 = vmatpush1.msra.mxu0 0.0
    %8952 = vmatprep.subr.mxu0 0.0
    %8953 = vmatpush1.msra.mxu0 0.0
    %8954 = vmatprep.subr.mxu0 0.0
    %8955 = vmatpush1.msra.mxu0 0.0
    %8956 = vmatprep.subr.mxu0 0.0
    %8957 = vmatpush1.msra.mxu0 %v8921
    %8958 = vmatprep.subr.mxu0 0.0
    %8959 = vmatpush1.msra.mxu0 %v8920
    %8960 = vmatprep.subr.mxu0 0.0
    %8961 = vmatpush1.msra.mxu0 %v8919
    %8962 = vmatprep.subr.mxu0 0.0
    %8963 = vmatpush1.msra.mxu0 %v8918
    %8964 = vmatprep.subr.mxu0 0.0
    %8965 = vmatpush2.msra.mxu0 0.0
    %8966 = vmatprep.subr.mxu0 0.0
    %8967 = vmatpush2.msra.mxu0 0.0
    %8968 = vmatprep.subr.mxu0 0.0
    %8969 = vmatpush2.msra.mxu0 0.0
    %8970 = vmatprep.subr.mxu0 0.0
    %8971 = vmatpush2.msra.mxu0 0.0
    %8972 = vmatprep.subr.mxu0 0.0
    %8973 = vmatpush2.msra.mxu0 0.0
    %8974 = vmatprep.subr.mxu0 0.0
    %8975 = vmatpush2.msra.mxu0 0.0
    %8976 = vmatprep.subr.mxu0 0.0
    %8977 = vmatpush2.msra.mxu0 0.0
    %8978 = vmatprep.subr.mxu0 0.0
    %8979 = vmatpush2.msra.mxu0 0.0
    %8980 = vmatprep.subr.mxu0 0.0
    %8981 = vmatpush2.msra.mxu0 0.0
    %8982 = vmatprep.subr.mxu0 0.0
    %8983 = vmatpush2.msra.mxu0 0.0
    %8984 = vmatprep.subr.mxu0 0.0
    %8985 = vmatpush2.msra.mxu0 0.0
    %8986 = vmatprep.subr.mxu0 0.0
    %8987 = vmatpush2.msra.mxu0 0.0
    %8988 = vmatprep.subr.mxu0 0.0
    %8989 = vmatpush2.msra.mxu0 0.0
    %8990 = vmatprep.subr.mxu0 0.0
    %8991 = vmatpush2.msra.mxu0 0.0
    %8992 = vmatprep.subr.mxu0 0.0
    %8993 = vmatpush2.msra.mxu0 0.0
    %8994 = vmatprep.subr.mxu0 0.0
    %8995 = vmatpush2.msra.mxu0 0.0
    %8996 = vmatprep.mubr.f32.mxu0 0.0
    %8997 = vmatmul.mubr.f32.gmra.mxu0 %v8930
    %v8998 = vpop.f32.mrf.mxu0
    %v8999 = vadd.f32 %v8927, %v8998
    %v9000 = vpop.f32.mrf.mxu0
    %9001 = vdwg.mxu0
    %vm9002 = vcmask 1024
    %9003 = vst.msk [vmem:[%s85] sm:$0x3] %vm9002, %v8999
    // Predicated region
    $region186: #{lstm_autoencoder_forward.1} parent=1 // pred_check
      _
    $region187: #{lstm_autoencoder_forward.1} parent=1 // pred_check_branch
      %9005 = sbr.rel (0) target = $region189
    $region188: #{lstm_autoencoder_forward.1} parent=1 // pred_region
      _
    $region189: #{lstm_autoencoder_forward.1} parent=1 // pred_fallthru
      _
    // Predicated region
    $region190: #{lstm_autoencoder_forward.1} parent=1 // pred_check
      _
    $region191: #{lstm_autoencoder_forward.1} parent=1 // pred_check_branch
      %9007 = sbr.rel (0) target = $region193
    $region192: #{lstm_autoencoder_forward.1} parent=1 // pred_region
      _
    $region193: #{lstm_autoencoder_forward.1} parent=1 // pred_fallthru
      _
    // Predicated region
    $region194: #{lstm_autoencoder_forward.1} parent=1 // pred_check
      _
    $region195: #{lstm_autoencoder_forward.1} parent=1 // pred_check_branch
      %9009 = sbr.rel (0) target = $region197
    $region196: #{lstm_autoencoder_forward.1} parent=1 // pred_region
      _
    $region197: #{lstm_autoencoder_forward.1} parent=1 // pred_fallthru
      _
    // Predicated region
    $region198: #{lstm_autoencoder_forward.1} parent=1 // pred_check
      _
    $region199: #{lstm_autoencoder_forward.1} parent=1 // pred_check_branch
      %9011 = sbr.rel (0) target = $region201
    $region200: #{lstm_autoencoder_forward.1} parent=1 // pred_region
      _
    $region201: #{lstm_autoencoder_forward.1} parent=1 // pred_fallthru
      _
    %9012 = vsyncpa [#allocation8], 1
    %9013 = vsyncpa [#allocation10], 1
    %9014 = vsyncpa [#allocation13], 1

</llo_original>
